<compile_context>
chip_gen: v7x
topology: tpu7x:2x2x1
jax: 0.10.0
libtpu: 0.0.40
codegen_flags: <defaults>
</compile_context>

<pallas_src>
import functools

import jax
import jax.numpy as jnp
from jax import lax
from jax.experimental import pallas as pl
from jax.experimental.pallas import tpu as pltpu

LANE = 128


def _round_up(x, m):
    return (x + m - 1) // m * m


def _fused_bboxhead_kernel(x_ref, w_mid_ref, b_mid_ref, w_fin_ref, b_fin_ref,
                           o_ref, pad_ref, *, num_mid):
    """Whole bbox head for one batch element, activations resident in VMEM.

    x_ref:     (1, H, W, C)        f32 input tile
    w_mid_ref: (num_mid, 9*C, C)   bf16 ConvBN weights (BN scale folded in)
    b_mid_ref: (num_mid, 1, C)     f32 folded BN biases
    w_fin_ref: (9*C, CP)           bf16 head weights, Cout zero-padded to CP
    b_fin_ref: (1, CP)             f32 head bias, zero-padded
    o_ref:     (1, H, W, CP)       f32 lane-dense output
    pad_ref:   (H+2, W+2, C)       f32 VMEM scratch with zero halo
    """
    H = x_ref.shape[1]
    W = x_ref.shape[2]
    C = x_ref.shape[3]

    # Build the zero halo once; only the interior is rewritten per layer.
    pad_ref[...] = jnp.zeros_like(pad_ref)
    pad_ref[1:H + 1, 1:W + 1, :] = x_ref[0]

    def im2col():
        # One aligned full load, then 9 static shifted-window slices
        # concatenated along channels -> (H, W, 9*C) patch tensor in bf16.
        p = pad_ref[...]
        cols = [p[ky:ky + H, kx:kx + W, :]
                for ky in range(3) for kx in range(3)]
        return jnp.concatenate(cols, axis=-1).astype(jnp.bfloat16)

    # 4x ConvBN + ReLU, intermediates stay in VMEM.
    for l in range(num_mid):
        patches = im2col()                                     # (H, W, 9C)
        acc = lax.dot_general(                                 # (H, W, C) f32
            patches, w_mid_ref[l],
            (((2,), (0,)), ((), ())),
            preferred_element_type=jnp.float32)
        acc = jnp.maximum(acc + b_mid_ref[l], 0.0)             # f32 epilogue
        pad_ref[1:H + 1, 1:W + 1, :] = acc

    # Final 3x3 conv head (bias, no ReLU); Cout padded to 128 lanes so the
    # single HBM store is lane-dense (no masked vst).
    patches = im2col()
    out = lax.dot_general(
        patches, w_fin_ref[...],
        (((2,), (0,)), ((), ())),
        preferred_element_type=jnp.float32)                    # (H, W, CP)
    o_ref[0] = (out + b_fin_ref[...]).astype(o_ref.dtype)


def bboxhead_pallas(x_nhwc, w_mid, b_mid, w_fin, b_fin):
    """Runs the fused bbox-head kernel over the batch dimension."""
    N, H, W, C = x_nhwc.shape
    num_mid = w_mid.shape[0]
    CP = w_fin.shape[-1]

    kernel = functools.partial(_fused_bboxhead_kernel, num_mid=num_mid)
    return pl.pallas_call(
        kernel,
        out_shape=jax.ShapeDtypeStruct((N, H, W, CP), jnp.float32),
        grid_spec=pltpu.PrefetchScalarGridSpec(
            num_scalar_prefetch=0,
            grid=(N,),
            in_specs=[
                pl.BlockSpec((1, H, W, C), lambda n: (n, 0, 0, 0)),
                pl.BlockSpec(w_mid.shape, lambda n: (0, 0, 0)),
                pl.BlockSpec(b_mid.shape, lambda n: (0, 0, 0)),
                pl.BlockSpec(w_fin.shape, lambda n: (0, 0)),
                pl.BlockSpec(b_fin.shape, lambda n: (0, 0)),
            ],
            out_specs=pl.BlockSpec((1, H, W, CP), lambda n: (n, 0, 0, 0)),
            scratch_shapes=[
                pltpu.VMEM((H + 2, W + 2, C), jnp.float32),
            ],
        ),
        compiler_params=pltpu.CompilerParams(
            dimension_semantics=("parallel",)),
    )(x_nhwc, w_mid, b_mid, w_fin, b_fin)


def init_bboxhead_params(key, channels, num_anchors):
    """Deterministic synthetic parameters, pre-folded into kernel layout."""
    eps = 1e-5
    C = channels
    w_mid, b_mid = [], []
    for _ in range(4):
        key, kw, kg, kb, km, kv = jax.random.split(key, 6)
        w = jax.random.normal(kw, (3, 3, C, C), jnp.float32) * 0.05   # HWIO
        gamma = 1.0 + 0.1 * jax.random.normal(kg, (C,), jnp.float32)
        beta = 0.1 * jax.random.normal(kb, (C,), jnp.float32)
        mean = 0.1 * jax.random.normal(km, (C,), jnp.float32)
        var = jnp.abs(jax.random.normal(kv, (C,), jnp.float32)) + 0.5
        scale = gamma / jnp.sqrt(var + eps)
        bias = beta - mean * scale
        # Fold the BN scale into the conv weight (per output channel).
        w_folded = w * scale[None, None, None, :]
        w_mid.append(w_folded.reshape(9 * C, C))     # K order = tap*C + cin
        b_mid.append(bias.reshape(1, C))
    w_mid = jnp.stack(w_mid, 0).astype(jnp.bfloat16)   # (4, 9C, C) bf16
    b_mid = jnp.stack(b_mid, 0)                        # (4, 1, C)  f32

    cout = num_anchors * 4
    cout_pad = _round_up(cout, LANE)                   # lane-dense head output
    key, kw, kb = jax.random.split(key, 3)
    lw = jax.random.normal(kw, (3, 3, C, cout), jnp.float32) * 0.05
    lb = 0.1 * jax.random.normal(kb, (cout,), jnp.float32)
    w_fin = jnp.zeros((9 * C, cout_pad), jnp.float32)
    w_fin = w_fin.at[:, :cout].set(lw.reshape(9 * C, cout)).astype(jnp.bfloat16)
    b_fin = jnp.zeros((1, cout_pad), jnp.float32).at[:, :cout].set(lb[None, :])

    return {"w_mid": w_mid, "b_mid": b_mid, "w_fin": w_fin, "b_fin": b_fin,
            "anchors": num_anchors, "cout": cout}


def bboxhead_forward(x_nchw, params):
    """Equivalent of bboxhead.forward; input NCHW, output (N, A*H*W, 4)."""
    A = params["anchors"]
    cout = params["cout"]
    x = jnp.transpose(x_nchw, (0, 2, 3, 1))            # NCHW -> NHWC

    y = bboxhead_pallas(x, params["w_mid"], params["b_mid"],
                        params["w_fin"], params["b_fin"])   # (N, H, W, CP)

    N, H, W, _ = y.shape
    y = y[..., :cout]                                   # strip lane padding
    # PyTorch: view(N, A, 4, H, W) -> permute(0,1,3,4,2) -> view(N, -1, 4).
    # In NHWC, channel a*4+c maps to (anchor a, coord c):
    y = y.reshape(N, H, W, A, 4)
    y = jnp.transpose(y, (0, 3, 1, 2, 4))               # (N, A, H, W, 4)
    return y.reshape(N, A * H * W, 4)


if __name__ == "__main__":
    key = jax.random.PRNGKey(0)
    channels, num_anchors = 32, 3
    N, H, W = 2, 16, 16

    kx, kp = jax.random.split(key)
    x = jax.random.normal(kx, (N, channels, H, W), jnp.float32)  # NCHW input
    params = init_bboxhead_params(kp, channels, num_anchors)

    out = bboxhead_forward(x, params)
    out = jax.block_until_ready(out)
    assert out.shape == (N, num_anchors * H * W, 4), out.shape
    print("KERNEL_OK")
</pallas_src>

<mosaic_0001>
module attributes {stable_mosaic.version = 11 : i64} {
  func.func @_fused_bboxhead_kernel(%arg0: i32, %arg1: memref<1x16x16x32xf32, #tpu.memory_space<vmem>>, %arg2: memref<4x288x32xbf16, #tpu.memory_space<vmem>>, %arg3: memref<4x1x32xf32, #tpu.memory_space<vmem>>, %arg4: memref<288x128xbf16, #tpu.memory_space<vmem>>, %arg5: memref<1x128xf32, #tpu.memory_space<vmem>>, %arg6: memref<1x16x16x128xf32, #tpu.memory_space<vmem>>, %arg7: memref<18x18x32xf32, #tpu.memory_space<vmem>>) attributes {dimension_semantics = [#tpu.dimension_semantics<parallel>], iteration_bounds = array<i64: 2>, scalar_prefetch = 0 : i64, scratch_operands = 1 : i64, tpu.core_type = #tpu.core_type<tc>, window_params = [{transform_indices = @transform_0, window_bounds = array<i64: 1, 16, 16, 32>}, {pipeline_mode = #tpu.pipeline_mode<synchronous>, transform_indices = @transform_1, window_bounds = array<i64: 4, 288, 32>}, {pipeline_mode = #tpu.pipeline_mode<synchronous>, transform_indices = @transform_2, window_bounds = array<i64: 4, 1, 32>}, {pipeline_mode = #tpu.pipeline_mode<synchronous>, transform_indices = @transform_3, window_bounds = array<i64: 288, 128>}, {pipeline_mode = #tpu.pipeline_mode<synchronous>, transform_indices = @transform_4, window_bounds = array<i64: 1, 128>}, {transform_indices = @transform_5, window_bounds = array<i64: 1, 16, 16, 128>}]} {
    %cst = arith.constant 0.000000e+00 : f32
    %0 = vector.broadcast %cst : f32 to vector<18x18x32xf32>
    %c0 = arith.constant 0 : index
    %c0_0 = arith.constant 0 : index
    %c0_1 = arith.constant 0 : index
    %1 = vector.load %arg7[%c0, %c0_0, %c0_1] : memref<18x18x32xf32, #tpu.memory_space<vmem>>, vector<18x18x32xf32>
    tpu.vector_store %arg7[%c0, %c0_0, %c0_1], %0 {strides = array<i32>} : memref<18x18x32xf32, #tpu.memory_space<vmem>>, vector<18x18x32xf32>,
    %c0_2 = arith.constant 0 : index
    %c0_3 = arith.constant 0 : index
    %c0_4 = arith.constant 0 : index
    %c0_5 = arith.constant 0 : index
    %2 = vector.load %arg1[%c0_2, %c0_3, %c0_4, %c0_5] : memref<1x16x16x32xf32, #tpu.memory_space<vmem>>, vector<1x16x16x32xf32>
    %3 = vector.shape_cast %2 : vector<1x16x16x32xf32> to vector<16x16x32xf32>
    %c1 = arith.constant 1 : index
    %c1_6 = arith.constant 1 : index
    %c0_7 = arith.constant 0 : index
    %4 = vector.load %arg7[%c1, %c1_6, %c0_7] : memref<18x18x32xf32, #tpu.memory_space<vmem>>, vector<16x16x32xf32>
    tpu.vector_store %arg7[%c1, %c1_6, %c0_7], %3 {strides = array<i32>} : memref<18x18x32xf32, #tpu.memory_space<vmem>>, vector<16x16x32xf32>,
    %c0_8 = arith.constant 0 : index
    %c0_9 = arith.constant 0 : index
    %c0_10 = arith.constant 0 : index
    %5 = vector.load %arg7[%c0_8, %c0_9, %c0_10] : memref<18x18x32xf32, #tpu.memory_space<vmem>>, vector<18x18x32xf32>
    %6 = vector.extract_strided_slice %5 {offsets = [0, 0, 0], sizes = [16, 16, 32], strides = [1, 1, 1]} : vector<18x18x32xf32> to vector<16x16x32xf32>
    %7 = vector.extract_strided_slice %5 {offsets = [0, 1, 0], sizes = [16, 16, 32], strides = [1, 1, 1]} : vector<18x18x32xf32> to vector<16x16x32xf32>
    %8 = vector.extract_strided_slice %5 {offsets = [0, 2, 0], sizes = [16, 16, 32], strides = [1, 1, 1]} : vector<18x18x32xf32> to vector<16x16x32xf32>
    %9 = vector.extract_strided_slice %5 {offsets = [1, 0, 0], sizes = [16, 16, 32], strides = [1, 1, 1]} : vector<18x18x32xf32> to vector<16x16x32xf32>
    %10 = vector.extract_strided_slice %5 {offsets = [1, 1, 0], sizes = [16, 16, 32], strides = [1, 1, 1]} : vector<18x18x32xf32> to vector<16x16x32xf32>
    %11 = vector.extract_strided_slice %5 {offsets = [1, 2, 0], sizes = [16, 16, 32], strides = [1, 1, 1]} : vector<18x18x32xf32> to vector<16x16x32xf32>
    %12 = vector.extract_strided_slice %5 {offsets = [2, 0, 0], sizes = [16, 16, 32], strides = [1, 1, 1]} : vector<18x18x32xf32> to vector<16x16x32xf32>
    %13 = vector.extract_strided_slice %5 {offsets = [2, 1, 0], sizes = [16, 16, 32], strides = [1, 1, 1]} : vector<18x18x32xf32> to vector<16x16x32xf32>
    %14 = vector.extract_strided_slice %5 {offsets = [2, 2, 0], sizes = [16, 16, 32], strides = [1, 1, 1]} : vector<18x18x32xf32> to vector<16x16x32xf32>
    %15 = tpu.concatenate %6, %7, %8, %9, %10, %11, %12, %13, %14 in 2 : vector<16x16x32xf32>, vector<16x16x32xf32>, vector<16x16x32xf32>, vector<16x16x32xf32>, vector<16x16x32xf32>, vector<16x16x32xf32>, vector<16x16x32xf32>, vector<16x16x32xf32>, vector<16x16x32xf32> -> vector<16x16x288xf32>
    %16 = arith.truncf %15 : vector<16x16x288xf32> to vector<16x16x288xbf16>
    %c0_11 = arith.constant 0 : index
    %c0_12 = arith.constant 0 : index
    %c0_13 = arith.constant 0 : index
    %17 = vector.load %arg2[%c0_11, %c0_12, %c0_13] : memref<4x288x32xbf16, #tpu.memory_space<vmem>>, vector<1x288x32xbf16>
    %18 = vector.shape_cast %17 : vector<1x288x32xbf16> to vector<288x32xbf16>
    %cst_14 = arith.constant dense<0.000000e+00> : vector<16x16x32xf32>
    %19 = tpu.matmul %16, %18, %cst_14 {dimension_numbers = #tpu.dot_dimension_numbers<[2], [0], [0, 1], [1], [0, 0, 0, 1, 1, 1], [], []>} : vector<16x16x288xbf16>, vector<288x32xbf16>, vector<16x16x32xf32> -> vector<16x16x32xf32>
    %c0_15 = arith.constant 0 : index
    %c0_16 = arith.constant 0 : index
    %c0_17 = arith.constant 0 : index
    %20 = vector.load %arg3[%c0_15, %c0_16, %c0_17] : memref<4x1x32xf32, #tpu.memory_space<vmem>>, vector<1x1x32xf32>
    %21 = vector.shape_cast %20 : vector<1x1x32xf32> to vector<1x32xf32>
    %22 = vector.shape_cast %21 : vector<1x32xf32> to vector<1x1x32xf32>
    %23 = vector.broadcast %22 : vector<1x1x32xf32> to vector<16x16x32xf32>
    %24 = arith.addf %19, %23 : vector<16x16x32xf32>
    %cst_18 = arith.constant 0.000000e+00 : f32
    %25 = vector.broadcast %cst_18 : f32 to vector<16x16x32xf32>
    %26 = arith.maximumf %24, %25 : vector<16x16x32xf32>
    %c1_19 = arith.constant 1 : index
    %c1_20 = arith.constant 1 : index
    %c0_21 = arith.constant 0 : index
    %27 = vector.load %arg7[%c1_19, %c1_20, %c0_21] : memref<18x18x32xf32, #tpu.memory_space<vmem>>, vector<16x16x32xf32>
    tpu.vector_store %arg7[%c1_19, %c1_20, %c0_21], %26 {strides = array<i32>} : memref<18x18x32xf32, #tpu.memory_space<vmem>>, vector<16x16x32xf32>,
    %c0_22 = arith.constant 0 : index
    %c0_23 = arith.constant 0 : index
    %c0_24 = arith.constant 0 : index
    %28 = vector.load %arg7[%c0_22, %c0_23, %c0_24] : memref<18x18x32xf32, #tpu.memory_space<vmem>>, vector<18x18x32xf32>
    %29 = vector.extract_strided_slice %28 {offsets = [0, 0, 0], sizes = [16, 16, 32], strides = [1, 1, 1]} : vector<18x18x32xf32> to vector<16x16x32xf32>
    %30 = vector.extract_strided_slice %28 {offsets = [0, 1, 0], sizes = [16, 16, 32], strides = [1, 1, 1]} : vector<18x18x32xf32> to vector<16x16x32xf32>
    %31 = vector.extract_strided_slice %28 {offsets = [0, 2, 0], sizes = [16, 16, 32], strides = [1, 1, 1]} : vector<18x18x32xf32> to vector<16x16x32xf32>
    %32 = vector.extract_strided_slice %28 {offsets = [1, 0, 0], sizes = [16, 16, 32], strides = [1, 1, 1]} : vector<18x18x32xf32> to vector<16x16x32xf32>
    %33 = vector.extract_strided_slice %28 {offsets = [1, 1, 0], sizes = [16, 16, 32], strides = [1, 1, 1]} : vector<18x18x32xf32> to vector<16x16x32xf32>
    %34 = vector.extract_strided_slice %28 {offsets = [1, 2, 0], sizes = [16, 16, 32], strides = [1, 1, 1]} : vector<18x18x32xf32> to vector<16x16x32xf32>
    %35 = vector.extract_strided_slice %28 {offsets = [2, 0, 0], sizes = [16, 16, 32], strides = [1, 1, 1]} : vector<18x18x32xf32> to vector<16x16x32xf32>
    %36 = vector.extract_strided_slice %28 {offsets = [2, 1, 0], sizes = [16, 16, 32], strides = [1, 1, 1]} : vector<18x18x32xf32> to vector<16x16x32xf32>
    %37 = vector.extract_strided_slice %28 {offsets = [2, 2, 0], sizes = [16, 16, 32], strides = [1, 1, 1]} : vector<18x18x32xf32> to vector<16x16x32xf32>
    %38 = tpu.concatenate %29, %30, %31, %32, %33, %34, %35, %36, %37 in 2 : vector<16x16x32xf32>, vector<16x16x32xf32>, vector<16x16x32xf32>, vector<16x16x32xf32>, vector<16x16x32xf32>, vector<16x16x32xf32>, vector<16x16x32xf32>, vector<16x16x32xf32>, vector<16x16x32xf32> -> vector<16x16x288xf32>
    %39 = arith.truncf %38 : vector<16x16x288xf32> to vector<16x16x288xbf16>
    %c1_25 = arith.constant 1 : index
    %c0_26 = arith.constant 0 : index
    %c0_27 = arith.constant 0 : index
    %40 = vector.load %arg2[%c1_25, %c0_26, %c0_27] : memref<4x288x32xbf16, #tpu.memory_space<vmem>>, vector<1x288x32xbf16>
    %41 = vector.shape_cast %40 : vector<1x288x32xbf16> to vector<288x32xbf16>
    %cst_28 = arith.constant dense<0.000000e+00> : vector<16x16x32xf32>
    %42 = tpu.matmul %39, %41, %cst_28 {dimension_numbers = #tpu.dot_dimension_numbers<[2], [0], [0, 1], [1], [0, 0, 0, 1, 1, 1], [], []>} : vector<16x16x288xbf16>, vector<288x32xbf16>, vector<16x16x32xf32> -> vector<16x16x32xf32>
    %c1_29 = arith.constant 1 : index
    %c0_30 = arith.constant 0 : index
    %c0_31 = arith.constant 0 : index
    %43 = vector.load %arg3[%c1_29, %c0_30, %c0_31] : memref<4x1x32xf32, #tpu.memory_space<vmem>>, vector<1x1x32xf32>
    %44 = vector.shape_cast %43 : vector<1x1x32xf32> to vector<1x32xf32>
    %45 = vector.shape_cast %44 : vector<1x32xf32> to vector<1x1x32xf32>
    %46 = vector.broadcast %45 : vector<1x1x32xf32> to vector<16x16x32xf32>
    %47 = arith.addf %42, %46 : vector<16x16x32xf32>
    %cst_32 = arith.constant 0.000000e+00 : f32
    %48 = vector.broadcast %cst_32 : f32 to vector<16x16x32xf32>
    %49 = arith.maximumf %47, %48 : vector<16x16x32xf32>
    %c1_33 = arith.constant 1 : index
    %c1_34 = arith.constant 1 : index
    %c0_35 = arith.constant 0 : index
    %50 = vector.load %arg7[%c1_33, %c1_34, %c0_35] : memref<18x18x32xf32, #tpu.memory_space<vmem>>, vector<16x16x32xf32>
    tpu.vector_store %arg7[%c1_33, %c1_34, %c0_35], %49 {strides = array<i32>} : memref<18x18x32xf32, #tpu.memory_space<vmem>>, vector<16x16x32xf32>,
    %c0_36 = arith.constant 0 : index
    %c0_37 = arith.constant 0 : index
    %c0_38 = arith.constant 0 : index
    %51 = vector.load %arg7[%c0_36, %c0_37, %c0_38] : memref<18x18x32xf32, #tpu.memory_space<vmem>>, vector<18x18x32xf32>
    %52 = vector.extract_strided_slice %51 {offsets = [0, 0, 0], sizes = [16, 16, 32], strides = [1, 1, 1]} : vector<18x18x32xf32> to vector<16x16x32xf32>
    %53 = vector.extract_strided_slice %51 {offsets = [0, 1, 0], sizes = [16, 16, 32], strides = [1, 1, 1]} : vector<18x18x32xf32> to vector<16x16x32xf32>
    %54 = vector.extract_strided_slice %51 {offsets = [0, 2, 0], sizes = [16, 16, 32], strides = [1, 1, 1]} : vector<18x18x32xf32> to vector<16x16x32xf32>
    %55 = vector.extract_strided_slice %51 {offsets = [1, 0, 0], sizes = [16, 16, 32], strides = [1, 1, 1]} : vector<18x18x32xf32> to vector<16x16x32xf32>
    %56 = vector.extract_strided_slice %51 {offsets = [1, 1, 0], sizes = [16, 16, 32], strides = [1, 1, 1]} : vector<18x18x32xf32> to vector<16x16x32xf32>
    %57 = vector.extract_strided_slice %51 {offsets = [1, 2, 0], sizes = [16, 16, 32], strides = [1, 1, 1]} : vector<18x18x32xf32> to vector<16x16x32xf32>
    %58 = vector.extract_strided_slice %51 {offsets = [2, 0, 0], sizes = [16, 16, 32], strides = [1, 1, 1]} : vector<18x18x32xf32> to vector<16x16x32xf32>
    %59 = vector.extract_strided_slice %51 {offsets = [2, 1, 0], sizes = [16, 16, 32], strides = [1, 1, 1]} : vector<18x18x32xf32> to vector<16x16x32xf32>
    %60 = vector.extract_strided_slice %51 {offsets = [2, 2, 0], sizes = [16, 16, 32], strides = [1, 1, 1]} : vector<18x18x32xf32> to vector<16x16x32xf32>
    %61 = tpu.concatenate %52, %53, %54, %55, %56, %57, %58, %59, %60 in 2 : vector<16x16x32xf32>, vector<16x16x32xf32>, vector<16x16x32xf32>, vector<16x16x32xf32>, vector<16x16x32xf32>, vector<16x16x32xf32>, vector<16x16x32xf32>, vector<16x16x32xf32>, vector<16x16x32xf32> -> vector<16x16x288xf32>
    %62 = arith.truncf %61 : vector<16x16x288xf32> to vector<16x16x288xbf16>
    %c2 = arith.constant 2 : index
    %c0_39 = arith.constant 0 : index
    %c0_40 = arith.constant 0 : index
    %63 = vector.load %arg2[%c2, %c0_39, %c0_40] : memref<4x288x32xbf16, #tpu.memory_space<vmem>>, vector<1x288x32xbf16>
    %64 = vector.shape_cast %63 : vector<1x288x32xbf16> to vector<288x32xbf16>
    %cst_41 = arith.constant dense<0.000000e+00> : vector<16x16x32xf32>
    %65 = tpu.matmul %62, %64, %cst_41 {dimension_numbers = #tpu.dot_dimension_numbers<[2], [0], [0, 1], [1], [0, 0, 0, 1, 1, 1], [], []>} : vector<16x16x288xbf16>, vector<288x32xbf16>, vector<16x16x32xf32> -> vector<16x16x32xf32>
    %c2_42 = arith.constant 2 : index
    %c0_43 = arith.constant 0 : index
    %c0_44 = arith.constant 0 : index
    %66 = vector.load %arg3[%c2_42, %c0_43, %c0_44] : memref<4x1x32xf32, #tpu.memory_space<vmem>>, vector<1x1x32xf32>
    %67 = vector.shape_cast %66 : vector<1x1x32xf32> to vector<1x32xf32>
    %68 = vector.shape_cast %67 : vector<1x32xf32> to vector<1x1x32xf32>
    %69 = vector.broadcast %68 : vector<1x1x32xf32> to vector<16x16x32xf32>
    %70 = arith.addf %65, %69 : vector<16x16x32xf32>
    %cst_45 = arith.constant 0.000000e+00 : f32
    %71 = vector.broadcast %cst_45 : f32 to vector<16x16x32xf32>
    %72 = arith.maximumf %70, %71 : vector<16x16x32xf32>
    %c1_46 = arith.constant 1 : index
    %c1_47 = arith.constant 1 : index
    %c0_48 = arith.constant 0 : index
    %73 = vector.load %arg7[%c1_46, %c1_47, %c0_48] : memref<18x18x32xf32, #tpu.memory_space<vmem>>, vector<16x16x32xf32>
    tpu.vector_store %arg7[%c1_46, %c1_47, %c0_48], %72 {strides = array<i32>} : memref<18x18x32xf32, #tpu.memory_space<vmem>>, vector<16x16x32xf32>,
    %c0_49 = arith.constant 0 : index
    %c0_50 = arith.constant 0 : index
    %c0_51 = arith.constant 0 : index
    %74 = vector.load %arg7[%c0_49, %c0_50, %c0_51] : memref<18x18x32xf32, #tpu.memory_space<vmem>>, vector<18x18x32xf32>
    %75 = vector.extract_strided_slice %74 {offsets = [0, 0, 0], sizes = [16, 16, 32], strides = [1, 1, 1]} : vector<18x18x32xf32> to vector<16x16x32xf32>
    %76 = vector.extract_strided_slice %74 {offsets = [0, 1, 0], sizes = [16, 16, 32], strides = [1, 1, 1]} : vector<18x18x32xf32> to vector<16x16x32xf32>
    %77 = vector.extract_strided_slice %74 {offsets = [0, 2, 0], sizes = [16, 16, 32], strides = [1, 1, 1]} : vector<18x18x32xf32> to vector<16x16x32xf32>
    %78 = vector.extract_strided_slice %74 {offsets = [1, 0, 0], sizes = [16, 16, 32], strides = [1, 1, 1]} : vector<18x18x32xf32> to vector<16x16x32xf32>
    %79 = vector.extract_strided_slice %74 {offsets = [1, 1, 0], sizes = [16, 16, 32], strides = [1, 1, 1]} : vector<18x18x32xf32> to vector<16x16x32xf32>
    %80 = vector.extract_strided_slice %74 {offsets = [1, 2, 0], sizes = [16, 16, 32], strides = [1, 1, 1]} : vector<18x18x32xf32> to vector<16x16x32xf32>
    %81 = vector.extract_strided_slice %74 {offsets = [2, 0, 0], sizes = [16, 16, 32], strides = [1, 1, 1]} : vector<18x18x32xf32> to vector<16x16x32xf32>
    %82 = vector.extract_strided_slice %74 {offsets = [2, 1, 0], sizes = [16, 16, 32], strides = [1, 1, 1]} : vector<18x18x32xf32> to vector<16x16x32xf32>
    %83 = vector.extract_strided_slice %74 {offsets = [2, 2, 0], sizes = [16, 16, 32], strides = [1, 1, 1]} : vector<18x18x32xf32> to vector<16x16x32xf32>
    %84 = tpu.concatenate %75, %76, %77, %78, %79, %80, %81, %82, %83 in 2 : vector<16x16x32xf32>, vector<16x16x32xf32>, vector<16x16x32xf32>, vector<16x16x32xf32>, vector<16x16x32xf32>, vector<16x16x32xf32>, vector<16x16x32xf32>, vector<16x16x32xf32>, vector<16x16x32xf32> -> vector<16x16x288xf32>
    %85 = arith.truncf %84 : vector<16x16x288xf32> to vector<16x16x288xbf16>
    %c3 = arith.constant 3 : index
    %c0_52 = arith.constant 0 : index
    %c0_53 = arith.constant 0 : index
    %86 = vector.load %arg2[%c3, %c0_52, %c0_53] : memref<4x288x32xbf16, #tpu.memory_space<vmem>>, vector<1x288x32xbf16>
    %87 = vector.shape_cast %86 : vector<1x288x32xbf16> to vector<288x32xbf16>
    %cst_54 = arith.constant dense<0.000000e+00> : vector<16x16x32xf32>
    %88 = tpu.matmul %85, %87, %cst_54 {dimension_numbers = #tpu.dot_dimension_numbers<[2], [0], [0, 1], [1], [0, 0, 0, 1, 1, 1], [], []>} : vector<16x16x288xbf16>, vector<288x32xbf16>, vector<16x16x32xf32> -> vector<16x16x32xf32>
    %c3_55 = arith.constant 3 : index
    %c0_56 = arith.constant 0 : index
    %c0_57 = arith.constant 0 : index
    %89 = vector.load %arg3[%c3_55, %c0_56, %c0_57] : memref<4x1x32xf32, #tpu.memory_space<vmem>>, vector<1x1x32xf32>
    %90 = vector.shape_cast %89 : vector<1x1x32xf32> to vector<1x32xf32>
    %91 = vector.shape_cast %90 : vector<1x32xf32> to vector<1x1x32xf32>
    %92 = vector.broadcast %91 : vector<1x1x32xf32> to vector<16x16x32xf32>
    %93 = arith.addf %88, %92 : vector<16x16x32xf32>
    %cst_58 = arith.constant 0.000000e+00 : f32
    %94 = vector.broadcast %cst_58 : f32 to vector<16x16x32xf32>
    %95 = arith.maximumf %93, %94 : vector<16x16x32xf32>
    %c1_59 = arith.constant 1 : index
    %c1_60 = arith.constant 1 : index
    %c0_61 = arith.constant 0 : index
    %96 = vector.load %arg7[%c1_59, %c1_60, %c0_61] : memref<18x18x32xf32, #tpu.memory_space<vmem>>, vector<16x16x32xf32>
    tpu.vector_store %arg7[%c1_59, %c1_60, %c0_61], %95 {strides = array<i32>} : memref<18x18x32xf32, #tpu.memory_space<vmem>>, vector<16x16x32xf32>,
    %c0_62 = arith.constant 0 : index
    %c0_63 = arith.constant 0 : index
    %c0_64 = arith.constant 0 : index
    %97 = vector.load %arg7[%c0_62, %c0_63, %c0_64] : memref<18x18x32xf32, #tpu.memory_space<vmem>>, vector<18x18x32xf32>
    %98 = vector.extract_strided_slice %97 {offsets = [0, 0, 0], sizes = [16, 16, 32], strides = [1, 1, 1]} : vector<18x18x32xf32> to vector<16x16x32xf32>
    %99 = vector.extract_strided_slice %97 {offsets = [0, 1, 0], sizes = [16, 16, 32], strides = [1, 1, 1]} : vector<18x18x32xf32> to vector<16x16x32xf32>
    %100 = vector.extract_strided_slice %97 {offsets = [0, 2, 0], sizes = [16, 16, 32], strides = [1, 1, 1]} : vector<18x18x32xf32> to vector<16x16x32xf32>
    %101 = vector.extract_strided_slice %97 {offsets = [1, 0, 0], sizes = [16, 16, 32], strides = [1, 1, 1]} : vector<18x18x32xf32> to vector<16x16x32xf32>
    %102 = vector.extract_strided_slice %97 {offsets = [1, 1, 0], sizes = [16, 16, 32], strides = [1, 1, 1]} : vector<18x18x32xf32> to vector<16x16x32xf32>
    %103 = vector.extract_strided_slice %97 {offsets = [1, 2, 0], sizes = [16, 16, 32], strides = [1, 1, 1]} : vector<18x18x32xf32> to vector<16x16x32xf32>
    %104 = vector.extract_strided_slice %97 {offsets = [2, 0, 0], sizes = [16, 16, 32], strides = [1, 1, 1]} : vector<18x18x32xf32> to vector<16x16x32xf32>
    %105 = vector.extract_strided_slice %97 {offsets = [2, 1, 0], sizes = [16, 16, 32], strides = [1, 1, 1]} : vector<18x18x32xf32> to vector<16x16x32xf32>
    %106 = vector.extract_strided_slice %97 {offsets = [2, 2, 0], sizes = [16, 16, 32], strides = [1, 1, 1]} : vector<18x18x32xf32> to vector<16x16x32xf32>
    %107 = tpu.concatenate %98, %99, %100, %101, %102, %103, %104, %105, %106 in 2 : vector<16x16x32xf32>, vector<16x16x32xf32>, vector<16x16x32xf32>, vector<16x16x32xf32>, vector<16x16x32xf32>, vector<16x16x32xf32>, vector<16x16x32xf32>, vector<16x16x32xf32>, vector<16x16x32xf32> -> vector<16x16x288xf32>
    %108 = arith.truncf %107 : vector<16x16x288xf32> to vector<16x16x288xbf16>
    %c0_65 = arith.constant 0 : index
    %c0_66 = arith.constant 0 : index
    %109 = vector.load %arg4[%c0_65, %c0_66] : memref<288x128xbf16, #tpu.memory_space<vmem>>, vector<288x128xbf16>
    %cst_67 = arith.constant dense<0.000000e+00> : vector<16x16x128xf32>
    %110 = tpu.matmul %108, %109, %cst_67 {dimension_numbers = #tpu.dot_dimension_numbers<[2], [0], [0, 1], [1], [0, 0, 0, 1, 1, 1], [], []>} : vector<16x16x288xbf16>, vector<288x128xbf16>, vector<16x16x128xf32> -> vector<16x16x128xf32>
    %c0_68 = arith.constant 0 : index
    %c0_69 = arith.constant 0 : index
    %111 = vector.load %arg5[%c0_68, %c0_69] : memref<1x128xf32, #tpu.memory_space<vmem>>, vector<1x128xf32>
    %112 = vector.shape_cast %111 : vector<1x128xf32> to vector<1x1x128xf32>
    %113 = vector.broadcast %112 : vector<1x1x128xf32> to vector<16x16x128xf32>
    %114 = arith.addf %110, %113 : vector<16x16x128xf32>
    %c0_70 = arith.constant 0 : index
    %c0_71 = arith.constant 0 : index
    %c0_72 = arith.constant 0 : index
    %c0_73 = arith.constant 0 : index
    %115 = vector.load %arg6[%c0_70, %c0_71, %c0_72, %c0_73] : memref<1x16x16x128xf32, #tpu.memory_space<vmem>>, vector<1x16x16x128xf32>
    %116 = vector.shape_cast %115 : vector<1x16x16x128xf32> to vector<16x16x128xf32>
    %117 = vector.shape_cast %114 : vector<16x16x128xf32> to vector<1x16x16x128xf32>
    tpu.vector_store %arg6[%c0_70, %c0_71, %c0_72, %c0_73], %117 {strides = array<i32>} : memref<1x16x16x128xf32, #tpu.memory_space<vmem>>, vector<1x16x16x128xf32>,
    return
  }
  func.func @transform_0(%arg0: i32) -> (i32, i32, i32, i32) {
    %c0_i32 = arith.constant 0 : i32
    %c0_i32_0 = arith.constant 0 : i32
    %c0_i32_1 = arith.constant 0 : i32
    %c0_i32_2 = arith.constant 0 : i32
    return %arg0, %c0_i32, %c0_i32_0, %c0_i32_1 : i32, i32, i32, i32
  }
  func.func @transform_1(%arg0: i32) -> (i32, i32, i32) {
    %c0_i32 = arith.constant 0 : i32
    %c0_i32_0 = arith.constant 0 : i32
    %c0_i32_1 = arith.constant 0 : i32
    %c0_i32_2 = arith.constant 0 : i32
    return %c0_i32, %c0_i32_0, %c0_i32_1 : i32, i32, i32
  }
  func.func @transform_2(%arg0: i32) -> (i32, i32, i32) {
    %c0_i32 = arith.constant 0 : i32
    %c0_i32_0 = arith.constant 0 : i32
    %c0_i32_1 = arith.constant 0 : i32
    %c0_i32_2 = arith.constant 0 : i32
    return %c0_i32, %c0_i32_0, %c0_i32_1 : i32, i32, i32
  }
  func.func @transform_3(%arg0: i32) -> (i32, i32) {
    %c0_i32 = arith.constant 0 : i32
    %c0_i32_0 = arith.constant 0 : i32
    %c0_i32_1 = arith.constant 0 : i32
    return %c0_i32, %c0_i32_0 : i32, i32
  }
  func.func @transform_4(%arg0: i32) -> (i32, i32) {
    %c0_i32 = arith.constant 0 : i32
    %c0_i32_0 = arith.constant 0 : i32
    %c0_i32_1 = arith.constant 0 : i32
    return %c0_i32, %c0_i32_0 : i32, i32
  }
  func.func @transform_5(%arg0: i32) -> (i32, i32, i32, i32) {
    %c0_i32 = arith.constant 0 : i32
    %c0_i32_0 = arith.constant 0 : i32
    %c0_i32_1 = arith.constant 0 : i32
    %c0_i32_2 = arith.constant 0 : i32
    return %arg0, %c0_i32, %c0_i32_0, %c0_i32_1 : i32, i32, i32, i32
  }
}

</mosaic_0001>

<llo_original>
// kernel: tpu_custom_call.1
$region0: #{tpu_custom_call.1}
  #allocation0 [shape = 'u32[]', space=smem, size = 0x4, offset = 0x4, fixed_abs, tag = 'smem constant byte address 0x4 - core index']
  #allocation1 [shape = 'u32[144,128]{1,0:T(1,128)}', space=vmem, size = 0x12000, scoped, tag = 'internal scratch']
  #allocation2 [shape = 'f32[18,18,32]{2,1,0:T(8,128)}', space=vmem, size = 0x36000, scoped, tag = 'scratch operand']
  %s0 = inlined_call_operand.vmem [shape: f32[2,16,16,32], index: 0, kind: input, shape index: {}]
  %s1 = inlined_call_operand.vmem [shape: bf16[4,288,32], index: 1, kind: input, shape index: {}]
  %s2 = inlined_call_operand.vmem [shape: f32[4,1,32], index: 2, kind: input, shape index: {}]
  %s3 = inlined_call_operand.vmem [shape: bf16[288,128], index: 3, kind: input, shape index: {}]
  %s4 = inlined_call_operand.vmem [shape: f32[1,128], index: 4, kind: input, shape index: {}]
  %s5 = inlined_call_operand.hbm [shape: f32[2,16,16,128], index: 5, kind: output, shape index: {}]
  %s6 = sld [smem:[#allocation0]]
  $region53: #{tpu_custom_call.1} parent=0
    _
  %s8 = ssub.s32 1, %s6
  %s9 = scalar_select 0, %s8, %s6
  $region1: #{tpu_custom_call.1} parent=0
    #allocation3 [shape = 'u8[262144]{0}', space=vmem, size = 0x40000, scoped, tag = 'output window, operand 0']
    #allocation4 [shape = 's32[2]{0}', space=sflag, size = 0x8, scoped, tag = 'scoped memory for tpu_custom_call.1']
    %10 = vsyncpa [#allocation4], 0
    %s11 = scalar_lea.sflag [#allocation4], 1
    %12 = vsyncpa %s11, 0
    loop: start=0, step=1, limit=4
    $region2: #{tpu_custom_call.1} parent=1 // loop_pre_header
      _
    $region3: #{tpu_custom_call.1} parent=1 // loop_header
      %s14 = sphi 0, %s18
      %p15 = scmp.ge.s32.totalorder %s14, 4
      %s24 = sphi 0, %s26
      %s27 = sphi 0, %s24
      %s28 = sphi 0, %s27
      %s44 = sphi 0, %s28
      %s48 = sphi 0, %s48
      %s50 = sphi 0, %s48
      %s51 = sphi 0, %s50
      %s65 = sphi 0, %s51
      %s69 = sphi 0, %s69
      %s71 = sphi 0, %s69
      %s72 = sphi 0, %s71
      %s86 = sphi 0, %s72
      %s90 = sphi 0, %s90
      %s92 = sphi 0, %s90
      %s93 = sphi 0, %s92
      %s107 = sphi 0, %s93
      %s111 = sphi 0, %s111
      %s113 = sphi 0, %s111
      %s114 = sphi 0, %s113
      %s128 = sphi 0, %s114
      %s134 = sphi 0, %s136
      %s137 = sphi 0, %s134
      %s138 = sphi 0, %s137
      %s154 = sphi 0, %s138
    $region4: #{tpu_custom_call.1} parent=1 // loop_header_branch
      %17 = sbr.rel (%p15) target = $region8
    $region5: #{tpu_custom_call.1} parent=1 // loop_body
      %s19 = ssub.s32 %s14, 1
      %s20 = ssub.s32 %s14, 2
      %s21 = sadd.s32 %s14, 1
      %s22 = ssub.s32 %s14, %s21
      %p23 = scmp.eq.s32.totalorder %s22, 0
      %s25 = sadd.s32 %s24, 1
      %s26 = scalar_select %p23, %s24, %s25
      %p29 = pneg %p23
      %p30 = scmp.eq.s32.totalorder %s14, 1
      %p31 = por %p29, %p30
      %p32 = scmp.ne.s32.totalorder %s24, %s27
      %p33 = scmp.eq.s32.totalorder %s14, 0
      %p34 = por %p32, %p33
      %p35 = scmp.ne.s32.totalorder %s24, %s27
      %p36 = scmp.eq.s32.totalorder %s19, 1
      %p37 = por %p35, %p36
      %p38 = scmp.ne.s32.totalorder %s27, %s28
      %p39 = scmp.eq.s32.totalorder %s19, 0
      %p40 = por %p38, %p39
      %p41 = scmp.ne.s32.totalorder %s27, %s28
      %p42 = scmp.eq.s32.totalorder %s20, 1
      %p43 = por %p41, %p42
      %p45 = scmp.ne.s32.totalorder %s28, %s44
      %p46 = scmp.eq.s32.totalorder %s20, 0
      %p47 = por %p45, %p46
      %s49 = sadd.s32 %s48, 1
      %p52 = scmp.eq.s32.totalorder %s14, 1
      %p53 = scmp.ne.s32.totalorder %s48, %s50
      %p54 = scmp.eq.s32.totalorder %s14, 0
      %p55 = por %p53, %p54
      %p56 = scmp.ne.s32.totalorder %s48, %s50
      %p57 = scmp.eq.s32.totalorder %s19, 1
      %p58 = por %p56, %p57
      %p59 = scmp.ne.s32.totalorder %s50, %s51
      %p60 = scmp.eq.s32.totalorder %s19, 0
      %p61 = por %p59, %p60
      %p62 = scmp.ne.s32.totalorder %s50, %s51
      %p63 = scmp.eq.s32.totalorder %s20, 1
      %p64 = por %p62, %p63
      %p66 = scmp.ne.s32.totalorder %s51, %s65
      %p67 = scmp.eq.s32.totalorder %s20, 0
      %p68 = por %p66, %p67
      %s70 = sadd.s32 %s69, 1
      %p73 = scmp.eq.s32.totalorder %s14, 1
      %p74 = scmp.ne.s32.totalorder %s69, %s71
      %p75 = scmp.eq.s32.totalorder %s14, 0
      %p76 = por %p74, %p75
      %p77 = scmp.ne.s32.totalorder %s69, %s71
      %p78 = scmp.eq.s32.totalorder %s19, 1
      %p79 = por %p77, %p78
      %p80 = scmp.ne.s32.totalorder %s71, %s72
      %p81 = scmp.eq.s32.totalorder %s19, 0
      %p82 = por %p80, %p81
      %p83 = scmp.ne.s32.totalorder %s71, %s72
      %p84 = scmp.eq.s32.totalorder %s20, 1
      %p85 = por %p83, %p84
      %p87 = scmp.ne.s32.totalorder %s72, %s86
      %p88 = scmp.eq.s32.totalorder %s20, 0
      %p89 = por %p87, %p88
      %s91 = sadd.s32 %s90, 1
      %p94 = scmp.eq.s32.totalorder %s14, 1
      %p95 = scmp.ne.s32.totalorder %s90, %s92
      %p96 = scmp.eq.s32.totalorder %s14, 0
      %p97 = por %p95, %p96
      %p98 = scmp.ne.s32.totalorder %s90, %s92
      %p99 = scmp.eq.s32.totalorder %s19, 1
      %p100 = por %p98, %p99
      %p101 = scmp.ne.s32.totalorder %s92, %s93
      %p102 = scmp.eq.s32.totalorder %s19, 0
      %p103 = por %p101, %p102
      %p104 = scmp.ne.s32.totalorder %s92, %s93
      %p105 = scmp.eq.s32.totalorder %s20, 1
      %p106 = por %p104, %p105
      %p108 = scmp.ne.s32.totalorder %s93, %s107
      %p109 = scmp.eq.s32.totalorder %s20, 0
      %p110 = por %p108, %p109
      %s112 = sadd.s32 %s111, 1
      %p115 = scmp.eq.s32.totalorder %s14, 1
      %p116 = scmp.ne.s32.totalorder %s111, %s113
      %p117 = scmp.eq.s32.totalorder %s14, 0
      %p118 = por %p116, %p117
      %p119 = scmp.ne.s32.totalorder %s111, %s113
      %p120 = scmp.eq.s32.totalorder %s19, 1
      %p121 = por %p119, %p120
      %p122 = scmp.ne.s32.totalorder %s113, %s114
      %p123 = scmp.eq.s32.totalorder %s19, 0
      %p124 = por %p122, %p123
      %p125 = scmp.ne.s32.totalorder %s113, %s114
      %p126 = scmp.eq.s32.totalorder %s20, 1
      %p127 = por %p125, %p126
      %p129 = scmp.ne.s32.totalorder %s114, %s128
      %p130 = scmp.eq.s32.totalorder %s20, 0
      %p131 = por %p129, %p130
      %s132 = ssub.s32 %s14, %s21
      %p133 = scmp.eq.s32.totalorder %s132, 0
      %s135 = sadd.s32 %s134, 1
      %s136 = scalar_select %p133, %s134, %s135
      %p139 = pneg %p133
      %p140 = scmp.eq.s32.totalorder %s14, 1
      %p141 = por %p139, %p140
      %p142 = scmp.ne.s32.totalorder %s134, %s137
      %p143 = scmp.eq.s32.totalorder %s14, 0
      %p144 = por %p142, %p143
      %p145 = scmp.ne.s32.totalorder %s134, %s137
      %p146 = scmp.eq.s32.totalorder %s19, 1
      %p147 = por %p145, %p146
      %p148 = scmp.ne.s32.totalorder %s137, %s138
      %p149 = scmp.eq.s32.totalorder %s19, 0
      %p150 = por %p148, %p149
      %p151 = scmp.ne.s32.totalorder %s137, %s138
      %p152 = scmp.eq.s32.totalorder %s20, 1
      %p153 = por %p151, %p152
      %p155 = scmp.ne.s32.totalorder %s138, %s154
      %p156 = scmp.eq.s32.totalorder %s20, 0
      %p157 = por %p155, %p156
      %p158 = scmp.le.s32.totalorder 1, %s14
      %p159 = scmp.lt.s32.totalorder %s14, 3
      %p160 = pnand %p158, %p159
      %p161 = pneg %p160
      // Predicated region
      $region9: #{tpu_custom_call.1} parent=5 // pred_check
        _
      $region10: #{tpu_custom_call.1} parent=5 // pred_check_branch
        %163 = sbr.rel (%p160) target = $region12
      $region11: #{tpu_custom_call.1} parent=5 // pred_region
        %s164 = ssub.s32 %s14, 1
        // Predicated region
        $region13: #{tpu_custom_call.1} parent=11 // pred_check
          %p165 = pneg %p61
        $region14: #{tpu_custom_call.1} parent=11 // pred_check_branch
          %167 = sbr.rel (%p165) target = $region16
        $region15: #{tpu_custom_call.1} parent=11 // pred_region
          _
        $region16: #{tpu_custom_call.1} parent=11 // pred_fallthru
          _
        // Predicated region
        $region17: #{tpu_custom_call.1} parent=11 // pred_check
          %p168 = pneg %p82
        $region18: #{tpu_custom_call.1} parent=11 // pred_check_branch
          %170 = sbr.rel (%p168) target = $region20
        $region19: #{tpu_custom_call.1} parent=11 // pred_region
          _
        $region20: #{tpu_custom_call.1} parent=11 // pred_fallthru
          _
        // Predicated region
        $region21: #{tpu_custom_call.1} parent=11 // pred_check
          %p171 = pneg %p103
        $region22: #{tpu_custom_call.1} parent=11 // pred_check_branch
          %173 = sbr.rel (%p171) target = $region24
        $region23: #{tpu_custom_call.1} parent=11 // pred_region
          _
        $region24: #{tpu_custom_call.1} parent=11 // pred_fallthru
          _
        // Predicated region
        $region25: #{tpu_custom_call.1} parent=11 // pred_check
          %p174 = pneg %p124
        $region26: #{tpu_custom_call.1} parent=11 // pred_check_branch
          %176 = sbr.rel (%p174) target = $region28
        $region27: #{tpu_custom_call.1} parent=11 // pred_region
          _
        $region28: #{tpu_custom_call.1} parent=11 // pred_fallthru
          _
      $region12: #{tpu_custom_call.1} parent=5 // pred_fallthru
        _
      %p177 = scmp.lt.s32.totalorder %s14, 2
      // Predicated region
      $region29: #{tpu_custom_call.1} parent=5 // pred_check
        %p178 = pneg %p177
      $region30: #{tpu_custom_call.1} parent=5 // pred_check_branch
        %180 = sbr.rel (%p178) target = $region32
      $region31: #{tpu_custom_call.1} parent=5 // pred_region
        // Predicated region
        $region33: #{tpu_custom_call.1} parent=31 // pred_check
          %p181 = pneg %p34
        $region34: #{tpu_custom_call.1} parent=31 // pred_check_branch
          %183 = sbr.rel (%p181) target = $region36
        $region35: #{tpu_custom_call.1} parent=31 // pred_region
          %p184 = scmp.lt.s32.totalorder %s14, 1
          %s185 = scalar_select %p184, %s14, 1
          %s186 = smul.addr %s185, 32
          %s187 = smul.addr %s186, 8
          %s188 = scalar_lea.vmem %s0, %s187
        $region36: #{tpu_custom_call.1} parent=31 // pred_fallthru
          _
      $region32: #{tpu_custom_call.1} parent=5 // pred_fallthru
        _
      %p189 = scmp.le.s32.totalorder 1, %s14
      %p190 = scmp.lt.s32.totalorder %s14, 3
      %p191 = pnand %p189, %p190
      %p192 = pneg %p191
      // Predicated region
      $region37: #{tpu_custom_call.1} parent=5 // pred_check
        _
      $region38: #{tpu_custom_call.1} parent=5 // pred_check_branch
        %194 = sbr.rel (%p191) target = $region40
      $region39: #{tpu_custom_call.1} parent=5 // pred_region
        %s195 = ssub.s32 %s14, 1
        %p196 = scmp.lt.s32.totalorder %s19, 1
        %s197 = scalar_select %p196, %s19, 1
        %s198 = smul.addr %s197, 32
        %s199 = smul.addr %s198, 8
        %s200 = scalar_lea.vmem %s0, %s199
        %p201 = pneg %p40
        %p202 = pneg %p37
        %p203 = pneg %p61
        %p204 = pneg %p58
        %p205 = pneg %p82
        %p206 = pneg %p79
        %p207 = pneg %p103
        %p208 = pneg %p100
        %p209 = pneg %p124
        %p210 = pneg %p121
        %p211 = pneg %p150
        %p212 = pneg %p147
        %s213 = sand.u32 %s137, 1
        %s214 = scalar_lea.sflag [#allocation4], %s213
        %s215 = sand.u32 %s137, 1
        %s216 = smul.addr %s215, 256
        %s217 = scalar_lea.vmem [#allocation3], %s216
        %p218 = scmp.lt.s32.totalorder %s19, 1
        %s219 = scalar_select %p218, %s19, 1
        %s220 = smul.addr %s219, 32
        %s221 = smul.addr %s220, 8
        %s222 = scalar_lea.vmem %s0, %s221
        %vm224 = vcmask 261120
        %225 = vst.msk [vmem:[#allocation2] sm:$0xff] %vm224, 0.0
        %226 = vst.msk [vmem:[#allocation2 + $0x8] sm:$0xff] %vm224, 0.0
        %vm227 = vcmask 254976
        %228 = vst.msk [vmem:[#allocation2 + $0x10] sm:$0x3] %vm227, 0.0
        %229 = vst.msk [vmem:[#allocation2 + $0x18] sm:$0xff] %vm224, 0.0
        %230 = vst.msk [vmem:[#allocation2 + $0x20] sm:$0xff] %vm224, 0.0
        %231 = vst.msk [vmem:[#allocation2 + $0x28] sm:$0x3] %vm227, 0.0
        %232 = vst.msk [vmem:[#allocation2 + $0x30] sm:$0xff] %vm224, 0.0
        %233 = vst.msk [vmem:[#allocation2 + $0x38] sm:$0xff] %vm224, 0.0
        %234 = vst.msk [vmem:[#allocation2 + $0x40] sm:$0x3] %vm227, 0.0
        %235 = vst.msk [vmem:[#allocation2 + $0x48] sm:$0xff] %vm224, 0.0
        %236 = vst.msk [vmem:[#allocation2 + $0x50] sm:$0xff] %vm224, 0.0
        %237 = vst.msk [vmem:[#allocation2 + $0x58] sm:$0x3] %vm227, 0.0
        %238 = vst.msk [vmem:[#allocation2 + $0x60] sm:$0xff] %vm224, 0.0
        %239 = vst.msk [vmem:[#allocation2 + $0x68] sm:$0xff] %vm224, 0.0
        %240 = vst.msk [vmem:[#allocation2 + $0x70] sm:$0x3] %vm227, 0.0
        %241 = vst.msk [vmem:[#allocation2 + $0x78] sm:$0xff] %vm224, 0.0
        %242 = vst.msk [vmem:[#allocation2 + $0x80] sm:$0xff] %vm224, 0.0
        %243 = vst.msk [vmem:[#allocation2 + $0x88] sm:$0x3] %vm227, 0.0
        %244 = vst.msk [vmem:[#allocation2 + $0x90] sm:$0xff] %vm224, 0.0
        %245 = vst.msk [vmem:[#allocation2 + $0x98] sm:$0xff] %vm224, 0.0
        %246 = vst.msk [vmem:[#allocation2 + $0xa0] sm:$0x3] %vm227, 0.0
        %247 = vst.msk [vmem:[#allocation2 + $0xa8] sm:$0xff] %vm224, 0.0
        %248 = vst.msk [vmem:[#allocation2 + $0xb0] sm:$0xff] %vm224, 0.0
        %249 = vst.msk [vmem:[#allocation2 + $0xb8] sm:$0x3] %vm227, 0.0
        %250 = vst.msk [vmem:[#allocation2 + $0xc0] sm:$0xff] %vm224, 0.0
        %251 = vst.msk [vmem:[#allocation2 + $0xc8] sm:$0xff] %vm224, 0.0
        %252 = vst.msk [vmem:[#allocation2 + $0xd0] sm:$0x3] %vm227, 0.0
        %253 = vst.msk [vmem:[#allocation2 + $0xd8] sm:$0xff] %vm224, 0.0
        %254 = vst.msk [vmem:[#allocation2 + $0xe0] sm:$0xff] %vm224, 0.0
        %255 = vst.msk [vmem:[#allocation2 + $0xe8] sm:$0x3] %vm227, 0.0
        %256 = vst.msk [vmem:[#allocation2 + $0xf0] sm:$0xff] %vm224, 0.0
        %257 = vst.msk [vmem:[#allocation2 + $0xf8] sm:$0xff] %vm224, 0.0
        %258 = vst.msk [vmem:[#allocation2 + $0x100] sm:$0x3] %vm227, 0.0
        %259 = vst.msk [vmem:[#allocation2 + $0x108] sm:$0xff] %vm224, 0.0
        %260 = vst.msk [vmem:[#allocation2 + $0x110] sm:$0xff] %vm224, 0.0
        %261 = vst.msk [vmem:[#allocation2 + $0x118] sm:$0x3] %vm227, 0.0
        %262 = vst.msk [vmem:[#allocation2 + $0x120] sm:$0xff] %vm224, 0.0
        %263 = vst.msk [vmem:[#allocation2 + $0x128] sm:$0xff] %vm224, 0.0
        %264 = vst.msk [vmem:[#allocation2 + $0x130] sm:$0x3] %vm227, 0.0
        %265 = vst.msk [vmem:[#allocation2 + $0x138] sm:$0xff] %vm224, 0.0
        %266 = vst.msk [vmem:[#allocation2 + $0x140] sm:$0xff] %vm224, 0.0
        %267 = vst.msk [vmem:[#allocation2 + $0x148] sm:$0x3] %vm227, 0.0
        %268 = vst.msk [vmem:[#allocation2 + $0x150] sm:$0xff] %vm224, 0.0
        %269 = vst.msk [vmem:[#allocation2 + $0x158] sm:$0xff] %vm224, 0.0
        %270 = vst.msk [vmem:[#allocation2 + $0x160] sm:$0x3] %vm227, 0.0
        %271 = vst.msk [vmem:[#allocation2 + $0x168] sm:$0xff] %vm224, 0.0
        %272 = vst.msk [vmem:[#allocation2 + $0x170] sm:$0xff] %vm224, 0.0
        %273 = vst.msk [vmem:[#allocation2 + $0x178] sm:$0x3] %vm227, 0.0
        %274 = vst.msk [vmem:[#allocation2 + $0x180] sm:$0xff] %vm224, 0.0
        %275 = vst.msk [vmem:[#allocation2 + $0x188] sm:$0xff] %vm224, 0.0
        %276 = vst.msk [vmem:[#allocation2 + $0x190] sm:$0x3] %vm227, 0.0
        %277 = vst.msk [vmem:[#allocation2 + $0x198] sm:$0xff] %vm224, 0.0
        %278 = vst.msk [vmem:[#allocation2 + $0x1a0] sm:$0xff] %vm224, 0.0
        %279 = vst.msk [vmem:[#allocation2 + $0x1a8] sm:$0x3] %vm227, 0.0
        %v280 = vld [vmem:[%s222] sm:$0xff]
        %v281 = vld [vmem:[%s222 + $0x8] sm:$0xff]
        %v282 = vld [vmem:[%s222 + $0x10] sm:$0xff]
        %v283 = vld [vmem:[%s222 + $0x18] sm:$0xff]
        %v284 = vld [vmem:[%s222 + $0x20] sm:$0xff]
        %v285 = vld [vmem:[%s222 + $0x28] sm:$0xff]
        %v286 = vld [vmem:[%s222 + $0x30] sm:$0xff]
        %v287 = vld [vmem:[%s222 + $0x38] sm:$0xff]
        %v288 = vld [vmem:[%s222 + $0x40] sm:$0xff]
        %v289 = vld [vmem:[%s222 + $0x48] sm:$0xff]
        %v290 = vld [vmem:[%s222 + $0x50] sm:$0xff]
        %v291 = vld [vmem:[%s222 + $0x58] sm:$0xff]
        %v292 = vld [vmem:[%s222 + $0x60] sm:$0xff]
        %v293 = vld [vmem:[%s222 + $0x68] sm:$0xff]
        %v294 = vld [vmem:[%s222 + $0x70] sm:$0xff]
        %v295 = vld [vmem:[%s222 + $0x78] sm:$0xff]
        %v296 = vld [vmem:[%s222 + $0x80] sm:$0xff]
        %v297 = vld [vmem:[%s222 + $0x88] sm:$0xff]
        %v298 = vld [vmem:[%s222 + $0x90] sm:$0xff]
        %v299 = vld [vmem:[%s222 + $0x98] sm:$0xff]
        %v300 = vld [vmem:[%s222 + $0xa0] sm:$0xff]
        %v301 = vld [vmem:[%s222 + $0xa8] sm:$0xff]
        %v302 = vld [vmem:[%s222 + $0xb0] sm:$0xff]
        %v303 = vld [vmem:[%s222 + $0xb8] sm:$0xff]
        %v304 = vld [vmem:[%s222 + $0xc0] sm:$0xff]
        %v305 = vld [vmem:[%s222 + $0xc8] sm:$0xff]
        %v306 = vld [vmem:[%s222 + $0xd0] sm:$0xff]
        %v307 = vld [vmem:[%s222 + $0xd8] sm:$0xff]
        %v308 = vld [vmem:[%s222 + $0xe0] sm:$0xff]
        %v309 = vld [vmem:[%s222 + $0xe8] sm:$0xff]
        %v310 = vld [vmem:[%s222 + $0xf0] sm:$0xff]
        %v311 = vld [vmem:[%s222 + $0xf8] sm:$0xff]
        %s312 = scalar_lea.vmem [#allocation2], 24
        %313 = vst.msk [vmem:[%s312 + $0x1] sm:$0xff] %vm224, %v280
        %314 = vst.msk [vmem:[%s312 + $0x9] sm:$0xff] %vm224, %v281
        %315 = vst.msk [vmem:[%s312 + $0x19] sm:$0xff] %vm224, %v282
        %316 = vst.msk [vmem:[%s312 + $0x21] sm:$0xff] %vm224, %v283
        %317 = vst.msk [vmem:[%s312 + $0x31] sm:$0xff] %vm224, %v284
        %318 = vst.msk [vmem:[%s312 + $0x39] sm:$0xff] %vm224, %v285
        %319 = vst.msk [vmem:[%s312 + $0x49] sm:$0xff] %vm224, %v286
        %320 = vst.msk [vmem:[%s312 + $0x51] sm:$0xff] %vm224, %v287
        %321 = vst.msk [vmem:[%s312 + $0x61] sm:$0xff] %vm224, %v288
        %322 = vst.msk [vmem:[%s312 + $0x69] sm:$0xff] %vm224, %v289
        %323 = vst.msk [vmem:[%s312 + $0x79] sm:$0xff] %vm224, %v290
        %324 = vst.msk [vmem:[%s312 + $0x81] sm:$0xff] %vm224, %v291
        %325 = vst.msk [vmem:[%s312 + $0x91] sm:$0xff] %vm224, %v292
        %326 = vst.msk [vmem:[%s312 + $0x99] sm:$0xff] %vm224, %v293
        %327 = vst.msk [vmem:[%s312 + $0xa9] sm:$0xff] %vm224, %v294
        %328 = vst.msk [vmem:[%s312 + $0xb1] sm:$0xff] %vm224, %v295
        %329 = vst.msk [vmem:[%s312 + $0xc1] sm:$0xff] %vm224, %v296
        %330 = vst.msk [vmem:[%s312 + $0xc9] sm:$0xff] %vm224, %v297
        %331 = vst.msk [vmem:[%s312 + $0xd9] sm:$0xff] %vm224, %v298
        %332 = vst.msk [vmem:[%s312 + $0xe1] sm:$0xff] %vm224, %v299
        %333 = vst.msk [vmem:[%s312 + $0xf1] sm:$0xff] %vm224, %v300
        %334 = vst.msk [vmem:[%s312 + $0xf9] sm:$0xff] %vm224, %v301
        %335 = vst.msk [vmem:[%s312 + $0x109] sm:$0xff] %vm224, %v302
        %336 = vst.msk [vmem:[%s312 + $0x111] sm:$0xff] %vm224, %v303
        %337 = vst.msk [vmem:[%s312 + $0x121] sm:$0xff] %vm224, %v304
        %338 = vst.msk [vmem:[%s312 + $0x129] sm:$0xff] %vm224, %v305
        %339 = vst.msk [vmem:[%s312 + $0x139] sm:$0xff] %vm224, %v306
        %340 = vst.msk [vmem:[%s312 + $0x141] sm:$0xff] %vm224, %v307
        %341 = vst.msk [vmem:[%s312 + $0x151] sm:$0xff] %vm224, %v308
        %342 = vst.msk [vmem:[%s312 + $0x159] sm:$0xff] %vm224, %v309
        %343 = vst.msk [vmem:[%s312 + $0x169] sm:$0xff] %vm224, %v310
        %344 = vst.msk [vmem:[%s312 + $0x171] sm:$0xff] %vm224, %v311
        %v345 = vld [vmem:[#allocation2] sm:$0xff]
        %v346 = vld [vmem:[#allocation2 + $0x8] sm:$0xff]
        %v347 = vld [vmem:[#allocation2 + $0x10] sm:$0x3]
        %v348 = vld [vmem:[#allocation2 + $0x18] sm:$0xff]
        %v349 = vld [vmem:[#allocation2 + $0x20] sm:$0xff]
        %v350 = vld [vmem:[#allocation2 + $0x28] sm:$0x3]
        %v351 = vld [vmem:[#allocation2 + $0x30] sm:$0xff]
        %v352 = vld [vmem:[#allocation2 + $0x38] sm:$0xff]
        %v353 = vld [vmem:[#allocation2 + $0x40] sm:$0x3]
        %v354 = vld [vmem:[#allocation2 + $0x48] sm:$0xff]
        %v355 = vld [vmem:[#allocation2 + $0x50] sm:$0xff]
        %v356 = vld [vmem:[#allocation2 + $0x58] sm:$0x3]
        %v357 = vld [vmem:[#allocation2 + $0x60] sm:$0xff]
        %v358 = vld [vmem:[#allocation2 + $0x68] sm:$0xff]
        %v359 = vld [vmem:[#allocation2 + $0x70] sm:$0x3]
        %v360 = vld [vmem:[#allocation2 + $0x78] sm:$0xff]
        %v361 = vld [vmem:[#allocation2 + $0x80] sm:$0xff]
        %v362 = vld [vmem:[#allocation2 + $0x88] sm:$0x3]
        %v363 = vld [vmem:[#allocation2 + $0x90] sm:$0xff]
        %v364 = vld [vmem:[#allocation2 + $0x98] sm:$0xff]
        %v365 = vld [vmem:[#allocation2 + $0xa0] sm:$0x3]
        %v366 = vld [vmem:[#allocation2 + $0xa8] sm:$0xff]
        %v367 = vld [vmem:[#allocation2 + $0xb0] sm:$0xff]
        %v368 = vld [vmem:[#allocation2 + $0xb8] sm:$0x3]
        %v369 = vld [vmem:[#allocation2 + $0xc0] sm:$0xff]
        %v370 = vld [vmem:[#allocation2 + $0xc8] sm:$0xff]
        %v371 = vld [vmem:[#allocation2 + $0xd0] sm:$0x3]
        %v372 = vld [vmem:[#allocation2 + $0xd8] sm:$0xff]
        %v373 = vld [vmem:[#allocation2 + $0xe0] sm:$0xff]
        %v374 = vld [vmem:[#allocation2 + $0xe8] sm:$0x3]
        %v375 = vld [vmem:[#allocation2 + $0xf0] sm:$0xff]
        %v376 = vld [vmem:[#allocation2 + $0xf8] sm:$0xff]
        %v377 = vld [vmem:[#allocation2 + $0x100] sm:$0x3]
        %v378 = vld [vmem:[#allocation2 + $0x108] sm:$0xff]
        %v379 = vld [vmem:[#allocation2 + $0x110] sm:$0xff]
        %v380 = vld [vmem:[#allocation2 + $0x118] sm:$0x3]
        %v381 = vld [vmem:[#allocation2 + $0x120] sm:$0xff]
        %v382 = vld [vmem:[#allocation2 + $0x128] sm:$0xff]
        %v383 = vld [vmem:[#allocation2 + $0x130] sm:$0x3]
        %v384 = vld [vmem:[#allocation2 + $0x138] sm:$0xff]
        %v385 = vld [vmem:[#allocation2 + $0x140] sm:$0xff]
        %v386 = vld [vmem:[#allocation2 + $0x148] sm:$0x3]
        %v387 = vld [vmem:[#allocation2 + $0x150] sm:$0xff]
        %v388 = vld [vmem:[#allocation2 + $0x158] sm:$0xff]
        %v389 = vld [vmem:[#allocation2 + $0x160] sm:$0x3]
        %v390 = vld [vmem:[#allocation2 + $0x168] sm:$0xff]
        %v391 = vld [vmem:[#allocation2 + $0x170] sm:$0xff]
        %v392 = vld [vmem:[#allocation2 + $0x178] sm:$0x3]
        %v393 = vld [vmem:[#allocation2 + $0x180] sm:$0xff]
        %v394 = vld [vmem:[#allocation2 + $0x188] sm:$0xff]
        %v395 = vld [vmem:[#allocation2 + $0x190] sm:$0x3]
        %v396 = vld [vmem:[#allocation2 + $0x198] sm:$0xff]
        %v397 = vld [vmem:[#allocation2 + $0x1a0] sm:$0xff]
        %v398 = vld [vmem:[#allocation2 + $0x1a8] sm:$0x3]
        %vm447 = vcmask 1046528
        %v448 = vrot.slane %v345, 1
        %v449 = vrot.slane %v346, 1
        %v450 = vsel %vm447, %v448, %v449
        %v451 = vrot.slane %v347, 1
        %v452 = vsel %vm447, %v449, %v451
        %v453 = vrot.slane %v348, 1
        %v454 = vrot.slane %v349, 1
        %v455 = vsel %vm447, %v453, %v454
        %v456 = vrot.slane %v350, 1
        %v457 = vsel %vm447, %v454, %v456
        %v458 = vrot.slane %v351, 1
        %v459 = vrot.slane %v352, 1
        %v460 = vsel %vm447, %v458, %v459
        %v461 = vrot.slane %v353, 1
        %v462 = vsel %vm447, %v459, %v461
        %v463 = vrot.slane %v354, 1
        %v464 = vrot.slane %v355, 1
        %v465 = vsel %vm447, %v463, %v464
        %v466 = vrot.slane %v356, 1
        %v467 = vsel %vm447, %v464, %v466
        %v468 = vrot.slane %v357, 1
        %v469 = vrot.slane %v358, 1
        %v470 = vsel %vm447, %v468, %v469
        %v471 = vrot.slane %v359, 1
        %v472 = vsel %vm447, %v469, %v471
        %v473 = vrot.slane %v360, 1
        %v474 = vrot.slane %v361, 1
        %v475 = vsel %vm447, %v473, %v474
        %v476 = vrot.slane %v362, 1
        %v477 = vsel %vm447, %v474, %v476
        %v478 = vrot.slane %v363, 1
        %v479 = vrot.slane %v364, 1
        %v480 = vsel %vm447, %v478, %v479
        %v481 = vrot.slane %v365, 1
        %v482 = vsel %vm447, %v479, %v481
        %v483 = vrot.slane %v366, 1
        %v484 = vrot.slane %v367, 1
        %v485 = vsel %vm447, %v483, %v484
        %v486 = vrot.slane %v368, 1
        %v487 = vsel %vm447, %v484, %v486
        %v488 = vrot.slane %v369, 1
        %v489 = vrot.slane %v370, 1
        %v490 = vsel %vm447, %v488, %v489
        %v491 = vrot.slane %v371, 1
        %v492 = vsel %vm447, %v489, %v491
        %v493 = vrot.slane %v372, 1
        %v494 = vrot.slane %v373, 1
        %v495 = vsel %vm447, %v493, %v494
        %v496 = vrot.slane %v374, 1
        %v497 = vsel %vm447, %v494, %v496
        %v498 = vrot.slane %v375, 1
        %v499 = vrot.slane %v376, 1
        %v500 = vsel %vm447, %v498, %v499
        %v501 = vrot.slane %v377, 1
        %v502 = vsel %vm447, %v499, %v501
        %v503 = vrot.slane %v378, 1
        %v504 = vrot.slane %v379, 1
        %v505 = vsel %vm447, %v503, %v504
        %v506 = vrot.slane %v380, 1
        %v507 = vsel %vm447, %v504, %v506
        %v508 = vrot.slane %v381, 1
        %v509 = vrot.slane %v382, 1
        %v510 = vsel %vm447, %v508, %v509
        %v511 = vrot.slane %v383, 1
        %v512 = vsel %vm447, %v509, %v511
        %v513 = vrot.slane %v384, 1
        %v514 = vrot.slane %v385, 1
        %v515 = vsel %vm447, %v513, %v514
        %v516 = vrot.slane %v386, 1
        %v517 = vsel %vm447, %v514, %v516
        %v518 = vrot.slane %v387, 1
        %v519 = vrot.slane %v388, 1
        %v520 = vsel %vm447, %v518, %v519
        %v521 = vrot.slane %v389, 1
        %v522 = vsel %vm447, %v519, %v521
        %v523 = vrot.slane %v390, 1
        %v524 = vrot.slane %v391, 1
        %v525 = vsel %vm447, %v523, %v524
        %v526 = vrot.slane %v392, 1
        %v527 = vsel %vm447, %v524, %v526
        %528 = vrot.lane.b32.xlu0 %v450, 32
        %v529 = vpop.permute.xlu0 %528
        %530 = vrot.lane.b32.xlu0 %v452, 32
        %v531 = vpop.permute.xlu0 %530
        %532 = vrot.lane.b32.xlu0 %v455, 32
        %v533 = vpop.permute.xlu0 %532
        %534 = vrot.lane.b32.xlu0 %v457, 32
        %v535 = vpop.permute.xlu0 %534
        %536 = vrot.lane.b32.xlu0 %v460, 32
        %v537 = vpop.permute.xlu0 %536
        %538 = vrot.lane.b32.xlu0 %v462, 32
        %v539 = vpop.permute.xlu0 %538
        %540 = vrot.lane.b32.xlu0 %v465, 32
        %v541 = vpop.permute.xlu0 %540
        %542 = vrot.lane.b32.xlu0 %v467, 32
        %v543 = vpop.permute.xlu0 %542
        %544 = vrot.lane.b32.xlu0 %v470, 32
        %v545 = vpop.permute.xlu0 %544
        %546 = vrot.lane.b32.xlu0 %v472, 32
        %v547 = vpop.permute.xlu0 %546
        %548 = vrot.lane.b32.xlu0 %v475, 32
        %v549 = vpop.permute.xlu0 %548
        %550 = vrot.lane.b32.xlu0 %v477, 32
        %v551 = vpop.permute.xlu0 %550
        %552 = vrot.lane.b32.xlu0 %v480, 32
        %v553 = vpop.permute.xlu0 %552
        %554 = vrot.lane.b32.xlu0 %v482, 32
        %v555 = vpop.permute.xlu0 %554
        %556 = vrot.lane.b32.xlu0 %v485, 32
        %v557 = vpop.permute.xlu0 %556
        %558 = vrot.lane.b32.xlu0 %v487, 32
        %v559 = vpop.permute.xlu0 %558
        %560 = vrot.lane.b32.xlu0 %v490, 32
        %v561 = vpop.permute.xlu0 %560
        %562 = vrot.lane.b32.xlu0 %v492, 32
        %v563 = vpop.permute.xlu0 %562
        %564 = vrot.lane.b32.xlu0 %v495, 32
        %v565 = vpop.permute.xlu0 %564
        %566 = vrot.lane.b32.xlu0 %v497, 32
        %v567 = vpop.permute.xlu0 %566
        %568 = vrot.lane.b32.xlu0 %v500, 32
        %v569 = vpop.permute.xlu0 %568
        %570 = vrot.lane.b32.xlu0 %v502, 32
        %v571 = vpop.permute.xlu0 %570
        %572 = vrot.lane.b32.xlu0 %v505, 32
        %v573 = vpop.permute.xlu0 %572
        %574 = vrot.lane.b32.xlu0 %v507, 32
        %v575 = vpop.permute.xlu0 %574
        %576 = vrot.lane.b32.xlu0 %v510, 32
        %v577 = vpop.permute.xlu0 %576
        %578 = vrot.lane.b32.xlu0 %v512, 32
        %v579 = vpop.permute.xlu0 %578
        %580 = vrot.lane.b32.xlu0 %v515, 32
        %v581 = vpop.permute.xlu0 %580
        %582 = vrot.lane.b32.xlu0 %v517, 32
        %v583 = vpop.permute.xlu0 %582
        %584 = vrot.lane.b32.xlu0 %v520, 32
        %v585 = vpop.permute.xlu0 %584
        %586 = vrot.lane.b32.xlu0 %v522, 32
        %v587 = vpop.permute.xlu0 %586
        %588 = vrot.lane.b32.xlu0 %v525, 32
        %v589 = vpop.permute.xlu0 %588
        %590 = vrot.lane.b32.xlu0 %v527, 32
        %v591 = vpop.permute.xlu0 %590
        %vm624 = vcmask 1045504
        %v625 = vrot.slane %v345, 2
        %v626 = vrot.slane %v346, 2
        %v627 = vsel %vm624, %v625, %v626
        %v628 = vrot.slane %v347, 2
        %v629 = vsel %vm624, %v626, %v628
        %v630 = vrot.slane %v348, 2
        %v631 = vrot.slane %v349, 2
        %v632 = vsel %vm624, %v630, %v631
        %v633 = vrot.slane %v350, 2
        %v634 = vsel %vm624, %v631, %v633
        %v635 = vrot.slane %v351, 2
        %v636 = vrot.slane %v352, 2
        %v637 = vsel %vm624, %v635, %v636
        %v638 = vrot.slane %v353, 2
        %v639 = vsel %vm624, %v636, %v638
        %v640 = vrot.slane %v354, 2
        %v641 = vrot.slane %v355, 2
        %v642 = vsel %vm624, %v640, %v641
        %v643 = vrot.slane %v356, 2
        %v644 = vsel %vm624, %v641, %v643
        %v645 = vrot.slane %v357, 2
        %v646 = vrot.slane %v358, 2
        %v647 = vsel %vm624, %v645, %v646
        %v648 = vrot.slane %v359, 2
        %v649 = vsel %vm624, %v646, %v648
        %v650 = vrot.slane %v360, 2
        %v651 = vrot.slane %v361, 2
        %v652 = vsel %vm624, %v650, %v651
        %v653 = vrot.slane %v362, 2
        %v654 = vsel %vm624, %v651, %v653
        %v655 = vrot.slane %v363, 2
        %v656 = vrot.slane %v364, 2
        %v657 = vsel %vm624, %v655, %v656
        %v658 = vrot.slane %v365, 2
        %v659 = vsel %vm624, %v656, %v658
        %v660 = vrot.slane %v366, 2
        %v661 = vrot.slane %v367, 2
        %v662 = vsel %vm624, %v660, %v661
        %v663 = vrot.slane %v368, 2
        %v664 = vsel %vm624, %v661, %v663
        %v665 = vrot.slane %v369, 2
        %v666 = vrot.slane %v370, 2
        %v667 = vsel %vm624, %v665, %v666
        %v668 = vrot.slane %v371, 2
        %v669 = vsel %vm624, %v666, %v668
        %v670 = vrot.slane %v372, 2
        %v671 = vrot.slane %v373, 2
        %v672 = vsel %vm624, %v670, %v671
        %v673 = vrot.slane %v374, 2
        %v674 = vsel %vm624, %v671, %v673
        %v675 = vrot.slane %v375, 2
        %v676 = vrot.slane %v376, 2
        %v677 = vsel %vm624, %v675, %v676
        %v678 = vrot.slane %v377, 2
        %v679 = vsel %vm624, %v676, %v678
        %v680 = vrot.slane %v378, 2
        %v681 = vrot.slane %v379, 2
        %v682 = vsel %vm624, %v680, %v681
        %v683 = vrot.slane %v380, 2
        %v684 = vsel %vm624, %v681, %v683
        %v685 = vrot.slane %v381, 2
        %v686 = vrot.slane %v382, 2
        %v687 = vsel %vm624, %v685, %v686
        %v688 = vrot.slane %v383, 2
        %v689 = vsel %vm624, %v686, %v688
        %v690 = vrot.slane %v384, 2
        %v691 = vrot.slane %v385, 2
        %v692 = vsel %vm624, %v690, %v691
        %v693 = vrot.slane %v386, 2
        %v694 = vsel %vm624, %v691, %v693
        %v695 = vrot.slane %v387, 2
        %v696 = vrot.slane %v388, 2
        %v697 = vsel %vm624, %v695, %v696
        %v698 = vrot.slane %v389, 2
        %v699 = vsel %vm624, %v696, %v698
        %v700 = vrot.slane %v390, 2
        %v701 = vrot.slane %v391, 2
        %v702 = vsel %vm624, %v700, %v701
        %v703 = vrot.slane %v392, 2
        %v704 = vsel %vm624, %v701, %v703
        %705 = vrot.lane.b32.xlu0 %v627, 64
        %v706 = vpop.permute.xlu0 %705
        %707 = vrot.lane.b32.xlu0 %v629, 64
        %v708 = vpop.permute.xlu0 %707
        %709 = vrot.lane.b32.xlu0 %v632, 64
        %v710 = vpop.permute.xlu0 %709
        %711 = vrot.lane.b32.xlu0 %v634, 64
        %v712 = vpop.permute.xlu0 %711
        %713 = vrot.lane.b32.xlu0 %v637, 64
        %v714 = vpop.permute.xlu0 %713
        %715 = vrot.lane.b32.xlu0 %v639, 64
        %v716 = vpop.permute.xlu0 %715
        %717 = vrot.lane.b32.xlu0 %v642, 64
        %v718 = vpop.permute.xlu0 %717
        %719 = vrot.lane.b32.xlu0 %v644, 64
        %v720 = vpop.permute.xlu0 %719
        %721 = vrot.lane.b32.xlu0 %v647, 64
        %v722 = vpop.permute.xlu0 %721
        %723 = vrot.lane.b32.xlu0 %v649, 64
        %v724 = vpop.permute.xlu0 %723
        %725 = vrot.lane.b32.xlu0 %v652, 64
        %v726 = vpop.permute.xlu0 %725
        %727 = vrot.lane.b32.xlu0 %v654, 64
        %v728 = vpop.permute.xlu0 %727
        %729 = vrot.lane.b32.xlu0 %v657, 64
        %v730 = vpop.permute.xlu0 %729
        %731 = vrot.lane.b32.xlu0 %v659, 64
        %v732 = vpop.permute.xlu0 %731
        %733 = vrot.lane.b32.xlu0 %v662, 64
        %v734 = vpop.permute.xlu0 %733
        %735 = vrot.lane.b32.xlu0 %v664, 64
        %v736 = vpop.permute.xlu0 %735
        %737 = vrot.lane.b32.xlu0 %v667, 64
        %v738 = vpop.permute.xlu0 %737
        %739 = vrot.lane.b32.xlu0 %v669, 64
        %v740 = vpop.permute.xlu0 %739
        %741 = vrot.lane.b32.xlu0 %v672, 64
        %v742 = vpop.permute.xlu0 %741
        %743 = vrot.lane.b32.xlu0 %v674, 64
        %v744 = vpop.permute.xlu0 %743
        %745 = vrot.lane.b32.xlu0 %v677, 64
        %v746 = vpop.permute.xlu0 %745
        %747 = vrot.lane.b32.xlu0 %v679, 64
        %v748 = vpop.permute.xlu0 %747
        %749 = vrot.lane.b32.xlu0 %v682, 64
        %v750 = vpop.permute.xlu0 %749
        %751 = vrot.lane.b32.xlu0 %v684, 64
        %v752 = vpop.permute.xlu0 %751
        %753 = vrot.lane.b32.xlu0 %v687, 64
        %v754 = vpop.permute.xlu0 %753
        %755 = vrot.lane.b32.xlu0 %v689, 64
        %v756 = vpop.permute.xlu0 %755
        %757 = vrot.lane.b32.xlu0 %v692, 64
        %v758 = vpop.permute.xlu0 %757
        %759 = vrot.lane.b32.xlu0 %v694, 64
        %v760 = vpop.permute.xlu0 %759
        %761 = vrot.lane.b32.xlu0 %v697, 64
        %v762 = vpop.permute.xlu0 %761
        %763 = vrot.lane.b32.xlu0 %v699, 64
        %v764 = vpop.permute.xlu0 %763
        %765 = vrot.lane.b32.xlu0 %v702, 64
        %v766 = vpop.permute.xlu0 %765
        %767 = vrot.lane.b32.xlu0 %v704, 64
        %v768 = vpop.permute.xlu0 %767
        %803 = vrot.lane.b32.xlu0 %v348, 96
        %v804 = vpop.permute.xlu0 %803
        %805 = vrot.lane.b32.xlu0 %v349, 96
        %v806 = vpop.permute.xlu0 %805
        %807 = vrot.lane.b32.xlu0 %v351, 96
        %v808 = vpop.permute.xlu0 %807
        %809 = vrot.lane.b32.xlu0 %v352, 96
        %v810 = vpop.permute.xlu0 %809
        %811 = vrot.lane.b32.xlu0 %v354, 96
        %v812 = vpop.permute.xlu0 %811
        %813 = vrot.lane.b32.xlu0 %v355, 96
        %v814 = vpop.permute.xlu0 %813
        %815 = vrot.lane.b32.xlu0 %v357, 96
        %v816 = vpop.permute.xlu0 %815
        %817 = vrot.lane.b32.xlu0 %v358, 96
        %v818 = vpop.permute.xlu0 %817
        %819 = vrot.lane.b32.xlu0 %v360, 96
        %v820 = vpop.permute.xlu0 %819
        %821 = vrot.lane.b32.xlu0 %v361, 96
        %v822 = vpop.permute.xlu0 %821
        %823 = vrot.lane.b32.xlu0 %v363, 96
        %v824 = vpop.permute.xlu0 %823
        %825 = vrot.lane.b32.xlu0 %v364, 96
        %v826 = vpop.permute.xlu0 %825
        %827 = vrot.lane.b32.xlu0 %v366, 96
        %v828 = vpop.permute.xlu0 %827
        %829 = vrot.lane.b32.xlu0 %v367, 96
        %v830 = vpop.permute.xlu0 %829
        %831 = vrot.lane.b32.xlu0 %v369, 96
        %v832 = vpop.permute.xlu0 %831
        %833 = vrot.lane.b32.xlu0 %v370, 96
        %v834 = vpop.permute.xlu0 %833
        %835 = vrot.lane.b32.xlu0 %v372, 96
        %v836 = vpop.permute.xlu0 %835
        %837 = vrot.lane.b32.xlu0 %v373, 96
        %v838 = vpop.permute.xlu0 %837
        %839 = vrot.lane.b32.xlu0 %v375, 96
        %v840 = vpop.permute.xlu0 %839
        %841 = vrot.lane.b32.xlu0 %v376, 96
        %v842 = vpop.permute.xlu0 %841
        %843 = vrot.lane.b32.xlu0 %v378, 96
        %v844 = vpop.permute.xlu0 %843
        %845 = vrot.lane.b32.xlu0 %v379, 96
        %v846 = vpop.permute.xlu0 %845
        %847 = vrot.lane.b32.xlu0 %v381, 96
        %v848 = vpop.permute.xlu0 %847
        %849 = vrot.lane.b32.xlu0 %v382, 96
        %v850 = vpop.permute.xlu0 %849
        %851 = vrot.lane.b32.xlu0 %v384, 96
        %v852 = vpop.permute.xlu0 %851
        %853 = vrot.lane.b32.xlu0 %v385, 96
        %v854 = vpop.permute.xlu0 %853
        %855 = vrot.lane.b32.xlu0 %v387, 96
        %v856 = vpop.permute.xlu0 %855
        %857 = vrot.lane.b32.xlu0 %v388, 96
        %v858 = vpop.permute.xlu0 %857
        %859 = vrot.lane.b32.xlu0 %v390, 96
        %v860 = vpop.permute.xlu0 %859
        %861 = vrot.lane.b32.xlu0 %v391, 96
        %v862 = vpop.permute.xlu0 %861
        %863 = vrot.lane.b32.xlu0 %v393, 96
        %v864 = vpop.permute.xlu0 %863
        %865 = vrot.lane.b32.xlu0 %v394, 96
        %v866 = vpop.permute.xlu0 %865
        %v900 = vrot.slane %v393, 1
        %v901 = vrot.slane %v394, 1
        %v902 = vsel %vm447, %v900, %v901
        %v903 = vrot.slane %v395, 1
        %v904 = vsel %vm447, %v901, %v903
        %v937 = vrot.slane %v393, 2
        %v938 = vrot.slane %v394, 2
        %v939 = vsel %vm624, %v937, %v938
        %v940 = vrot.slane %v395, 2
        %v941 = vsel %vm624, %v938, %v940
        %942 = vrot.lane.b32.xlu0 %v632, 32
        %v943 = vpop.permute.xlu0 %942
        %944 = vrot.lane.b32.xlu0 %v634, 32
        %v945 = vpop.permute.xlu0 %944
        %946 = vrot.lane.b32.xlu0 %v637, 32
        %v947 = vpop.permute.xlu0 %946
        %948 = vrot.lane.b32.xlu0 %v639, 32
        %v949 = vpop.permute.xlu0 %948
        %950 = vrot.lane.b32.xlu0 %v642, 32
        %v951 = vpop.permute.xlu0 %950
        %952 = vrot.lane.b32.xlu0 %v644, 32
        %v953 = vpop.permute.xlu0 %952
        %954 = vrot.lane.b32.xlu0 %v647, 32
        %v955 = vpop.permute.xlu0 %954
        %956 = vrot.lane.b32.xlu0 %v649, 32
        %v957 = vpop.permute.xlu0 %956
        %958 = vrot.lane.b32.xlu0 %v652, 32
        %v959 = vpop.permute.xlu0 %958
        %960 = vrot.lane.b32.xlu0 %v654, 32
        %v961 = vpop.permute.xlu0 %960
        %962 = vrot.lane.b32.xlu0 %v657, 32
        %v963 = vpop.permute.xlu0 %962
        %964 = vrot.lane.b32.xlu0 %v659, 32
        %v965 = vpop.permute.xlu0 %964
        %966 = vrot.lane.b32.xlu0 %v662, 32
        %v967 = vpop.permute.xlu0 %966
        %968 = vrot.lane.b32.xlu0 %v664, 32
        %v969 = vpop.permute.xlu0 %968
        %970 = vrot.lane.b32.xlu0 %v667, 32
        %v971 = vpop.permute.xlu0 %970
        %972 = vrot.lane.b32.xlu0 %v669, 32
        %v973 = vpop.permute.xlu0 %972
        %974 = vrot.lane.b32.xlu0 %v672, 32
        %v975 = vpop.permute.xlu0 %974
        %976 = vrot.lane.b32.xlu0 %v674, 32
        %v977 = vpop.permute.xlu0 %976
        %978 = vrot.lane.b32.xlu0 %v677, 32
        %v979 = vpop.permute.xlu0 %978
        %980 = vrot.lane.b32.xlu0 %v679, 32
        %v981 = vpop.permute.xlu0 %980
        %982 = vrot.lane.b32.xlu0 %v682, 32
        %v983 = vpop.permute.xlu0 %982
        %984 = vrot.lane.b32.xlu0 %v684, 32
        %v985 = vpop.permute.xlu0 %984
        %986 = vrot.lane.b32.xlu0 %v687, 32
        %v987 = vpop.permute.xlu0 %986
        %988 = vrot.lane.b32.xlu0 %v689, 32
        %v989 = vpop.permute.xlu0 %988
        %990 = vrot.lane.b32.xlu0 %v692, 32
        %v991 = vpop.permute.xlu0 %990
        %992 = vrot.lane.b32.xlu0 %v694, 32
        %v993 = vpop.permute.xlu0 %992
        %994 = vrot.lane.b32.xlu0 %v697, 32
        %v995 = vpop.permute.xlu0 %994
        %996 = vrot.lane.b32.xlu0 %v699, 32
        %v997 = vpop.permute.xlu0 %996
        %998 = vrot.lane.b32.xlu0 %v702, 32
        %v999 = vpop.permute.xlu0 %998
        %1000 = vrot.lane.b32.xlu0 %v704, 32
        %v1001 = vpop.permute.xlu0 %1000
        %1002 = vrot.lane.b32.xlu0 %v939, 32
        %v1003 = vpop.permute.xlu0 %1002
        %1004 = vrot.lane.b32.xlu0 %v941, 32
        %v1005 = vpop.permute.xlu0 %1004
        %1040 = vrot.lane.b32.xlu0 %v351, 64
        %v1041 = vpop.permute.xlu0 %1040
        %1042 = vrot.lane.b32.xlu0 %v352, 64
        %v1043 = vpop.permute.xlu0 %1042
        %1044 = vrot.lane.b32.xlu0 %v354, 64
        %v1045 = vpop.permute.xlu0 %1044
        %1046 = vrot.lane.b32.xlu0 %v355, 64
        %v1047 = vpop.permute.xlu0 %1046
        %1048 = vrot.lane.b32.xlu0 %v357, 64
        %v1049 = vpop.permute.xlu0 %1048
        %1050 = vrot.lane.b32.xlu0 %v358, 64
        %v1051 = vpop.permute.xlu0 %1050
        %1052 = vrot.lane.b32.xlu0 %v360, 64
        %v1053 = vpop.permute.xlu0 %1052
        %1054 = vrot.lane.b32.xlu0 %v361, 64
        %v1055 = vpop.permute.xlu0 %1054
        %1056 = vrot.lane.b32.xlu0 %v363, 64
        %v1057 = vpop.permute.xlu0 %1056
        %1058 = vrot.lane.b32.xlu0 %v364, 64
        %v1059 = vpop.permute.xlu0 %1058
        %1060 = vrot.lane.b32.xlu0 %v366, 64
        %v1061 = vpop.permute.xlu0 %1060
        %1062 = vrot.lane.b32.xlu0 %v367, 64
        %v1063 = vpop.permute.xlu0 %1062
        %1064 = vrot.lane.b32.xlu0 %v369, 64
        %v1065 = vpop.permute.xlu0 %1064
        %1066 = vrot.lane.b32.xlu0 %v370, 64
        %v1067 = vpop.permute.xlu0 %1066
        %1068 = vrot.lane.b32.xlu0 %v372, 64
        %v1069 = vpop.permute.xlu0 %1068
        %1070 = vrot.lane.b32.xlu0 %v373, 64
        %v1071 = vpop.permute.xlu0 %1070
        %1072 = vrot.lane.b32.xlu0 %v375, 64
        %v1073 = vpop.permute.xlu0 %1072
        %1074 = vrot.lane.b32.xlu0 %v376, 64
        %v1075 = vpop.permute.xlu0 %1074
        %1076 = vrot.lane.b32.xlu0 %v378, 64
        %v1077 = vpop.permute.xlu0 %1076
        %1078 = vrot.lane.b32.xlu0 %v379, 64
        %v1079 = vpop.permute.xlu0 %1078
        %1080 = vrot.lane.b32.xlu0 %v381, 64
        %v1081 = vpop.permute.xlu0 %1080
        %1082 = vrot.lane.b32.xlu0 %v382, 64
        %v1083 = vpop.permute.xlu0 %1082
        %1084 = vrot.lane.b32.xlu0 %v384, 64
        %v1085 = vpop.permute.xlu0 %1084
        %1086 = vrot.lane.b32.xlu0 %v385, 64
        %v1087 = vpop.permute.xlu0 %1086
        %1088 = vrot.lane.b32.xlu0 %v387, 64
        %v1089 = vpop.permute.xlu0 %1088
        %1090 = vrot.lane.b32.xlu0 %v388, 64
        %v1091 = vpop.permute.xlu0 %1090
        %1092 = vrot.lane.b32.xlu0 %v390, 64
        %v1093 = vpop.permute.xlu0 %1092
        %1094 = vrot.lane.b32.xlu0 %v391, 64
        %v1095 = vpop.permute.xlu0 %1094
        %1096 = vrot.lane.b32.xlu0 %v393, 64
        %v1097 = vpop.permute.xlu0 %1096
        %1098 = vrot.lane.b32.xlu0 %v394, 64
        %v1099 = vpop.permute.xlu0 %1098
        %1100 = vrot.lane.b32.xlu0 %v396, 64
        %v1101 = vpop.permute.xlu0 %1100
        %1102 = vrot.lane.b32.xlu0 %v397, 64
        %v1103 = vpop.permute.xlu0 %1102
        %v1137 = vrot.slane %v396, 1
        %v1138 = vrot.slane %v397, 1
        %v1139 = vsel %vm447, %v1137, %v1138
        %v1140 = vrot.slane %v398, 1
        %v1141 = vsel %vm447, %v1138, %v1140
        %1142 = vrot.lane.b32.xlu0 %v460, 96
        %v1143 = vpop.permute.xlu0 %1142
        %1144 = vrot.lane.b32.xlu0 %v462, 96
        %v1145 = vpop.permute.xlu0 %1144
        %1146 = vrot.lane.b32.xlu0 %v465, 96
        %v1147 = vpop.permute.xlu0 %1146
        %1148 = vrot.lane.b32.xlu0 %v467, 96
        %v1149 = vpop.permute.xlu0 %1148
        %1150 = vrot.lane.b32.xlu0 %v470, 96
        %v1151 = vpop.permute.xlu0 %1150
        %1152 = vrot.lane.b32.xlu0 %v472, 96
        %v1153 = vpop.permute.xlu0 %1152
        %1154 = vrot.lane.b32.xlu0 %v475, 96
        %v1155 = vpop.permute.xlu0 %1154
        %1156 = vrot.lane.b32.xlu0 %v477, 96
        %v1157 = vpop.permute.xlu0 %1156
        %1158 = vrot.lane.b32.xlu0 %v480, 96
        %v1159 = vpop.permute.xlu0 %1158
        %1160 = vrot.lane.b32.xlu0 %v482, 96
        %v1161 = vpop.permute.xlu0 %1160
        %1162 = vrot.lane.b32.xlu0 %v485, 96
        %v1163 = vpop.permute.xlu0 %1162
        %1164 = vrot.lane.b32.xlu0 %v487, 96
        %v1165 = vpop.permute.xlu0 %1164
        %1166 = vrot.lane.b32.xlu0 %v490, 96
        %v1167 = vpop.permute.xlu0 %1166
        %1168 = vrot.lane.b32.xlu0 %v492, 96
        %v1169 = vpop.permute.xlu0 %1168
        %1170 = vrot.lane.b32.xlu0 %v495, 96
        %v1171 = vpop.permute.xlu0 %1170
        %1172 = vrot.lane.b32.xlu0 %v497, 96
        %v1173 = vpop.permute.xlu0 %1172
        %1174 = vrot.lane.b32.xlu0 %v500, 96
        %v1175 = vpop.permute.xlu0 %1174
        %1176 = vrot.lane.b32.xlu0 %v502, 96
        %v1177 = vpop.permute.xlu0 %1176
        %1178 = vrot.lane.b32.xlu0 %v505, 96
        %v1179 = vpop.permute.xlu0 %1178
        %1180 = vrot.lane.b32.xlu0 %v507, 96
        %v1181 = vpop.permute.xlu0 %1180
        %1182 = vrot.lane.b32.xlu0 %v510, 96
        %v1183 = vpop.permute.xlu0 %1182
        %1184 = vrot.lane.b32.xlu0 %v512, 96
        %v1185 = vpop.permute.xlu0 %1184
        %1186 = vrot.lane.b32.xlu0 %v515, 96
        %v1187 = vpop.permute.xlu0 %1186
        %1188 = vrot.lane.b32.xlu0 %v517, 96
        %v1189 = vpop.permute.xlu0 %1188
        %1190 = vrot.lane.b32.xlu0 %v520, 96
        %v1191 = vpop.permute.xlu0 %1190
        %1192 = vrot.lane.b32.xlu0 %v522, 96
        %v1193 = vpop.permute.xlu0 %1192
        %1194 = vrot.lane.b32.xlu0 %v525, 96
        %v1195 = vpop.permute.xlu0 %1194
        %1196 = vrot.lane.b32.xlu0 %v527, 96
        %v1197 = vpop.permute.xlu0 %1196
        %1198 = vrot.lane.b32.xlu0 %v902, 96
        %v1199 = vpop.permute.xlu0 %1198
        %1200 = vrot.lane.b32.xlu0 %v904, 96
        %v1201 = vpop.permute.xlu0 %1200
        %1202 = vrot.lane.b32.xlu0 %v1139, 96
        %v1203 = vpop.permute.xlu0 %1202
        %1204 = vrot.lane.b32.xlu0 %v1141, 96
        %v1205 = vpop.permute.xlu0 %1204
        %v1238 = vrot.slane %v396, 2
        %v1239 = vrot.slane %v397, 2
        %v1240 = vsel %vm624, %v1238, %v1239
        %v1241 = vrot.slane %v398, 2
        %v1242 = vsel %vm624, %v1239, %v1241
        %v1275 = vsel %vm224, %v345, %v529
        %v1276 = vsel %vm224, %v346, %v531
        %v1277 = vsel %vm224, %v348, %v533
        %v1278 = vsel %vm224, %v349, %v535
        %v1279 = vsel %vm224, %v351, %v537
        %v1280 = vsel %vm224, %v352, %v539
        %v1281 = vsel %vm224, %v354, %v541
        %v1282 = vsel %vm224, %v355, %v543
        %v1283 = vsel %vm224, %v357, %v545
        %v1284 = vsel %vm224, %v358, %v547
        %v1285 = vsel %vm224, %v360, %v549
        %v1286 = vsel %vm224, %v361, %v551
        %v1287 = vsel %vm224, %v363, %v553
        %v1288 = vsel %vm224, %v364, %v555
        %v1289 = vsel %vm224, %v366, %v557
        %v1290 = vsel %vm224, %v367, %v559
        %v1291 = vsel %vm224, %v369, %v561
        %v1292 = vsel %vm224, %v370, %v563
        %v1293 = vsel %vm224, %v372, %v565
        %v1294 = vsel %vm224, %v373, %v567
        %v1295 = vsel %vm224, %v375, %v569
        %v1296 = vsel %vm224, %v376, %v571
        %v1297 = vsel %vm224, %v378, %v573
        %v1298 = vsel %vm224, %v379, %v575
        %v1299 = vsel %vm224, %v381, %v577
        %v1300 = vsel %vm224, %v382, %v579
        %v1301 = vsel %vm224, %v384, %v581
        %v1302 = vsel %vm224, %v385, %v583
        %v1303 = vsel %vm224, %v387, %v585
        %v1304 = vsel %vm224, %v388, %v587
        %v1305 = vsel %vm224, %v390, %v589
        %v1306 = vsel %vm224, %v391, %v591
        %vm1307 = vcmask 523264
        %v1308 = vsel %vm1307, %v1275, %v706
        %v1309 = vsel %vm1307, %v1276, %v708
        %v1310 = vsel %vm1307, %v1277, %v710
        %v1311 = vsel %vm1307, %v1278, %v712
        %v1312 = vsel %vm1307, %v1279, %v714
        %v1313 = vsel %vm1307, %v1280, %v716
        %v1314 = vsel %vm1307, %v1281, %v718
        %v1315 = vsel %vm1307, %v1282, %v720
        %v1316 = vsel %vm1307, %v1283, %v722
        %v1317 = vsel %vm1307, %v1284, %v724
        %v1318 = vsel %vm1307, %v1285, %v726
        %v1319 = vsel %vm1307, %v1286, %v728
        %v1320 = vsel %vm1307, %v1287, %v730
        %v1321 = vsel %vm1307, %v1288, %v732
        %v1322 = vsel %vm1307, %v1289, %v734
        %v1323 = vsel %vm1307, %v1290, %v736
        %v1324 = vsel %vm1307, %v1291, %v738
        %v1325 = vsel %vm1307, %v1292, %v740
        %v1326 = vsel %vm1307, %v1293, %v742
        %v1327 = vsel %vm1307, %v1294, %v744
        %v1328 = vsel %vm1307, %v1295, %v746
        %v1329 = vsel %vm1307, %v1296, %v748
        %v1330 = vsel %vm1307, %v1297, %v750
        %v1331 = vsel %vm1307, %v1298, %v752
        %v1332 = vsel %vm1307, %v1299, %v754
        %v1333 = vsel %vm1307, %v1300, %v756
        %v1334 = vsel %vm1307, %v1301, %v758
        %v1335 = vsel %vm1307, %v1302, %v760
        %v1336 = vsel %vm1307, %v1303, %v762
        %v1337 = vsel %vm1307, %v1304, %v764
        %v1338 = vsel %vm1307, %v1305, %v766
        %v1339 = vsel %vm1307, %v1306, %v768
        %vm1340 = vcmask 785408
        %v1341 = vsel %vm1340, %v1308, %v804
        %v1342 = vsel %vm1340, %v1309, %v806
        %v1343 = vsel %vm1340, %v1310, %v808
        %v1344 = vsel %vm1340, %v1311, %v810
        %v1345 = vsel %vm1340, %v1312, %v812
        %v1346 = vsel %vm1340, %v1313, %v814
        %v1347 = vsel %vm1340, %v1314, %v816
        %v1348 = vsel %vm1340, %v1315, %v818
        %v1349 = vsel %vm1340, %v1316, %v820
        %v1350 = vsel %vm1340, %v1317, %v822
        %v1351 = vsel %vm1340, %v1318, %v824
        %v1352 = vsel %vm1340, %v1319, %v826
        %v1353 = vsel %vm1340, %v1320, %v828
        %v1354 = vsel %vm1340, %v1321, %v830
        %v1355 = vsel %vm1340, %v1322, %v832
        %v1356 = vsel %vm1340, %v1323, %v834
        %v1357 = vsel %vm1340, %v1324, %v836
        %v1358 = vsel %vm1340, %v1325, %v838
        %v1359 = vsel %vm1340, %v1326, %v840
        %v1360 = vsel %vm1340, %v1327, %v842
        %v1361 = vsel %vm1340, %v1328, %v844
        %v1362 = vsel %vm1340, %v1329, %v846
        %v1363 = vsel %vm1340, %v1330, %v848
        %v1364 = vsel %vm1340, %v1331, %v850
        %v1365 = vsel %vm1340, %v1332, %v852
        %v1366 = vsel %vm1340, %v1333, %v854
        %v1367 = vsel %vm1340, %v1334, %v856
        %v1368 = vsel %vm1340, %v1335, %v858
        %v1369 = vsel %vm1340, %v1336, %v860
        %v1370 = vsel %vm1340, %v1337, %v862
        %v1371 = vsel %vm1340, %v1338, %v864
        %v1372 = vsel %vm1340, %v1339, %v866
        %v1373 = vsel %vm224, %v455, %v943
        %v1374 = vsel %vm224, %v457, %v945
        %v1375 = vsel %vm224, %v460, %v947
        %v1376 = vsel %vm224, %v462, %v949
        %v1377 = vsel %vm224, %v465, %v951
        %v1378 = vsel %vm224, %v467, %v953
        %v1379 = vsel %vm224, %v470, %v955
        %v1380 = vsel %vm224, %v472, %v957
        %v1381 = vsel %vm224, %v475, %v959
        %v1382 = vsel %vm224, %v477, %v961
        %v1383 = vsel %vm224, %v480, %v963
        %v1384 = vsel %vm224, %v482, %v965
        %v1385 = vsel %vm224, %v485, %v967
        %v1386 = vsel %vm224, %v487, %v969
        %v1387 = vsel %vm224, %v490, %v971
        %v1388 = vsel %vm224, %v492, %v973
        %v1389 = vsel %vm224, %v495, %v975
        %v1390 = vsel %vm224, %v497, %v977
        %v1391 = vsel %vm224, %v500, %v979
        %v1392 = vsel %vm224, %v502, %v981
        %v1393 = vsel %vm224, %v505, %v983
        %v1394 = vsel %vm224, %v507, %v985
        %v1395 = vsel %vm224, %v510, %v987
        %v1396 = vsel %vm224, %v512, %v989
        %v1397 = vsel %vm224, %v515, %v991
        %v1398 = vsel %vm224, %v517, %v993
        %v1399 = vsel %vm224, %v520, %v995
        %v1400 = vsel %vm224, %v522, %v997
        %v1401 = vsel %vm224, %v525, %v999
        %v1402 = vsel %vm224, %v527, %v1001
        %v1403 = vsel %vm224, %v902, %v1003
        %v1404 = vsel %vm224, %v904, %v1005
        %v1405 = vsel %vm1307, %v1373, %v1041
        %v1406 = vsel %vm1307, %v1374, %v1043
        %v1407 = vsel %vm1307, %v1375, %v1045
        %v1408 = vsel %vm1307, %v1376, %v1047
        %v1409 = vsel %vm1307, %v1377, %v1049
        %v1410 = vsel %vm1307, %v1378, %v1051
        %v1411 = vsel %vm1307, %v1379, %v1053
        %v1412 = vsel %vm1307, %v1380, %v1055
        %v1413 = vsel %vm1307, %v1381, %v1057
        %v1414 = vsel %vm1307, %v1382, %v1059
        %v1415 = vsel %vm1307, %v1383, %v1061
        %v1416 = vsel %vm1307, %v1384, %v1063
        %v1417 = vsel %vm1307, %v1385, %v1065
        %v1418 = vsel %vm1307, %v1386, %v1067
        %v1419 = vsel %vm1307, %v1387, %v1069
        %v1420 = vsel %vm1307, %v1388, %v1071
        %v1421 = vsel %vm1307, %v1389, %v1073
        %v1422 = vsel %vm1307, %v1390, %v1075
        %v1423 = vsel %vm1307, %v1391, %v1077
        %v1424 = vsel %vm1307, %v1392, %v1079
        %v1425 = vsel %vm1307, %v1393, %v1081
        %v1426 = vsel %vm1307, %v1394, %v1083
        %v1427 = vsel %vm1307, %v1395, %v1085
        %v1428 = vsel %vm1307, %v1396, %v1087
        %v1429 = vsel %vm1307, %v1397, %v1089
        %v1430 = vsel %vm1307, %v1398, %v1091
        %v1431 = vsel %vm1307, %v1399, %v1093
        %v1432 = vsel %vm1307, %v1400, %v1095
        %v1433 = vsel %vm1307, %v1401, %v1097
        %v1434 = vsel %vm1307, %v1402, %v1099
        %v1435 = vsel %vm1307, %v1403, %v1101
        %v1436 = vsel %vm1307, %v1404, %v1103
        %v1437 = vsel %vm1340, %v1405, %v1143
        %v1438 = vsel %vm1340, %v1406, %v1145
        %v1439 = vsel %vm1340, %v1407, %v1147
        %v1440 = vsel %vm1340, %v1408, %v1149
        %v1441 = vsel %vm1340, %v1409, %v1151
        %v1442 = vsel %vm1340, %v1410, %v1153
        %v1443 = vsel %vm1340, %v1411, %v1155
        %v1444 = vsel %vm1340, %v1412, %v1157
        %v1445 = vsel %vm1340, %v1413, %v1159
        %v1446 = vsel %vm1340, %v1414, %v1161
        %v1447 = vsel %vm1340, %v1415, %v1163
        %v1448 = vsel %vm1340, %v1416, %v1165
        %v1449 = vsel %vm1340, %v1417, %v1167
        %v1450 = vsel %vm1340, %v1418, %v1169
        %v1451 = vsel %vm1340, %v1419, %v1171
        %v1452 = vsel %vm1340, %v1420, %v1173
        %v1453 = vsel %vm1340, %v1421, %v1175
        %v1454 = vsel %vm1340, %v1422, %v1177
        %v1455 = vsel %vm1340, %v1423, %v1179
        %v1456 = vsel %vm1340, %v1424, %v1181
        %v1457 = vsel %vm1340, %v1425, %v1183
        %v1458 = vsel %vm1340, %v1426, %v1185
        %v1459 = vsel %vm1340, %v1427, %v1187
        %v1460 = vsel %vm1340, %v1428, %v1189
        %v1461 = vsel %vm1340, %v1429, %v1191
        %v1462 = vsel %vm1340, %v1430, %v1193
        %v1463 = vsel %vm1340, %v1431, %v1195
        %v1464 = vsel %vm1340, %v1432, %v1197
        %v1465 = vsel %vm1340, %v1433, %v1199
        %v1466 = vsel %vm1340, %v1434, %v1201
        %v1467 = vsel %vm1340, %v1435, %v1203
        %v1468 = vsel %vm1340, %v1436, %v1205
        %v1469 = vpack.c.bf16 %v1342, %v1341
        %v1470 = vpack.c.bf16 %v1438, %v1437
        %v1471 = vpack.c.bf16 %v639, %v637
        %v1472 = vpack.c.bf16 %v1344, %v1343
        %v1473 = vpack.c.bf16 %v1440, %v1439
        %v1474 = vpack.c.bf16 %v644, %v642
        %v1475 = vpack.c.bf16 %v1346, %v1345
        %v1476 = vpack.c.bf16 %v1442, %v1441
        %v1477 = vpack.c.bf16 %v649, %v647
        %v1478 = vpack.c.bf16 %v1348, %v1347
        %v1479 = vpack.c.bf16 %v1444, %v1443
        %v1480 = vpack.c.bf16 %v654, %v652
        %v1481 = vpack.c.bf16 %v1350, %v1349
        %v1482 = vpack.c.bf16 %v1446, %v1445
        %v1483 = vpack.c.bf16 %v659, %v657
        %v1484 = vpack.c.bf16 %v1352, %v1351
        %v1485 = vpack.c.bf16 %v1448, %v1447
        %v1486 = vpack.c.bf16 %v664, %v662
        %v1487 = vpack.c.bf16 %v1354, %v1353
        %v1488 = vpack.c.bf16 %v1450, %v1449
        %v1489 = vpack.c.bf16 %v669, %v667
        %v1490 = vpack.c.bf16 %v1356, %v1355
        %v1491 = vpack.c.bf16 %v1452, %v1451
        %v1492 = vpack.c.bf16 %v674, %v672
        %v1493 = vpack.c.bf16 %v1358, %v1357
        %v1494 = vpack.c.bf16 %v1454, %v1453
        %v1495 = vpack.c.bf16 %v679, %v677
        %v1496 = vpack.c.bf16 %v1360, %v1359
        %v1497 = vpack.c.bf16 %v1456, %v1455
        %v1498 = vpack.c.bf16 %v684, %v682
        %v1499 = vpack.c.bf16 %v1362, %v1361
        %v1500 = vpack.c.bf16 %v1458, %v1457
        %v1501 = vpack.c.bf16 %v689, %v687
        %v1502 = vpack.c.bf16 %v1364, %v1363
        %v1503 = vpack.c.bf16 %v1460, %v1459
        %v1504 = vpack.c.bf16 %v694, %v692
        %v1505 = vpack.c.bf16 %v1366, %v1365
        %v1506 = vpack.c.bf16 %v1462, %v1461
        %v1507 = vpack.c.bf16 %v699, %v697
        %v1508 = vpack.c.bf16 %v1368, %v1367
        %v1509 = vpack.c.bf16 %v1464, %v1463
        %v1510 = vpack.c.bf16 %v704, %v702
        %v1511 = vpack.c.bf16 %v1370, %v1369
        %v1512 = vpack.c.bf16 %v1466, %v1465
        %v1513 = vpack.c.bf16 %v941, %v939
        %v1514 = vpack.c.bf16 %v1372, %v1371
        %v1515 = vpack.c.bf16 %v1468, %v1467
        %v1516 = vpack.c.bf16 %v1242, %v1240
        %v1517 = vld [vmem:[%s1] sm:$0xf]
        %v1518 = vld [vmem:[%s1 + $0x4] sm:$0xf]
        %v1519 = vld [vmem:[%s1 + $0x8] sm:$0xf]
        %v1520 = vld [vmem:[%s1 + $0xc] sm:$0xf]
        %v1521 = vld [vmem:[%s1 + $0x10] sm:$0xf]
        %v1522 = vld [vmem:[%s1 + $0x14] sm:$0xf]
        %v1523 = vld [vmem:[%s1 + $0x18] sm:$0xf]
        %v1524 = vld [vmem:[%s1 + $0x1c] sm:$0xf]
        %v1525 = vld [vmem:[%s1 + $0x20] sm:$0xf]
        %v1526 = vld [vmem:[%s1 + $0x24] sm:$0xf]
        %v1527 = vld [vmem:[%s1 + $0x28] sm:$0xf]
        %v1528 = vld [vmem:[%s1 + $0x2c] sm:$0xf]
        %v1529 = vld [vmem:[%s1 + $0x30] sm:$0xf]
        %v1530 = vld [vmem:[%s1 + $0x34] sm:$0xf]
        %v1531 = vld [vmem:[%s1 + $0x38] sm:$0xf]
        %v1532 = vld [vmem:[%s1 + $0x3c] sm:$0xf]
        %v1533 = vld [vmem:[%s1 + $0x40] sm:$0xf]
        %v1534 = vld [vmem:[%s1 + $0x44] sm:$0xf]
        %v1535 = vld [vmem:[%s1 + $0x48] sm:$0xf]
        %v1536 = vld [vmem:[%s1 + $0x4c] sm:$0xf]
        %v1537 = vld [vmem:[%s1 + $0x50] sm:$0xf]
        %v1538 = vld [vmem:[%s1 + $0x54] sm:$0xf]
        %v1539 = vld [vmem:[%s1 + $0x58] sm:$0xf]
        %v1540 = vld [vmem:[%s1 + $0x5c] sm:$0xf]
        %v1541 = vld [vmem:[%s1 + $0x60] sm:$0xf]
        %v1542 = vld [vmem:[%s1 + $0x64] sm:$0xf]
        %v1543 = vld [vmem:[%s1 + $0x68] sm:$0xf]
        %v1544 = vld [vmem:[%s1 + $0x6c] sm:$0xf]
        %v1545 = vld [vmem:[%s1 + $0x70] sm:$0xf]
        %v1546 = vld [vmem:[%s1 + $0x74] sm:$0xf]
        %v1547 = vld [vmem:[%s1 + $0x78] sm:$0xf]
        %v1548 = vld [vmem:[%s1 + $0x7c] sm:$0xf]
        %v1549 = vld [vmem:[%s1 + $0x80] sm:$0xf]
        %v1550 = vld [vmem:[%s1 + $0x84] sm:$0xf]
        %v1551 = vld [vmem:[%s1 + $0x88] sm:$0xf]
        %v1552 = vld [vmem:[%s1 + $0x8c] sm:$0xf]
        %v1553 = vld [vmem:[%s2] sm:$0x1]
        %v1555 = vlaneseq
        %v1556 = vshrl.u32 %v1555, 7
        %v1557 = vsub.s32 0, %v1556
        %v1558 = vrot.slane %v1553, %v1557
        %v1596 = vunpack.c.l.b16 %v1517
        %v1597 = vunpack.c.l.b16 %v1518
        %v1598 = vunpack.c.l.b16 %v1519
        %v1599 = vunpack.c.l.b16 %v1520
        %v1600 = vunpack.c.l.b16 %v1521
        %v1601 = vunpack.c.l.b16 %v1522
        %v1602 = vunpack.c.l.b16 %v1523
        %v1603 = vunpack.c.l.b16 %v1524
        %v1604 = vunpack.c.l.b16 %v1525
        %v1605 = vunpack.c.l.b16 %v1526
        %v1606 = vunpack.c.l.b16 %v1527
        %v1607 = vunpack.c.l.b16 %v1528
        %v1608 = vunpack.c.l.b16 %v1529
        %v1609 = vunpack.c.l.b16 %v1530
        %v1610 = vunpack.c.l.b16 %v1531
        %v1611 = vunpack.c.l.b16 %v1532
        %v1612 = vunpack.c.l.b16 %v1533
        %v1613 = vunpack.c.l.b16 %v1534
        %v1614 = vunpack.c.l.b16 %v1535
        %v1615 = vunpack.c.l.b16 %v1536
        %v1616 = vunpack.c.l.b16 %v1537
        %v1617 = vunpack.c.l.b16 %v1538
        %v1618 = vunpack.c.l.b16 %v1539
        %v1619 = vunpack.c.l.b16 %v1540
        %v1620 = vunpack.c.l.b16 %v1541
        %v1621 = vunpack.c.l.b16 %v1542
        %v1622 = vunpack.c.l.b16 %v1543
        %v1623 = vunpack.c.l.b16 %v1544
        %v1624 = vunpack.c.l.b16 %v1545
        %v1625 = vunpack.c.l.b16 %v1546
        %v1626 = vunpack.c.l.b16 %v1547
        %v1627 = vunpack.c.l.b16 %v1548
        %v1628 = vunpack.c.l.b16 %v1549
        %v1629 = vunpack.c.l.b16 %v1550
        %v1630 = vunpack.c.l.b16 %v1551
        %v1631 = vunpack.c.l.b16 %v1552
        %v1632 = vpack.c.b16 %v1597, %v1596
        %v1633 = vpack.c.b16 %v1599, %v1598
        %v1634 = vpack.c.b16 %v1601, %v1600
        %v1635 = vpack.c.b16 %v1603, %v1602
        %v1636 = vpack.c.b16 %v1605, %v1604
        %v1637 = vpack.c.b16 %v1607, %v1606
        %v1638 = vpack.c.b16 %v1609, %v1608
        %v1639 = vpack.c.b16 %v1611, %v1610
        %v1640 = vpack.c.b16 %v1613, %v1612
        %v1641 = vpack.c.b16 %v1615, %v1614
        %v1642 = vpack.c.b16 %v1617, %v1616
        %v1643 = vpack.c.b16 %v1619, %v1618
        %v1644 = vpack.c.b16 %v1621, %v1620
        %v1645 = vpack.c.b16 %v1623, %v1622
        %v1646 = vpack.c.b16 %v1625, %v1624
        %v1647 = vpack.c.b16 %v1627, %v1626
        %v1648 = vpack.c.b16 %v1629, %v1628
        %v1649 = vpack.c.b16 %v1631, %v1630
        %v1669 = vsel %vm224, %v1471, 0
        %v1672 = vsel %vm224, %v1474, 0
        %v1675 = vsel %vm224, %v1477, 0
        %v1678 = vsel %vm224, %v1480, 0
        %v1681 = vsel %vm224, %v1483, 0
        %v1684 = vsel %vm224, %v1486, 0
        %v1687 = vsel %vm224, %v1489, 0
        %v1690 = vsel %vm224, %v1492, 0
        %v1693 = vsel %vm224, %v1495, 0
        %v1696 = vsel %vm224, %v1498, 0
        %v1699 = vsel %vm224, %v1501, 0
        %v1702 = vsel %vm224, %v1504, 0
        %v1705 = vsel %vm224, %v1507, 0
        %v1708 = vsel %vm224, %v1510, 0
        %v1711 = vsel %vm224, %v1513, 0
        %v1714 = vsel %vm224, %v1516, 0
        %1716 = vmatprep.subr.bf16.mxu0 0
        %1717 = vmatpush1.bf16.msra.mxu0 %v1632
        %1718 = vmatprep.subr.bf16.mxu0 0
        %1719 = vmatpush1.bf16.msra.mxu0 %v1633
        %1720 = vmatprep.subr.bf16.mxu0 0
        %1721 = vmatpush1.bf16.msra.mxu0 %v1634
        %1722 = vmatprep.subr.bf16.mxu0 0
        %1723 = vmatpush1.bf16.msra.mxu0 %v1635
        %1724 = vmatprep.subr.bf16.mxu0 0
        %1725 = vmatpush1.bf16.msra.mxu0 %v1636
        %1726 = vmatprep.subr.bf16.mxu0 0
        %1727 = vmatpush1.bf16.msra.mxu0 %v1637
        %1728 = vmatprep.subr.bf16.mxu0 0
        %1729 = vmatpush1.bf16.msra.mxu0 %v1638
        %1730 = vmatprep.subr.bf16.mxu0 0
        %1731 = vmatpush1.bf16.msra.mxu0 %v1639
        %1732 = vmatprep.subr.bf16.mxu0 0
        %1733 = vmatpush1.bf16.msra.mxu0 %v1640
        %1734 = vmatprep.subr.bf16.mxu0 0
        %1735 = vmatpush1.bf16.msra.mxu0 %v1641
        %1736 = vmatprep.subr.bf16.mxu0 0
        %1737 = vmatpush1.bf16.msra.mxu0 %v1642
        %1738 = vmatprep.subr.bf16.mxu0 0
        %1739 = vmatpush1.bf16.msra.mxu0 %v1643
        %1740 = vmatprep.subr.bf16.mxu0 0
        %1741 = vmatpush1.bf16.msra.mxu0 %v1644
        %1742 = vmatprep.subr.bf16.mxu0 0
        %1743 = vmatpush1.bf16.msra.mxu0 %v1645
        %1744 = vmatprep.subr.bf16.mxu0 0
        %1745 = vmatpush1.bf16.msra.mxu0 %v1646
        %1746 = vmatprep.subr.bf16.mxu0 0
        %1747 = vmatpush1.bf16.msra.mxu0 %v1647
        %1748 = vmatprep.mubr.bf16.mxu0 %v1470
        %1749 = vmatmul.mubr.bf16.gmra.mrb[0].mxu0 %v1469
        %v1750 = vpop.f32.mrb[0].mxu0
        %v1751 = vadd.f32 %v1558, %v1750
        %v1752 = vpop.f32.mrb[0].mxu0
        %v1753 = vpop.f32.mrb[0].mxu0
        %v1754 = vadd.f32 %v1558, %v1753
        %v1755 = vpop.f32.mrb[0].mxu0
        %1756 = vmatprep.mubr.bf16.mxu0 %v1473
        %1757 = vmatmul.mubr.bf16.gmra.mrb[0].mxu0 %v1472
        %v1758 = vpop.f32.mrb[0].mxu0
        %v1759 = vadd.f32 %v1558, %v1758
        %v1760 = vpop.f32.mrb[0].mxu0
        %v1761 = vpop.f32.mrb[0].mxu0
        %v1762 = vadd.f32 %v1558, %v1761
        %v1763 = vpop.f32.mrb[0].mxu0
        %1764 = vmatprep.mubr.bf16.mxu0 %v1476
        %1765 = vmatmul.mubr.bf16.gmra.mrb[0].mxu0 %v1475
        %v1766 = vpop.f32.mrb[0].mxu0
        %v1767 = vadd.f32 %v1558, %v1766
        %v1768 = vpop.f32.mrb[0].mxu0
        %v1769 = vpop.f32.mrb[0].mxu0
        %v1770 = vadd.f32 %v1558, %v1769
        %v1771 = vpop.f32.mrb[0].mxu0
        %1772 = vmatprep.mubr.bf16.mxu0 %v1479
        %1773 = vmatmul.mubr.bf16.gmra.mrb[0].mxu0 %v1478
        %v1774 = vpop.f32.mrb[0].mxu0
        %v1775 = vadd.f32 %v1558, %v1774
        %v1776 = vpop.f32.mrb[0].mxu0
        %v1777 = vpop.f32.mrb[0].mxu0
        %v1778 = vadd.f32 %v1558, %v1777
        %v1779 = vpop.f32.mrb[0].mxu0
        %1780 = vmatprep.mubr.bf16.mxu0 %v1482
        %1781 = vmatmul.mubr.bf16.gmra.mrb[0].mxu0 %v1481
        %v1782 = vpop.f32.mrb[0].mxu0
        %v1783 = vadd.f32 %v1558, %v1782
        %v1784 = vpop.f32.mrb[0].mxu0
        %v1785 = vpop.f32.mrb[0].mxu0
        %v1786 = vadd.f32 %v1558, %v1785
        %v1787 = vpop.f32.mrb[0].mxu0
        %1788 = vmatprep.mubr.bf16.mxu0 %v1485
        %1789 = vmatmul.mubr.bf16.gmra.mrb[0].mxu0 %v1484
        %v1790 = vpop.f32.mrb[0].mxu0
        %v1791 = vadd.f32 %v1558, %v1790
        %v1792 = vpop.f32.mrb[0].mxu0
        %v1793 = vpop.f32.mrb[0].mxu0
        %v1794 = vadd.f32 %v1558, %v1793
        %v1795 = vpop.f32.mrb[0].mxu0
        %1796 = vmatprep.mubr.bf16.mxu0 %v1488
        %1797 = vmatmul.mubr.bf16.gmra.mrb[0].mxu0 %v1487
        %v1798 = vpop.f32.mrb[0].mxu0
        %v1799 = vadd.f32 %v1558, %v1798
        %v1800 = vpop.f32.mrb[0].mxu0
        %v1801 = vpop.f32.mrb[0].mxu0
        %v1802 = vadd.f32 %v1558, %v1801
        %v1803 = vpop.f32.mrb[0].mxu0
        %1804 = vmatprep.mubr.bf16.mxu0 %v1491
        %1805 = vmatmul.mubr.bf16.gmra.mrb[0].mxu0 %v1490
        %v1806 = vpop.f32.mrb[0].mxu0
        %v1807 = vadd.f32 %v1558, %v1806
        %v1808 = vpop.f32.mrb[0].mxu0
        %v1809 = vpop.f32.mrb[0].mxu0
        %v1810 = vadd.f32 %v1558, %v1809
        %v1811 = vpop.f32.mrb[0].mxu0
        %1812 = vmatprep.mubr.bf16.mxu0 %v1494
        %1813 = vmatmul.mubr.bf16.gmra.mrb[0].mxu0 %v1493
        %v1814 = vpop.f32.mrb[0].mxu0
        %v1815 = vadd.f32 %v1558, %v1814
        %v1816 = vpop.f32.mrb[0].mxu0
        %v1817 = vpop.f32.mrb[0].mxu0
        %v1818 = vadd.f32 %v1558, %v1817
        %v1819 = vpop.f32.mrb[0].mxu0
        %1820 = vmatprep.mubr.bf16.mxu0 %v1497
        %1821 = vmatmul.mubr.bf16.gmra.mrb[0].mxu0 %v1496
        %v1822 = vpop.f32.mrb[0].mxu0
        %v1823 = vadd.f32 %v1558, %v1822
        %v1824 = vpop.f32.mrb[0].mxu0
        %v1825 = vpop.f32.mrb[0].mxu0
        %v1826 = vadd.f32 %v1558, %v1825
        %v1827 = vpop.f32.mrb[0].mxu0
        %1828 = vmatprep.mubr.bf16.mxu0 %v1500
        %1829 = vmatmul.mubr.bf16.gmra.mrb[0].mxu0 %v1499
        %v1830 = vpop.f32.mrb[0].mxu0
        %v1831 = vadd.f32 %v1558, %v1830
        %v1832 = vpop.f32.mrb[0].mxu0
        %v1833 = vpop.f32.mrb[0].mxu0
        %v1834 = vadd.f32 %v1558, %v1833
        %v1835 = vpop.f32.mrb[0].mxu0
        %1836 = vmatprep.mubr.bf16.mxu0 %v1503
        %1837 = vmatmul.mubr.bf16.gmra.mrb[0].mxu0 %v1502
        %v1838 = vpop.f32.mrb[0].mxu0
        %v1839 = vadd.f32 %v1558, %v1838
        %v1840 = vpop.f32.mrb[0].mxu0
        %v1841 = vpop.f32.mrb[0].mxu0
        %v1842 = vadd.f32 %v1558, %v1841
        %v1843 = vpop.f32.mrb[0].mxu0
        %1844 = vmatprep.mubr.bf16.mxu0 %v1506
        %1845 = vmatmul.mubr.bf16.gmra.mrb[0].mxu0 %v1505
        %v1846 = vpop.f32.mrb[0].mxu0
        %v1847 = vadd.f32 %v1558, %v1846
        %v1848 = vpop.f32.mrb[0].mxu0
        %v1849 = vpop.f32.mrb[0].mxu0
        %v1850 = vadd.f32 %v1558, %v1849
        %v1851 = vpop.f32.mrb[0].mxu0
        %1852 = vmatprep.mubr.bf16.mxu0 %v1509
        %1853 = vmatmul.mubr.bf16.gmra.mrb[0].mxu0 %v1508
        %v1854 = vpop.f32.mrb[0].mxu0
        %v1855 = vadd.f32 %v1558, %v1854
        %v1856 = vpop.f32.mrb[0].mxu0
        %v1857 = vpop.f32.mrb[0].mxu0
        %v1858 = vadd.f32 %v1558, %v1857
        %v1859 = vpop.f32.mrb[0].mxu0
        %1860 = vmatprep.mubr.bf16.mxu0 %v1512
        %1861 = vmatmul.mubr.bf16.gmra.mrb[0].mxu0 %v1511
        %v1862 = vpop.f32.mrb[0].mxu0
        %v1863 = vadd.f32 %v1558, %v1862
        %v1864 = vpop.f32.mrb[0].mxu0
        %v1865 = vpop.f32.mrb[0].mxu0
        %v1866 = vadd.f32 %v1558, %v1865
        %v1867 = vpop.f32.mrb[0].mxu0
        %1868 = vmatprep.mubr.bf16.mxu0 %v1515
        %1869 = vmatmul.mubr.bf16.gmra.mrb[0].mxu0 %v1514
        %v1870 = vpop.f32.mrb[0].mxu0
        %v1871 = vadd.f32 %v1558, %v1870
        %v1872 = vpop.f32.mrb[0].mxu0
        %v1873 = vpop.f32.mrb[0].mxu0
        %v1874 = vadd.f32 %v1558, %v1873
        %v1875 = vpop.f32.mrb[0].mxu0
        %1876 = vdwg.mxu0
        %1877 = vmatprep.subr.bf16.mxu0 0
        %1878 = vmatpush1.bf16.msra.mxu0 %v1648
        %1879 = vmatprep.subr.bf16.mxu0 0
        %1880 = vmatpush1.bf16.msra.mxu0 %v1649
        %1881 = vmatprep.subr.bf16.mxu0 0
        %1882 = vmatpush1.bf16.msra.mxu0 0
        %1883 = vmatprep.subr.bf16.mxu0 0
        %1884 = vmatpush1.bf16.msra.mxu0 0
        %1885 = vmatprep.subr.bf16.mxu0 0
        %1886 = vmatpush1.bf16.msra.mxu0 0
        %1887 = vmatprep.subr.bf16.mxu0 0
        %1888 = vmatpush1.bf16.msra.mxu0 0
        %1889 = vmatprep.subr.bf16.mxu0 0
        %1890 = vmatpush1.bf16.msra.mxu0 0
        %1891 = vmatprep.subr.bf16.mxu0 0
        %1892 = vmatpush1.bf16.msra.mxu0 0
        %1893 = vmatprep.subr.bf16.mxu0 0
        %1894 = vmatpush1.bf16.msra.mxu0 0
        %1895 = vmatprep.subr.bf16.mxu0 0
        %1896 = vmatpush1.bf16.msra.mxu0 0
        %1897 = vmatprep.subr.bf16.mxu0 0
        %1898 = vmatpush1.bf16.msra.mxu0 0
        %1899 = vmatprep.subr.bf16.mxu0 0
        %1900 = vmatpush1.bf16.msra.mxu0 0
        %1901 = vmatprep.subr.bf16.mxu0 0
        %1902 = vmatpush1.bf16.msra.mxu0 0
        %1903 = vmatprep.subr.bf16.mxu0 0
        %1904 = vmatpush1.bf16.msra.mxu0 0
        %1905 = vmatprep.subr.bf16.mxu0 0
        %1906 = vmatpush1.bf16.msra.mxu0 0
        %1907 = vmatprep.subr.bf16.mxu0 0
        %1908 = vmatpush1.bf16.msra.mxu0 0
        %1909 = vmatprep.mubr.bf16.mxu0 0
        %1910 = vmatmul.mubr.bf16.gmra.mrb[0].mxu0 %v1669
        %v1911 = vpop.f32.mrb[0].mxu0
        %v1912 = vadd.f32 %v1751, %v1911
        %v1913 = vpop.f32.mrb[0].mxu0
        %v1914 = vpop.f32.mrb[0].mxu0
        %v1915 = vadd.f32 %v1754, %v1914
        %v1916 = vpop.f32.mrb[0].mxu0
        %1917 = vmatprep.mubr.bf16.mxu0 0
        %1918 = vmatmul.mubr.bf16.gmra.mrb[0].mxu0 %v1672
        %v1919 = vpop.f32.mrb[0].mxu0
        %v1920 = vadd.f32 %v1759, %v1919
        %v1921 = vpop.f32.mrb[0].mxu0
        %v1922 = vpop.f32.mrb[0].mxu0
        %v1923 = vadd.f32 %v1762, %v1922
        %v1924 = vpop.f32.mrb[0].mxu0
        %1925 = vmatprep.mubr.bf16.mxu0 0
        %1926 = vmatmul.mubr.bf16.gmra.mrb[0].mxu0 %v1675
        %v1927 = vpop.f32.mrb[0].mxu0
        %v1928 = vadd.f32 %v1767, %v1927
        %v1929 = vpop.f32.mrb[0].mxu0
        %v1930 = vpop.f32.mrb[0].mxu0
        %v1931 = vadd.f32 %v1770, %v1930
        %v1932 = vpop.f32.mrb[0].mxu0
        %1933 = vmatprep.mubr.bf16.mxu0 0
        %1934 = vmatmul.mubr.bf16.gmra.mrb[0].mxu0 %v1678
        %v1935 = vpop.f32.mrb[0].mxu0
        %v1936 = vadd.f32 %v1775, %v1935
        %v1937 = vpop.f32.mrb[0].mxu0
        %v1938 = vpop.f32.mrb[0].mxu0
        %v1939 = vadd.f32 %v1778, %v1938
        %v1940 = vpop.f32.mrb[0].mxu0
        %1941 = vmatprep.mubr.bf16.mxu0 0
        %1942 = vmatmul.mubr.bf16.gmra.mrb[0].mxu0 %v1681
        %v1943 = vpop.f32.mrb[0].mxu0
        %v1944 = vadd.f32 %v1783, %v1943
        %v1945 = vpop.f32.mrb[0].mxu0
        %v1946 = vpop.f32.mrb[0].mxu0
        %v1947 = vadd.f32 %v1786, %v1946
        %v1948 = vpop.f32.mrb[0].mxu0
        %1949 = vmatprep.mubr.bf16.mxu0 0
        %1950 = vmatmul.mubr.bf16.gmra.mrb[0].mxu0 %v1684
        %v1951 = vpop.f32.mrb[0].mxu0
        %v1952 = vadd.f32 %v1791, %v1951
        %v1953 = vpop.f32.mrb[0].mxu0
        %v1954 = vpop.f32.mrb[0].mxu0
        %v1955 = vadd.f32 %v1794, %v1954
        %v1956 = vpop.f32.mrb[0].mxu0
        %1957 = vmatprep.mubr.bf16.mxu0 0
        %1958 = vmatmul.mubr.bf16.gmra.mrb[0].mxu0 %v1687
        %v1959 = vpop.f32.mrb[0].mxu0
        %v1960 = vadd.f32 %v1799, %v1959
        %v1961 = vpop.f32.mrb[0].mxu0
        %v1962 = vpop.f32.mrb[0].mxu0
        %v1963 = vadd.f32 %v1802, %v1962
        %v1964 = vpop.f32.mrb[0].mxu0
        %1965 = vmatprep.mubr.bf16.mxu0 0
        %1966 = vmatmul.mubr.bf16.gmra.mrb[0].mxu0 %v1690
        %v1967 = vpop.f32.mrb[0].mxu0
        %v1968 = vadd.f32 %v1807, %v1967
        %v1969 = vpop.f32.mrb[0].mxu0
        %v1970 = vpop.f32.mrb[0].mxu0
        %v1971 = vadd.f32 %v1810, %v1970
        %v1972 = vpop.f32.mrb[0].mxu0
        %1973 = vmatprep.mubr.bf16.mxu0 0
        %1974 = vmatmul.mubr.bf16.gmra.mrb[0].mxu0 %v1693
        %v1975 = vpop.f32.mrb[0].mxu0
        %v1976 = vadd.f32 %v1815, %v1975
        %v1977 = vpop.f32.mrb[0].mxu0
        %v1978 = vpop.f32.mrb[0].mxu0
        %v1979 = vadd.f32 %v1818, %v1978
        %v1980 = vpop.f32.mrb[0].mxu0
        %1981 = vmatprep.mubr.bf16.mxu0 0
        %1982 = vmatmul.mubr.bf16.gmra.mrb[0].mxu0 %v1696
        %v1983 = vpop.f32.mrb[0].mxu0
        %v1984 = vadd.f32 %v1823, %v1983
        %v1985 = vpop.f32.mrb[0].mxu0
        %v1986 = vpop.f32.mrb[0].mxu0
        %v1987 = vadd.f32 %v1826, %v1986
        %v1988 = vpop.f32.mrb[0].mxu0
        %1989 = vmatprep.mubr.bf16.mxu0 0
        %1990 = vmatmul.mubr.bf16.gmra.mrb[0].mxu0 %v1699
        %v1991 = vpop.f32.mrb[0].mxu0
        %v1992 = vadd.f32 %v1831, %v1991
        %v1993 = vpop.f32.mrb[0].mxu0
        %v1994 = vpop.f32.mrb[0].mxu0
        %v1995 = vadd.f32 %v1834, %v1994
        %v1996 = vpop.f32.mrb[0].mxu0
        %1997 = vmatprep.mubr.bf16.mxu0 0
        %1998 = vmatmul.mubr.bf16.gmra.mrb[0].mxu0 %v1702
        %v1999 = vpop.f32.mrb[0].mxu0
        %v2000 = vadd.f32 %v1839, %v1999
        %v2001 = vpop.f32.mrb[0].mxu0
        %v2002 = vpop.f32.mrb[0].mxu0
        %v2003 = vadd.f32 %v1842, %v2002
        %v2004 = vpop.f32.mrb[0].mxu0
        %2005 = vmatprep.mubr.bf16.mxu0 0
        %2006 = vmatmul.mubr.bf16.gmra.mrb[0].mxu0 %v1705
        %v2007 = vpop.f32.mrb[0].mxu0
        %v2008 = vadd.f32 %v1847, %v2007
        %v2009 = vpop.f32.mrb[0].mxu0
        %v2010 = vpop.f32.mrb[0].mxu0
        %v2011 = vadd.f32 %v1850, %v2010
        %v2012 = vpop.f32.mrb[0].mxu0
        %2013 = vmatprep.mubr.bf16.mxu0 0
        %2014 = vmatmul.mubr.bf16.gmra.mrb[0].mxu0 %v1708
        %v2015 = vpop.f32.mrb[0].mxu0
        %v2016 = vadd.f32 %v1855, %v2015
        %v2017 = vpop.f32.mrb[0].mxu0
        %v2018 = vpop.f32.mrb[0].mxu0
        %v2019 = vadd.f32 %v1858, %v2018
        %v2020 = vpop.f32.mrb[0].mxu0
        %2021 = vmatprep.mubr.bf16.mxu0 0
        %2022 = vmatmul.mubr.bf16.gmra.mrb[0].mxu0 %v1711
        %v2023 = vpop.f32.mrb[0].mxu0
        %v2024 = vadd.f32 %v1863, %v2023
        %v2025 = vpop.f32.mrb[0].mxu0
        %v2026 = vpop.f32.mrb[0].mxu0
        %v2027 = vadd.f32 %v1866, %v2026
        %v2028 = vpop.f32.mrb[0].mxu0
        %2029 = vmatprep.mubr.bf16.mxu0 0
        %2030 = vmatmul.mubr.bf16.gmra.mrb[0].mxu0 %v1714
        %v2031 = vpop.f32.mrb[0].mxu0
        %v2032 = vadd.f32 %v1871, %v2031
        %v2033 = vpop.f32.mrb[0].mxu0
        %v2034 = vpop.f32.mrb[0].mxu0
        %v2035 = vadd.f32 %v1874, %v2034
        %v2036 = vpop.f32.mrb[0].mxu0
        %2037 = vdwg.mxu0
        %v2038 = vmax.f32 %v1912, 0.0
        %v2039 = vmax.f32 %v1915, 0.0
        %v2040 = vmax.f32 %v1920, 0.0
        %v2041 = vmax.f32 %v1923, 0.0
        %v2042 = vmax.f32 %v1928, 0.0
        %v2043 = vmax.f32 %v1931, 0.0
        %v2044 = vmax.f32 %v1936, 0.0
        %v2045 = vmax.f32 %v1939, 0.0
        %v2046 = vmax.f32 %v1944, 0.0
        %v2047 = vmax.f32 %v1947, 0.0
        %v2048 = vmax.f32 %v1952, 0.0
        %v2049 = vmax.f32 %v1955, 0.0
        %v2050 = vmax.f32 %v1960, 0.0
        %v2051 = vmax.f32 %v1963, 0.0
        %v2052 = vmax.f32 %v1968, 0.0
        %v2053 = vmax.f32 %v1971, 0.0
        %v2054 = vmax.f32 %v1976, 0.0
        %v2055 = vmax.f32 %v1979, 0.0
        %v2056 = vmax.f32 %v1984, 0.0
        %v2057 = vmax.f32 %v1987, 0.0
        %v2058 = vmax.f32 %v1992, 0.0
        %v2059 = vmax.f32 %v1995, 0.0
        %v2060 = vmax.f32 %v2000, 0.0
        %v2061 = vmax.f32 %v2003, 0.0
        %v2062 = vmax.f32 %v2008, 0.0
        %v2063 = vmax.f32 %v2011, 0.0
        %v2064 = vmax.f32 %v2016, 0.0
        %v2065 = vmax.f32 %v2019, 0.0
        %v2066 = vmax.f32 %v2024, 0.0
        %v2067 = vmax.f32 %v2027, 0.0
        %v2068 = vmax.f32 %v2032, 0.0
        %v2069 = vmax.f32 %v2035, 0.0
        %2070 = vst.msk [vmem:[%s312 + $0x1] sm:$0xff] %vm224, %v2038
        %2071 = vst.msk [vmem:[%s312 + $0x9] sm:$0xff] %vm224, %v2039
        %2072 = vst.msk [vmem:[%s312 + $0x19] sm:$0xff] %vm224, %v2040
        %2073 = vst.msk [vmem:[%s312 + $0x21] sm:$0xff] %vm224, %v2041
        %2074 = vst.msk [vmem:[%s312 + $0x31] sm:$0xff] %vm224, %v2042
        %2075 = vst.msk [vmem:[%s312 + $0x39] sm:$0xff] %vm224, %v2043
        %2076 = vst.msk [vmem:[%s312 + $0x49] sm:$0xff] %vm224, %v2044
        %2077 = vst.msk [vmem:[%s312 + $0x51] sm:$0xff] %vm224, %v2045
        %2078 = vst.msk [vmem:[%s312 + $0x61] sm:$0xff] %vm224, %v2046
        %2079 = vst.msk [vmem:[%s312 + $0x69] sm:$0xff] %vm224, %v2047
        %2080 = vst.msk [vmem:[%s312 + $0x79] sm:$0xff] %vm224, %v2048
        %2081 = vst.msk [vmem:[%s312 + $0x81] sm:$0xff] %vm224, %v2049
        %2082 = vst.msk [vmem:[%s312 + $0x91] sm:$0xff] %vm224, %v2050
        %2083 = vst.msk [vmem:[%s312 + $0x99] sm:$0xff] %vm224, %v2051
        %2084 = vst.msk [vmem:[%s312 + $0xa9] sm:$0xff] %vm224, %v2052
        %2085 = vst.msk [vmem:[%s312 + $0xb1] sm:$0xff] %vm224, %v2053
        %2086 = vst.msk [vmem:[%s312 + $0xc1] sm:$0xff] %vm224, %v2054
        %2087 = vst.msk [vmem:[%s312 + $0xc9] sm:$0xff] %vm224, %v2055
        %2088 = vst.msk [vmem:[%s312 + $0xd9] sm:$0xff] %vm224, %v2056
        %2089 = vst.msk [vmem:[%s312 + $0xe1] sm:$0xff] %vm224, %v2057
        %2090 = vst.msk [vmem:[%s312 + $0xf1] sm:$0xff] %vm224, %v2058
        %2091 = vst.msk [vmem:[%s312 + $0xf9] sm:$0xff] %vm224, %v2059
        %2092 = vst.msk [vmem:[%s312 + $0x109] sm:$0xff] %vm224, %v2060
        %2093 = vst.msk [vmem:[%s312 + $0x111] sm:$0xff] %vm224, %v2061
        %2094 = vst.msk [vmem:[%s312 + $0x121] sm:$0xff] %vm224, %v2062
        %2095 = vst.msk [vmem:[%s312 + $0x129] sm:$0xff] %vm224, %v2063
        %2096 = vst.msk [vmem:[%s312 + $0x139] sm:$0xff] %vm224, %v2064
        %2097 = vst.msk [vmem:[%s312 + $0x141] sm:$0xff] %vm224, %v2065
        %2098 = vst.msk [vmem:[%s312 + $0x151] sm:$0xff] %vm224, %v2066
        %2099 = vst.msk [vmem:[%s312 + $0x159] sm:$0xff] %vm224, %v2067
        %2100 = vst.msk [vmem:[%s312 + $0x169] sm:$0xff] %vm224, %v2068
        %2101 = vst.msk [vmem:[%s312 + $0x171] sm:$0xff] %vm224, %v2069
        %v2102 = vld [vmem:[#allocation2] sm:$0xff]
        %v2103 = vld [vmem:[#allocation2 + $0x8] sm:$0xff]
        %v2104 = vld [vmem:[#allocation2 + $0x10] sm:$0x3]
        %v2105 = vld [vmem:[#allocation2 + $0x18] sm:$0xff]
        %v2106 = vld [vmem:[#allocation2 + $0x20] sm:$0xff]
        %v2107 = vld [vmem:[#allocation2 + $0x28] sm:$0x3]
        %v2108 = vld [vmem:[#allocation2 + $0x30] sm:$0xff]
        %v2109 = vld [vmem:[#allocation2 + $0x38] sm:$0xff]
        %v2110 = vld [vmem:[#allocation2 + $0x40] sm:$0x3]
        %v2111 = vld [vmem:[#allocation2 + $0x48] sm:$0xff]
        %v2112 = vld [vmem:[#allocation2 + $0x50] sm:$0xff]
        %v2113 = vld [vmem:[#allocation2 + $0x58] sm:$0x3]
        %v2114 = vld [vmem:[#allocation2 + $0x60] sm:$0xff]
        %v2115 = vld [vmem:[#allocation2 + $0x68] sm:$0xff]
        %v2116 = vld [vmem:[#allocation2 + $0x70] sm:$0x3]
        %v2117 = vld [vmem:[#allocation2 + $0x78] sm:$0xff]
        %v2118 = vld [vmem:[#allocation2 + $0x80] sm:$0xff]
        %v2119 = vld [vmem:[#allocation2 + $0x88] sm:$0x3]
        %v2120 = vld [vmem:[#allocation2 + $0x90] sm:$0xff]
        %v2121 = vld [vmem:[#allocation2 + $0x98] sm:$0xff]
        %v2122 = vld [vmem:[#allocation2 + $0xa0] sm:$0x3]
        %v2123 = vld [vmem:[#allocation2 + $0xa8] sm:$0xff]
        %v2124 = vld [vmem:[#allocation2 + $0xb0] sm:$0xff]
        %v2125 = vld [vmem:[#allocation2 + $0xb8] sm:$0x3]
        %v2126 = vld [vmem:[#allocation2 + $0xc0] sm:$0xff]
        %v2127 = vld [vmem:[#allocation2 + $0xc8] sm:$0xff]
        %v2128 = vld [vmem:[#allocation2 + $0xd0] sm:$0x3]
        %v2129 = vld [vmem:[#allocation2 + $0xd8] sm:$0xff]
        %v2130 = vld [vmem:[#allocation2 + $0xe0] sm:$0xff]
        %v2131 = vld [vmem:[#allocation2 + $0xe8] sm:$0x3]
        %v2132 = vld [vmem:[#allocation2 + $0xf0] sm:$0xff]
        %v2133 = vld [vmem:[#allocation2 + $0xf8] sm:$0xff]
        %v2134 = vld [vmem:[#allocation2 + $0x100] sm:$0x3]
        %v2135 = vld [vmem:[#allocation2 + $0x108] sm:$0xff]
        %v2136 = vld [vmem:[#allocation2 + $0x110] sm:$0xff]
        %v2137 = vld [vmem:[#allocation2 + $0x118] sm:$0x3]
        %v2138 = vld [vmem:[#allocation2 + $0x120] sm:$0xff]
        %v2139 = vld [vmem:[#allocation2 + $0x128] sm:$0xff]
        %v2140 = vld [vmem:[#allocation2 + $0x130] sm:$0x3]
        %v2141 = vld [vmem:[#allocation2 + $0x138] sm:$0xff]
        %v2142 = vld [vmem:[#allocation2 + $0x140] sm:$0xff]
        %v2143 = vld [vmem:[#allocation2 + $0x148] sm:$0x3]
        %v2144 = vld [vmem:[#allocation2 + $0x150] sm:$0xff]
        %v2145 = vld [vmem:[#allocation2 + $0x158] sm:$0xff]
        %v2146 = vld [vmem:[#allocation2 + $0x160] sm:$0x3]
        %v2147 = vld [vmem:[#allocation2 + $0x168] sm:$0xff]
        %v2148 = vld [vmem:[#allocation2 + $0x170] sm:$0xff]
        %v2149 = vld [vmem:[#allocation2 + $0x178] sm:$0x3]
        %v2150 = vld [vmem:[#allocation2 + $0x180] sm:$0xff]
        %v2151 = vld [vmem:[#allocation2 + $0x188] sm:$0xff]
        %v2152 = vld [vmem:[#allocation2 + $0x190] sm:$0x3]
        %v2153 = vld [vmem:[#allocation2 + $0x198] sm:$0xff]
        %v2154 = vld [vmem:[#allocation2 + $0x1a0] sm:$0xff]
        %v2155 = vld [vmem:[#allocation2 + $0x1a8] sm:$0x3]
        %v2204 = vrot.slane %v2102, 1
        %v2205 = vrot.slane %v2103, 1
        %v2206 = vsel %vm447, %v2204, %v2205
        %v2207 = vrot.slane %v2104, 1
        %v2208 = vsel %vm447, %v2205, %v2207
        %v2209 = vrot.slane %v2105, 1
        %v2210 = vrot.slane %v2106, 1
        %v2211 = vsel %vm447, %v2209, %v2210
        %v2212 = vrot.slane %v2107, 1
        %v2213 = vsel %vm447, %v2210, %v2212
        %v2214 = vrot.slane %v2108, 1
        %v2215 = vrot.slane %v2109, 1
        %v2216 = vsel %vm447, %v2214, %v2215
        %v2217 = vrot.slane %v2110, 1
        %v2218 = vsel %vm447, %v2215, %v2217
        %v2219 = vrot.slane %v2111, 1
        %v2220 = vrot.slane %v2112, 1
        %v2221 = vsel %vm447, %v2219, %v2220
        %v2222 = vrot.slane %v2113, 1
        %v2223 = vsel %vm447, %v2220, %v2222
        %v2224 = vrot.slane %v2114, 1
        %v2225 = vrot.slane %v2115, 1
        %v2226 = vsel %vm447, %v2224, %v2225
        %v2227 = vrot.slane %v2116, 1
        %v2228 = vsel %vm447, %v2225, %v2227
        %v2229 = vrot.slane %v2117, 1
        %v2230 = vrot.slane %v2118, 1
        %v2231 = vsel %vm447, %v2229, %v2230
        %v2232 = vrot.slane %v2119, 1
        %v2233 = vsel %vm447, %v2230, %v2232
        %v2234 = vrot.slane %v2120, 1
        %v2235 = vrot.slane %v2121, 1
        %v2236 = vsel %vm447, %v2234, %v2235
        %v2237 = vrot.slane %v2122, 1
        %v2238 = vsel %vm447, %v2235, %v2237
        %v2239 = vrot.slane %v2123, 1
        %v2240 = vrot.slane %v2124, 1
        %v2241 = vsel %vm447, %v2239, %v2240
        %v2242 = vrot.slane %v2125, 1
        %v2243 = vsel %vm447, %v2240, %v2242
        %v2244 = vrot.slane %v2126, 1
        %v2245 = vrot.slane %v2127, 1
        %v2246 = vsel %vm447, %v2244, %v2245
        %v2247 = vrot.slane %v2128, 1
        %v2248 = vsel %vm447, %v2245, %v2247
        %v2249 = vrot.slane %v2129, 1
        %v2250 = vrot.slane %v2130, 1
        %v2251 = vsel %vm447, %v2249, %v2250
        %v2252 = vrot.slane %v2131, 1
        %v2253 = vsel %vm447, %v2250, %v2252
        %v2254 = vrot.slane %v2132, 1
        %v2255 = vrot.slane %v2133, 1
        %v2256 = vsel %vm447, %v2254, %v2255
        %v2257 = vrot.slane %v2134, 1
        %v2258 = vsel %vm447, %v2255, %v2257
        %v2259 = vrot.slane %v2135, 1
        %v2260 = vrot.slane %v2136, 1
        %v2261 = vsel %vm447, %v2259, %v2260
        %v2262 = vrot.slane %v2137, 1
        %v2263 = vsel %vm447, %v2260, %v2262
        %v2264 = vrot.slane %v2138, 1
        %v2265 = vrot.slane %v2139, 1
        %v2266 = vsel %vm447, %v2264, %v2265
        %v2267 = vrot.slane %v2140, 1
        %v2268 = vsel %vm447, %v2265, %v2267
        %v2269 = vrot.slane %v2141, 1
        %v2270 = vrot.slane %v2142, 1
        %v2271 = vsel %vm447, %v2269, %v2270
        %v2272 = vrot.slane %v2143, 1
        %v2273 = vsel %vm447, %v2270, %v2272
        %v2274 = vrot.slane %v2144, 1
        %v2275 = vrot.slane %v2145, 1
        %v2276 = vsel %vm447, %v2274, %v2275
        %v2277 = vrot.slane %v2146, 1
        %v2278 = vsel %vm447, %v2275, %v2277
        %v2279 = vrot.slane %v2147, 1
        %v2280 = vrot.slane %v2148, 1
        %v2281 = vsel %vm447, %v2279, %v2280
        %v2282 = vrot.slane %v2149, 1
        %v2283 = vsel %vm447, %v2280, %v2282
        %2284 = vrot.lane.b32.xlu0 %v2206, 32
        %v2285 = vpop.permute.xlu0 %2284
        %2286 = vrot.lane.b32.xlu0 %v2208, 32
        %v2287 = vpop.permute.xlu0 %2286
        %2288 = vrot.lane.b32.xlu0 %v2211, 32
        %v2289 = vpop.permute.xlu0 %2288
        %2290 = vrot.lane.b32.xlu0 %v2213, 32
        %v2291 = vpop.permute.xlu0 %2290
        %2292 = vrot.lane.b32.xlu0 %v2216, 32
        %v2293 = vpop.permute.xlu0 %2292
        %2294 = vrot.lane.b32.xlu0 %v2218, 32
        %v2295 = vpop.permute.xlu0 %2294
        %2296 = vrot.lane.b32.xlu0 %v2221, 32
        %v2297 = vpop.permute.xlu0 %2296
        %2298 = vrot.lane.b32.xlu0 %v2223, 32
        %v2299 = vpop.permute.xlu0 %2298
        %2300 = vrot.lane.b32.xlu0 %v2226, 32
        %v2301 = vpop.permute.xlu0 %2300
        %2302 = vrot.lane.b32.xlu0 %v2228, 32
        %v2303 = vpop.permute.xlu0 %2302
        %2304 = vrot.lane.b32.xlu0 %v2231, 32
        %v2305 = vpop.permute.xlu0 %2304
        %2306 = vrot.lane.b32.xlu0 %v2233, 32
        %v2307 = vpop.permute.xlu0 %2306
        %2308 = vrot.lane.b32.xlu0 %v2236, 32
        %v2309 = vpop.permute.xlu0 %2308
        %2310 = vrot.lane.b32.xlu0 %v2238, 32
        %v2311 = vpop.permute.xlu0 %2310
        %2312 = vrot.lane.b32.xlu0 %v2241, 32
        %v2313 = vpop.permute.xlu0 %2312
        %2314 = vrot.lane.b32.xlu0 %v2243, 32
        %v2315 = vpop.permute.xlu0 %2314
        %2316 = vrot.lane.b32.xlu0 %v2246, 32
        %v2317 = vpop.permute.xlu0 %2316
        %2318 = vrot.lane.b32.xlu0 %v2248, 32
        %v2319 = vpop.permute.xlu0 %2318
        %2320 = vrot.lane.b32.xlu0 %v2251, 32
        %v2321 = vpop.permute.xlu0 %2320
        %2322 = vrot.lane.b32.xlu0 %v2253, 32
        %v2323 = vpop.permute.xlu0 %2322
        %2324 = vrot.lane.b32.xlu0 %v2256, 32
        %v2325 = vpop.permute.xlu0 %2324
        %2326 = vrot.lane.b32.xlu0 %v2258, 32
        %v2327 = vpop.permute.xlu0 %2326
        %2328 = vrot.lane.b32.xlu0 %v2261, 32
        %v2329 = vpop.permute.xlu0 %2328
        %2330 = vrot.lane.b32.xlu0 %v2263, 32
        %v2331 = vpop.permute.xlu0 %2330
        %2332 = vrot.lane.b32.xlu0 %v2266, 32
        %v2333 = vpop.permute.xlu0 %2332
        %2334 = vrot.lane.b32.xlu0 %v2268, 32
        %v2335 = vpop.permute.xlu0 %2334
        %2336 = vrot.lane.b32.xlu0 %v2271, 32
        %v2337 = vpop.permute.xlu0 %2336
        %2338 = vrot.lane.b32.xlu0 %v2273, 32
        %v2339 = vpop.permute.xlu0 %2338
        %2340 = vrot.lane.b32.xlu0 %v2276, 32
        %v2341 = vpop.permute.xlu0 %2340
        %2342 = vrot.lane.b32.xlu0 %v2278, 32
        %v2343 = vpop.permute.xlu0 %2342
        %2344 = vrot.lane.b32.xlu0 %v2281, 32
        %v2345 = vpop.permute.xlu0 %2344
        %2346 = vrot.lane.b32.xlu0 %v2283, 32
        %v2347 = vpop.permute.xlu0 %2346
        %v2380 = vrot.slane %v2102, 2
        %v2381 = vrot.slane %v2103, 2
        %v2382 = vsel %vm624, %v2380, %v2381
        %v2383 = vrot.slane %v2104, 2
        %v2384 = vsel %vm624, %v2381, %v2383
        %v2385 = vrot.slane %v2105, 2
        %v2386 = vrot.slane %v2106, 2
        %v2387 = vsel %vm624, %v2385, %v2386
        %v2388 = vrot.slane %v2107, 2
        %v2389 = vsel %vm624, %v2386, %v2388
        %v2390 = vrot.slane %v2108, 2
        %v2391 = vrot.slane %v2109, 2
        %v2392 = vsel %vm624, %v2390, %v2391
        %v2393 = vrot.slane %v2110, 2
        %v2394 = vsel %vm624, %v2391, %v2393
        %v2395 = vrot.slane %v2111, 2
        %v2396 = vrot.slane %v2112, 2
        %v2397 = vsel %vm624, %v2395, %v2396
        %v2398 = vrot.slane %v2113, 2
        %v2399 = vsel %vm624, %v2396, %v2398
        %v2400 = vrot.slane %v2114, 2
        %v2401 = vrot.slane %v2115, 2
        %v2402 = vsel %vm624, %v2400, %v2401
        %v2403 = vrot.slane %v2116, 2
        %v2404 = vsel %vm624, %v2401, %v2403
        %v2405 = vrot.slane %v2117, 2
        %v2406 = vrot.slane %v2118, 2
        %v2407 = vsel %vm624, %v2405, %v2406
        %v2408 = vrot.slane %v2119, 2
        %v2409 = vsel %vm624, %v2406, %v2408
        %v2410 = vrot.slane %v2120, 2
        %v2411 = vrot.slane %v2121, 2
        %v2412 = vsel %vm624, %v2410, %v2411
        %v2413 = vrot.slane %v2122, 2
        %v2414 = vsel %vm624, %v2411, %v2413
        %v2415 = vrot.slane %v2123, 2
        %v2416 = vrot.slane %v2124, 2
        %v2417 = vsel %vm624, %v2415, %v2416
        %v2418 = vrot.slane %v2125, 2
        %v2419 = vsel %vm624, %v2416, %v2418
        %v2420 = vrot.slane %v2126, 2
        %v2421 = vrot.slane %v2127, 2
        %v2422 = vsel %vm624, %v2420, %v2421
        %v2423 = vrot.slane %v2128, 2
        %v2424 = vsel %vm624, %v2421, %v2423
        %v2425 = vrot.slane %v2129, 2
        %v2426 = vrot.slane %v2130, 2
        %v2427 = vsel %vm624, %v2425, %v2426
        %v2428 = vrot.slane %v2131, 2
        %v2429 = vsel %vm624, %v2426, %v2428
        %v2430 = vrot.slane %v2132, 2
        %v2431 = vrot.slane %v2133, 2
        %v2432 = vsel %vm624, %v2430, %v2431
        %v2433 = vrot.slane %v2134, 2
        %v2434 = vsel %vm624, %v2431, %v2433
        %v2435 = vrot.slane %v2135, 2
        %v2436 = vrot.slane %v2136, 2
        %v2437 = vsel %vm624, %v2435, %v2436
        %v2438 = vrot.slane %v2137, 2
        %v2439 = vsel %vm624, %v2436, %v2438
        %v2440 = vrot.slane %v2138, 2
        %v2441 = vrot.slane %v2139, 2
        %v2442 = vsel %vm624, %v2440, %v2441
        %v2443 = vrot.slane %v2140, 2
        %v2444 = vsel %vm624, %v2441, %v2443
        %v2445 = vrot.slane %v2141, 2
        %v2446 = vrot.slane %v2142, 2
        %v2447 = vsel %vm624, %v2445, %v2446
        %v2448 = vrot.slane %v2143, 2
        %v2449 = vsel %vm624, %v2446, %v2448
        %v2450 = vrot.slane %v2144, 2
        %v2451 = vrot.slane %v2145, 2
        %v2452 = vsel %vm624, %v2450, %v2451
        %v2453 = vrot.slane %v2146, 2
        %v2454 = vsel %vm624, %v2451, %v2453
        %v2455 = vrot.slane %v2147, 2
        %v2456 = vrot.slane %v2148, 2
        %v2457 = vsel %vm624, %v2455, %v2456
        %v2458 = vrot.slane %v2149, 2
        %v2459 = vsel %vm624, %v2456, %v2458
        %2460 = vrot.lane.b32.xlu0 %v2382, 64
        %v2461 = vpop.permute.xlu0 %2460
        %2462 = vrot.lane.b32.xlu0 %v2384, 64
        %v2463 = vpop.permute.xlu0 %2462
        %2464 = vrot.lane.b32.xlu0 %v2387, 64
        %v2465 = vpop.permute.xlu0 %2464
        %2466 = vrot.lane.b32.xlu0 %v2389, 64
        %v2467 = vpop.permute.xlu0 %2466
        %2468 = vrot.lane.b32.xlu0 %v2392, 64
        %v2469 = vpop.permute.xlu0 %2468
        %2470 = vrot.lane.b32.xlu0 %v2394, 64
        %v2471 = vpop.permute.xlu0 %2470
        %2472 = vrot.lane.b32.xlu0 %v2397, 64
        %v2473 = vpop.permute.xlu0 %2472
        %2474 = vrot.lane.b32.xlu0 %v2399, 64
        %v2475 = vpop.permute.xlu0 %2474
        %2476 = vrot.lane.b32.xlu0 %v2402, 64
        %v2477 = vpop.permute.xlu0 %2476
        %2478 = vrot.lane.b32.xlu0 %v2404, 64
        %v2479 = vpop.permute.xlu0 %2478
        %2480 = vrot.lane.b32.xlu0 %v2407, 64
        %v2481 = vpop.permute.xlu0 %2480
        %2482 = vrot.lane.b32.xlu0 %v2409, 64
        %v2483 = vpop.permute.xlu0 %2482
        %2484 = vrot.lane.b32.xlu0 %v2412, 64
        %v2485 = vpop.permute.xlu0 %2484
        %2486 = vrot.lane.b32.xlu0 %v2414, 64
        %v2487 = vpop.permute.xlu0 %2486
        %2488 = vrot.lane.b32.xlu0 %v2417, 64
        %v2489 = vpop.permute.xlu0 %2488
        %2490 = vrot.lane.b32.xlu0 %v2419, 64
        %v2491 = vpop.permute.xlu0 %2490
        %2492 = vrot.lane.b32.xlu0 %v2422, 64
        %v2493 = vpop.permute.xlu0 %2492
        %2494 = vrot.lane.b32.xlu0 %v2424, 64
        %v2495 = vpop.permute.xlu0 %2494
        %2496 = vrot.lane.b32.xlu0 %v2427, 64
        %v2497 = vpop.permute.xlu0 %2496
        %2498 = vrot.lane.b32.xlu0 %v2429, 64
        %v2499 = vpop.permute.xlu0 %2498
        %2500 = vrot.lane.b32.xlu0 %v2432, 64
        %v2501 = vpop.permute.xlu0 %2500
        %2502 = vrot.lane.b32.xlu0 %v2434, 64
        %v2503 = vpop.permute.xlu0 %2502
        %2504 = vrot.lane.b32.xlu0 %v2437, 64
        %v2505 = vpop.permute.xlu0 %2504
        %2506 = vrot.lane.b32.xlu0 %v2439, 64
        %v2507 = vpop.permute.xlu0 %2506
        %2508 = vrot.lane.b32.xlu0 %v2442, 64
        %v2509 = vpop.permute.xlu0 %2508
        %2510 = vrot.lane.b32.xlu0 %v2444, 64
        %v2511 = vpop.permute.xlu0 %2510
        %2512 = vrot.lane.b32.xlu0 %v2447, 64
        %v2513 = vpop.permute.xlu0 %2512
        %2514 = vrot.lane.b32.xlu0 %v2449, 64
        %v2515 = vpop.permute.xlu0 %2514
        %2516 = vrot.lane.b32.xlu0 %v2452, 64
        %v2517 = vpop.permute.xlu0 %2516
        %2518 = vrot.lane.b32.xlu0 %v2454, 64
        %v2519 = vpop.permute.xlu0 %2518
        %2520 = vrot.lane.b32.xlu0 %v2457, 64
        %v2521 = vpop.permute.xlu0 %2520
        %2522 = vrot.lane.b32.xlu0 %v2459, 64
        %v2523 = vpop.permute.xlu0 %2522
        %2558 = vrot.lane.b32.xlu0 %v2105, 96
        %v2559 = vpop.permute.xlu0 %2558
        %2560 = vrot.lane.b32.xlu0 %v2106, 96
        %v2561 = vpop.permute.xlu0 %2560
        %2562 = vrot.lane.b32.xlu0 %v2108, 96
        %v2563 = vpop.permute.xlu0 %2562
        %2564 = vrot.lane.b32.xlu0 %v2109, 96
        %v2565 = vpop.permute.xlu0 %2564
        %2566 = vrot.lane.b32.xlu0 %v2111, 96
        %v2567 = vpop.permute.xlu0 %2566
        %2568 = vrot.lane.b32.xlu0 %v2112, 96
        %v2569 = vpop.permute.xlu0 %2568
        %2570 = vrot.lane.b32.xlu0 %v2114, 96
        %v2571 = vpop.permute.xlu0 %2570
        %2572 = vrot.lane.b32.xlu0 %v2115, 96
        %v2573 = vpop.permute.xlu0 %2572
        %2574 = vrot.lane.b32.xlu0 %v2117, 96
        %v2575 = vpop.permute.xlu0 %2574
        %2576 = vrot.lane.b32.xlu0 %v2118, 96
        %v2577 = vpop.permute.xlu0 %2576
        %2578 = vrot.lane.b32.xlu0 %v2120, 96
        %v2579 = vpop.permute.xlu0 %2578
        %2580 = vrot.lane.b32.xlu0 %v2121, 96
        %v2581 = vpop.permute.xlu0 %2580
        %2582 = vrot.lane.b32.xlu0 %v2123, 96
        %v2583 = vpop.permute.xlu0 %2582
        %2584 = vrot.lane.b32.xlu0 %v2124, 96
        %v2585 = vpop.permute.xlu0 %2584
        %2586 = vrot.lane.b32.xlu0 %v2126, 96
        %v2587 = vpop.permute.xlu0 %2586
        %2588 = vrot.lane.b32.xlu0 %v2127, 96
        %v2589 = vpop.permute.xlu0 %2588
        %2590 = vrot.lane.b32.xlu0 %v2129, 96
        %v2591 = vpop.permute.xlu0 %2590
        %2592 = vrot.lane.b32.xlu0 %v2130, 96
        %v2593 = vpop.permute.xlu0 %2592
        %2594 = vrot.lane.b32.xlu0 %v2132, 96
        %v2595 = vpop.permute.xlu0 %2594
        %2596 = vrot.lane.b32.xlu0 %v2133, 96
        %v2597 = vpop.permute.xlu0 %2596
        %2598 = vrot.lane.b32.xlu0 %v2135, 96
        %v2599 = vpop.permute.xlu0 %2598
        %2600 = vrot.lane.b32.xlu0 %v2136, 96
        %v2601 = vpop.permute.xlu0 %2600
        %2602 = vrot.lane.b32.xlu0 %v2138, 96
        %v2603 = vpop.permute.xlu0 %2602
        %2604 = vrot.lane.b32.xlu0 %v2139, 96
        %v2605 = vpop.permute.xlu0 %2604
        %2606 = vrot.lane.b32.xlu0 %v2141, 96
        %v2607 = vpop.permute.xlu0 %2606
        %2608 = vrot.lane.b32.xlu0 %v2142, 96
        %v2609 = vpop.permute.xlu0 %2608
        %2610 = vrot.lane.b32.xlu0 %v2144, 96
        %v2611 = vpop.permute.xlu0 %2610
        %2612 = vrot.lane.b32.xlu0 %v2145, 96
        %v2613 = vpop.permute.xlu0 %2612
        %2614 = vrot.lane.b32.xlu0 %v2147, 96
        %v2615 = vpop.permute.xlu0 %2614
        %2616 = vrot.lane.b32.xlu0 %v2148, 96
        %v2617 = vpop.permute.xlu0 %2616
        %2618 = vrot.lane.b32.xlu0 %v2150, 96
        %v2619 = vpop.permute.xlu0 %2618
        %2620 = vrot.lane.b32.xlu0 %v2151, 96
        %v2621 = vpop.permute.xlu0 %2620
        %v2655 = vrot.slane %v2150, 1
        %v2656 = vrot.slane %v2151, 1
        %v2657 = vsel %vm447, %v2655, %v2656
        %v2658 = vrot.slane %v2152, 1
        %v2659 = vsel %vm447, %v2656, %v2658
        %v2692 = vrot.slane %v2150, 2
        %v2693 = vrot.slane %v2151, 2
        %v2694 = vsel %vm624, %v2692, %v2693
        %v2695 = vrot.slane %v2152, 2
        %v2696 = vsel %vm624, %v2693, %v2695
        %2697 = vrot.lane.b32.xlu0 %v2387, 32
        %v2698 = vpop.permute.xlu0 %2697
        %2699 = vrot.lane.b32.xlu0 %v2389, 32
        %v2700 = vpop.permute.xlu0 %2699
        %2701 = vrot.lane.b32.xlu0 %v2392, 32
        %v2702 = vpop.permute.xlu0 %2701
        %2703 = vrot.lane.b32.xlu0 %v2394, 32
        %v2704 = vpop.permute.xlu0 %2703
        %2705 = vrot.lane.b32.xlu0 %v2397, 32
        %v2706 = vpop.permute.xlu0 %2705
        %2707 = vrot.lane.b32.xlu0 %v2399, 32
        %v2708 = vpop.permute.xlu0 %2707
        %2709 = vrot.lane.b32.xlu0 %v2402, 32
        %v2710 = vpop.permute.xlu0 %2709
        %2711 = vrot.lane.b32.xlu0 %v2404, 32
        %v2712 = vpop.permute.xlu0 %2711
        %2713 = vrot.lane.b32.xlu0 %v2407, 32
        %v2714 = vpop.permute.xlu0 %2713
        %2715 = vrot.lane.b32.xlu0 %v2409, 32
        %v2716 = vpop.permute.xlu0 %2715
        %2717 = vrot.lane.b32.xlu0 %v2412, 32
        %v2718 = vpop.permute.xlu0 %2717
        %2719 = vrot.lane.b32.xlu0 %v2414, 32
        %v2720 = vpop.permute.xlu0 %2719
        %2721 = vrot.lane.b32.xlu0 %v2417, 32
        %v2722 = vpop.permute.xlu0 %2721
        %2723 = vrot.lane.b32.xlu0 %v2419, 32
        %v2724 = vpop.permute.xlu0 %2723
        %2725 = vrot.lane.b32.xlu0 %v2422, 32
        %v2726 = vpop.permute.xlu0 %2725
        %2727 = vrot.lane.b32.xlu0 %v2424, 32
        %v2728 = vpop.permute.xlu0 %2727
        %2729 = vrot.lane.b32.xlu0 %v2427, 32
        %v2730 = vpop.permute.xlu0 %2729
        %2731 = vrot.lane.b32.xlu0 %v2429, 32
        %v2732 = vpop.permute.xlu0 %2731
        %2733 = vrot.lane.b32.xlu0 %v2432, 32
        %v2734 = vpop.permute.xlu0 %2733
        %2735 = vrot.lane.b32.xlu0 %v2434, 32
        %v2736 = vpop.permute.xlu0 %2735
        %2737 = vrot.lane.b32.xlu0 %v2437, 32
        %v2738 = vpop.permute.xlu0 %2737
        %2739 = vrot.lane.b32.xlu0 %v2439, 32
        %v2740 = vpop.permute.xlu0 %2739
        %2741 = vrot.lane.b32.xlu0 %v2442, 32
        %v2742 = vpop.permute.xlu0 %2741
        %2743 = vrot.lane.b32.xlu0 %v2444, 32
        %v2744 = vpop.permute.xlu0 %2743
        %2745 = vrot.lane.b32.xlu0 %v2447, 32
        %v2746 = vpop.permute.xlu0 %2745
        %2747 = vrot.lane.b32.xlu0 %v2449, 32
        %v2748 = vpop.permute.xlu0 %2747
        %2749 = vrot.lane.b32.xlu0 %v2452, 32
        %v2750 = vpop.permute.xlu0 %2749
        %2751 = vrot.lane.b32.xlu0 %v2454, 32
        %v2752 = vpop.permute.xlu0 %2751
        %2753 = vrot.lane.b32.xlu0 %v2457, 32
        %v2754 = vpop.permute.xlu0 %2753
        %2755 = vrot.lane.b32.xlu0 %v2459, 32
        %v2756 = vpop.permute.xlu0 %2755
        %2757 = vrot.lane.b32.xlu0 %v2694, 32
        %v2758 = vpop.permute.xlu0 %2757
        %2759 = vrot.lane.b32.xlu0 %v2696, 32
        %v2760 = vpop.permute.xlu0 %2759
        %2795 = vrot.lane.b32.xlu0 %v2108, 64
        %v2796 = vpop.permute.xlu0 %2795
        %2797 = vrot.lane.b32.xlu0 %v2109, 64
        %v2798 = vpop.permute.xlu0 %2797
        %2799 = vrot.lane.b32.xlu0 %v2111, 64
        %v2800 = vpop.permute.xlu0 %2799
        %2801 = vrot.lane.b32.xlu0 %v2112, 64
        %v2802 = vpop.permute.xlu0 %2801
        %2803 = vrot.lane.b32.xlu0 %v2114, 64
        %v2804 = vpop.permute.xlu0 %2803
        %2805 = vrot.lane.b32.xlu0 %v2115, 64
        %v2806 = vpop.permute.xlu0 %2805
        %2807 = vrot.lane.b32.xlu0 %v2117, 64
        %v2808 = vpop.permute.xlu0 %2807
        %2809 = vrot.lane.b32.xlu0 %v2118, 64
        %v2810 = vpop.permute.xlu0 %2809
        %2811 = vrot.lane.b32.xlu0 %v2120, 64
        %v2812 = vpop.permute.xlu0 %2811
        %2813 = vrot.lane.b32.xlu0 %v2121, 64
        %v2814 = vpop.permute.xlu0 %2813
        %2815 = vrot.lane.b32.xlu0 %v2123, 64
        %v2816 = vpop.permute.xlu0 %2815
        %2817 = vrot.lane.b32.xlu0 %v2124, 64
        %v2818 = vpop.permute.xlu0 %2817
        %2819 = vrot.lane.b32.xlu0 %v2126, 64
        %v2820 = vpop.permute.xlu0 %2819
        %2821 = vrot.lane.b32.xlu0 %v2127, 64
        %v2822 = vpop.permute.xlu0 %2821
        %2823 = vrot.lane.b32.xlu0 %v2129, 64
        %v2824 = vpop.permute.xlu0 %2823
        %2825 = vrot.lane.b32.xlu0 %v2130, 64
        %v2826 = vpop.permute.xlu0 %2825
        %2827 = vrot.lane.b32.xlu0 %v2132, 64
        %v2828 = vpop.permute.xlu0 %2827
        %2829 = vrot.lane.b32.xlu0 %v2133, 64
        %v2830 = vpop.permute.xlu0 %2829
        %2831 = vrot.lane.b32.xlu0 %v2135, 64
        %v2832 = vpop.permute.xlu0 %2831
        %2833 = vrot.lane.b32.xlu0 %v2136, 64
        %v2834 = vpop.permute.xlu0 %2833
        %2835 = vrot.lane.b32.xlu0 %v2138, 64
        %v2836 = vpop.permute.xlu0 %2835
        %2837 = vrot.lane.b32.xlu0 %v2139, 64
        %v2838 = vpop.permute.xlu0 %2837
        %2839 = vrot.lane.b32.xlu0 %v2141, 64
        %v2840 = vpop.permute.xlu0 %2839
        %2841 = vrot.lane.b32.xlu0 %v2142, 64
        %v2842 = vpop.permute.xlu0 %2841
        %2843 = vrot.lane.b32.xlu0 %v2144, 64
        %v2844 = vpop.permute.xlu0 %2843
        %2845 = vrot.lane.b32.xlu0 %v2145, 64
        %v2846 = vpop.permute.xlu0 %2845
        %2847 = vrot.lane.b32.xlu0 %v2147, 64
        %v2848 = vpop.permute.xlu0 %2847
        %2849 = vrot.lane.b32.xlu0 %v2148, 64
        %v2850 = vpop.permute.xlu0 %2849
        %2851 = vrot.lane.b32.xlu0 %v2150, 64
        %v2852 = vpop.permute.xlu0 %2851
        %2853 = vrot.lane.b32.xlu0 %v2151, 64
        %v2854 = vpop.permute.xlu0 %2853
        %2855 = vrot.lane.b32.xlu0 %v2153, 64
        %v2856 = vpop.permute.xlu0 %2855
        %2857 = vrot.lane.b32.xlu0 %v2154, 64
        %v2858 = vpop.permute.xlu0 %2857
        %v2892 = vrot.slane %v2153, 1
        %v2893 = vrot.slane %v2154, 1
        %v2894 = vsel %vm447, %v2892, %v2893
        %v2895 = vrot.slane %v2155, 1
        %v2896 = vsel %vm447, %v2893, %v2895
        %2897 = vrot.lane.b32.xlu0 %v2216, 96
        %v2898 = vpop.permute.xlu0 %2897
        %2899 = vrot.lane.b32.xlu0 %v2218, 96
        %v2900 = vpop.permute.xlu0 %2899
        %2901 = vrot.lane.b32.xlu0 %v2221, 96
        %v2902 = vpop.permute.xlu0 %2901
        %2903 = vrot.lane.b32.xlu0 %v2223, 96
        %v2904 = vpop.permute.xlu0 %2903
        %2905 = vrot.lane.b32.xlu0 %v2226, 96
        %v2906 = vpop.permute.xlu0 %2905
        %2907 = vrot.lane.b32.xlu0 %v2228, 96
        %v2908 = vpop.permute.xlu0 %2907
        %2909 = vrot.lane.b32.xlu0 %v2231, 96
        %v2910 = vpop.permute.xlu0 %2909
        %2911 = vrot.lane.b32.xlu0 %v2233, 96
        %v2912 = vpop.permute.xlu0 %2911
        %2913 = vrot.lane.b32.xlu0 %v2236, 96
        %v2914 = vpop.permute.xlu0 %2913
        %2915 = vrot.lane.b32.xlu0 %v2238, 96
        %v2916 = vpop.permute.xlu0 %2915
        %2917 = vrot.lane.b32.xlu0 %v2241, 96
        %v2918 = vpop.permute.xlu0 %2917
        %2919 = vrot.lane.b32.xlu0 %v2243, 96
        %v2920 = vpop.permute.xlu0 %2919
        %2921 = vrot.lane.b32.xlu0 %v2246, 96
        %v2922 = vpop.permute.xlu0 %2921
        %2923 = vrot.lane.b32.xlu0 %v2248, 96
        %v2924 = vpop.permute.xlu0 %2923
        %2925 = vrot.lane.b32.xlu0 %v2251, 96
        %v2926 = vpop.permute.xlu0 %2925
        %2927 = vrot.lane.b32.xlu0 %v2253, 96
        %v2928 = vpop.permute.xlu0 %2927
        %2929 = vrot.lane.b32.xlu0 %v2256, 96
        %v2930 = vpop.permute.xlu0 %2929
        %2931 = vrot.lane.b32.xlu0 %v2258, 96
        %v2932 = vpop.permute.xlu0 %2931
        %2933 = vrot.lane.b32.xlu0 %v2261, 96
        %v2934 = vpop.permute.xlu0 %2933
        %2935 = vrot.lane.b32.xlu0 %v2263, 96
        %v2936 = vpop.permute.xlu0 %2935
        %2937 = vrot.lane.b32.xlu0 %v2266, 96
        %v2938 = vpop.permute.xlu0 %2937
        %2939 = vrot.lane.b32.xlu0 %v2268, 96
        %v2940 = vpop.permute.xlu0 %2939
        %2941 = vrot.lane.b32.xlu0 %v2271, 96
        %v2942 = vpop.permute.xlu0 %2941
        %2943 = vrot.lane.b32.xlu0 %v2273, 96
        %v2944 = vpop.permute.xlu0 %2943
        %2945 = vrot.lane.b32.xlu0 %v2276, 96
        %v2946 = vpop.permute.xlu0 %2945
        %2947 = vrot.lane.b32.xlu0 %v2278, 96
        %v2948 = vpop.permute.xlu0 %2947
        %2949 = vrot.lane.b32.xlu0 %v2281, 96
        %v2950 = vpop.permute.xlu0 %2949
        %2951 = vrot.lane.b32.xlu0 %v2283, 96
        %v2952 = vpop.permute.xlu0 %2951
        %2953 = vrot.lane.b32.xlu0 %v2657, 96
        %v2954 = vpop.permute.xlu0 %2953
        %2955 = vrot.lane.b32.xlu0 %v2659, 96
        %v2956 = vpop.permute.xlu0 %2955
        %2957 = vrot.lane.b32.xlu0 %v2894, 96
        %v2958 = vpop.permute.xlu0 %2957
        %2959 = vrot.lane.b32.xlu0 %v2896, 96
        %v2960 = vpop.permute.xlu0 %2959
        %v2993 = vrot.slane %v2153, 2
        %v2994 = vrot.slane %v2154, 2
        %v2995 = vsel %vm624, %v2993, %v2994
        %v2996 = vrot.slane %v2155, 2
        %v2997 = vsel %vm624, %v2994, %v2996
        %v3030 = vsel %vm224, %v2102, %v2285
        %v3031 = vsel %vm224, %v2103, %v2287
        %v3032 = vsel %vm224, %v2105, %v2289
        %v3033 = vsel %vm224, %v2106, %v2291
        %v3034 = vsel %vm224, %v2108, %v2293
        %v3035 = vsel %vm224, %v2109, %v2295
        %v3036 = vsel %vm224, %v2111, %v2297
        %v3037 = vsel %vm224, %v2112, %v2299
        %v3038 = vsel %vm224, %v2114, %v2301
        %v3039 = vsel %vm224, %v2115, %v2303
        %v3040 = vsel %vm224, %v2117, %v2305
        %v3041 = vsel %vm224, %v2118, %v2307
        %v3042 = vsel %vm224, %v2120, %v2309
        %v3043 = vsel %vm224, %v2121, %v2311
        %v3044 = vsel %vm224, %v2123, %v2313
        %v3045 = vsel %vm224, %v2124, %v2315
        %v3046 = vsel %vm224, %v2126, %v2317
        %v3047 = vsel %vm224, %v2127, %v2319
        %v3048 = vsel %vm224, %v2129, %v2321
        %v3049 = vsel %vm224, %v2130, %v2323
        %v3050 = vsel %vm224, %v2132, %v2325
        %v3051 = vsel %vm224, %v2133, %v2327
        %v3052 = vsel %vm224, %v2135, %v2329
        %v3053 = vsel %vm224, %v2136, %v2331
        %v3054 = vsel %vm224, %v2138, %v2333
        %v3055 = vsel %vm224, %v2139, %v2335
        %v3056 = vsel %vm224, %v2141, %v2337
        %v3057 = vsel %vm224, %v2142, %v2339
        %v3058 = vsel %vm224, %v2144, %v2341
        %v3059 = vsel %vm224, %v2145, %v2343
        %v3060 = vsel %vm224, %v2147, %v2345
        %v3061 = vsel %vm224, %v2148, %v2347
        %v3062 = vsel %vm1307, %v3030, %v2461
        %v3063 = vsel %vm1307, %v3031, %v2463
        %v3064 = vsel %vm1307, %v3032, %v2465
        %v3065 = vsel %vm1307, %v3033, %v2467
        %v3066 = vsel %vm1307, %v3034, %v2469
        %v3067 = vsel %vm1307, %v3035, %v2471
        %v3068 = vsel %vm1307, %v3036, %v2473
        %v3069 = vsel %vm1307, %v3037, %v2475
        %v3070 = vsel %vm1307, %v3038, %v2477
        %v3071 = vsel %vm1307, %v3039, %v2479
        %v3072 = vsel %vm1307, %v3040, %v2481
        %v3073 = vsel %vm1307, %v3041, %v2483
        %v3074 = vsel %vm1307, %v3042, %v2485
        %v3075 = vsel %vm1307, %v3043, %v2487
        %v3076 = vsel %vm1307, %v3044, %v2489
        %v3077 = vsel %vm1307, %v3045, %v2491
        %v3078 = vsel %vm1307, %v3046, %v2493
        %v3079 = vsel %vm1307, %v3047, %v2495
        %v3080 = vsel %vm1307, %v3048, %v2497
        %v3081 = vsel %vm1307, %v3049, %v2499
        %v3082 = vsel %vm1307, %v3050, %v2501
        %v3083 = vsel %vm1307, %v3051, %v2503
        %v3084 = vsel %vm1307, %v3052, %v2505
        %v3085 = vsel %vm1307, %v3053, %v2507
        %v3086 = vsel %vm1307, %v3054, %v2509
        %v3087 = vsel %vm1307, %v3055, %v2511
        %v3088 = vsel %vm1307, %v3056, %v2513
        %v3089 = vsel %vm1307, %v3057, %v2515
        %v3090 = vsel %vm1307, %v3058, %v2517
        %v3091 = vsel %vm1307, %v3059, %v2519
        %v3092 = vsel %vm1307, %v3060, %v2521
        %v3093 = vsel %vm1307, %v3061, %v2523
        %v3094 = vsel %vm1340, %v3062, %v2559
        %v3095 = vsel %vm1340, %v3063, %v2561
        %v3096 = vsel %vm1340, %v3064, %v2563
        %v3097 = vsel %vm1340, %v3065, %v2565
        %v3098 = vsel %vm1340, %v3066, %v2567
        %v3099 = vsel %vm1340, %v3067, %v2569
        %v3100 = vsel %vm1340, %v3068, %v2571
        %v3101 = vsel %vm1340, %v3069, %v2573
        %v3102 = vsel %vm1340, %v3070, %v2575
        %v3103 = vsel %vm1340, %v3071, %v2577
        %v3104 = vsel %vm1340, %v3072, %v2579
        %v3105 = vsel %vm1340, %v3073, %v2581
        %v3106 = vsel %vm1340, %v3074, %v2583
        %v3107 = vsel %vm1340, %v3075, %v2585
        %v3108 = vsel %vm1340, %v3076, %v2587
        %v3109 = vsel %vm1340, %v3077, %v2589
        %v3110 = vsel %vm1340, %v3078, %v2591
        %v3111 = vsel %vm1340, %v3079, %v2593
        %v3112 = vsel %vm1340, %v3080, %v2595
        %v3113 = vsel %vm1340, %v3081, %v2597
        %v3114 = vsel %vm1340, %v3082, %v2599
        %v3115 = vsel %vm1340, %v3083, %v2601
        %v3116 = vsel %vm1340, %v3084, %v2603
        %v3117 = vsel %vm1340, %v3085, %v2605
        %v3118 = vsel %vm1340, %v3086, %v2607
        %v3119 = vsel %vm1340, %v3087, %v2609
        %v3120 = vsel %vm1340, %v3088, %v2611
        %v3121 = vsel %vm1340, %v3089, %v2613
        %v3122 = vsel %vm1340, %v3090, %v2615
        %v3123 = vsel %vm1340, %v3091, %v2617
        %v3124 = vsel %vm1340, %v3092, %v2619
        %v3125 = vsel %vm1340, %v3093, %v2621
        %v3126 = vsel %vm224, %v2211, %v2698
        %v3127 = vsel %vm224, %v2213, %v2700
        %v3128 = vsel %vm224, %v2216, %v2702
        %v3129 = vsel %vm224, %v2218, %v2704
        %v3130 = vsel %vm224, %v2221, %v2706
        %v3131 = vsel %vm224, %v2223, %v2708
        %v3132 = vsel %vm224, %v2226, %v2710
        %v3133 = vsel %vm224, %v2228, %v2712
        %v3134 = vsel %vm224, %v2231, %v2714
        %v3135 = vsel %vm224, %v2233, %v2716
        %v3136 = vsel %vm224, %v2236, %v2718
        %v3137 = vsel %vm224, %v2238, %v2720
        %v3138 = vsel %vm224, %v2241, %v2722
        %v3139 = vsel %vm224, %v2243, %v2724
        %v3140 = vsel %vm224, %v2246, %v2726
        %v3141 = vsel %vm224, %v2248, %v2728
        %v3142 = vsel %vm224, %v2251, %v2730
        %v3143 = vsel %vm224, %v2253, %v2732
        %v3144 = vsel %vm224, %v2256, %v2734
        %v3145 = vsel %vm224, %v2258, %v2736
        %v3146 = vsel %vm224, %v2261, %v2738
        %v3147 = vsel %vm224, %v2263, %v2740
        %v3148 = vsel %vm224, %v2266, %v2742
        %v3149 = vsel %vm224, %v2268, %v2744
        %v3150 = vsel %vm224, %v2271, %v2746
        %v3151 = vsel %vm224, %v2273, %v2748
        %v3152 = vsel %vm224, %v2276, %v2750
        %v3153 = vsel %vm224, %v2278, %v2752
        %v3154 = vsel %vm224, %v2281, %v2754
        %v3155 = vsel %vm224, %v2283, %v2756
        %v3156 = vsel %vm224, %v2657, %v2758
        %v3157 = vsel %vm224, %v2659, %v2760
        %v3158 = vsel %vm1307, %v3126, %v2796
        %v3159 = vsel %vm1307, %v3127, %v2798
        %v3160 = vsel %vm1307, %v3128, %v2800
        %v3161 = vsel %vm1307, %v3129, %v2802
        %v3162 = vsel %vm1307, %v3130, %v2804
        %v3163 = vsel %vm1307, %v3131, %v2806
        %v3164 = vsel %vm1307, %v3132, %v2808
        %v3165 = vsel %vm1307, %v3133, %v2810
        %v3166 = vsel %vm1307, %v3134, %v2812
        %v3167 = vsel %vm1307, %v3135, %v2814
        %v3168 = vsel %vm1307, %v3136, %v2816
        %v3169 = vsel %vm1307, %v3137, %v2818
        %v3170 = vsel %vm1307, %v3138, %v2820
        %v3171 = vsel %vm1307, %v3139, %v2822
        %v3172 = vsel %vm1307, %v3140, %v2824
        %v3173 = vsel %vm1307, %v3141, %v2826
        %v3174 = vsel %vm1307, %v3142, %v2828
        %v3175 = vsel %vm1307, %v3143, %v2830
        %v3176 = vsel %vm1307, %v3144, %v2832
        %v3177 = vsel %vm1307, %v3145, %v2834
        %v3178 = vsel %vm1307, %v3146, %v2836
        %v3179 = vsel %vm1307, %v3147, %v2838
        %v3180 = vsel %vm1307, %v3148, %v2840
        %v3181 = vsel %vm1307, %v3149, %v2842
        %v3182 = vsel %vm1307, %v3150, %v2844
        %v3183 = vsel %vm1307, %v3151, %v2846
        %v3184 = vsel %vm1307, %v3152, %v2848
        %v3185 = vsel %vm1307, %v3153, %v2850
        %v3186 = vsel %vm1307, %v3154, %v2852
        %v3187 = vsel %vm1307, %v3155, %v2854
        %v3188 = vsel %vm1307, %v3156, %v2856
        %v3189 = vsel %vm1307, %v3157, %v2858
        %v3190 = vsel %vm1340, %v3158, %v2898
        %v3191 = vsel %vm1340, %v3159, %v2900
        %v3192 = vsel %vm1340, %v3160, %v2902
        %v3193 = vsel %vm1340, %v3161, %v2904
        %v3194 = vsel %vm1340, %v3162, %v2906
        %v3195 = vsel %vm1340, %v3163, %v2908
        %v3196 = vsel %vm1340, %v3164, %v2910
        %v3197 = vsel %vm1340, %v3165, %v2912
        %v3198 = vsel %vm1340, %v3166, %v2914
        %v3199 = vsel %vm1340, %v3167, %v2916
        %v3200 = vsel %vm1340, %v3168, %v2918
        %v3201 = vsel %vm1340, %v3169, %v2920
        %v3202 = vsel %vm1340, %v3170, %v2922
        %v3203 = vsel %vm1340, %v3171, %v2924
        %v3204 = vsel %vm1340, %v3172, %v2926
        %v3205 = vsel %vm1340, %v3173, %v2928
        %v3206 = vsel %vm1340, %v3174, %v2930
        %v3207 = vsel %vm1340, %v3175, %v2932
        %v3208 = vsel %vm1340, %v3176, %v2934
        %v3209 = vsel %vm1340, %v3177, %v2936
        %v3210 = vsel %vm1340, %v3178, %v2938
        %v3211 = vsel %vm1340, %v3179, %v2940
        %v3212 = vsel %vm1340, %v3180, %v2942
        %v3213 = vsel %vm1340, %v3181, %v2944
        %v3214 = vsel %vm1340, %v3182, %v2946
        %v3215 = vsel %vm1340, %v3183, %v2948
        %v3216 = vsel %vm1340, %v3184, %v2950
        %v3217 = vsel %vm1340, %v3185, %v2952
        %v3218 = vsel %vm1340, %v3186, %v2954
        %v3219 = vsel %vm1340, %v3187, %v2956
        %v3220 = vsel %vm1340, %v3188, %v2958
        %v3221 = vsel %vm1340, %v3189, %v2960
        %v3222 = vpack.c.bf16 %v3095, %v3094
        %v3223 = vpack.c.bf16 %v3191, %v3190
        %v3224 = vpack.c.bf16 %v2394, %v2392
        %v3225 = vpack.c.bf16 %v3097, %v3096
        %v3226 = vpack.c.bf16 %v3193, %v3192
        %v3227 = vpack.c.bf16 %v2399, %v2397
        %v3228 = vpack.c.bf16 %v3099, %v3098
        %v3229 = vpack.c.bf16 %v3195, %v3194
        %v3230 = vpack.c.bf16 %v2404, %v2402
        %v3231 = vpack.c.bf16 %v3101, %v3100
        %v3232 = vpack.c.bf16 %v3197, %v3196
        %v3233 = vpack.c.bf16 %v2409, %v2407
        %v3234 = vpack.c.bf16 %v3103, %v3102
        %v3235 = vpack.c.bf16 %v3199, %v3198
        %v3236 = vpack.c.bf16 %v2414, %v2412
        %v3237 = vpack.c.bf16 %v3105, %v3104
        %v3238 = vpack.c.bf16 %v3201, %v3200
        %v3239 = vpack.c.bf16 %v2419, %v2417
        %v3240 = vpack.c.bf16 %v3107, %v3106
        %v3241 = vpack.c.bf16 %v3203, %v3202
        %v3242 = vpack.c.bf16 %v2424, %v2422
        %v3243 = vpack.c.bf16 %v3109, %v3108
        %v3244 = vpack.c.bf16 %v3205, %v3204
        %v3245 = vpack.c.bf16 %v2429, %v2427
        %v3246 = vpack.c.bf16 %v3111, %v3110
        %v3247 = vpack.c.bf16 %v3207, %v3206
        %v3248 = vpack.c.bf16 %v2434, %v2432
        %v3249 = vpack.c.bf16 %v3113, %v3112
        %v3250 = vpack.c.bf16 %v3209, %v3208
        %v3251 = vpack.c.bf16 %v2439, %v2437
        %v3252 = vpack.c.bf16 %v3115, %v3114
        %v3253 = vpack.c.bf16 %v3211, %v3210
        %v3254 = vpack.c.bf16 %v2444, %v2442
        %v3255 = vpack.c.bf16 %v3117, %v3116
        %v3256 = vpack.c.bf16 %v3213, %v3212
        %v3257 = vpack.c.bf16 %v2449, %v2447
        %v3258 = vpack.c.bf16 %v3119, %v3118
        %v3259 = vpack.c.bf16 %v3215, %v3214
        %v3260 = vpack.c.bf16 %v2454, %v2452
        %v3261 = vpack.c.bf16 %v3121, %v3120
        %v3262 = vpack.c.bf16 %v3217, %v3216
        %v3263 = vpack.c.bf16 %v2459, %v2457
        %v3264 = vpack.c.bf16 %v3123, %v3122
        %v3265 = vpack.c.bf16 %v3219, %v3218
        %v3266 = vpack.c.bf16 %v2696, %v2694
        %v3267 = vpack.c.bf16 %v3125, %v3124
        %v3268 = vpack.c.bf16 %v3221, %v3220
        %v3269 = vpack.c.bf16 %v2997, %v2995
        %s3270 = scalar_lea.vmem %s1, 144
        %v3271 = vld [vmem:[%s3270] sm:$0xf]
        %v3272 = vld [vmem:[%s3270 + $0x4] sm:$0xf]
        %v3273 = vld [vmem:[%s3270 + $0x8] sm:$0xf]
        %v3274 = vld [vmem:[%s3270 + $0xc] sm:$0xf]
        %v3275 = vld [vmem:[%s3270 + $0x10] sm:$0xf]
        %v3276 = vld [vmem:[%s3270 + $0x14] sm:$0xf]
        %v3277 = vld [vmem:[%s3270 + $0x18] sm:$0xf]
        %v3278 = vld [vmem:[%s3270 + $0x1c] sm:$0xf]
        %v3279 = vld [vmem:[%s3270 + $0x20] sm:$0xf]
        %v3280 = vld [vmem:[%s3270 + $0x24] sm:$0xf]
        %v3281 = vld [vmem:[%s3270 + $0x28] sm:$0xf]
        %v3282 = vld [vmem:[%s3270 + $0x2c] sm:$0xf]
        %v3283 = vld [vmem:[%s3270 + $0x30] sm:$0xf]
        %v3284 = vld [vmem:[%s3270 + $0x34] sm:$0xf]
        %v3285 = vld [vmem:[%s3270 + $0x38] sm:$0xf]
        %v3286 = vld [vmem:[%s3270 + $0x3c] sm:$0xf]
        %v3287 = vld [vmem:[%s3270 + $0x40] sm:$0xf]
        %v3288 = vld [vmem:[%s3270 + $0x44] sm:$0xf]
        %v3289 = vld [vmem:[%s3270 + $0x48] sm:$0xf]
        %v3290 = vld [vmem:[%s3270 + $0x4c] sm:$0xf]
        %v3291 = vld [vmem:[%s3270 + $0x50] sm:$0xf]
        %v3292 = vld [vmem:[%s3270 + $0x54] sm:$0xf]
        %v3293 = vld [vmem:[%s3270 + $0x58] sm:$0xf]
        %v3294 = vld [vmem:[%s3270 + $0x5c] sm:$0xf]
        %v3295 = vld [vmem:[%s3270 + $0x60] sm:$0xf]
        %v3296 = vld [vmem:[%s3270 + $0x64] sm:$0xf]
        %v3297 = vld [vmem:[%s3270 + $0x68] sm:$0xf]
        %v3298 = vld [vmem:[%s3270 + $0x6c] sm:$0xf]
        %v3299 = vld [vmem:[%s3270 + $0x70] sm:$0xf]
        %v3300 = vld [vmem:[%s3270 + $0x74] sm:$0xf]
        %v3301 = vld [vmem:[%s3270 + $0x78] sm:$0xf]
        %v3302 = vld [vmem:[%s3270 + $0x7c] sm:$0xf]
        %v3303 = vld [vmem:[%s3270 + $0x80] sm:$0xf]
        %v3304 = vld [vmem:[%s3270 + $0x84] sm:$0xf]
        %v3305 = vld [vmem:[%s3270 + $0x88] sm:$0xf]
        %v3306 = vld [vmem:[%s3270 + $0x8c] sm:$0xf]
        %s3307 = scalar_lea.vmem %s2, 1
        %v3308 = vld [vmem:[%s3307] sm:$0x1]
        %v3310 = vlaneseq
        %v3311 = vshrl.u32 %v3310, 7
        %v3312 = vsub.s32 0, %v3311
        %v3313 = vrot.slane %v3308, %v3312
        %v3351 = vunpack.c.l.b16 %v3271
        %v3352 = vunpack.c.l.b16 %v3272
        %v3353 = vunpack.c.l.b16 %v3273
        %v3354 = vunpack.c.l.b16 %v3274
        %v3355 = vunpack.c.l.b16 %v3275
        %v3356 = vunpack.c.l.b16 %v3276
        %v3357 = vunpack.c.l.b16 %v3277
        %v3358 = vunpack.c.l.b16 %v3278
        %v3359 = vunpack.c.l.b16 %v3279
        %v3360 = vunpack.c.l.b16 %v3280
        %v3361 = vunpack.c.l.b16 %v3281
        %v3362 = vunpack.c.l.b16 %v3282
        %v3363 = vunpack.c.l.b16 %v3283
        %v3364 = vunpack.c.l.b16 %v3284
        %v3365 = vunpack.c.l.b16 %v3285
        %v3366 = vunpack.c.l.b16 %v3286
        %v3367 = vunpack.c.l.b16 %v3287
        %v3368 = vunpack.c.l.b16 %v3288
        %v3369 = vunpack.c.l.b16 %v3289
        %v3370 = vunpack.c.l.b16 %v3290
        %v3371 = vunpack.c.l.b16 %v3291
        %v3372 = vunpack.c.l.b16 %v3292
        %v3373 = vunpack.c.l.b16 %v3293
        %v3374 = vunpack.c.l.b16 %v3294
        %v3375 = vunpack.c.l.b16 %v3295
        %v3376 = vunpack.c.l.b16 %v3296
        %v3377 = vunpack.c.l.b16 %v3297
        %v3378 = vunpack.c.l.b16 %v3298
        %v3379 = vunpack.c.l.b16 %v3299
        %v3380 = vunpack.c.l.b16 %v3300
        %v3381 = vunpack.c.l.b16 %v3301
        %v3382 = vunpack.c.l.b16 %v3302
        %v3383 = vunpack.c.l.b16 %v3303
        %v3384 = vunpack.c.l.b16 %v3304
        %v3385 = vunpack.c.l.b16 %v3305
        %v3386 = vunpack.c.l.b16 %v3306
        %v3387 = vpack.c.b16 %v3352, %v3351
        %v3388 = vpack.c.b16 %v3354, %v3353
        %v3389 = vpack.c.b16 %v3356, %v3355
        %v3390 = vpack.c.b16 %v3358, %v3357
        %v3391 = vpack.c.b16 %v3360, %v3359
        %v3392 = vpack.c.b16 %v3362, %v3361
        %v3393 = vpack.c.b16 %v3364, %v3363
        %v3394 = vpack.c.b16 %v3366, %v3365
        %v3395 = vpack.c.b16 %v3368, %v3367
        %v3396 = vpack.c.b16 %v3370, %v3369
        %v3397 = vpack.c.b16 %v3372, %v3371
        %v3398 = vpack.c.b16 %v3374, %v3373
        %v3399 = vpack.c.b16 %v3376, %v3375
        %v3400 = vpack.c.b16 %v3378, %v3377
        %v3401 = vpack.c.b16 %v3380, %v3379
        %v3402 = vpack.c.b16 %v3382, %v3381
        %v3403 = vpack.c.b16 %v3384, %v3383
        %v3404 = vpack.c.b16 %v3386, %v3385
        %v3424 = vsel %vm224, %v3224, 0
        %v3427 = vsel %vm224, %v3227, 0
        %v3430 = vsel %vm224, %v3230, 0
        %v3433 = vsel %vm224, %v3233, 0
        %v3436 = vsel %vm224, %v3236, 0
        %v3439 = vsel %vm224, %v3239, 0
        %v3442 = vsel %vm224, %v3242, 0
        %v3445 = vsel %vm224, %v3245, 0
        %v3448 = vsel %vm224, %v3248, 0
        %v3451 = vsel %vm224, %v3251, 0
        %v3454 = vsel %vm224, %v3254, 0
        %v3457 = vsel %vm224, %v3257, 0
        %v3460 = vsel %vm224, %v3260, 0
        %v3463 = vsel %vm224, %v3263, 0
        %v3466 = vsel %vm224, %v3266, 0
        %v3469 = vsel %vm224, %v3269, 0
        %3471 = vmatprep.subr.bf16.mxu0 0
        %3472 = vmatpush1.bf16.msra.mxu0 %v3387
        %3473 = vmatprep.subr.bf16.mxu0 0
        %3474 = vmatpush1.bf16.msra.mxu0 %v3388
        %3475 = vmatprep.subr.bf16.mxu0 0
        %3476 = vmatpush1.bf16.msra.mxu0 %v3389
        %3477 = vmatprep.subr.bf16.mxu0 0
        %3478 = vmatpush1.bf16.msra.mxu0 %v3390
        %3479 = vmatprep.subr.bf16.mxu0 0
        %3480 = vmatpush1.bf16.msra.mxu0 %v3391
        %3481 = vmatprep.subr.bf16.mxu0 0
        %3482 = vmatpush1.bf16.msra.mxu0 %v3392
        %3483 = vmatprep.subr.bf16.mxu0 0
        %3484 = vmatpush1.bf16.msra.mxu0 %v3393
        %3485 = vmatprep.subr.bf16.mxu0 0
        %3486 = vmatpush1.bf16.msra.mxu0 %v3394
        %3487 = vmatprep.subr.bf16.mxu0 0
        %3488 = vmatpush1.bf16.msra.mxu0 %v3395
        %3489 = vmatprep.subr.bf16.mxu0 0
        %3490 = vmatpush1.bf16.msra.mxu0 %v3396
        %3491 = vmatprep.subr.bf16.mxu0 0
        %3492 = vmatpush1.bf16.msra.mxu0 %v3397
        %3493 = vmatprep.subr.bf16.mxu0 0
        %3494 = vmatpush1.bf16.msra.mxu0 %v3398
        %3495 = vmatprep.subr.bf16.mxu0 0
        %3496 = vmatpush1.bf16.msra.mxu0 %v3399
        %3497 = vmatprep.subr.bf16.mxu0 0
        %3498 = vmatpush1.bf16.msra.mxu0 %v3400
        %3499 = vmatprep.subr.bf16.mxu0 0
        %3500 = vmatpush1.bf16.msra.mxu0 %v3401
        %3501 = vmatprep.subr.bf16.mxu0 0
        %3502 = vmatpush1.bf16.msra.mxu0 %v3402
        %3503 = vmatprep.mubr.bf16.mxu0 %v3223
        %3504 = vmatmul.mubr.bf16.gmra.mrb[0].mxu0 %v3222
        %v3505 = vpop.f32.mrb[0].mxu0
        %v3506 = vadd.f32 %v3313, %v3505
        %v3507 = vpop.f32.mrb[0].mxu0
        %v3508 = vpop.f32.mrb[0].mxu0
        %v3509 = vadd.f32 %v3313, %v3508
        %v3510 = vpop.f32.mrb[0].mxu0
        %3511 = vmatprep.mubr.bf16.mxu0 %v3226
        %3512 = vmatmul.mubr.bf16.gmra.mrb[0].mxu0 %v3225
        %v3513 = vpop.f32.mrb[0].mxu0
        %v3514 = vadd.f32 %v3313, %v3513
        %v3515 = vpop.f32.mrb[0].mxu0
        %v3516 = vpop.f32.mrb[0].mxu0
        %v3517 = vadd.f32 %v3313, %v3516
        %v3518 = vpop.f32.mrb[0].mxu0
        %3519 = vmatprep.mubr.bf16.mxu0 %v3229
        %3520 = vmatmul.mubr.bf16.gmra.mrb[0].mxu0 %v3228
        %v3521 = vpop.f32.mrb[0].mxu0
        %v3522 = vadd.f32 %v3313, %v3521
        %v3523 = vpop.f32.mrb[0].mxu0
        %v3524 = vpop.f32.mrb[0].mxu0
        %v3525 = vadd.f32 %v3313, %v3524
        %v3526 = vpop.f32.mrb[0].mxu0
        %3527 = vmatprep.mubr.bf16.mxu0 %v3232
        %3528 = vmatmul.mubr.bf16.gmra.mrb[0].mxu0 %v3231
        %v3529 = vpop.f32.mrb[0].mxu0
        %v3530 = vadd.f32 %v3313, %v3529
        %v3531 = vpop.f32.mrb[0].mxu0
        %v3532 = vpop.f32.mrb[0].mxu0
        %v3533 = vadd.f32 %v3313, %v3532
        %v3534 = vpop.f32.mrb[0].mxu0
        %3535 = vmatprep.mubr.bf16.mxu0 %v3235
        %3536 = vmatmul.mubr.bf16.gmra.mrb[0].mxu0 %v3234
        %v3537 = vpop.f32.mrb[0].mxu0
        %v3538 = vadd.f32 %v3313, %v3537
        %v3539 = vpop.f32.mrb[0].mxu0
        %v3540 = vpop.f32.mrb[0].mxu0
        %v3541 = vadd.f32 %v3313, %v3540
        %v3542 = vpop.f32.mrb[0].mxu0
        %3543 = vmatprep.mubr.bf16.mxu0 %v3238
        %3544 = vmatmul.mubr.bf16.gmra.mrb[0].mxu0 %v3237
        %v3545 = vpop.f32.mrb[0].mxu0
        %v3546 = vadd.f32 %v3313, %v3545
        %v3547 = vpop.f32.mrb[0].mxu0
        %v3548 = vpop.f32.mrb[0].mxu0
        %v3549 = vadd.f32 %v3313, %v3548
        %v3550 = vpop.f32.mrb[0].mxu0
        %3551 = vmatprep.mubr.bf16.mxu0 %v3241
        %3552 = vmatmul.mubr.bf16.gmra.mrb[0].mxu0 %v3240
        %v3553 = vpop.f32.mrb[0].mxu0
        %v3554 = vadd.f32 %v3313, %v3553
        %v3555 = vpop.f32.mrb[0].mxu0
        %v3556 = vpop.f32.mrb[0].mxu0
        %v3557 = vadd.f32 %v3313, %v3556
        %v3558 = vpop.f32.mrb[0].mxu0
        %3559 = vmatprep.mubr.bf16.mxu0 %v3244
        %3560 = vmatmul.mubr.bf16.gmra.mrb[0].mxu0 %v3243
        %v3561 = vpop.f32.mrb[0].mxu0
        %v3562 = vadd.f32 %v3313, %v3561
        %v3563 = vpop.f32.mrb[0].mxu0
        %v3564 = vpop.f32.mrb[0].mxu0
        %v3565 = vadd.f32 %v3313, %v3564
        %v3566 = vpop.f32.mrb[0].mxu0
        %3567 = vmatprep.mubr.bf16.mxu0 %v3247
        %3568 = vmatmul.mubr.bf16.gmra.mrb[0].mxu0 %v3246
        %v3569 = vpop.f32.mrb[0].mxu0
        %v3570 = vadd.f32 %v3313, %v3569
        %v3571 = vpop.f32.mrb[0].mxu0
        %v3572 = vpop.f32.mrb[0].mxu0
        %v3573 = vadd.f32 %v3313, %v3572
        %v3574 = vpop.f32.mrb[0].mxu0
        %3575 = vmatprep.mubr.bf16.mxu0 %v3250
        %3576 = vmatmul.mubr.bf16.gmra.mrb[0].mxu0 %v3249
        %v3577 = vpop.f32.mrb[0].mxu0
        %v3578 = vadd.f32 %v3313, %v3577
        %v3579 = vpop.f32.mrb[0].mxu0
        %v3580 = vpop.f32.mrb[0].mxu0
        %v3581 = vadd.f32 %v3313, %v3580
        %v3582 = vpop.f32.mrb[0].mxu0
        %3583 = vmatprep.mubr.bf16.mxu0 %v3253
        %3584 = vmatmul.mubr.bf16.gmra.mrb[0].mxu0 %v3252
        %v3585 = vpop.f32.mrb[0].mxu0
        %v3586 = vadd.f32 %v3313, %v3585
        %v3587 = vpop.f32.mrb[0].mxu0
        %v3588 = vpop.f32.mrb[0].mxu0
        %v3589 = vadd.f32 %v3313, %v3588
        %v3590 = vpop.f32.mrb[0].mxu0
        %3591 = vmatprep.mubr.bf16.mxu0 %v3256
        %3592 = vmatmul.mubr.bf16.gmra.mrb[0].mxu0 %v3255
        %v3593 = vpop.f32.mrb[0].mxu0
        %v3594 = vadd.f32 %v3313, %v3593
        %v3595 = vpop.f32.mrb[0].mxu0
        %v3596 = vpop.f32.mrb[0].mxu0
        %v3597 = vadd.f32 %v3313, %v3596
        %v3598 = vpop.f32.mrb[0].mxu0
        %3599 = vmatprep.mubr.bf16.mxu0 %v3259
        %3600 = vmatmul.mubr.bf16.gmra.mrb[0].mxu0 %v3258
        %v3601 = vpop.f32.mrb[0].mxu0
        %v3602 = vadd.f32 %v3313, %v3601
        %v3603 = vpop.f32.mrb[0].mxu0
        %v3604 = vpop.f32.mrb[0].mxu0
        %v3605 = vadd.f32 %v3313, %v3604
        %v3606 = vpop.f32.mrb[0].mxu0
        %3607 = vmatprep.mubr.bf16.mxu0 %v3262
        %3608 = vmatmul.mubr.bf16.gmra.mrb[0].mxu0 %v3261
        %v3609 = vpop.f32.mrb[0].mxu0
        %v3610 = vadd.f32 %v3313, %v3609
        %v3611 = vpop.f32.mrb[0].mxu0
        %v3612 = vpop.f32.mrb[0].mxu0
        %v3613 = vadd.f32 %v3313, %v3612
        %v3614 = vpop.f32.mrb[0].mxu0
        %3615 = vmatprep.mubr.bf16.mxu0 %v3265
        %3616 = vmatmul.mubr.bf16.gmra.mrb[0].mxu0 %v3264
        %v3617 = vpop.f32.mrb[0].mxu0
        %v3618 = vadd.f32 %v3313, %v3617
        %v3619 = vpop.f32.mrb[0].mxu0
        %v3620 = vpop.f32.mrb[0].mxu0
        %v3621 = vadd.f32 %v3313, %v3620
        %v3622 = vpop.f32.mrb[0].mxu0
        %3623 = vmatprep.mubr.bf16.mxu0 %v3268
        %3624 = vmatmul.mubr.bf16.gmra.mrb[0].mxu0 %v3267
        %v3625 = vpop.f32.mrb[0].mxu0
        %v3626 = vadd.f32 %v3313, %v3625
        %v3627 = vpop.f32.mrb[0].mxu0
        %v3628 = vpop.f32.mrb[0].mxu0
        %v3629 = vadd.f32 %v3313, %v3628
        %v3630 = vpop.f32.mrb[0].mxu0
        %3631 = vdwg.mxu0
        %3632 = vmatprep.subr.bf16.mxu0 0
        %3633 = vmatpush1.bf16.msra.mxu0 %v3403
        %3634 = vmatprep.subr.bf16.mxu0 0
        %3635 = vmatpush1.bf16.msra.mxu0 %v3404
        %3636 = vmatprep.subr.bf16.mxu0 0
        %3637 = vmatpush1.bf16.msra.mxu0 0
        %3638 = vmatprep.subr.bf16.mxu0 0
        %3639 = vmatpush1.bf16.msra.mxu0 0
        %3640 = vmatprep.subr.bf16.mxu0 0
        %3641 = vmatpush1.bf16.msra.mxu0 0
        %3642 = vmatprep.subr.bf16.mxu0 0
        %3643 = vmatpush1.bf16.msra.mxu0 0
        %3644 = vmatprep.subr.bf16.mxu0 0
        %3645 = vmatpush1.bf16.msra.mxu0 0
        %3646 = vmatprep.subr.bf16.mxu0 0
        %3647 = vmatpush1.bf16.msra.mxu0 0
        %3648 = vmatprep.subr.bf16.mxu0 0
        %3649 = vmatpush1.bf16.msra.mxu0 0
        %3650 = vmatprep.subr.bf16.mxu0 0
        %3651 = vmatpush1.bf16.msra.mxu0 0
        %3652 = vmatprep.subr.bf16.mxu0 0
        %3653 = vmatpush1.bf16.msra.mxu0 0
        %3654 = vmatprep.subr.bf16.mxu0 0
        %3655 = vmatpush1.bf16.msra.mxu0 0
        %3656 = vmatprep.subr.bf16.mxu0 0
        %3657 = vmatpush1.bf16.msra.mxu0 0
        %3658 = vmatprep.subr.bf16.mxu0 0
        %3659 = vmatpush1.bf16.msra.mxu0 0
        %3660 = vmatprep.subr.bf16.mxu0 0
        %3661 = vmatpush1.bf16.msra.mxu0 0
        %3662 = vmatprep.subr.bf16.mxu0 0
        %3663 = vmatpush1.bf16.msra.mxu0 0
        %3664 = vmatprep.mubr.bf16.mxu0 0
        %3665 = vmatmul.mubr.bf16.gmra.mrb[0].mxu0 %v3424
        %v3666 = vpop.f32.mrb[0].mxu0
        %v3667 = vadd.f32 %v3506, %v3666
        %v3668 = vpop.f32.mrb[0].mxu0
        %v3669 = vpop.f32.mrb[0].mxu0
        %v3670 = vadd.f32 %v3509, %v3669
        %v3671 = vpop.f32.mrb[0].mxu0
        %3672 = vmatprep.mubr.bf16.mxu0 0
        %3673 = vmatmul.mubr.bf16.gmra.mrb[0].mxu0 %v3427
        %v3674 = vpop.f32.mrb[0].mxu0
        %v3675 = vadd.f32 %v3514, %v3674
        %v3676 = vpop.f32.mrb[0].mxu0
        %v3677 = vpop.f32.mrb[0].mxu0
        %v3678 = vadd.f32 %v3517, %v3677
        %v3679 = vpop.f32.mrb[0].mxu0
        %3680 = vmatprep.mubr.bf16.mxu0 0
        %3681 = vmatmul.mubr.bf16.gmra.mrb[0].mxu0 %v3430
        %v3682 = vpop.f32.mrb[0].mxu0
        %v3683 = vadd.f32 %v3522, %v3682
        %v3684 = vpop.f32.mrb[0].mxu0
        %v3685 = vpop.f32.mrb[0].mxu0
        %v3686 = vadd.f32 %v3525, %v3685
        %v3687 = vpop.f32.mrb[0].mxu0
        %3688 = vmatprep.mubr.bf16.mxu0 0
        %3689 = vmatmul.mubr.bf16.gmra.mrb[0].mxu0 %v3433
        %v3690 = vpop.f32.mrb[0].mxu0
        %v3691 = vadd.f32 %v3530, %v3690
        %v3692 = vpop.f32.mrb[0].mxu0
        %v3693 = vpop.f32.mrb[0].mxu0
        %v3694 = vadd.f32 %v3533, %v3693
        %v3695 = vpop.f32.mrb[0].mxu0
        %3696 = vmatprep.mubr.bf16.mxu0 0
        %3697 = vmatmul.mubr.bf16.gmra.mrb[0].mxu0 %v3436
        %v3698 = vpop.f32.mrb[0].mxu0
        %v3699 = vadd.f32 %v3538, %v3698
        %v3700 = vpop.f32.mrb[0].mxu0
        %v3701 = vpop.f32.mrb[0].mxu0
        %v3702 = vadd.f32 %v3541, %v3701
        %v3703 = vpop.f32.mrb[0].mxu0
        %3704 = vmatprep.mubr.bf16.mxu0 0
        %3705 = vmatmul.mubr.bf16.gmra.mrb[0].mxu0 %v3439
        %v3706 = vpop.f32.mrb[0].mxu0
        %v3707 = vadd.f32 %v3546, %v3706
        %v3708 = vpop.f32.mrb[0].mxu0
        %v3709 = vpop.f32.mrb[0].mxu0
        %v3710 = vadd.f32 %v3549, %v3709
        %v3711 = vpop.f32.mrb[0].mxu0
        %3712 = vmatprep.mubr.bf16.mxu0 0
        %3713 = vmatmul.mubr.bf16.gmra.mrb[0].mxu0 %v3442
        %v3714 = vpop.f32.mrb[0].mxu0
        %v3715 = vadd.f32 %v3554, %v3714
        %v3716 = vpop.f32.mrb[0].mxu0
        %v3717 = vpop.f32.mrb[0].mxu0
        %v3718 = vadd.f32 %v3557, %v3717
        %v3719 = vpop.f32.mrb[0].mxu0
        %3720 = vmatprep.mubr.bf16.mxu0 0
        %3721 = vmatmul.mubr.bf16.gmra.mrb[0].mxu0 %v3445
        %v3722 = vpop.f32.mrb[0].mxu0
        %v3723 = vadd.f32 %v3562, %v3722
        %v3724 = vpop.f32.mrb[0].mxu0
        %v3725 = vpop.f32.mrb[0].mxu0
        %v3726 = vadd.f32 %v3565, %v3725
        %v3727 = vpop.f32.mrb[0].mxu0
        %3728 = vmatprep.mubr.bf16.mxu0 0
        %3729 = vmatmul.mubr.bf16.gmra.mrb[0].mxu0 %v3448
        %v3730 = vpop.f32.mrb[0].mxu0
        %v3731 = vadd.f32 %v3570, %v3730
        %v3732 = vpop.f32.mrb[0].mxu0
        %v3733 = vpop.f32.mrb[0].mxu0
        %v3734 = vadd.f32 %v3573, %v3733
        %v3735 = vpop.f32.mrb[0].mxu0
        %3736 = vmatprep.mubr.bf16.mxu0 0
        %3737 = vmatmul.mubr.bf16.gmra.mrb[0].mxu0 %v3451
        %v3738 = vpop.f32.mrb[0].mxu0
        %v3739 = vadd.f32 %v3578, %v3738
        %v3740 = vpop.f32.mrb[0].mxu0
        %v3741 = vpop.f32.mrb[0].mxu0
        %v3742 = vadd.f32 %v3581, %v3741
        %v3743 = vpop.f32.mrb[0].mxu0
        %3744 = vmatprep.mubr.bf16.mxu0 0
        %3745 = vmatmul.mubr.bf16.gmra.mrb[0].mxu0 %v3454
        %v3746 = vpop.f32.mrb[0].mxu0
        %v3747 = vadd.f32 %v3586, %v3746
        %v3748 = vpop.f32.mrb[0].mxu0
        %v3749 = vpop.f32.mrb[0].mxu0
        %v3750 = vadd.f32 %v3589, %v3749
        %v3751 = vpop.f32.mrb[0].mxu0
        %3752 = vmatprep.mubr.bf16.mxu0 0
        %3753 = vmatmul.mubr.bf16.gmra.mrb[0].mxu0 %v3457
        %v3754 = vpop.f32.mrb[0].mxu0
        %v3755 = vadd.f32 %v3594, %v3754
        %v3756 = vpop.f32.mrb[0].mxu0
        %v3757 = vpop.f32.mrb[0].mxu0
        %v3758 = vadd.f32 %v3597, %v3757
        %v3759 = vpop.f32.mrb[0].mxu0
        %3760 = vmatprep.mubr.bf16.mxu0 0
        %3761 = vmatmul.mubr.bf16.gmra.mrb[0].mxu0 %v3460
        %v3762 = vpop.f32.mrb[0].mxu0
        %v3763 = vadd.f32 %v3602, %v3762
        %v3764 = vpop.f32.mrb[0].mxu0
        %v3765 = vpop.f32.mrb[0].mxu0
        %v3766 = vadd.f32 %v3605, %v3765
        %v3767 = vpop.f32.mrb[0].mxu0
        %3768 = vmatprep.mubr.bf16.mxu0 0
        %3769 = vmatmul.mubr.bf16.gmra.mrb[0].mxu0 %v3463
        %v3770 = vpop.f32.mrb[0].mxu0
        %v3771 = vadd.f32 %v3610, %v3770
        %v3772 = vpop.f32.mrb[0].mxu0
        %v3773 = vpop.f32.mrb[0].mxu0
        %v3774 = vadd.f32 %v3613, %v3773
        %v3775 = vpop.f32.mrb[0].mxu0
        %3776 = vmatprep.mubr.bf16.mxu0 0
        %3777 = vmatmul.mubr.bf16.gmra.mrb[0].mxu0 %v3466
        %v3778 = vpop.f32.mrb[0].mxu0
        %v3779 = vadd.f32 %v3618, %v3778
        %v3780 = vpop.f32.mrb[0].mxu0
        %v3781 = vpop.f32.mrb[0].mxu0
        %v3782 = vadd.f32 %v3621, %v3781
        %v3783 = vpop.f32.mrb[0].mxu0
        %3784 = vmatprep.mubr.bf16.mxu0 0
        %3785 = vmatmul.mubr.bf16.gmra.mrb[0].mxu0 %v3469
        %v3786 = vpop.f32.mrb[0].mxu0
        %v3787 = vadd.f32 %v3626, %v3786
        %v3788 = vpop.f32.mrb[0].mxu0
        %v3789 = vpop.f32.mrb[0].mxu0
        %v3790 = vadd.f32 %v3629, %v3789
        %v3791 = vpop.f32.mrb[0].mxu0
        %3792 = vdwg.mxu0
        %v3793 = vmax.f32 %v3667, 0.0
        %v3794 = vmax.f32 %v3670, 0.0
        %v3795 = vmax.f32 %v3675, 0.0
        %v3796 = vmax.f32 %v3678, 0.0
        %v3797 = vmax.f32 %v3683, 0.0
        %v3798 = vmax.f32 %v3686, 0.0
        %v3799 = vmax.f32 %v3691, 0.0
        %v3800 = vmax.f32 %v3694, 0.0
        %v3801 = vmax.f32 %v3699, 0.0
        %v3802 = vmax.f32 %v3702, 0.0
        %v3803 = vmax.f32 %v3707, 0.0
        %v3804 = vmax.f32 %v3710, 0.0
        %v3805 = vmax.f32 %v3715, 0.0
        %v3806 = vmax.f32 %v3718, 0.0
        %v3807 = vmax.f32 %v3723, 0.0
        %v3808 = vmax.f32 %v3726, 0.0
        %v3809 = vmax.f32 %v3731, 0.0
        %v3810 = vmax.f32 %v3734, 0.0
        %v3811 = vmax.f32 %v3739, 0.0
        %v3812 = vmax.f32 %v3742, 0.0
        %v3813 = vmax.f32 %v3747, 0.0
        %v3814 = vmax.f32 %v3750, 0.0
        %v3815 = vmax.f32 %v3755, 0.0
        %v3816 = vmax.f32 %v3758, 0.0
        %v3817 = vmax.f32 %v3763, 0.0
        %v3818 = vmax.f32 %v3766, 0.0
        %v3819 = vmax.f32 %v3771, 0.0
        %v3820 = vmax.f32 %v3774, 0.0
        %v3821 = vmax.f32 %v3779, 0.0
        %v3822 = vmax.f32 %v3782, 0.0
        %v3823 = vmax.f32 %v3787, 0.0
        %v3824 = vmax.f32 %v3790, 0.0
        %3825 = vst.msk [vmem:[%s312 + $0x1] sm:$0xff] %vm224, %v3793
        %3826 = vst.msk [vmem:[%s312 + $0x9] sm:$0xff] %vm224, %v3794
        %3827 = vst.msk [vmem:[%s312 + $0x19] sm:$0xff] %vm224, %v3795
        %3828 = vst.msk [vmem:[%s312 + $0x21] sm:$0xff] %vm224, %v3796
        %3829 = vst.msk [vmem:[%s312 + $0x31] sm:$0xff] %vm224, %v3797
        %3830 = vst.msk [vmem:[%s312 + $0x39] sm:$0xff] %vm224, %v3798
        %3831 = vst.msk [vmem:[%s312 + $0x49] sm:$0xff] %vm224, %v3799
        %3832 = vst.msk [vmem:[%s312 + $0x51] sm:$0xff] %vm224, %v3800
        %3833 = vst.msk [vmem:[%s312 + $0x61] sm:$0xff] %vm224, %v3801
        %3834 = vst.msk [vmem:[%s312 + $0x69] sm:$0xff] %vm224, %v3802
        %3835 = vst.msk [vmem:[%s312 + $0x79] sm:$0xff] %vm224, %v3803
        %3836 = vst.msk [vmem:[%s312 + $0x81] sm:$0xff] %vm224, %v3804
        %3837 = vst.msk [vmem:[%s312 + $0x91] sm:$0xff] %vm224, %v3805
        %3838 = vst.msk [vmem:[%s312 + $0x99] sm:$0xff] %vm224, %v3806
        %3839 = vst.msk [vmem:[%s312 + $0xa9] sm:$0xff] %vm224, %v3807
        %3840 = vst.msk [vmem:[%s312 + $0xb1] sm:$0xff] %vm224, %v3808
        %3841 = vst.msk [vmem:[%s312 + $0xc1] sm:$0xff] %vm224, %v3809
        %3842 = vst.msk [vmem:[%s312 + $0xc9] sm:$0xff] %vm224, %v3810
        %3843 = vst.msk [vmem:[%s312 + $0xd9] sm:$0xff] %vm224, %v3811
        %3844 = vst.msk [vmem:[%s312 + $0xe1] sm:$0xff] %vm224, %v3812
        %3845 = vst.msk [vmem:[%s312 + $0xf1] sm:$0xff] %vm224, %v3813
        %3846 = vst.msk [vmem:[%s312 + $0xf9] sm:$0xff] %vm224, %v3814
        %3847 = vst.msk [vmem:[%s312 + $0x109] sm:$0xff] %vm224, %v3815
        %3848 = vst.msk [vmem:[%s312 + $0x111] sm:$0xff] %vm224, %v3816
        %3849 = vst.msk [vmem:[%s312 + $0x121] sm:$0xff] %vm224, %v3817
        %3850 = vst.msk [vmem:[%s312 + $0x129] sm:$0xff] %vm224, %v3818
        %3851 = vst.msk [vmem:[%s312 + $0x139] sm:$0xff] %vm224, %v3819
        %3852 = vst.msk [vmem:[%s312 + $0x141] sm:$0xff] %vm224, %v3820
        %3853 = vst.msk [vmem:[%s312 + $0x151] sm:$0xff] %vm224, %v3821
        %3854 = vst.msk [vmem:[%s312 + $0x159] sm:$0xff] %vm224, %v3822
        %3855 = vst.msk [vmem:[%s312 + $0x169] sm:$0xff] %vm224, %v3823
        %3856 = vst.msk [vmem:[%s312 + $0x171] sm:$0xff] %vm224, %v3824
        %v3857 = vld [vmem:[#allocation2] sm:$0xff]
        %v3858 = vld [vmem:[#allocation2 + $0x8] sm:$0xff]
        %v3859 = vld [vmem:[#allocation2 + $0x10] sm:$0x3]
        %v3860 = vld [vmem:[#allocation2 + $0x18] sm:$0xff]
        %v3861 = vld [vmem:[#allocation2 + $0x20] sm:$0xff]
        %v3862 = vld [vmem:[#allocation2 + $0x28] sm:$0x3]
        %v3863 = vld [vmem:[#allocation2 + $0x30] sm:$0xff]
        %v3864 = vld [vmem:[#allocation2 + $0x38] sm:$0xff]
        %v3865 = vld [vmem:[#allocation2 + $0x40] sm:$0x3]
        %v3866 = vld [vmem:[#allocation2 + $0x48] sm:$0xff]
        %v3867 = vld [vmem:[#allocation2 + $0x50] sm:$0xff]
        %v3868 = vld [vmem:[#allocation2 + $0x58] sm:$0x3]
        %v3869 = vld [vmem:[#allocation2 + $0x60] sm:$0xff]
        %v3870 = vld [vmem:[#allocation2 + $0x68] sm:$0xff]
        %v3871 = vld [vmem:[#allocation2 + $0x70] sm:$0x3]
        %v3872 = vld [vmem:[#allocation2 + $0x78] sm:$0xff]
        %v3873 = vld [vmem:[#allocation2 + $0x80] sm:$0xff]
        %v3874 = vld [vmem:[#allocation2 + $0x88] sm:$0x3]
        %v3875 = vld [vmem:[#allocation2 + $0x90] sm:$0xff]
        %v3876 = vld [vmem:[#allocation2 + $0x98] sm:$0xff]
        %v3877 = vld [vmem:[#allocation2 + $0xa0] sm:$0x3]
        %v3878 = vld [vmem:[#allocation2 + $0xa8] sm:$0xff]
        %v3879 = vld [vmem:[#allocation2 + $0xb0] sm:$0xff]
        %v3880 = vld [vmem:[#allocation2 + $0xb8] sm:$0x3]
        %v3881 = vld [vmem:[#allocation2 + $0xc0] sm:$0xff]
        %v3882 = vld [vmem:[#allocation2 + $0xc8] sm:$0xff]
        %v3883 = vld [vmem:[#allocation2 + $0xd0] sm:$0x3]
        %v3884 = vld [vmem:[#allocation2 + $0xd8] sm:$0xff]
        %v3885 = vld [vmem:[#allocation2 + $0xe0] sm:$0xff]
        %v3886 = vld [vmem:[#allocation2 + $0xe8] sm:$0x3]
        %v3887 = vld [vmem:[#allocation2 + $0xf0] sm:$0xff]
        %v3888 = vld [vmem:[#allocation2 + $0xf8] sm:$0xff]
        %v3889 = vld [vmem:[#allocation2 + $0x100] sm:$0x3]
        %v3890 = vld [vmem:[#allocation2 + $0x108] sm:$0xff]
        %v3891 = vld [vmem:[#allocation2 + $0x110] sm:$0xff]
        %v3892 = vld [vmem:[#allocation2 + $0x118] sm:$0x3]
        %v3893 = vld [vmem:[#allocation2 + $0x120] sm:$0xff]
        %v3894 = vld [vmem:[#allocation2 + $0x128] sm:$0xff]
        %v3895 = vld [vmem:[#allocation2 + $0x130] sm:$0x3]
        %v3896 = vld [vmem:[#allocation2 + $0x138] sm:$0xff]
        %v3897 = vld [vmem:[#allocation2 + $0x140] sm:$0xff]
        %v3898 = vld [vmem:[#allocation2 + $0x148] sm:$0x3]
        %v3899 = vld [vmem:[#allocation2 + $0x150] sm:$0xff]
        %v3900 = vld [vmem:[#allocation2 + $0x158] sm:$0xff]
        %v3901 = vld [vmem:[#allocation2 + $0x160] sm:$0x3]
        %v3902 = vld [vmem:[#allocation2 + $0x168] sm:$0xff]
        %v3903 = vld [vmem:[#allocation2 + $0x170] sm:$0xff]
        %v3904 = vld [vmem:[#allocation2 + $0x178] sm:$0x3]
        %v3905 = vld [vmem:[#allocation2 + $0x180] sm:$0xff]
        %v3906 = vld [vmem:[#allocation2 + $0x188] sm:$0xff]
        %v3907 = vld [vmem:[#allocation2 + $0x190] sm:$0x3]
        %v3908 = vld [vmem:[#allocation2 + $0x198] sm:$0xff]
        %v3909 = vld [vmem:[#allocation2 + $0x1a0] sm:$0xff]
        %v3910 = vld [vmem:[#allocation2 + $0x1a8] sm:$0x3]
        %v3959 = vrot.slane %v3857, 1
        %v3960 = vrot.slane %v3858, 1
        %v3961 = vsel %vm447, %v3959, %v3960
        %v3962 = vrot.slane %v3859, 1
        %v3963 = vsel %vm447, %v3960, %v3962
        %v3964 = vrot.slane %v3860, 1
        %v3965 = vrot.slane %v3861, 1
        %v3966 = vsel %vm447, %v3964, %v3965
        %v3967 = vrot.slane %v3862, 1
        %v3968 = vsel %vm447, %v3965, %v3967
        %v3969 = vrot.slane %v3863, 1
        %v3970 = vrot.slane %v3864, 1
        %v3971 = vsel %vm447, %v3969, %v3970
        %v3972 = vrot.slane %v3865, 1
        %v3973 = vsel %vm447, %v3970, %v3972
        %v3974 = vrot.slane %v3866, 1
        %v3975 = vrot.slane %v3867, 1
        %v3976 = vsel %vm447, %v3974, %v3975
        %v3977 = vrot.slane %v3868, 1
        %v3978 = vsel %vm447, %v3975, %v3977
        %v3979 = vrot.slane %v3869, 1
        %v3980 = vrot.slane %v3870, 1
        %v3981 = vsel %vm447, %v3979, %v3980
        %v3982 = vrot.slane %v3871, 1
        %v3983 = vsel %vm447, %v3980, %v3982
        %v3984 = vrot.slane %v3872, 1
        %v3985 = vrot.slane %v3873, 1
        %v3986 = vsel %vm447, %v3984, %v3985
        %v3987 = vrot.slane %v3874, 1
        %v3988 = vsel %vm447, %v3985, %v3987
        %v3989 = vrot.slane %v3875, 1
        %v3990 = vrot.slane %v3876, 1
        %v3991 = vsel %vm447, %v3989, %v3990
        %v3992 = vrot.slane %v3877, 1
        %v3993 = vsel %vm447, %v3990, %v3992
        %v3994 = vrot.slane %v3878, 1
        %v3995 = vrot.slane %v3879, 1
        %v3996 = vsel %vm447, %v3994, %v3995
        %v3997 = vrot.slane %v3880, 1
        %v3998 = vsel %vm447, %v3995, %v3997
        %v3999 = vrot.slane %v3881, 1
        %v4000 = vrot.slane %v3882, 1
        %v4001 = vsel %vm447, %v3999, %v4000
        %v4002 = vrot.slane %v3883, 1
        %v4003 = vsel %vm447, %v4000, %v4002
        %v4004 = vrot.slane %v3884, 1
        %v4005 = vrot.slane %v3885, 1
        %v4006 = vsel %vm447, %v4004, %v4005
        %v4007 = vrot.slane %v3886, 1
        %v4008 = vsel %vm447, %v4005, %v4007
        %v4009 = vrot.slane %v3887, 1
        %v4010 = vrot.slane %v3888, 1
        %v4011 = vsel %vm447, %v4009, %v4010
        %v4012 = vrot.slane %v3889, 1
        %v4013 = vsel %vm447, %v4010, %v4012
        %v4014 = vrot.slane %v3890, 1
        %v4015 = vrot.slane %v3891, 1
        %v4016 = vsel %vm447, %v4014, %v4015
        %v4017 = vrot.slane %v3892, 1
        %v4018 = vsel %vm447, %v4015, %v4017
        %v4019 = vrot.slane %v3893, 1
        %v4020 = vrot.slane %v3894, 1
        %v4021 = vsel %vm447, %v4019, %v4020
        %v4022 = vrot.slane %v3895, 1
        %v4023 = vsel %vm447, %v4020, %v4022
        %v4024 = vrot.slane %v3896, 1
        %v4025 = vrot.slane %v3897, 1
        %v4026 = vsel %vm447, %v4024, %v4025
        %v4027 = vrot.slane %v3898, 1
        %v4028 = vsel %vm447, %v4025, %v4027
        %v4029 = vrot.slane %v3899, 1
        %v4030 = vrot.slane %v3900, 1
        %v4031 = vsel %vm447, %v4029, %v4030
        %v4032 = vrot.slane %v3901, 1
        %v4033 = vsel %vm447, %v4030, %v4032
        %v4034 = vrot.slane %v3902, 1
        %v4035 = vrot.slane %v3903, 1
        %v4036 = vsel %vm447, %v4034, %v4035
        %v4037 = vrot.slane %v3904, 1
        %v4038 = vsel %vm447, %v4035, %v4037
        %4039 = vrot.lane.b32.xlu0 %v3961, 32
        %v4040 = vpop.permute.xlu0 %4039
        %4041 = vrot.lane.b32.xlu0 %v3963, 32
        %v4042 = vpop.permute.xlu0 %4041
        %4043 = vrot.lane.b32.xlu0 %v3966, 32
        %v4044 = vpop.permute.xlu0 %4043
        %4045 = vrot.lane.b32.xlu0 %v3968, 32
        %v4046 = vpop.permute.xlu0 %4045
        %4047 = vrot.lane.b32.xlu0 %v3971, 32
        %v4048 = vpop.permute.xlu0 %4047
        %4049 = vrot.lane.b32.xlu0 %v3973, 32
        %v4050 = vpop.permute.xlu0 %4049
        %4051 = vrot.lane.b32.xlu0 %v3976, 32
        %v4052 = vpop.permute.xlu0 %4051
        %4053 = vrot.lane.b32.xlu0 %v3978, 32
        %v4054 = vpop.permute.xlu0 %4053
        %4055 = vrot.lane.b32.xlu0 %v3981, 32
        %v4056 = vpop.permute.xlu0 %4055
        %4057 = vrot.lane.b32.xlu0 %v3983, 32
        %v4058 = vpop.permute.xlu0 %4057
        %4059 = vrot.lane.b32.xlu0 %v3986, 32
        %v4060 = vpop.permute.xlu0 %4059
        %4061 = vrot.lane.b32.xlu0 %v3988, 32
        %v4062 = vpop.permute.xlu0 %4061
        %4063 = vrot.lane.b32.xlu0 %v3991, 32
        %v4064 = vpop.permute.xlu0 %4063
        %4065 = vrot.lane.b32.xlu0 %v3993, 32
        %v4066 = vpop.permute.xlu0 %4065
        %4067 = vrot.lane.b32.xlu0 %v3996, 32
        %v4068 = vpop.permute.xlu0 %4067
        %4069 = vrot.lane.b32.xlu0 %v3998, 32
        %v4070 = vpop.permute.xlu0 %4069
        %4071 = vrot.lane.b32.xlu0 %v4001, 32
        %v4072 = vpop.permute.xlu0 %4071
        %4073 = vrot.lane.b32.xlu0 %v4003, 32
        %v4074 = vpop.permute.xlu0 %4073
        %4075 = vrot.lane.b32.xlu0 %v4006, 32
        %v4076 = vpop.permute.xlu0 %4075
        %4077 = vrot.lane.b32.xlu0 %v4008, 32
        %v4078 = vpop.permute.xlu0 %4077
        %4079 = vrot.lane.b32.xlu0 %v4011, 32
        %v4080 = vpop.permute.xlu0 %4079
        %4081 = vrot.lane.b32.xlu0 %v4013, 32
        %v4082 = vpop.permute.xlu0 %4081
        %4083 = vrot.lane.b32.xlu0 %v4016, 32
        %v4084 = vpop.permute.xlu0 %4083
        %4085 = vrot.lane.b32.xlu0 %v4018, 32
        %v4086 = vpop.permute.xlu0 %4085
        %4087 = vrot.lane.b32.xlu0 %v4021, 32
        %v4088 = vpop.permute.xlu0 %4087
        %4089 = vrot.lane.b32.xlu0 %v4023, 32
        %v4090 = vpop.permute.xlu0 %4089
        %4091 = vrot.lane.b32.xlu0 %v4026, 32
        %v4092 = vpop.permute.xlu0 %4091
        %4093 = vrot.lane.b32.xlu0 %v4028, 32
        %v4094 = vpop.permute.xlu0 %4093
        %4095 = vrot.lane.b32.xlu0 %v4031, 32
        %v4096 = vpop.permute.xlu0 %4095
        %4097 = vrot.lane.b32.xlu0 %v4033, 32
        %v4098 = vpop.permute.xlu0 %4097
        %4099 = vrot.lane.b32.xlu0 %v4036, 32
        %v4100 = vpop.permute.xlu0 %4099
        %4101 = vrot.lane.b32.xlu0 %v4038, 32
        %v4102 = vpop.permute.xlu0 %4101
        %v4135 = vrot.slane %v3857, 2
        %v4136 = vrot.slane %v3858, 2
        %v4137 = vsel %vm624, %v4135, %v4136
        %v4138 = vrot.slane %v3859, 2
        %v4139 = vsel %vm624, %v4136, %v4138
        %v4140 = vrot.slane %v3860, 2
        %v4141 = vrot.slane %v3861, 2
        %v4142 = vsel %vm624, %v4140, %v4141
        %v4143 = vrot.slane %v3862, 2
        %v4144 = vsel %vm624, %v4141, %v4143
        %v4145 = vrot.slane %v3863, 2
        %v4146 = vrot.slane %v3864, 2
        %v4147 = vsel %vm624, %v4145, %v4146
        %v4148 = vrot.slane %v3865, 2
        %v4149 = vsel %vm624, %v4146, %v4148
        %v4150 = vrot.slane %v3866, 2
        %v4151 = vrot.slane %v3867, 2
        %v4152 = vsel %vm624, %v4150, %v4151
        %v4153 = vrot.slane %v3868, 2
        %v4154 = vsel %vm624, %v4151, %v4153
        %v4155 = vrot.slane %v3869, 2
        %v4156 = vrot.slane %v3870, 2
        %v4157 = vsel %vm624, %v4155, %v4156
        %v4158 = vrot.slane %v3871, 2
        %v4159 = vsel %vm624, %v4156, %v4158
        %v4160 = vrot.slane %v3872, 2
        %v4161 = vrot.slane %v3873, 2
        %v4162 = vsel %vm624, %v4160, %v4161
        %v4163 = vrot.slane %v3874, 2
        %v4164 = vsel %vm624, %v4161, %v4163
        %v4165 = vrot.slane %v3875, 2
        %v4166 = vrot.slane %v3876, 2
        %v4167 = vsel %vm624, %v4165, %v4166
        %v4168 = vrot.slane %v3877, 2
        %v4169 = vsel %vm624, %v4166, %v4168
        %v4170 = vrot.slane %v3878, 2
        %v4171 = vrot.slane %v3879, 2
        %v4172 = vsel %vm624, %v4170, %v4171
        %v4173 = vrot.slane %v3880, 2
        %v4174 = vsel %vm624, %v4171, %v4173
        %v4175 = vrot.slane %v3881, 2
        %v4176 = vrot.slane %v3882, 2
        %v4177 = vsel %vm624, %v4175, %v4176
        %v4178 = vrot.slane %v3883, 2
        %v4179 = vsel %vm624, %v4176, %v4178
        %v4180 = vrot.slane %v3884, 2
        %v4181 = vrot.slane %v3885, 2
        %v4182 = vsel %vm624, %v4180, %v4181
        %v4183 = vrot.slane %v3886, 2
        %v4184 = vsel %vm624, %v4181, %v4183
        %v4185 = vrot.slane %v3887, 2
        %v4186 = vrot.slane %v3888, 2
        %v4187 = vsel %vm624, %v4185, %v4186
        %v4188 = vrot.slane %v3889, 2
        %v4189 = vsel %vm624, %v4186, %v4188
        %v4190 = vrot.slane %v3890, 2
        %v4191 = vrot.slane %v3891, 2
        %v4192 = vsel %vm624, %v4190, %v4191
        %v4193 = vrot.slane %v3892, 2
        %v4194 = vsel %vm624, %v4191, %v4193
        %v4195 = vrot.slane %v3893, 2
        %v4196 = vrot.slane %v3894, 2
        %v4197 = vsel %vm624, %v4195, %v4196
        %v4198 = vrot.slane %v3895, 2
        %v4199 = vsel %vm624, %v4196, %v4198
        %v4200 = vrot.slane %v3896, 2
        %v4201 = vrot.slane %v3897, 2
        %v4202 = vsel %vm624, %v4200, %v4201
        %v4203 = vrot.slane %v3898, 2
        %v4204 = vsel %vm624, %v4201, %v4203
        %v4205 = vrot.slane %v3899, 2
        %v4206 = vrot.slane %v3900, 2
        %v4207 = vsel %vm624, %v4205, %v4206
        %v4208 = vrot.slane %v3901, 2
        %v4209 = vsel %vm624, %v4206, %v4208
        %v4210 = vrot.slane %v3902, 2
        %v4211 = vrot.slane %v3903, 2
        %v4212 = vsel %vm624, %v4210, %v4211
        %v4213 = vrot.slane %v3904, 2
        %v4214 = vsel %vm624, %v4211, %v4213
        %4215 = vrot.lane.b32.xlu0 %v4137, 64
        %v4216 = vpop.permute.xlu0 %4215
        %4217 = vrot.lane.b32.xlu0 %v4139, 64
        %v4218 = vpop.permute.xlu0 %4217
        %4219 = vrot.lane.b32.xlu0 %v4142, 64
        %v4220 = vpop.permute.xlu0 %4219
        %4221 = vrot.lane.b32.xlu0 %v4144, 64
        %v4222 = vpop.permute.xlu0 %4221
        %4223 = vrot.lane.b32.xlu0 %v4147, 64
        %v4224 = vpop.permute.xlu0 %4223
        %4225 = vrot.lane.b32.xlu0 %v4149, 64
        %v4226 = vpop.permute.xlu0 %4225
        %4227 = vrot.lane.b32.xlu0 %v4152, 64
        %v4228 = vpop.permute.xlu0 %4227
        %4229 = vrot.lane.b32.xlu0 %v4154, 64
        %v4230 = vpop.permute.xlu0 %4229
        %4231 = vrot.lane.b32.xlu0 %v4157, 64
        %v4232 = vpop.permute.xlu0 %4231
        %4233 = vrot.lane.b32.xlu0 %v4159, 64
        %v4234 = vpop.permute.xlu0 %4233
        %4235 = vrot.lane.b32.xlu0 %v4162, 64
        %v4236 = vpop.permute.xlu0 %4235
        %4237 = vrot.lane.b32.xlu0 %v4164, 64
        %v4238 = vpop.permute.xlu0 %4237
        %4239 = vrot.lane.b32.xlu0 %v4167, 64
        %v4240 = vpop.permute.xlu0 %4239
        %4241 = vrot.lane.b32.xlu0 %v4169, 64
        %v4242 = vpop.permute.xlu0 %4241
        %4243 = vrot.lane.b32.xlu0 %v4172, 64
        %v4244 = vpop.permute.xlu0 %4243
        %4245 = vrot.lane.b32.xlu0 %v4174, 64
        %v4246 = vpop.permute.xlu0 %4245
        %4247 = vrot.lane.b32.xlu0 %v4177, 64
        %v4248 = vpop.permute.xlu0 %4247
        %4249 = vrot.lane.b32.xlu0 %v4179, 64
        %v4250 = vpop.permute.xlu0 %4249
        %4251 = vrot.lane.b32.xlu0 %v4182, 64
        %v4252 = vpop.permute.xlu0 %4251
        %4253 = vrot.lane.b32.xlu0 %v4184, 64
        %v4254 = vpop.permute.xlu0 %4253
        %4255 = vrot.lane.b32.xlu0 %v4187, 64
        %v4256 = vpop.permute.xlu0 %4255
        %4257 = vrot.lane.b32.xlu0 %v4189, 64
        %v4258 = vpop.permute.xlu0 %4257
        %4259 = vrot.lane.b32.xlu0 %v4192, 64
        %v4260 = vpop.permute.xlu0 %4259
        %4261 = vrot.lane.b32.xlu0 %v4194, 64
        %v4262 = vpop.permute.xlu0 %4261
        %4263 = vrot.lane.b32.xlu0 %v4197, 64
        %v4264 = vpop.permute.xlu0 %4263
        %4265 = vrot.lane.b32.xlu0 %v4199, 64
        %v4266 = vpop.permute.xlu0 %4265
        %4267 = vrot.lane.b32.xlu0 %v4202, 64
        %v4268 = vpop.permute.xlu0 %4267
        %4269 = vrot.lane.b32.xlu0 %v4204, 64
        %v4270 = vpop.permute.xlu0 %4269
        %4271 = vrot.lane.b32.xlu0 %v4207, 64
        %v4272 = vpop.permute.xlu0 %4271
        %4273 = vrot.lane.b32.xlu0 %v4209, 64
        %v4274 = vpop.permute.xlu0 %4273
        %4275 = vrot.lane.b32.xlu0 %v4212, 64
        %v4276 = vpop.permute.xlu0 %4275
        %4277 = vrot.lane.b32.xlu0 %v4214, 64
        %v4278 = vpop.permute.xlu0 %4277
        %4313 = vrot.lane.b32.xlu0 %v3860, 96
        %v4314 = vpop.permute.xlu0 %4313
        %4315 = vrot.lane.b32.xlu0 %v3861, 96
        %v4316 = vpop.permute.xlu0 %4315
        %4317 = vrot.lane.b32.xlu0 %v3863, 96
        %v4318 = vpop.permute.xlu0 %4317
        %4319 = vrot.lane.b32.xlu0 %v3864, 96
        %v4320 = vpop.permute.xlu0 %4319
        %4321 = vrot.lane.b32.xlu0 %v3866, 96
        %v4322 = vpop.permute.xlu0 %4321
        %4323 = vrot.lane.b32.xlu0 %v3867, 96
        %v4324 = vpop.permute.xlu0 %4323
        %4325 = vrot.lane.b32.xlu0 %v3869, 96
        %v4326 = vpop.permute.xlu0 %4325
        %4327 = vrot.lane.b32.xlu0 %v3870, 96
        %v4328 = vpop.permute.xlu0 %4327
        %4329 = vrot.lane.b32.xlu0 %v3872, 96
        %v4330 = vpop.permute.xlu0 %4329
        %4331 = vrot.lane.b32.xlu0 %v3873, 96
        %v4332 = vpop.permute.xlu0 %4331
        %4333 = vrot.lane.b32.xlu0 %v3875, 96
        %v4334 = vpop.permute.xlu0 %4333
        %4335 = vrot.lane.b32.xlu0 %v3876, 96
        %v4336 = vpop.permute.xlu0 %4335
        %4337 = vrot.lane.b32.xlu0 %v3878, 96
        %v4338 = vpop.permute.xlu0 %4337
        %4339 = vrot.lane.b32.xlu0 %v3879, 96
        %v4340 = vpop.permute.xlu0 %4339
        %4341 = vrot.lane.b32.xlu0 %v3881, 96
        %v4342 = vpop.permute.xlu0 %4341
        %4343 = vrot.lane.b32.xlu0 %v3882, 96
        %v4344 = vpop.permute.xlu0 %4343
        %4345 = vrot.lane.b32.xlu0 %v3884, 96
        %v4346 = vpop.permute.xlu0 %4345
        %4347 = vrot.lane.b32.xlu0 %v3885, 96
        %v4348 = vpop.permute.xlu0 %4347
        %4349 = vrot.lane.b32.xlu0 %v3887, 96
        %v4350 = vpop.permute.xlu0 %4349
        %4351 = vrot.lane.b32.xlu0 %v3888, 96
        %v4352 = vpop.permute.xlu0 %4351
        %4353 = vrot.lane.b32.xlu0 %v3890, 96
        %v4354 = vpop.permute.xlu0 %4353
        %4355 = vrot.lane.b32.xlu0 %v3891, 96
        %v4356 = vpop.permute.xlu0 %4355
        %4357 = vrot.lane.b32.xlu0 %v3893, 96
        %v4358 = vpop.permute.xlu0 %4357
        %4359 = vrot.lane.b32.xlu0 %v3894, 96
        %v4360 = vpop.permute.xlu0 %4359
        %4361 = vrot.lane.b32.xlu0 %v3896, 96
        %v4362 = vpop.permute.xlu0 %4361
        %4363 = vrot.lane.b32.xlu0 %v3897, 96
        %v4364 = vpop.permute.xlu0 %4363
        %4365 = vrot.lane.b32.xlu0 %v3899, 96
        %v4366 = vpop.permute.xlu0 %4365
        %4367 = vrot.lane.b32.xlu0 %v3900, 96
        %v4368 = vpop.permute.xlu0 %4367
        %4369 = vrot.lane.b32.xlu0 %v3902, 96
        %v4370 = vpop.permute.xlu0 %4369
        %4371 = vrot.lane.b32.xlu0 %v3903, 96
        %v4372 = vpop.permute.xlu0 %4371
        %4373 = vrot.lane.b32.xlu0 %v3905, 96
        %v4374 = vpop.permute.xlu0 %4373
        %4375 = vrot.lane.b32.xlu0 %v3906, 96
        %v4376 = vpop.permute.xlu0 %4375
        %v4410 = vrot.slane %v3905, 1
        %v4411 = vrot.slane %v3906, 1
        %v4412 = vsel %vm447, %v4410, %v4411
        %v4413 = vrot.slane %v3907, 1
        %v4414 = vsel %vm447, %v4411, %v4413
        %v4447 = vrot.slane %v3905, 2
        %v4448 = vrot.slane %v3906, 2
        %v4449 = vsel %vm624, %v4447, %v4448
        %v4450 = vrot.slane %v3907, 2
        %v4451 = vsel %vm624, %v4448, %v4450
        %4452 = vrot.lane.b32.xlu0 %v4142, 32
        %v4453 = vpop.permute.xlu0 %4452
        %4454 = vrot.lane.b32.xlu0 %v4144, 32
        %v4455 = vpop.permute.xlu0 %4454
        %4456 = vrot.lane.b32.xlu0 %v4147, 32
        %v4457 = vpop.permute.xlu0 %4456
        %4458 = vrot.lane.b32.xlu0 %v4149, 32
        %v4459 = vpop.permute.xlu0 %4458
        %4460 = vrot.lane.b32.xlu0 %v4152, 32
        %v4461 = vpop.permute.xlu0 %4460
        %4462 = vrot.lane.b32.xlu0 %v4154, 32
        %v4463 = vpop.permute.xlu0 %4462
        %4464 = vrot.lane.b32.xlu0 %v4157, 32
        %v4465 = vpop.permute.xlu0 %4464
        %4466 = vrot.lane.b32.xlu0 %v4159, 32
        %v4467 = vpop.permute.xlu0 %4466
        %4468 = vrot.lane.b32.xlu0 %v4162, 32
        %v4469 = vpop.permute.xlu0 %4468
        %4470 = vrot.lane.b32.xlu0 %v4164, 32
        %v4471 = vpop.permute.xlu0 %4470
        %4472 = vrot.lane.b32.xlu0 %v4167, 32
        %v4473 = vpop.permute.xlu0 %4472
        %4474 = vrot.lane.b32.xlu0 %v4169, 32
        %v4475 = vpop.permute.xlu0 %4474
        %4476 = vrot.lane.b32.xlu0 %v4172, 32
        %v4477 = vpop.permute.xlu0 %4476
        %4478 = vrot.lane.b32.xlu0 %v4174, 32
        %v4479 = vpop.permute.xlu0 %4478
        %4480 = vrot.lane.b32.xlu0 %v4177, 32
        %v4481 = vpop.permute.xlu0 %4480
        %4482 = vrot.lane.b32.xlu0 %v4179, 32
        %v4483 = vpop.permute.xlu0 %4482
        %4484 = vrot.lane.b32.xlu0 %v4182, 32
        %v4485 = vpop.permute.xlu0 %4484
        %4486 = vrot.lane.b32.xlu0 %v4184, 32
        %v4487 = vpop.permute.xlu0 %4486
        %4488 = vrot.lane.b32.xlu0 %v4187, 32
        %v4489 = vpop.permute.xlu0 %4488
        %4490 = vrot.lane.b32.xlu0 %v4189, 32
        %v4491 = vpop.permute.xlu0 %4490
        %4492 = vrot.lane.b32.xlu0 %v4192, 32
        %v4493 = vpop.permute.xlu0 %4492
        %4494 = vrot.lane.b32.xlu0 %v4194, 32
        %v4495 = vpop.permute.xlu0 %4494
        %4496 = vrot.lane.b32.xlu0 %v4197, 32
        %v4497 = vpop.permute.xlu0 %4496
        %4498 = vrot.lane.b32.xlu0 %v4199, 32
        %v4499 = vpop.permute.xlu0 %4498
        %4500 = vrot.lane.b32.xlu0 %v4202, 32
        %v4501 = vpop.permute.xlu0 %4500
        %4502 = vrot.lane.b32.xlu0 %v4204, 32
        %v4503 = vpop.permute.xlu0 %4502
        %4504 = vrot.lane.b32.xlu0 %v4207, 32
        %v4505 = vpop.permute.xlu0 %4504
        %4506 = vrot.lane.b32.xlu0 %v4209, 32
        %v4507 = vpop.permute.xlu0 %4506
        %4508 = vrot.lane.b32.xlu0 %v4212, 32
        %v4509 = vpop.permute.xlu0 %4508
        %4510 = vrot.lane.b32.xlu0 %v4214, 32
        %v4511 = vpop.permute.xlu0 %4510
        %4512 = vrot.lane.b32.xlu0 %v4449, 32
        %v4513 = vpop.permute.xlu0 %4512
        %4514 = vrot.lane.b32.xlu0 %v4451, 32
        %v4515 = vpop.permute.xlu0 %4514
        %4550 = vrot.lane.b32.xlu0 %v3863, 64
        %v4551 = vpop.permute.xlu0 %4550
        %4552 = vrot.lane.b32.xlu0 %v3864, 64
        %v4553 = vpop.permute.xlu0 %4552
        %4554 = vrot.lane.b32.xlu0 %v3866, 64
        %v4555 = vpop.permute.xlu0 %4554
        %4556 = vrot.lane.b32.xlu0 %v3867, 64
        %v4557 = vpop.permute.xlu0 %4556
        %4558 = vrot.lane.b32.xlu0 %v3869, 64
        %v4559 = vpop.permute.xlu0 %4558
        %4560 = vrot.lane.b32.xlu0 %v3870, 64
        %v4561 = vpop.permute.xlu0 %4560
        %4562 = vrot.lane.b32.xlu0 %v3872, 64
        %v4563 = vpop.permute.xlu0 %4562
        %4564 = vrot.lane.b32.xlu0 %v3873, 64
        %v4565 = vpop.permute.xlu0 %4564
        %4566 = vrot.lane.b32.xlu0 %v3875, 64
        %v4567 = vpop.permute.xlu0 %4566
        %4568 = vrot.lane.b32.xlu0 %v3876, 64
        %v4569 = vpop.permute.xlu0 %4568
        %4570 = vrot.lane.b32.xlu0 %v3878, 64
        %v4571 = vpop.permute.xlu0 %4570
        %4572 = vrot.lane.b32.xlu0 %v3879, 64
        %v4573 = vpop.permute.xlu0 %4572
        %4574 = vrot.lane.b32.xlu0 %v3881, 64
        %v4575 = vpop.permute.xlu0 %4574
        %4576 = vrot.lane.b32.xlu0 %v3882, 64
        %v4577 = vpop.permute.xlu0 %4576
        %4578 = vrot.lane.b32.xlu0 %v3884, 64
        %v4579 = vpop.permute.xlu0 %4578
        %4580 = vrot.lane.b32.xlu0 %v3885, 64
        %v4581 = vpop.permute.xlu0 %4580
        %4582 = vrot.lane.b32.xlu0 %v3887, 64
        %v4583 = vpop.permute.xlu0 %4582
        %4584 = vrot.lane.b32.xlu0 %v3888, 64
        %v4585 = vpop.permute.xlu0 %4584
        %4586 = vrot.lane.b32.xlu0 %v3890, 64
        %v4587 = vpop.permute.xlu0 %4586
        %4588 = vrot.lane.b32.xlu0 %v3891, 64
        %v4589 = vpop.permute.xlu0 %4588
        %4590 = vrot.lane.b32.xlu0 %v3893, 64
        %v4591 = vpop.permute.xlu0 %4590
        %4592 = vrot.lane.b32.xlu0 %v3894, 64
        %v4593 = vpop.permute.xlu0 %4592
        %4594 = vrot.lane.b32.xlu0 %v3896, 64
        %v4595 = vpop.permute.xlu0 %4594
        %4596 = vrot.lane.b32.xlu0 %v3897, 64
        %v4597 = vpop.permute.xlu0 %4596
        %4598 = vrot.lane.b32.xlu0 %v3899, 64
        %v4599 = vpop.permute.xlu0 %4598
        %4600 = vrot.lane.b32.xlu0 %v3900, 64
        %v4601 = vpop.permute.xlu0 %4600
        %4602 = vrot.lane.b32.xlu0 %v3902, 64
        %v4603 = vpop.permute.xlu0 %4602
        %4604 = vrot.lane.b32.xlu0 %v3903, 64
        %v4605 = vpop.permute.xlu0 %4604
        %4606 = vrot.lane.b32.xlu0 %v3905, 64
        %v4607 = vpop.permute.xlu0 %4606
        %4608 = vrot.lane.b32.xlu0 %v3906, 64
        %v4609 = vpop.permute.xlu0 %4608
        %4610 = vrot.lane.b32.xlu0 %v3908, 64
        %v4611 = vpop.permute.xlu0 %4610
        %4612 = vrot.lane.b32.xlu0 %v3909, 64
        %v4613 = vpop.permute.xlu0 %4612
        %v4647 = vrot.slane %v3908, 1
        %v4648 = vrot.slane %v3909, 1
        %v4649 = vsel %vm447, %v4647, %v4648
        %v4650 = vrot.slane %v3910, 1
        %v4651 = vsel %vm447, %v4648, %v4650
        %4652 = vrot.lane.b32.xlu0 %v3971, 96
        %v4653 = vpop.permute.xlu0 %4652
        %4654 = vrot.lane.b32.xlu0 %v3973, 96
        %v4655 = vpop.permute.xlu0 %4654
        %4656 = vrot.lane.b32.xlu0 %v3976, 96
        %v4657 = vpop.permute.xlu0 %4656
        %4658 = vrot.lane.b32.xlu0 %v3978, 96
        %v4659 = vpop.permute.xlu0 %4658
        %4660 = vrot.lane.b32.xlu0 %v3981, 96
        %v4661 = vpop.permute.xlu0 %4660
        %4662 = vrot.lane.b32.xlu0 %v3983, 96
        %v4663 = vpop.permute.xlu0 %4662
        %4664 = vrot.lane.b32.xlu0 %v3986, 96
        %v4665 = vpop.permute.xlu0 %4664
        %4666 = vrot.lane.b32.xlu0 %v3988, 96
        %v4667 = vpop.permute.xlu0 %4666
        %4668 = vrot.lane.b32.xlu0 %v3991, 96
        %v4669 = vpop.permute.xlu0 %4668
        %4670 = vrot.lane.b32.xlu0 %v3993, 96
        %v4671 = vpop.permute.xlu0 %4670
        %4672 = vrot.lane.b32.xlu0 %v3996, 96
        %v4673 = vpop.permute.xlu0 %4672
        %4674 = vrot.lane.b32.xlu0 %v3998, 96
        %v4675 = vpop.permute.xlu0 %4674
        %4676 = vrot.lane.b32.xlu0 %v4001, 96
        %v4677 = vpop.permute.xlu0 %4676
        %4678 = vrot.lane.b32.xlu0 %v4003, 96
        %v4679 = vpop.permute.xlu0 %4678
        %4680 = vrot.lane.b32.xlu0 %v4006, 96
        %v4681 = vpop.permute.xlu0 %4680
        %4682 = vrot.lane.b32.xlu0 %v4008, 96
        %v4683 = vpop.permute.xlu0 %4682
        %4684 = vrot.lane.b32.xlu0 %v4011, 96
        %v4685 = vpop.permute.xlu0 %4684
        %4686 = vrot.lane.b32.xlu0 %v4013, 96
        %v4687 = vpop.permute.xlu0 %4686
        %4688 = vrot.lane.b32.xlu0 %v4016, 96
        %v4689 = vpop.permute.xlu0 %4688
        %4690 = vrot.lane.b32.xlu0 %v4018, 96
        %v4691 = vpop.permute.xlu0 %4690
        %4692 = vrot.lane.b32.xlu0 %v4021, 96
        %v4693 = vpop.permute.xlu0 %4692
        %4694 = vrot.lane.b32.xlu0 %v4023, 96
        %v4695 = vpop.permute.xlu0 %4694
        %4696 = vrot.lane.b32.xlu0 %v4026, 96
        %v4697 = vpop.permute.xlu0 %4696
        %4698 = vrot.lane.b32.xlu0 %v4028, 96
        %v4699 = vpop.permute.xlu0 %4698
        %4700 = vrot.lane.b32.xlu0 %v4031, 96
        %v4701 = vpop.permute.xlu0 %4700
        %4702 = vrot.lane.b32.xlu0 %v4033, 96
        %v4703 = vpop.permute.xlu0 %4702
        %4704 = vrot.lane.b32.xlu0 %v4036, 96
        %v4705 = vpop.permute.xlu0 %4704
        %4706 = vrot.lane.b32.xlu0 %v4038, 96
        %v4707 = vpop.permute.xlu0 %4706
        %4708 = vrot.lane.b32.xlu0 %v4412, 96
        %v4709 = vpop.permute.xlu0 %4708
        %4710 = vrot.lane.b32.xlu0 %v4414, 96
        %v4711 = vpop.permute.xlu0 %4710
        %4712 = vrot.lane.b32.xlu0 %v4649, 96
        %v4713 = vpop.permute.xlu0 %4712
        %4714 = vrot.lane.b32.xlu0 %v4651, 96
        %v4715 = vpop.permute.xlu0 %4714
        %v4748 = vrot.slane %v3908, 2
        %v4749 = vrot.slane %v3909, 2
        %v4750 = vsel %vm624, %v4748, %v4749
        %v4751 = vrot.slane %v3910, 2
        %v4752 = vsel %vm624, %v4749, %v4751
        %v4785 = vsel %vm224, %v3857, %v4040
        %v4786 = vsel %vm224, %v3858, %v4042
        %v4787 = vsel %vm224, %v3860, %v4044
        %v4788 = vsel %vm224, %v3861, %v4046
        %v4789 = vsel %vm224, %v3863, %v4048
        %v4790 = vsel %vm224, %v3864, %v4050
        %v4791 = vsel %vm224, %v3866, %v4052
        %v4792 = vsel %vm224, %v3867, %v4054
        %v4793 = vsel %vm224, %v3869, %v4056
        %v4794 = vsel %vm224, %v3870, %v4058
        %v4795 = vsel %vm224, %v3872, %v4060
        %v4796 = vsel %vm224, %v3873, %v4062
        %v4797 = vsel %vm224, %v3875, %v4064
        %v4798 = vsel %vm224, %v3876, %v4066
        %v4799 = vsel %vm224, %v3878, %v4068
        %v4800 = vsel %vm224, %v3879, %v4070
        %v4801 = vsel %vm224, %v3881, %v4072
        %v4802 = vsel %vm224, %v3882, %v4074
        %v4803 = vsel %vm224, %v3884, %v4076
        %v4804 = vsel %vm224, %v3885, %v4078
        %v4805 = vsel %vm224, %v3887, %v4080
        %v4806 = vsel %vm224, %v3888, %v4082
        %v4807 = vsel %vm224, %v3890, %v4084
        %v4808 = vsel %vm224, %v3891, %v4086
        %v4809 = vsel %vm224, %v3893, %v4088
        %v4810 = vsel %vm224, %v3894, %v4090
        %v4811 = vsel %vm224, %v3896, %v4092
        %v4812 = vsel %vm224, %v3897, %v4094
        %v4813 = vsel %vm224, %v3899, %v4096
        %v4814 = vsel %vm224, %v3900, %v4098
        %v4815 = vsel %vm224, %v3902, %v4100
        %v4816 = vsel %vm224, %v3903, %v4102
        %v4817 = vsel %vm1307, %v4785, %v4216
        %v4818 = vsel %vm1307, %v4786, %v4218
        %v4819 = vsel %vm1307, %v4787, %v4220
        %v4820 = vsel %vm1307, %v4788, %v4222
        %v4821 = vsel %vm1307, %v4789, %v4224
        %v4822 = vsel %vm1307, %v4790, %v4226
        %v4823 = vsel %vm1307, %v4791, %v4228
        %v4824 = vsel %vm1307, %v4792, %v4230
        %v4825 = vsel %vm1307, %v4793, %v4232
        %v4826 = vsel %vm1307, %v4794, %v4234
        %v4827 = vsel %vm1307, %v4795, %v4236
        %v4828 = vsel %vm1307, %v4796, %v4238
        %v4829 = vsel %vm1307, %v4797, %v4240
        %v4830 = vsel %vm1307, %v4798, %v4242
        %v4831 = vsel %vm1307, %v4799, %v4244
        %v4832 = vsel %vm1307, %v4800, %v4246
        %v4833 = vsel %vm1307, %v4801, %v4248
        %v4834 = vsel %vm1307, %v4802, %v4250
        %v4835 = vsel %vm1307, %v4803, %v4252
        %v4836 = vsel %vm1307, %v4804, %v4254
        %v4837 = vsel %vm1307, %v4805, %v4256
        %v4838 = vsel %vm1307, %v4806, %v4258
        %v4839 = vsel %vm1307, %v4807, %v4260
        %v4840 = vsel %vm1307, %v4808, %v4262
        %v4841 = vsel %vm1307, %v4809, %v4264
        %v4842 = vsel %vm1307, %v4810, %v4266
        %v4843 = vsel %vm1307, %v4811, %v4268
        %v4844 = vsel %vm1307, %v4812, %v4270
        %v4845 = vsel %vm1307, %v4813, %v4272
        %v4846 = vsel %vm1307, %v4814, %v4274
        %v4847 = vsel %vm1307, %v4815, %v4276
        %v4848 = vsel %vm1307, %v4816, %v4278
        %v4849 = vsel %vm1340, %v4817, %v4314
        %v4850 = vsel %vm1340, %v4818, %v4316
        %v4851 = vsel %vm1340, %v4819, %v4318
        %v4852 = vsel %vm1340, %v4820, %v4320
        %v4853 = vsel %vm1340, %v4821, %v4322
        %v4854 = vsel %vm1340, %v4822, %v4324
        %v4855 = vsel %vm1340, %v4823, %v4326
        %v4856 = vsel %vm1340, %v4824, %v4328
        %v4857 = vsel %vm1340, %v4825, %v4330
        %v4858 = vsel %vm1340, %v4826, %v4332
        %v4859 = vsel %vm1340, %v4827, %v4334
        %v4860 = vsel %vm1340, %v4828, %v4336
        %v4861 = vsel %vm1340, %v4829, %v4338
        %v4862 = vsel %vm1340, %v4830, %v4340
        %v4863 = vsel %vm1340, %v4831, %v4342
        %v4864 = vsel %vm1340, %v4832, %v4344
        %v4865 = vsel %vm1340, %v4833, %v4346
        %v4866 = vsel %vm1340, %v4834, %v4348
        %v4867 = vsel %vm1340, %v4835, %v4350
        %v4868 = vsel %vm1340, %v4836, %v4352
        %v4869 = vsel %vm1340, %v4837, %v4354
        %v4870 = vsel %vm1340, %v4838, %v4356
        %v4871 = vsel %vm1340, %v4839, %v4358
        %v4872 = vsel %vm1340, %v4840, %v4360
        %v4873 = vsel %vm1340, %v4841, %v4362
        %v4874 = vsel %vm1340, %v4842, %v4364
        %v4875 = vsel %vm1340, %v4843, %v4366
        %v4876 = vsel %vm1340, %v4844, %v4368
        %v4877 = vsel %vm1340, %v4845, %v4370
        %v4878 = vsel %vm1340, %v4846, %v4372
        %v4879 = vsel %vm1340, %v4847, %v4374
        %v4880 = vsel %vm1340, %v4848, %v4376
        %v4881 = vsel %vm224, %v3966, %v4453
        %v4882 = vsel %vm224, %v3968, %v4455
        %v4883 = vsel %vm224, %v3971, %v4457
        %v4884 = vsel %vm224, %v3973, %v4459
        %v4885 = vsel %vm224, %v3976, %v4461
        %v4886 = vsel %vm224, %v3978, %v4463
        %v4887 = vsel %vm224, %v3981, %v4465
        %v4888 = vsel %vm224, %v3983, %v4467
        %v4889 = vsel %vm224, %v3986, %v4469
        %v4890 = vsel %vm224, %v3988, %v4471
        %v4891 = vsel %vm224, %v3991, %v4473
        %v4892 = vsel %vm224, %v3993, %v4475
        %v4893 = vsel %vm224, %v3996, %v4477
        %v4894 = vsel %vm224, %v3998, %v4479
        %v4895 = vsel %vm224, %v4001, %v4481
        %v4896 = vsel %vm224, %v4003, %v4483
        %v4897 = vsel %vm224, %v4006, %v4485
        %v4898 = vsel %vm224, %v4008, %v4487
        %v4899 = vsel %vm224, %v4011, %v4489
        %v4900 = vsel %vm224, %v4013, %v4491
        %v4901 = vsel %vm224, %v4016, %v4493
        %v4902 = vsel %vm224, %v4018, %v4495
        %v4903 = vsel %vm224, %v4021, %v4497
        %v4904 = vsel %vm224, %v4023, %v4499
        %v4905 = vsel %vm224, %v4026, %v4501
        %v4906 = vsel %vm224, %v4028, %v4503
        %v4907 = vsel %vm224, %v4031, %v4505
        %v4908 = vsel %vm224, %v4033, %v4507
        %v4909 = vsel %vm224, %v4036, %v4509
        %v4910 = vsel %vm224, %v4038, %v4511
        %v4911 = vsel %vm224, %v4412, %v4513
        %v4912 = vsel %vm224, %v4414, %v4515
        %v4913 = vsel %vm1307, %v4881, %v4551
        %v4914 = vsel %vm1307, %v4882, %v4553
        %v4915 = vsel %vm1307, %v4883, %v4555
        %v4916 = vsel %vm1307, %v4884, %v4557
        %v4917 = vsel %vm1307, %v4885, %v4559
        %v4918 = vsel %vm1307, %v4886, %v4561
        %v4919 = vsel %vm1307, %v4887, %v4563
        %v4920 = vsel %vm1307, %v4888, %v4565
        %v4921 = vsel %vm1307, %v4889, %v4567
        %v4922 = vsel %vm1307, %v4890, %v4569
        %v4923 = vsel %vm1307, %v4891, %v4571
        %v4924 = vsel %vm1307, %v4892, %v4573
        %v4925 = vsel %vm1307, %v4893, %v4575
        %v4926 = vsel %vm1307, %v4894, %v4577
        %v4927 = vsel %vm1307, %v4895, %v4579
        %v4928 = vsel %vm1307, %v4896, %v4581
        %v4929 = vsel %vm1307, %v4897, %v4583
        %v4930 = vsel %vm1307, %v4898, %v4585
        %v4931 = vsel %vm1307, %v4899, %v4587
        %v4932 = vsel %vm1307, %v4900, %v4589
        %v4933 = vsel %vm1307, %v4901, %v4591
        %v4934 = vsel %vm1307, %v4902, %v4593
        %v4935 = vsel %vm1307, %v4903, %v4595
        %v4936 = vsel %vm1307, %v4904, %v4597
        %v4937 = vsel %vm1307, %v4905, %v4599
        %v4938 = vsel %vm1307, %v4906, %v4601
        %v4939 = vsel %vm1307, %v4907, %v4603
        %v4940 = vsel %vm1307, %v4908, %v4605
        %v4941 = vsel %vm1307, %v4909, %v4607
        %v4942 = vsel %vm1307, %v4910, %v4609
        %v4943 = vsel %vm1307, %v4911, %v4611
        %v4944 = vsel %vm1307, %v4912, %v4613
        %v4945 = vsel %vm1340, %v4913, %v4653
        %v4946 = vsel %vm1340, %v4914, %v4655
        %v4947 = vsel %vm1340, %v4915, %v4657
        %v4948 = vsel %vm1340, %v4916, %v4659
        %v4949 = vsel %vm1340, %v4917, %v4661
        %v4950 = vsel %vm1340, %v4918, %v4663
        %v4951 = vsel %vm1340, %v4919, %v4665
        %v4952 = vsel %vm1340, %v4920, %v4667
        %v4953 = vsel %vm1340, %v4921, %v4669
        %v4954 = vsel %vm1340, %v4922, %v4671
        %v4955 = vsel %vm1340, %v4923, %v4673
        %v4956 = vsel %vm1340, %v4924, %v4675
        %v4957 = vsel %vm1340, %v4925, %v4677
        %v4958 = vsel %vm1340, %v4926, %v4679
        %v4959 = vsel %vm1340, %v4927, %v4681
        %v4960 = vsel %vm1340, %v4928, %v4683
        %v4961 = vsel %vm1340, %v4929, %v4685
        %v4962 = vsel %vm1340, %v4930, %v4687
        %v4963 = vsel %vm1340, %v4931, %v4689
        %v4964 = vsel %vm1340, %v4932, %v4691
        %v4965 = vsel %vm1340, %v4933, %v4693
        %v4966 = vsel %vm1340, %v4934, %v4695
        %v4967 = vsel %vm1340, %v4935, %v4697
        %v4968 = vsel %vm1340, %v4936, %v4699
        %v4969 = vsel %vm1340, %v4937, %v4701
        %v4970 = vsel %vm1340, %v4938, %v4703
        %v4971 = vsel %vm1340, %v4939, %v4705
        %v4972 = vsel %vm1340, %v4940, %v4707
        %v4973 = vsel %vm1340, %v4941, %v4709
        %v4974 = vsel %vm1340, %v4942, %v4711
        %v4975 = vsel %vm1340, %v4943, %v4713
        %v4976 = vsel %vm1340, %v4944, %v4715
        %v4977 = vpack.c.bf16 %v4850, %v4849
        %v4978 = vpack.c.bf16 %v4946, %v4945
        %v4979 = vpack.c.bf16 %v4149, %v4147
        %v4980 = vpack.c.bf16 %v4852, %v4851
        %v4981 = vpack.c.bf16 %v4948, %v4947
        %v4982 = vpack.c.bf16 %v4154, %v4152
        %v4983 = vpack.c.bf16 %v4854, %v4853
        %v4984 = vpack.c.bf16 %v4950, %v4949
        %v4985 = vpack.c.bf16 %v4159, %v4157
        %v4986 = vpack.c.bf16 %v4856, %v4855
        %v4987 = vpack.c.bf16 %v4952, %v4951
        %v4988 = vpack.c.bf16 %v4164, %v4162
        %v4989 = vpack.c.bf16 %v4858, %v4857
        %v4990 = vpack.c.bf16 %v4954, %v4953
        %v4991 = vpack.c.bf16 %v4169, %v4167
        %v4992 = vpack.c.bf16 %v4860, %v4859
        %v4993 = vpack.c.bf16 %v4956, %v4955
        %v4994 = vpack.c.bf16 %v4174, %v4172
        %v4995 = vpack.c.bf16 %v4862, %v4861
        %v4996 = vpack.c.bf16 %v4958, %v4957
        %v4997 = vpack.c.bf16 %v4179, %v4177
        %v4998 = vpack.c.bf16 %v4864, %v4863
        %v4999 = vpack.c.bf16 %v4960, %v4959
        %v5000 = vpack.c.bf16 %v4184, %v4182
        %v5001 = vpack.c.bf16 %v4866, %v4865
        %v5002 = vpack.c.bf16 %v4962, %v4961
        %v5003 = vpack.c.bf16 %v4189, %v4187
        %v5004 = vpack.c.bf16 %v4868, %v4867
        %v5005 = vpack.c.bf16 %v4964, %v4963
        %v5006 = vpack.c.bf16 %v4194, %v4192
        %v5007 = vpack.c.bf16 %v4870, %v4869
        %v5008 = vpack.c.bf16 %v4966, %v4965
        %v5009 = vpack.c.bf16 %v4199, %v4197
        %v5010 = vpack.c.bf16 %v4872, %v4871
        %v5011 = vpack.c.bf16 %v4968, %v4967
        %v5012 = vpack.c.bf16 %v4204, %v4202
        %v5013 = vpack.c.bf16 %v4874, %v4873
        %v5014 = vpack.c.bf16 %v4970, %v4969
        %v5015 = vpack.c.bf16 %v4209, %v4207
        %v5016 = vpack.c.bf16 %v4876, %v4875
        %v5017 = vpack.c.bf16 %v4972, %v4971
        %v5018 = vpack.c.bf16 %v4214, %v4212
        %v5019 = vpack.c.bf16 %v4878, %v4877
        %v5020 = vpack.c.bf16 %v4974, %v4973
        %v5021 = vpack.c.bf16 %v4451, %v4449
        %v5022 = vpack.c.bf16 %v4880, %v4879
        %v5023 = vpack.c.bf16 %v4976, %v4975
        %v5024 = vpack.c.bf16 %v4752, %v4750
        %s5025 = scalar_lea.vmem %s1, 288
        %v5026 = vld [vmem:[%s5025] sm:$0xf]
        %v5027 = vld [vmem:[%s5025 + $0x4] sm:$0xf]
        %v5028 = vld [vmem:[%s5025 + $0x8] sm:$0xf]
        %v5029 = vld [vmem:[%s5025 + $0xc] sm:$0xf]
        %v5030 = vld [vmem:[%s5025 + $0x10] sm:$0xf]
        %v5031 = vld [vmem:[%s5025 + $0x14] sm:$0xf]
        %v5032 = vld [vmem:[%s5025 + $0x18] sm:$0xf]
        %v5033 = vld [vmem:[%s5025 + $0x1c] sm:$0xf]
        %v5034 = vld [vmem:[%s5025 + $0x20] sm:$0xf]
        %v5035 = vld [vmem:[%s5025 + $0x24] sm:$0xf]
        %v5036 = vld [vmem:[%s5025 + $0x28] sm:$0xf]
        %v5037 = vld [vmem:[%s5025 + $0x2c] sm:$0xf]
        %v5038 = vld [vmem:[%s5025 + $0x30] sm:$0xf]
        %v5039 = vld [vmem:[%s5025 + $0x34] sm:$0xf]
        %v5040 = vld [vmem:[%s5025 + $0x38] sm:$0xf]
        %v5041 = vld [vmem:[%s5025 + $0x3c] sm:$0xf]
        %v5042 = vld [vmem:[%s5025 + $0x40] sm:$0xf]
        %v5043 = vld [vmem:[%s5025 + $0x44] sm:$0xf]
        %v5044 = vld [vmem:[%s5025 + $0x48] sm:$0xf]
        %v5045 = vld [vmem:[%s5025 + $0x4c] sm:$0xf]
        %v5046 = vld [vmem:[%s5025 + $0x50] sm:$0xf]
        %v5047 = vld [vmem:[%s5025 + $0x54] sm:$0xf]
        %v5048 = vld [vmem:[%s5025 + $0x58] sm:$0xf]
        %v5049 = vld [vmem:[%s5025 + $0x5c] sm:$0xf]
        %v5050 = vld [vmem:[%s5025 + $0x60] sm:$0xf]
        %v5051 = vld [vmem:[%s5025 + $0x64] sm:$0xf]
        %v5052 = vld [vmem:[%s5025 + $0x68] sm:$0xf]
        %v5053 = vld [vmem:[%s5025 + $0x6c] sm:$0xf]
        %v5054 = vld [vmem:[%s5025 + $0x70] sm:$0xf]
        %v5055 = vld [vmem:[%s5025 + $0x74] sm:$0xf]
        %v5056 = vld [vmem:[%s5025 + $0x78] sm:$0xf]
        %v5057 = vld [vmem:[%s5025 + $0x7c] sm:$0xf]
        %v5058 = vld [vmem:[%s5025 + $0x80] sm:$0xf]
        %v5059 = vld [vmem:[%s5025 + $0x84] sm:$0xf]
        %v5060 = vld [vmem:[%s5025 + $0x88] sm:$0xf]
        %v5061 = vld [vmem:[%s5025 + $0x8c] sm:$0xf]
        %s5062 = scalar_lea.vmem %s2, 2
        %v5063 = vld [vmem:[%s5062] sm:$0x1]
        %v5065 = vlaneseq
        %v5066 = vshrl.u32 %v5065, 7
        %v5067 = vsub.s32 0, %v5066
        %v5068 = vrot.slane %v5063, %v5067
        %v5106 = vunpack.c.l.b16 %v5026
        %v5107 = vunpack.c.l.b16 %v5027
        %v5108 = vunpack.c.l.b16 %v5028
        %v5109 = vunpack.c.l.b16 %v5029
        %v5110 = vunpack.c.l.b16 %v5030
        %v5111 = vunpack.c.l.b16 %v5031
        %v5112 = vunpack.c.l.b16 %v5032
        %v5113 = vunpack.c.l.b16 %v5033
        %v5114 = vunpack.c.l.b16 %v5034
        %v5115 = vunpack.c.l.b16 %v5035
        %v5116 = vunpack.c.l.b16 %v5036
        %v5117 = vunpack.c.l.b16 %v5037
        %v5118 = vunpack.c.l.b16 %v5038
        %v5119 = vunpack.c.l.b16 %v5039
        %v5120 = vunpack.c.l.b16 %v5040
        %v5121 = vunpack.c.l.b16 %v5041
        %v5122 = vunpack.c.l.b16 %v5042
        %v5123 = vunpack.c.l.b16 %v5043
        %v5124 = vunpack.c.l.b16 %v5044
        %v5125 = vunpack.c.l.b16 %v5045
        %v5126 = vunpack.c.l.b16 %v5046
        %v5127 = vunpack.c.l.b16 %v5047
        %v5128 = vunpack.c.l.b16 %v5048
        %v5129 = vunpack.c.l.b16 %v5049
        %v5130 = vunpack.c.l.b16 %v5050
        %v5131 = vunpack.c.l.b16 %v5051
        %v5132 = vunpack.c.l.b16 %v5052
        %v5133 = vunpack.c.l.b16 %v5053
        %v5134 = vunpack.c.l.b16 %v5054
        %v5135 = vunpack.c.l.b16 %v5055
        %v5136 = vunpack.c.l.b16 %v5056
        %v5137 = vunpack.c.l.b16 %v5057
        %v5138 = vunpack.c.l.b16 %v5058
        %v5139 = vunpack.c.l.b16 %v5059
        %v5140 = vunpack.c.l.b16 %v5060
        %v5141 = vunpack.c.l.b16 %v5061
        %v5142 = vpack.c.b16 %v5107, %v5106
        %v5143 = vpack.c.b16 %v5109, %v5108
        %v5144 = vpack.c.b16 %v5111, %v5110
        %v5145 = vpack.c.b16 %v5113, %v5112
        %v5146 = vpack.c.b16 %v5115, %v5114
        %v5147 = vpack.c.b16 %v5117, %v5116
        %v5148 = vpack.c.b16 %v5119, %v5118
        %v5149 = vpack.c.b16 %v5121, %v5120
        %v5150 = vpack.c.b16 %v5123, %v5122
        %v5151 = vpack.c.b16 %v5125, %v5124
        %v5152 = vpack.c.b16 %v5127, %v5126
        %v5153 = vpack.c.b16 %v5129, %v5128
        %v5154 = vpack.c.b16 %v5131, %v5130
        %v5155 = vpack.c.b16 %v5133, %v5132
        %v5156 = vpack.c.b16 %v5135, %v5134
        %v5157 = vpack.c.b16 %v5137, %v5136
        %v5158 = vpack.c.b16 %v5139, %v5138
        %v5159 = vpack.c.b16 %v5141, %v5140
        %v5179 = vsel %vm224, %v4979, 0
        %v5182 = vsel %vm224, %v4982, 0
        %v5185 = vsel %vm224, %v4985, 0
        %v5188 = vsel %vm224, %v4988, 0
        %v5191 = vsel %vm224, %v4991, 0
        %v5194 = vsel %vm224, %v4994, 0
        %v5197 = vsel %vm224, %v4997, 0
        %v5200 = vsel %vm224, %v5000, 0
        %v5203 = vsel %vm224, %v5003, 0
        %v5206 = vsel %vm224, %v5006, 0
        %v5209 = vsel %vm224, %v5009, 0
        %v5212 = vsel %vm224, %v5012, 0
        %v5215 = vsel %vm224, %v5015, 0
        %v5218 = vsel %vm224, %v5018, 0
        %v5221 = vsel %vm224, %v5021, 0
        %v5224 = vsel %vm224, %v5024, 0
        %5226 = vmatprep.subr.bf16.mxu0 0
        %5227 = vmatpush1.bf16.msra.mxu0 %v5142
        %5228 = vmatprep.subr.bf16.mxu0 0
        %5229 = vmatpush1.bf16.msra.mxu0 %v5143
        %5230 = vmatprep.subr.bf16.mxu0 0
        %5231 = vmatpush1.bf16.msra.mxu0 %v5144
        %5232 = vmatprep.subr.bf16.mxu0 0
        %5233 = vmatpush1.bf16.msra.mxu0 %v5145
        %5234 = vmatprep.subr.bf16.mxu0 0
        %5235 = vmatpush1.bf16.msra.mxu0 %v5146
        %5236 = vmatprep.subr.bf16.mxu0 0
        %5237 = vmatpush1.bf16.msra.mxu0 %v5147
        %5238 = vmatprep.subr.bf16.mxu0 0
        %5239 = vmatpush1.bf16.msra.mxu0 %v5148
        %5240 = vmatprep.subr.bf16.mxu0 0
        %5241 = vmatpush1.bf16.msra.mxu0 %v5149
        %5242 = vmatprep.subr.bf16.mxu0 0
        %5243 = vmatpush1.bf16.msra.mxu0 %v5150
        %5244 = vmatprep.subr.bf16.mxu0 0
        %5245 = vmatpush1.bf16.msra.mxu0 %v5151
        %5246 = vmatprep.subr.bf16.mxu0 0
        %5247 = vmatpush1.bf16.msra.mxu0 %v5152
        %5248 = vmatprep.subr.bf16.mxu0 0
        %5249 = vmatpush1.bf16.msra.mxu0 %v5153
        %5250 = vmatprep.subr.bf16.mxu0 0
        %5251 = vmatpush1.bf16.msra.mxu0 %v5154
        %5252 = vmatprep.subr.bf16.mxu0 0
        %5253 = vmatpush1.bf16.msra.mxu0 %v5155
        %5254 = vmatprep.subr.bf16.mxu0 0
        %5255 = vmatpush1.bf16.msra.mxu0 %v5156
        %5256 = vmatprep.subr.bf16.mxu0 0
        %5257 = vmatpush1.bf16.msra.mxu0 %v5157
        %5258 = vmatprep.mubr.bf16.mxu0 %v4978
        %5259 = vmatmul.mubr.bf16.gmra.mrb[0].mxu0 %v4977
        %v5260 = vpop.f32.mrb[0].mxu0
        %v5261 = vadd.f32 %v5068, %v5260
        %v5262 = vpop.f32.mrb[0].mxu0
        %v5263 = vpop.f32.mrb[0].mxu0
        %v5264 = vadd.f32 %v5068, %v5263
        %v5265 = vpop.f32.mrb[0].mxu0
        %5266 = vmatprep.mubr.bf16.mxu0 %v4981
        %5267 = vmatmul.mubr.bf16.gmra.mrb[0].mxu0 %v4980
        %v5268 = vpop.f32.mrb[0].mxu0
        %v5269 = vadd.f32 %v5068, %v5268
        %v5270 = vpop.f32.mrb[0].mxu0
        %v5271 = vpop.f32.mrb[0].mxu0
        %v5272 = vadd.f32 %v5068, %v5271
        %v5273 = vpop.f32.mrb[0].mxu0
        %5274 = vmatprep.mubr.bf16.mxu0 %v4984
        %5275 = vmatmul.mubr.bf16.gmra.mrb[0].mxu0 %v4983
        %v5276 = vpop.f32.mrb[0].mxu0
        %v5277 = vadd.f32 %v5068, %v5276
        %v5278 = vpop.f32.mrb[0].mxu0
        %v5279 = vpop.f32.mrb[0].mxu0
        %v5280 = vadd.f32 %v5068, %v5279
        %v5281 = vpop.f32.mrb[0].mxu0
        %5282 = vmatprep.mubr.bf16.mxu0 %v4987
        %5283 = vmatmul.mubr.bf16.gmra.mrb[0].mxu0 %v4986
        %v5284 = vpop.f32.mrb[0].mxu0
        %v5285 = vadd.f32 %v5068, %v5284
        %v5286 = vpop.f32.mrb[0].mxu0
        %v5287 = vpop.f32.mrb[0].mxu0
        %v5288 = vadd.f32 %v5068, %v5287
        %v5289 = vpop.f32.mrb[0].mxu0
        %5290 = vmatprep.mubr.bf16.mxu0 %v4990
        %5291 = vmatmul.mubr.bf16.gmra.mrb[0].mxu0 %v4989
        %v5292 = vpop.f32.mrb[0].mxu0
        %v5293 = vadd.f32 %v5068, %v5292
        %v5294 = vpop.f32.mrb[0].mxu0
        %v5295 = vpop.f32.mrb[0].mxu0
        %v5296 = vadd.f32 %v5068, %v5295
        %v5297 = vpop.f32.mrb[0].mxu0
        %5298 = vmatprep.mubr.bf16.mxu0 %v4993
        %5299 = vmatmul.mubr.bf16.gmra.mrb[0].mxu0 %v4992
        %v5300 = vpop.f32.mrb[0].mxu0
        %v5301 = vadd.f32 %v5068, %v5300
        %v5302 = vpop.f32.mrb[0].mxu0
        %v5303 = vpop.f32.mrb[0].mxu0
        %v5304 = vadd.f32 %v5068, %v5303
        %v5305 = vpop.f32.mrb[0].mxu0
        %5306 = vmatprep.mubr.bf16.mxu0 %v4996
        %5307 = vmatmul.mubr.bf16.gmra.mrb[0].mxu0 %v4995
        %v5308 = vpop.f32.mrb[0].mxu0
        %v5309 = vadd.f32 %v5068, %v5308
        %v5310 = vpop.f32.mrb[0].mxu0
        %v5311 = vpop.f32.mrb[0].mxu0
        %v5312 = vadd.f32 %v5068, %v5311
        %v5313 = vpop.f32.mrb[0].mxu0
        %5314 = vmatprep.mubr.bf16.mxu0 %v4999
        %5315 = vmatmul.mubr.bf16.gmra.mrb[0].mxu0 %v4998
        %v5316 = vpop.f32.mrb[0].mxu0
        %v5317 = vadd.f32 %v5068, %v5316
        %v5318 = vpop.f32.mrb[0].mxu0
        %v5319 = vpop.f32.mrb[0].mxu0
        %v5320 = vadd.f32 %v5068, %v5319
        %v5321 = vpop.f32.mrb[0].mxu0
        %5322 = vmatprep.mubr.bf16.mxu0 %v5002
        %5323 = vmatmul.mubr.bf16.gmra.mrb[0].mxu0 %v5001
        %v5324 = vpop.f32.mrb[0].mxu0
        %v5325 = vadd.f32 %v5068, %v5324
        %v5326 = vpop.f32.mrb[0].mxu0
        %v5327 = vpop.f32.mrb[0].mxu0
        %v5328 = vadd.f32 %v5068, %v5327
        %v5329 = vpop.f32.mrb[0].mxu0
        %5330 = vmatprep.mubr.bf16.mxu0 %v5005
        %5331 = vmatmul.mubr.bf16.gmra.mrb[0].mxu0 %v5004
        %v5332 = vpop.f32.mrb[0].mxu0
        %v5333 = vadd.f32 %v5068, %v5332
        %v5334 = vpop.f32.mrb[0].mxu0
        %v5335 = vpop.f32.mrb[0].mxu0
        %v5336 = vadd.f32 %v5068, %v5335
        %v5337 = vpop.f32.mrb[0].mxu0
        %5338 = vmatprep.mubr.bf16.mxu0 %v5008
        %5339 = vmatmul.mubr.bf16.gmra.mrb[0].mxu0 %v5007
        %v5340 = vpop.f32.mrb[0].mxu0
        %v5341 = vadd.f32 %v5068, %v5340
        %v5342 = vpop.f32.mrb[0].mxu0
        %v5343 = vpop.f32.mrb[0].mxu0
        %v5344 = vadd.f32 %v5068, %v5343
        %v5345 = vpop.f32.mrb[0].mxu0
        %5346 = vmatprep.mubr.bf16.mxu0 %v5011
        %5347 = vmatmul.mubr.bf16.gmra.mrb[0].mxu0 %v5010
        %v5348 = vpop.f32.mrb[0].mxu0
        %v5349 = vadd.f32 %v5068, %v5348
        %v5350 = vpop.f32.mrb[0].mxu0
        %v5351 = vpop.f32.mrb[0].mxu0
        %v5352 = vadd.f32 %v5068, %v5351
        %v5353 = vpop.f32.mrb[0].mxu0
        %5354 = vmatprep.mubr.bf16.mxu0 %v5014
        %5355 = vmatmul.mubr.bf16.gmra.mrb[0].mxu0 %v5013
        %v5356 = vpop.f32.mrb[0].mxu0
        %v5357 = vadd.f32 %v5068, %v5356
        %v5358 = vpop.f32.mrb[0].mxu0
        %v5359 = vpop.f32.mrb[0].mxu0
        %v5360 = vadd.f32 %v5068, %v5359
        %v5361 = vpop.f32.mrb[0].mxu0
        %5362 = vmatprep.mubr.bf16.mxu0 %v5017
        %5363 = vmatmul.mubr.bf16.gmra.mrb[0].mxu0 %v5016
        %v5364 = vpop.f32.mrb[0].mxu0
        %v5365 = vadd.f32 %v5068, %v5364
        %v5366 = vpop.f32.mrb[0].mxu0
        %v5367 = vpop.f32.mrb[0].mxu0
        %v5368 = vadd.f32 %v5068, %v5367
        %v5369 = vpop.f32.mrb[0].mxu0
        %5370 = vmatprep.mubr.bf16.mxu0 %v5020
        %5371 = vmatmul.mubr.bf16.gmra.mrb[0].mxu0 %v5019
        %v5372 = vpop.f32.mrb[0].mxu0
        %v5373 = vadd.f32 %v5068, %v5372
        %v5374 = vpop.f32.mrb[0].mxu0
        %v5375 = vpop.f32.mrb[0].mxu0
        %v5376 = vadd.f32 %v5068, %v5375
        %v5377 = vpop.f32.mrb[0].mxu0
        %5378 = vmatprep.mubr.bf16.mxu0 %v5023
        %5379 = vmatmul.mubr.bf16.gmra.mrb[0].mxu0 %v5022
        %v5380 = vpop.f32.mrb[0].mxu0
        %v5381 = vadd.f32 %v5068, %v5380
        %v5382 = vpop.f32.mrb[0].mxu0
        %v5383 = vpop.f32.mrb[0].mxu0
        %v5384 = vadd.f32 %v5068, %v5383
        %v5385 = vpop.f32.mrb[0].mxu0
        %5386 = vdwg.mxu0
        %5387 = vmatprep.subr.bf16.mxu0 0
        %5388 = vmatpush1.bf16.msra.mxu0 %v5158
        %5389 = vmatprep.subr.bf16.mxu0 0
        %5390 = vmatpush1.bf16.msra.mxu0 %v5159
        %5391 = vmatprep.subr.bf16.mxu0 0
        %5392 = vmatpush1.bf16.msra.mxu0 0
        %5393 = vmatprep.subr.bf16.mxu0 0
        %5394 = vmatpush1.bf16.msra.mxu0 0
        %5395 = vmatprep.subr.bf16.mxu0 0
        %5396 = vmatpush1.bf16.msra.mxu0 0
        %5397 = vmatprep.subr.bf16.mxu0 0
        %5398 = vmatpush1.bf16.msra.mxu0 0
        %5399 = vmatprep.subr.bf16.mxu0 0
        %5400 = vmatpush1.bf16.msra.mxu0 0
        %5401 = vmatprep.subr.bf16.mxu0 0
        %5402 = vmatpush1.bf16.msra.mxu0 0
        %5403 = vmatprep.subr.bf16.mxu0 0
        %5404 = vmatpush1.bf16.msra.mxu0 0
        %5405 = vmatprep.subr.bf16.mxu0 0
        %5406 = vmatpush1.bf16.msra.mxu0 0
        %5407 = vmatprep.subr.bf16.mxu0 0
        %5408 = vmatpush1.bf16.msra.mxu0 0
        %5409 = vmatprep.subr.bf16.mxu0 0
        %5410 = vmatpush1.bf16.msra.mxu0 0
        %5411 = vmatprep.subr.bf16.mxu0 0
        %5412 = vmatpush1.bf16.msra.mxu0 0
        %5413 = vmatprep.subr.bf16.mxu0 0
        %5414 = vmatpush1.bf16.msra.mxu0 0
        %5415 = vmatprep.subr.bf16.mxu0 0
        %5416 = vmatpush1.bf16.msra.mxu0 0
        %5417 = vmatprep.subr.bf16.mxu0 0
        %5418 = vmatpush1.bf16.msra.mxu0 0
        %5419 = vmatprep.mubr.bf16.mxu0 0
        %5420 = vmatmul.mubr.bf16.gmra.mrb[0].mxu0 %v5179
        %v5421 = vpop.f32.mrb[0].mxu0
        %v5422 = vadd.f32 %v5261, %v5421
        %v5423 = vpop.f32.mrb[0].mxu0
        %v5424 = vpop.f32.mrb[0].mxu0
        %v5425 = vadd.f32 %v5264, %v5424
        %v5426 = vpop.f32.mrb[0].mxu0
        %5427 = vmatprep.mubr.bf16.mxu0 0
        %5428 = vmatmul.mubr.bf16.gmra.mrb[0].mxu0 %v5182
        %v5429 = vpop.f32.mrb[0].mxu0
        %v5430 = vadd.f32 %v5269, %v5429
        %v5431 = vpop.f32.mrb[0].mxu0
        %v5432 = vpop.f32.mrb[0].mxu0
        %v5433 = vadd.f32 %v5272, %v5432
        %v5434 = vpop.f32.mrb[0].mxu0
        %5435 = vmatprep.mubr.bf16.mxu0 0
        %5436 = vmatmul.mubr.bf16.gmra.mrb[0].mxu0 %v5185
        %v5437 = vpop.f32.mrb[0].mxu0
        %v5438 = vadd.f32 %v5277, %v5437
        %v5439 = vpop.f32.mrb[0].mxu0
        %v5440 = vpop.f32.mrb[0].mxu0
        %v5441 = vadd.f32 %v5280, %v5440
        %v5442 = vpop.f32.mrb[0].mxu0
        %5443 = vmatprep.mubr.bf16.mxu0 0
        %5444 = vmatmul.mubr.bf16.gmra.mrb[0].mxu0 %v5188
        %v5445 = vpop.f32.mrb[0].mxu0
        %v5446 = vadd.f32 %v5285, %v5445
        %v5447 = vpop.f32.mrb[0].mxu0
        %v5448 = vpop.f32.mrb[0].mxu0
        %v5449 = vadd.f32 %v5288, %v5448
        %v5450 = vpop.f32.mrb[0].mxu0
        %5451 = vmatprep.mubr.bf16.mxu0 0
        %5452 = vmatmul.mubr.bf16.gmra.mrb[0].mxu0 %v5191
        %v5453 = vpop.f32.mrb[0].mxu0
        %v5454 = vadd.f32 %v5293, %v5453
        %v5455 = vpop.f32.mrb[0].mxu0
        %v5456 = vpop.f32.mrb[0].mxu0
        %v5457 = vadd.f32 %v5296, %v5456
        %v5458 = vpop.f32.mrb[0].mxu0
        %5459 = vmatprep.mubr.bf16.mxu0 0
        %5460 = vmatmul.mubr.bf16.gmra.mrb[0].mxu0 %v5194
        %v5461 = vpop.f32.mrb[0].mxu0
        %v5462 = vadd.f32 %v5301, %v5461
        %v5463 = vpop.f32.mrb[0].mxu0
        %v5464 = vpop.f32.mrb[0].mxu0
        %v5465 = vadd.f32 %v5304, %v5464
        %v5466 = vpop.f32.mrb[0].mxu0
        %5467 = vmatprep.mubr.bf16.mxu0 0
        %5468 = vmatmul.mubr.bf16.gmra.mrb[0].mxu0 %v5197
        %v5469 = vpop.f32.mrb[0].mxu0
        %v5470 = vadd.f32 %v5309, %v5469
        %v5471 = vpop.f32.mrb[0].mxu0
        %v5472 = vpop.f32.mrb[0].mxu0
        %v5473 = vadd.f32 %v5312, %v5472
        %v5474 = vpop.f32.mrb[0].mxu0
        %5475 = vmatprep.mubr.bf16.mxu0 0
        %5476 = vmatmul.mubr.bf16.gmra.mrb[0].mxu0 %v5200
        %v5477 = vpop.f32.mrb[0].mxu0
        %v5478 = vadd.f32 %v5317, %v5477
        %v5479 = vpop.f32.mrb[0].mxu0
        %v5480 = vpop.f32.mrb[0].mxu0
        %v5481 = vadd.f32 %v5320, %v5480
        %v5482 = vpop.f32.mrb[0].mxu0
        %5483 = vmatprep.mubr.bf16.mxu0 0
        %5484 = vmatmul.mubr.bf16.gmra.mrb[0].mxu0 %v5203
        %v5485 = vpop.f32.mrb[0].mxu0
        %v5486 = vadd.f32 %v5325, %v5485
        %v5487 = vpop.f32.mrb[0].mxu0
        %v5488 = vpop.f32.mrb[0].mxu0
        %v5489 = vadd.f32 %v5328, %v5488
        %v5490 = vpop.f32.mrb[0].mxu0
        %5491 = vmatprep.mubr.bf16.mxu0 0
        %5492 = vmatmul.mubr.bf16.gmra.mrb[0].mxu0 %v5206
        %v5493 = vpop.f32.mrb[0].mxu0
        %v5494 = vadd.f32 %v5333, %v5493
        %v5495 = vpop.f32.mrb[0].mxu0
        %v5496 = vpop.f32.mrb[0].mxu0
        %v5497 = vadd.f32 %v5336, %v5496
        %v5498 = vpop.f32.mrb[0].mxu0
        %5499 = vmatprep.mubr.bf16.mxu0 0
        %5500 = vmatmul.mubr.bf16.gmra.mrb[0].mxu0 %v5209
        %v5501 = vpop.f32.mrb[0].mxu0
        %v5502 = vadd.f32 %v5341, %v5501
        %v5503 = vpop.f32.mrb[0].mxu0
        %v5504 = vpop.f32.mrb[0].mxu0
        %v5505 = vadd.f32 %v5344, %v5504
        %v5506 = vpop.f32.mrb[0].mxu0
        %5507 = vmatprep.mubr.bf16.mxu0 0
        %5508 = vmatmul.mubr.bf16.gmra.mrb[0].mxu0 %v5212
        %v5509 = vpop.f32.mrb[0].mxu0
        %v5510 = vadd.f32 %v5349, %v5509
        %v5511 = vpop.f32.mrb[0].mxu0
        %v5512 = vpop.f32.mrb[0].mxu0
        %v5513 = vadd.f32 %v5352, %v5512
        %v5514 = vpop.f32.mrb[0].mxu0
        %5515 = vmatprep.mubr.bf16.mxu0 0
        %5516 = vmatmul.mubr.bf16.gmra.mrb[0].mxu0 %v5215
        %v5517 = vpop.f32.mrb[0].mxu0
        %v5518 = vadd.f32 %v5357, %v5517
        %v5519 = vpop.f32.mrb[0].mxu0
        %v5520 = vpop.f32.mrb[0].mxu0
        %v5521 = vadd.f32 %v5360, %v5520
        %v5522 = vpop.f32.mrb[0].mxu0
        %5523 = vmatprep.mubr.bf16.mxu0 0
        %5524 = vmatmul.mubr.bf16.gmra.mrb[0].mxu0 %v5218
        %v5525 = vpop.f32.mrb[0].mxu0
        %v5526 = vadd.f32 %v5365, %v5525
        %v5527 = vpop.f32.mrb[0].mxu0
        %v5528 = vpop.f32.mrb[0].mxu0
        %v5529 = vadd.f32 %v5368, %v5528
        %v5530 = vpop.f32.mrb[0].mxu0
        %5531 = vmatprep.mubr.bf16.mxu0 0
        %5532 = vmatmul.mubr.bf16.gmra.mrb[0].mxu0 %v5221
        %v5533 = vpop.f32.mrb[0].mxu0
        %v5534 = vadd.f32 %v5373, %v5533
        %v5535 = vpop.f32.mrb[0].mxu0
        %v5536 = vpop.f32.mrb[0].mxu0
        %v5537 = vadd.f32 %v5376, %v5536
        %v5538 = vpop.f32.mrb[0].mxu0
        %5539 = vmatprep.mubr.bf16.mxu0 0
        %5540 = vmatmul.mubr.bf16.gmra.mrb[0].mxu0 %v5224
        %v5541 = vpop.f32.mrb[0].mxu0
        %v5542 = vadd.f32 %v5381, %v5541
        %v5543 = vpop.f32.mrb[0].mxu0
        %v5544 = vpop.f32.mrb[0].mxu0
        %v5545 = vadd.f32 %v5384, %v5544
        %v5546 = vpop.f32.mrb[0].mxu0
        %5547 = vdwg.mxu0
        %v5548 = vmax.f32 %v5422, 0.0
        %v5549 = vmax.f32 %v5425, 0.0
        %v5550 = vmax.f32 %v5430, 0.0
        %v5551 = vmax.f32 %v5433, 0.0
        %v5552 = vmax.f32 %v5438, 0.0
        %v5553 = vmax.f32 %v5441, 0.0
        %v5554 = vmax.f32 %v5446, 0.0
        %v5555 = vmax.f32 %v5449, 0.0
        %v5556 = vmax.f32 %v5454, 0.0
        %v5557 = vmax.f32 %v5457, 0.0
        %v5558 = vmax.f32 %v5462, 0.0
        %v5559 = vmax.f32 %v5465, 0.0
        %v5560 = vmax.f32 %v5470, 0.0
        %v5561 = vmax.f32 %v5473, 0.0
        %v5562 = vmax.f32 %v5478, 0.0
        %v5563 = vmax.f32 %v5481, 0.0
        %v5564 = vmax.f32 %v5486, 0.0
        %v5565 = vmax.f32 %v5489, 0.0
        %v5566 = vmax.f32 %v5494, 0.0
        %v5567 = vmax.f32 %v5497, 0.0
        %v5568 = vmax.f32 %v5502, 0.0
        %v5569 = vmax.f32 %v5505, 0.0
        %v5570 = vmax.f32 %v5510, 0.0
        %v5571 = vmax.f32 %v5513, 0.0
        %v5572 = vmax.f32 %v5518, 0.0
        %v5573 = vmax.f32 %v5521, 0.0
        %v5574 = vmax.f32 %v5526, 0.0
        %v5575 = vmax.f32 %v5529, 0.0
        %v5576 = vmax.f32 %v5534, 0.0
        %v5577 = vmax.f32 %v5537, 0.0
        %v5578 = vmax.f32 %v5542, 0.0
        %v5579 = vmax.f32 %v5545, 0.0
        %5580 = vst.msk [vmem:[%s312 + $0x1] sm:$0xff] %vm224, %v5548
        %5581 = vst.msk [vmem:[%s312 + $0x9] sm:$0xff] %vm224, %v5549
        %5582 = vst.msk [vmem:[%s312 + $0x19] sm:$0xff] %vm224, %v5550
        %5583 = vst.msk [vmem:[%s312 + $0x21] sm:$0xff] %vm224, %v5551
        %5584 = vst.msk [vmem:[%s312 + $0x31] sm:$0xff] %vm224, %v5552
        %5585 = vst.msk [vmem:[%s312 + $0x39] sm:$0xff] %vm224, %v5553
        %5586 = vst.msk [vmem:[%s312 + $0x49] sm:$0xff] %vm224, %v5554
        %5587 = vst.msk [vmem:[%s312 + $0x51] sm:$0xff] %vm224, %v5555
        %5588 = vst.msk [vmem:[%s312 + $0x61] sm:$0xff] %vm224, %v5556
        %5589 = vst.msk [vmem:[%s312 + $0x69] sm:$0xff] %vm224, %v5557
        %5590 = vst.msk [vmem:[%s312 + $0x79] sm:$0xff] %vm224, %v5558
        %5591 = vst.msk [vmem:[%s312 + $0x81] sm:$0xff] %vm224, %v5559
        %5592 = vst.msk [vmem:[%s312 + $0x91] sm:$0xff] %vm224, %v5560
        %5593 = vst.msk [vmem:[%s312 + $0x99] sm:$0xff] %vm224, %v5561
        %5594 = vst.msk [vmem:[%s312 + $0xa9] sm:$0xff] %vm224, %v5562
        %5595 = vst.msk [vmem:[%s312 + $0xb1] sm:$0xff] %vm224, %v5563
        %5596 = vst.msk [vmem:[%s312 + $0xc1] sm:$0xff] %vm224, %v5564
        %5597 = vst.msk [vmem:[%s312 + $0xc9] sm:$0xff] %vm224, %v5565
        %5598 = vst.msk [vmem:[%s312 + $0xd9] sm:$0xff] %vm224, %v5566
        %5599 = vst.msk [vmem:[%s312 + $0xe1] sm:$0xff] %vm224, %v5567
        %5600 = vst.msk [vmem:[%s312 + $0xf1] sm:$0xff] %vm224, %v5568
        %5601 = vst.msk [vmem:[%s312 + $0xf9] sm:$0xff] %vm224, %v5569
        %5602 = vst.msk [vmem:[%s312 + $0x109] sm:$0xff] %vm224, %v5570
        %5603 = vst.msk [vmem:[%s312 + $0x111] sm:$0xff] %vm224, %v5571
        %5604 = vst.msk [vmem:[%s312 + $0x121] sm:$0xff] %vm224, %v5572
        %5605 = vst.msk [vmem:[%s312 + $0x129] sm:$0xff] %vm224, %v5573
        %5606 = vst.msk [vmem:[%s312 + $0x139] sm:$0xff] %vm224, %v5574
        %5607 = vst.msk [vmem:[%s312 + $0x141] sm:$0xff] %vm224, %v5575
        %5608 = vst.msk [vmem:[%s312 + $0x151] sm:$0xff] %vm224, %v5576
        %5609 = vst.msk [vmem:[%s312 + $0x159] sm:$0xff] %vm224, %v5577
        %5610 = vst.msk [vmem:[%s312 + $0x169] sm:$0xff] %vm224, %v5578
        %5611 = vst.msk [vmem:[%s312 + $0x171] sm:$0xff] %vm224, %v5579
        %v5612 = vld [vmem:[#allocation2] sm:$0xff]
        %v5613 = vld [vmem:[#allocation2 + $0x8] sm:$0xff]
        %v5614 = vld [vmem:[#allocation2 + $0x10] sm:$0x3]
        %v5615 = vld [vmem:[#allocation2 + $0x18] sm:$0xff]
        %v5616 = vld [vmem:[#allocation2 + $0x20] sm:$0xff]
        %v5617 = vld [vmem:[#allocation2 + $0x28] sm:$0x3]
        %v5618 = vld [vmem:[#allocation2 + $0x30] sm:$0xff]
        %v5619 = vld [vmem:[#allocation2 + $0x38] sm:$0xff]
        %v5620 = vld [vmem:[#allocation2 + $0x40] sm:$0x3]
        %v5621 = vld [vmem:[#allocation2 + $0x48] sm:$0xff]
        %v5622 = vld [vmem:[#allocation2 + $0x50] sm:$0xff]
        %v5623 = vld [vmem:[#allocation2 + $0x58] sm:$0x3]
        %v5624 = vld [vmem:[#allocation2 + $0x60] sm:$0xff]
        %v5625 = vld [vmem:[#allocation2 + $0x68] sm:$0xff]
        %v5626 = vld [vmem:[#allocation2 + $0x70] sm:$0x3]
        %v5627 = vld [vmem:[#allocation2 + $0x78] sm:$0xff]
        %v5628 = vld [vmem:[#allocation2 + $0x80] sm:$0xff]
        %v5629 = vld [vmem:[#allocation2 + $0x88] sm:$0x3]
        %v5630 = vld [vmem:[#allocation2 + $0x90] sm:$0xff]
        %v5631 = vld [vmem:[#allocation2 + $0x98] sm:$0xff]
        %v5632 = vld [vmem:[#allocation2 + $0xa0] sm:$0x3]
        %v5633 = vld [vmem:[#allocation2 + $0xa8] sm:$0xff]
        %v5634 = vld [vmem:[#allocation2 + $0xb0] sm:$0xff]
        %v5635 = vld [vmem:[#allocation2 + $0xb8] sm:$0x3]
        %v5636 = vld [vmem:[#allocation2 + $0xc0] sm:$0xff]
        %v5637 = vld [vmem:[#allocation2 + $0xc8] sm:$0xff]
        %v5638 = vld [vmem:[#allocation2 + $0xd0] sm:$0x3]
        %v5639 = vld [vmem:[#allocation2 + $0xd8] sm:$0xff]
        %v5640 = vld [vmem:[#allocation2 + $0xe0] sm:$0xff]
        %v5641 = vld [vmem:[#allocation2 + $0xe8] sm:$0x3]
        %v5642 = vld [vmem:[#allocation2 + $0xf0] sm:$0xff]
        %v5643 = vld [vmem:[#allocation2 + $0xf8] sm:$0xff]
        %v5644 = vld [vmem:[#allocation2 + $0x100] sm:$0x3]
        %v5645 = vld [vmem:[#allocation2 + $0x108] sm:$0xff]
        %v5646 = vld [vmem:[#allocation2 + $0x110] sm:$0xff]
        %v5647 = vld [vmem:[#allocation2 + $0x118] sm:$0x3]
        %v5648 = vld [vmem:[#allocation2 + $0x120] sm:$0xff]
        %v5649 = vld [vmem:[#allocation2 + $0x128] sm:$0xff]
        %v5650 = vld [vmem:[#allocation2 + $0x130] sm:$0x3]
        %v5651 = vld [vmem:[#allocation2 + $0x138] sm:$0xff]
        %v5652 = vld [vmem:[#allocation2 + $0x140] sm:$0xff]
        %v5653 = vld [vmem:[#allocation2 + $0x148] sm:$0x3]
        %v5654 = vld [vmem:[#allocation2 + $0x150] sm:$0xff]
        %v5655 = vld [vmem:[#allocation2 + $0x158] sm:$0xff]
        %v5656 = vld [vmem:[#allocation2 + $0x160] sm:$0x3]
        %v5657 = vld [vmem:[#allocation2 + $0x168] sm:$0xff]
        %v5658 = vld [vmem:[#allocation2 + $0x170] sm:$0xff]
        %v5659 = vld [vmem:[#allocation2 + $0x178] sm:$0x3]
        %v5660 = vld [vmem:[#allocation2 + $0x180] sm:$0xff]
        %v5661 = vld [vmem:[#allocation2 + $0x188] sm:$0xff]
        %v5662 = vld [vmem:[#allocation2 + $0x190] sm:$0x3]
        %v5663 = vld [vmem:[#allocation2 + $0x198] sm:$0xff]
        %v5664 = vld [vmem:[#allocation2 + $0x1a0] sm:$0xff]
        %v5665 = vld [vmem:[#allocation2 + $0x1a8] sm:$0x3]
        %v5714 = vrot.slane %v5612, 1
        %v5715 = vrot.slane %v5613, 1
        %v5716 = vsel %vm447, %v5714, %v5715
        %v5717 = vrot.slane %v5614, 1
        %v5718 = vsel %vm447, %v5715, %v5717
        %v5719 = vrot.slane %v5615, 1
        %v5720 = vrot.slane %v5616, 1
        %v5721 = vsel %vm447, %v5719, %v5720
        %v5722 = vrot.slane %v5617, 1
        %v5723 = vsel %vm447, %v5720, %v5722
        %v5724 = vrot.slane %v5618, 1
        %v5725 = vrot.slane %v5619, 1
        %v5726 = vsel %vm447, %v5724, %v5725
        %v5727 = vrot.slane %v5620, 1
        %v5728 = vsel %vm447, %v5725, %v5727
        %v5729 = vrot.slane %v5621, 1
        %v5730 = vrot.slane %v5622, 1
        %v5731 = vsel %vm447, %v5729, %v5730
        %v5732 = vrot.slane %v5623, 1
        %v5733 = vsel %vm447, %v5730, %v5732
        %v5734 = vrot.slane %v5624, 1
        %v5735 = vrot.slane %v5625, 1
        %v5736 = vsel %vm447, %v5734, %v5735
        %v5737 = vrot.slane %v5626, 1
        %v5738 = vsel %vm447, %v5735, %v5737
        %v5739 = vrot.slane %v5627, 1
        %v5740 = vrot.slane %v5628, 1
        %v5741 = vsel %vm447, %v5739, %v5740
        %v5742 = vrot.slane %v5629, 1
        %v5743 = vsel %vm447, %v5740, %v5742
        %v5744 = vrot.slane %v5630, 1
        %v5745 = vrot.slane %v5631, 1
        %v5746 = vsel %vm447, %v5744, %v5745
        %v5747 = vrot.slane %v5632, 1
        %v5748 = vsel %vm447, %v5745, %v5747
        %v5749 = vrot.slane %v5633, 1
        %v5750 = vrot.slane %v5634, 1
        %v5751 = vsel %vm447, %v5749, %v5750
        %v5752 = vrot.slane %v5635, 1
        %v5753 = vsel %vm447, %v5750, %v5752
        %v5754 = vrot.slane %v5636, 1
        %v5755 = vrot.slane %v5637, 1
        %v5756 = vsel %vm447, %v5754, %v5755
        %v5757 = vrot.slane %v5638, 1
        %v5758 = vsel %vm447, %v5755, %v5757
        %v5759 = vrot.slane %v5639, 1
        %v5760 = vrot.slane %v5640, 1
        %v5761 = vsel %vm447, %v5759, %v5760
        %v5762 = vrot.slane %v5641, 1
        %v5763 = vsel %vm447, %v5760, %v5762
        %v5764 = vrot.slane %v5642, 1
        %v5765 = vrot.slane %v5643, 1
        %v5766 = vsel %vm447, %v5764, %v5765
        %v5767 = vrot.slane %v5644, 1
        %v5768 = vsel %vm447, %v5765, %v5767
        %v5769 = vrot.slane %v5645, 1
        %v5770 = vrot.slane %v5646, 1
        %v5771 = vsel %vm447, %v5769, %v5770
        %v5772 = vrot.slane %v5647, 1
        %v5773 = vsel %vm447, %v5770, %v5772
        %v5774 = vrot.slane %v5648, 1
        %v5775 = vrot.slane %v5649, 1
        %v5776 = vsel %vm447, %v5774, %v5775
        %v5777 = vrot.slane %v5650, 1
        %v5778 = vsel %vm447, %v5775, %v5777
        %v5779 = vrot.slane %v5651, 1
        %v5780 = vrot.slane %v5652, 1
        %v5781 = vsel %vm447, %v5779, %v5780
        %v5782 = vrot.slane %v5653, 1
        %v5783 = vsel %vm447, %v5780, %v5782
        %v5784 = vrot.slane %v5654, 1
        %v5785 = vrot.slane %v5655, 1
        %v5786 = vsel %vm447, %v5784, %v5785
        %v5787 = vrot.slane %v5656, 1
        %v5788 = vsel %vm447, %v5785, %v5787
        %v5789 = vrot.slane %v5657, 1
        %v5790 = vrot.slane %v5658, 1
        %v5791 = vsel %vm447, %v5789, %v5790
        %v5792 = vrot.slane %v5659, 1
        %v5793 = vsel %vm447, %v5790, %v5792
        %5794 = vrot.lane.b32.xlu0 %v5716, 32
        %v5795 = vpop.permute.xlu0 %5794
        %5796 = vrot.lane.b32.xlu0 %v5718, 32
        %v5797 = vpop.permute.xlu0 %5796
        %5798 = vrot.lane.b32.xlu0 %v5721, 32
        %v5799 = vpop.permute.xlu0 %5798
        %5800 = vrot.lane.b32.xlu0 %v5723, 32
        %v5801 = vpop.permute.xlu0 %5800
        %5802 = vrot.lane.b32.xlu0 %v5726, 32
        %v5803 = vpop.permute.xlu0 %5802
        %5804 = vrot.lane.b32.xlu0 %v5728, 32
        %v5805 = vpop.permute.xlu0 %5804
        %5806 = vrot.lane.b32.xlu0 %v5731, 32
        %v5807 = vpop.permute.xlu0 %5806
        %5808 = vrot.lane.b32.xlu0 %v5733, 32
        %v5809 = vpop.permute.xlu0 %5808
        %5810 = vrot.lane.b32.xlu0 %v5736, 32
        %v5811 = vpop.permute.xlu0 %5810
        %5812 = vrot.lane.b32.xlu0 %v5738, 32
        %v5813 = vpop.permute.xlu0 %5812
        %5814 = vrot.lane.b32.xlu0 %v5741, 32
        %v5815 = vpop.permute.xlu0 %5814
        %5816 = vrot.lane.b32.xlu0 %v5743, 32
        %v5817 = vpop.permute.xlu0 %5816
        %5818 = vrot.lane.b32.xlu0 %v5746, 32
        %v5819 = vpop.permute.xlu0 %5818
        %5820 = vrot.lane.b32.xlu0 %v5748, 32
        %v5821 = vpop.permute.xlu0 %5820
        %5822 = vrot.lane.b32.xlu0 %v5751, 32
        %v5823 = vpop.permute.xlu0 %5822
        %5824 = vrot.lane.b32.xlu0 %v5753, 32
        %v5825 = vpop.permute.xlu0 %5824
        %5826 = vrot.lane.b32.xlu0 %v5756, 32
        %v5827 = vpop.permute.xlu0 %5826
        %5828 = vrot.lane.b32.xlu0 %v5758, 32
        %v5829 = vpop.permute.xlu0 %5828
        %5830 = vrot.lane.b32.xlu0 %v5761, 32
        %v5831 = vpop.permute.xlu0 %5830
        %5832 = vrot.lane.b32.xlu0 %v5763, 32
        %v5833 = vpop.permute.xlu0 %5832
        %5834 = vrot.lane.b32.xlu0 %v5766, 32
        %v5835 = vpop.permute.xlu0 %5834
        %5836 = vrot.lane.b32.xlu0 %v5768, 32
        %v5837 = vpop.permute.xlu0 %5836
        %5838 = vrot.lane.b32.xlu0 %v5771, 32
        %v5839 = vpop.permute.xlu0 %5838
        %5840 = vrot.lane.b32.xlu0 %v5773, 32
        %v5841 = vpop.permute.xlu0 %5840
        %5842 = vrot.lane.b32.xlu0 %v5776, 32
        %v5843 = vpop.permute.xlu0 %5842
        %5844 = vrot.lane.b32.xlu0 %v5778, 32
        %v5845 = vpop.permute.xlu0 %5844
        %5846 = vrot.lane.b32.xlu0 %v5781, 32
        %v5847 = vpop.permute.xlu0 %5846
        %5848 = vrot.lane.b32.xlu0 %v5783, 32
        %v5849 = vpop.permute.xlu0 %5848
        %5850 = vrot.lane.b32.xlu0 %v5786, 32
        %v5851 = vpop.permute.xlu0 %5850
        %5852 = vrot.lane.b32.xlu0 %v5788, 32
        %v5853 = vpop.permute.xlu0 %5852
        %5854 = vrot.lane.b32.xlu0 %v5791, 32
        %v5855 = vpop.permute.xlu0 %5854
        %5856 = vrot.lane.b32.xlu0 %v5793, 32
        %v5857 = vpop.permute.xlu0 %5856
        %v5890 = vrot.slane %v5612, 2
        %v5891 = vrot.slane %v5613, 2
        %v5892 = vsel %vm624, %v5890, %v5891
        %v5893 = vrot.slane %v5614, 2
        %v5894 = vsel %vm624, %v5891, %v5893
        %v5895 = vrot.slane %v5615, 2
        %v5896 = vrot.slane %v5616, 2
        %v5897 = vsel %vm624, %v5895, %v5896
        %v5898 = vrot.slane %v5617, 2
        %v5899 = vsel %vm624, %v5896, %v5898
        %v5900 = vrot.slane %v5618, 2
        %v5901 = vrot.slane %v5619, 2
        %v5902 = vsel %vm624, %v5900, %v5901
        %v5903 = vrot.slane %v5620, 2
        %v5904 = vsel %vm624, %v5901, %v5903
        %v5905 = vrot.slane %v5621, 2
        %v5906 = vrot.slane %v5622, 2
        %v5907 = vsel %vm624, %v5905, %v5906
        %v5908 = vrot.slane %v5623, 2
        %v5909 = vsel %vm624, %v5906, %v5908
        %v5910 = vrot.slane %v5624, 2
        %v5911 = vrot.slane %v5625, 2
        %v5912 = vsel %vm624, %v5910, %v5911
        %v5913 = vrot.slane %v5626, 2
        %v5914 = vsel %vm624, %v5911, %v5913
        %v5915 = vrot.slane %v5627, 2
        %v5916 = vrot.slane %v5628, 2
        %v5917 = vsel %vm624, %v5915, %v5916
        %v5918 = vrot.slane %v5629, 2
        %v5919 = vsel %vm624, %v5916, %v5918
        %v5920 = vrot.slane %v5630, 2
        %v5921 = vrot.slane %v5631, 2
        %v5922 = vsel %vm624, %v5920, %v5921
        %v5923 = vrot.slane %v5632, 2
        %v5924 = vsel %vm624, %v5921, %v5923
        %v5925 = vrot.slane %v5633, 2
        %v5926 = vrot.slane %v5634, 2
        %v5927 = vsel %vm624, %v5925, %v5926
        %v5928 = vrot.slane %v5635, 2
        %v5929 = vsel %vm624, %v5926, %v5928
        %v5930 = vrot.slane %v5636, 2
        %v5931 = vrot.slane %v5637, 2
        %v5932 = vsel %vm624, %v5930, %v5931
        %v5933 = vrot.slane %v5638, 2
        %v5934 = vsel %vm624, %v5931, %v5933
        %v5935 = vrot.slane %v5639, 2
        %v5936 = vrot.slane %v5640, 2
        %v5937 = vsel %vm624, %v5935, %v5936
        %v5938 = vrot.slane %v5641, 2
        %v5939 = vsel %vm624, %v5936, %v5938
        %v5940 = vrot.slane %v5642, 2
        %v5941 = vrot.slane %v5643, 2
        %v5942 = vsel %vm624, %v5940, %v5941
        %v5943 = vrot.slane %v5644, 2
        %v5944 = vsel %vm624, %v5941, %v5943
        %v5945 = vrot.slane %v5645, 2
        %v5946 = vrot.slane %v5646, 2
        %v5947 = vsel %vm624, %v5945, %v5946
        %v5948 = vrot.slane %v5647, 2
        %v5949 = vsel %vm624, %v5946, %v5948
        %v5950 = vrot.slane %v5648, 2
        %v5951 = vrot.slane %v5649, 2
        %v5952 = vsel %vm624, %v5950, %v5951
        %v5953 = vrot.slane %v5650, 2
        %v5954 = vsel %vm624, %v5951, %v5953
        %v5955 = vrot.slane %v5651, 2
        %v5956 = vrot.slane %v5652, 2
        %v5957 = vsel %vm624, %v5955, %v5956
        %v5958 = vrot.slane %v5653, 2
        %v5959 = vsel %vm624, %v5956, %v5958
        %v5960 = vrot.slane %v5654, 2
        %v5961 = vrot.slane %v5655, 2
        %v5962 = vsel %vm624, %v5960, %v5961
        %v5963 = vrot.slane %v5656, 2
        %v5964 = vsel %vm624, %v5961, %v5963
        %v5965 = vrot.slane %v5657, 2
        %v5966 = vrot.slane %v5658, 2
        %v5967 = vsel %vm624, %v5965, %v5966
        %v5968 = vrot.slane %v5659, 2
        %v5969 = vsel %vm624, %v5966, %v5968
        %5970 = vrot.lane.b32.xlu0 %v5892, 64
        %v5971 = vpop.permute.xlu0 %5970
        %5972 = vrot.lane.b32.xlu0 %v5894, 64
        %v5973 = vpop.permute.xlu0 %5972
        %5974 = vrot.lane.b32.xlu0 %v5897, 64
        %v5975 = vpop.permute.xlu0 %5974
        %5976 = vrot.lane.b32.xlu0 %v5899, 64
        %v5977 = vpop.permute.xlu0 %5976
        %5978 = vrot.lane.b32.xlu0 %v5902, 64
        %v5979 = vpop.permute.xlu0 %5978
        %5980 = vrot.lane.b32.xlu0 %v5904, 64
        %v5981 = vpop.permute.xlu0 %5980
        %5982 = vrot.lane.b32.xlu0 %v5907, 64
        %v5983 = vpop.permute.xlu0 %5982
        %5984 = vrot.lane.b32.xlu0 %v5909, 64
        %v5985 = vpop.permute.xlu0 %5984
        %5986 = vrot.lane.b32.xlu0 %v5912, 64
        %v5987 = vpop.permute.xlu0 %5986
        %5988 = vrot.lane.b32.xlu0 %v5914, 64
        %v5989 = vpop.permute.xlu0 %5988
        %5990 = vrot.lane.b32.xlu0 %v5917, 64
        %v5991 = vpop.permute.xlu0 %5990
        %5992 = vrot.lane.b32.xlu0 %v5919, 64
        %v5993 = vpop.permute.xlu0 %5992
        %5994 = vrot.lane.b32.xlu0 %v5922, 64
        %v5995 = vpop.permute.xlu0 %5994
        %5996 = vrot.lane.b32.xlu0 %v5924, 64
        %v5997 = vpop.permute.xlu0 %5996
        %5998 = vrot.lane.b32.xlu0 %v5927, 64
        %v5999 = vpop.permute.xlu0 %5998
        %6000 = vrot.lane.b32.xlu0 %v5929, 64
        %v6001 = vpop.permute.xlu0 %6000
        %6002 = vrot.lane.b32.xlu0 %v5932, 64
        %v6003 = vpop.permute.xlu0 %6002
        %6004 = vrot.lane.b32.xlu0 %v5934, 64
        %v6005 = vpop.permute.xlu0 %6004
        %6006 = vrot.lane.b32.xlu0 %v5937, 64
        %v6007 = vpop.permute.xlu0 %6006
        %6008 = vrot.lane.b32.xlu0 %v5939, 64
        %v6009 = vpop.permute.xlu0 %6008
        %6010 = vrot.lane.b32.xlu0 %v5942, 64
        %v6011 = vpop.permute.xlu0 %6010
        %6012 = vrot.lane.b32.xlu0 %v5944, 64
        %v6013 = vpop.permute.xlu0 %6012
        %6014 = vrot.lane.b32.xlu0 %v5947, 64
        %v6015 = vpop.permute.xlu0 %6014
        %6016 = vrot.lane.b32.xlu0 %v5949, 64
        %v6017 = vpop.permute.xlu0 %6016
        %6018 = vrot.lane.b32.xlu0 %v5952, 64
        %v6019 = vpop.permute.xlu0 %6018
        %6020 = vrot.lane.b32.xlu0 %v5954, 64
        %v6021 = vpop.permute.xlu0 %6020
        %6022 = vrot.lane.b32.xlu0 %v5957, 64
        %v6023 = vpop.permute.xlu0 %6022
        %6024 = vrot.lane.b32.xlu0 %v5959, 64
        %v6025 = vpop.permute.xlu0 %6024
        %6026 = vrot.lane.b32.xlu0 %v5962, 64
        %v6027 = vpop.permute.xlu0 %6026
        %6028 = vrot.lane.b32.xlu0 %v5964, 64
        %v6029 = vpop.permute.xlu0 %6028
        %6030 = vrot.lane.b32.xlu0 %v5967, 64
        %v6031 = vpop.permute.xlu0 %6030
        %6032 = vrot.lane.b32.xlu0 %v5969, 64
        %v6033 = vpop.permute.xlu0 %6032
        %6068 = vrot.lane.b32.xlu0 %v5615, 96
        %v6069 = vpop.permute.xlu0 %6068
        %6070 = vrot.lane.b32.xlu0 %v5616, 96
        %v6071 = vpop.permute.xlu0 %6070
        %6072 = vrot.lane.b32.xlu0 %v5618, 96
        %v6073 = vpop.permute.xlu0 %6072
        %6074 = vrot.lane.b32.xlu0 %v5619, 96
        %v6075 = vpop.permute.xlu0 %6074
        %6076 = vrot.lane.b32.xlu0 %v5621, 96
        %v6077 = vpop.permute.xlu0 %6076
        %6078 = vrot.lane.b32.xlu0 %v5622, 96
        %v6079 = vpop.permute.xlu0 %6078
        %6080 = vrot.lane.b32.xlu0 %v5624, 96
        %v6081 = vpop.permute.xlu0 %6080
        %6082 = vrot.lane.b32.xlu0 %v5625, 96
        %v6083 = vpop.permute.xlu0 %6082
        %6084 = vrot.lane.b32.xlu0 %v5627, 96
        %v6085 = vpop.permute.xlu0 %6084
        %6086 = vrot.lane.b32.xlu0 %v5628, 96
        %v6087 = vpop.permute.xlu0 %6086
        %6088 = vrot.lane.b32.xlu0 %v5630, 96
        %v6089 = vpop.permute.xlu0 %6088
        %6090 = vrot.lane.b32.xlu0 %v5631, 96
        %v6091 = vpop.permute.xlu0 %6090
        %6092 = vrot.lane.b32.xlu0 %v5633, 96
        %v6093 = vpop.permute.xlu0 %6092
        %6094 = vrot.lane.b32.xlu0 %v5634, 96
        %v6095 = vpop.permute.xlu0 %6094
        %6096 = vrot.lane.b32.xlu0 %v5636, 96
        %v6097 = vpop.permute.xlu0 %6096
        %6098 = vrot.lane.b32.xlu0 %v5637, 96
        %v6099 = vpop.permute.xlu0 %6098
        %6100 = vrot.lane.b32.xlu0 %v5639, 96
        %v6101 = vpop.permute.xlu0 %6100
        %6102 = vrot.lane.b32.xlu0 %v5640, 96
        %v6103 = vpop.permute.xlu0 %6102
        %6104 = vrot.lane.b32.xlu0 %v5642, 96
        %v6105 = vpop.permute.xlu0 %6104
        %6106 = vrot.lane.b32.xlu0 %v5643, 96
        %v6107 = vpop.permute.xlu0 %6106
        %6108 = vrot.lane.b32.xlu0 %v5645, 96
        %v6109 = vpop.permute.xlu0 %6108
        %6110 = vrot.lane.b32.xlu0 %v5646, 96
        %v6111 = vpop.permute.xlu0 %6110
        %6112 = vrot.lane.b32.xlu0 %v5648, 96
        %v6113 = vpop.permute.xlu0 %6112
        %6114 = vrot.lane.b32.xlu0 %v5649, 96
        %v6115 = vpop.permute.xlu0 %6114
        %6116 = vrot.lane.b32.xlu0 %v5651, 96
        %v6117 = vpop.permute.xlu0 %6116
        %6118 = vrot.lane.b32.xlu0 %v5652, 96
        %v6119 = vpop.permute.xlu0 %6118
        %6120 = vrot.lane.b32.xlu0 %v5654, 96
        %v6121 = vpop.permute.xlu0 %6120
        %6122 = vrot.lane.b32.xlu0 %v5655, 96
        %v6123 = vpop.permute.xlu0 %6122
        %6124 = vrot.lane.b32.xlu0 %v5657, 96
        %v6125 = vpop.permute.xlu0 %6124
        %6126 = vrot.lane.b32.xlu0 %v5658, 96
        %v6127 = vpop.permute.xlu0 %6126
        %6128 = vrot.lane.b32.xlu0 %v5660, 96
        %v6129 = vpop.permute.xlu0 %6128
        %6130 = vrot.lane.b32.xlu0 %v5661, 96
        %v6131 = vpop.permute.xlu0 %6130
        %v6165 = vrot.slane %v5660, 1
        %v6166 = vrot.slane %v5661, 1
        %v6167 = vsel %vm447, %v6165, %v6166
        %v6168 = vrot.slane %v5662, 1
        %v6169 = vsel %vm447, %v6166, %v6168
        %v6202 = vrot.slane %v5660, 2
        %v6203 = vrot.slane %v5661, 2
        %v6204 = vsel %vm624, %v6202, %v6203
        %v6205 = vrot.slane %v5662, 2
        %v6206 = vsel %vm624, %v6203, %v6205
        %6207 = vrot.lane.b32.xlu0 %v5897, 32
        %v6208 = vpop.permute.xlu0 %6207
        %6209 = vrot.lane.b32.xlu0 %v5899, 32
        %v6210 = vpop.permute.xlu0 %6209
        %6211 = vrot.lane.b32.xlu0 %v5902, 32
        %v6212 = vpop.permute.xlu0 %6211
        %6213 = vrot.lane.b32.xlu0 %v5904, 32
        %v6214 = vpop.permute.xlu0 %6213
        %6215 = vrot.lane.b32.xlu0 %v5907, 32
        %v6216 = vpop.permute.xlu0 %6215
        %6217 = vrot.lane.b32.xlu0 %v5909, 32
        %v6218 = vpop.permute.xlu0 %6217
        %6219 = vrot.lane.b32.xlu0 %v5912, 32
        %v6220 = vpop.permute.xlu0 %6219
        %6221 = vrot.lane.b32.xlu0 %v5914, 32
        %v6222 = vpop.permute.xlu0 %6221
        %6223 = vrot.lane.b32.xlu0 %v5917, 32
        %v6224 = vpop.permute.xlu0 %6223
        %6225 = vrot.lane.b32.xlu0 %v5919, 32
        %v6226 = vpop.permute.xlu0 %6225
        %6227 = vrot.lane.b32.xlu0 %v5922, 32
        %v6228 = vpop.permute.xlu0 %6227
        %6229 = vrot.lane.b32.xlu0 %v5924, 32
        %v6230 = vpop.permute.xlu0 %6229
        %6231 = vrot.lane.b32.xlu0 %v5927, 32
        %v6232 = vpop.permute.xlu0 %6231
        %6233 = vrot.lane.b32.xlu0 %v5929, 32
        %v6234 = vpop.permute.xlu0 %6233
        %6235 = vrot.lane.b32.xlu0 %v5932, 32
        %v6236 = vpop.permute.xlu0 %6235
        %6237 = vrot.lane.b32.xlu0 %v5934, 32
        %v6238 = vpop.permute.xlu0 %6237
        %6239 = vrot.lane.b32.xlu0 %v5937, 32
        %v6240 = vpop.permute.xlu0 %6239
        %6241 = vrot.lane.b32.xlu0 %v5939, 32
        %v6242 = vpop.permute.xlu0 %6241
        %6243 = vrot.lane.b32.xlu0 %v5942, 32
        %v6244 = vpop.permute.xlu0 %6243
        %6245 = vrot.lane.b32.xlu0 %v5944, 32
        %v6246 = vpop.permute.xlu0 %6245
        %6247 = vrot.lane.b32.xlu0 %v5947, 32
        %v6248 = vpop.permute.xlu0 %6247
        %6249 = vrot.lane.b32.xlu0 %v5949, 32
        %v6250 = vpop.permute.xlu0 %6249
        %6251 = vrot.lane.b32.xlu0 %v5952, 32
        %v6252 = vpop.permute.xlu0 %6251
        %6253 = vrot.lane.b32.xlu0 %v5954, 32
        %v6254 = vpop.permute.xlu0 %6253
        %6255 = vrot.lane.b32.xlu0 %v5957, 32
        %v6256 = vpop.permute.xlu0 %6255
        %6257 = vrot.lane.b32.xlu0 %v5959, 32
        %v6258 = vpop.permute.xlu0 %6257
        %6259 = vrot.lane.b32.xlu0 %v5962, 32
        %v6260 = vpop.permute.xlu0 %6259
        %6261 = vrot.lane.b32.xlu0 %v5964, 32
        %v6262 = vpop.permute.xlu0 %6261
        %6263 = vrot.lane.b32.xlu0 %v5967, 32
        %v6264 = vpop.permute.xlu0 %6263
        %6265 = vrot.lane.b32.xlu0 %v5969, 32
        %v6266 = vpop.permute.xlu0 %6265
        %6267 = vrot.lane.b32.xlu0 %v6204, 32
        %v6268 = vpop.permute.xlu0 %6267
        %6269 = vrot.lane.b32.xlu0 %v6206, 32
        %v6270 = vpop.permute.xlu0 %6269
        %6305 = vrot.lane.b32.xlu0 %v5618, 64
        %v6306 = vpop.permute.xlu0 %6305
        %6307 = vrot.lane.b32.xlu0 %v5619, 64
        %v6308 = vpop.permute.xlu0 %6307
        %6309 = vrot.lane.b32.xlu0 %v5621, 64
        %v6310 = vpop.permute.xlu0 %6309
        %6311 = vrot.lane.b32.xlu0 %v5622, 64
        %v6312 = vpop.permute.xlu0 %6311
        %6313 = vrot.lane.b32.xlu0 %v5624, 64
        %v6314 = vpop.permute.xlu0 %6313
        %6315 = vrot.lane.b32.xlu0 %v5625, 64
        %v6316 = vpop.permute.xlu0 %6315
        %6317 = vrot.lane.b32.xlu0 %v5627, 64
        %v6318 = vpop.permute.xlu0 %6317
        %6319 = vrot.lane.b32.xlu0 %v5628, 64
        %v6320 = vpop.permute.xlu0 %6319
        %6321 = vrot.lane.b32.xlu0 %v5630, 64
        %v6322 = vpop.permute.xlu0 %6321
        %6323 = vrot.lane.b32.xlu0 %v5631, 64
        %v6324 = vpop.permute.xlu0 %6323
        %6325 = vrot.lane.b32.xlu0 %v5633, 64
        %v6326 = vpop.permute.xlu0 %6325
        %6327 = vrot.lane.b32.xlu0 %v5634, 64
        %v6328 = vpop.permute.xlu0 %6327
        %6329 = vrot.lane.b32.xlu0 %v5636, 64
        %v6330 = vpop.permute.xlu0 %6329
        %6331 = vrot.lane.b32.xlu0 %v5637, 64
        %v6332 = vpop.permute.xlu0 %6331
        %6333 = vrot.lane.b32.xlu0 %v5639, 64
        %v6334 = vpop.permute.xlu0 %6333
        %6335 = vrot.lane.b32.xlu0 %v5640, 64
        %v6336 = vpop.permute.xlu0 %6335
        %6337 = vrot.lane.b32.xlu0 %v5642, 64
        %v6338 = vpop.permute.xlu0 %6337
        %6339 = vrot.lane.b32.xlu0 %v5643, 64
        %v6340 = vpop.permute.xlu0 %6339
        %6341 = vrot.lane.b32.xlu0 %v5645, 64
        %v6342 = vpop.permute.xlu0 %6341
        %6343 = vrot.lane.b32.xlu0 %v5646, 64
        %v6344 = vpop.permute.xlu0 %6343
        %6345 = vrot.lane.b32.xlu0 %v5648, 64
        %v6346 = vpop.permute.xlu0 %6345
        %6347 = vrot.lane.b32.xlu0 %v5649, 64
        %v6348 = vpop.permute.xlu0 %6347
        %6349 = vrot.lane.b32.xlu0 %v5651, 64
        %v6350 = vpop.permute.xlu0 %6349
        %6351 = vrot.lane.b32.xlu0 %v5652, 64
        %v6352 = vpop.permute.xlu0 %6351
        %6353 = vrot.lane.b32.xlu0 %v5654, 64
        %v6354 = vpop.permute.xlu0 %6353
        %6355 = vrot.lane.b32.xlu0 %v5655, 64
        %v6356 = vpop.permute.xlu0 %6355
        %6357 = vrot.lane.b32.xlu0 %v5657, 64
        %v6358 = vpop.permute.xlu0 %6357
        %6359 = vrot.lane.b32.xlu0 %v5658, 64
        %v6360 = vpop.permute.xlu0 %6359
        %6361 = vrot.lane.b32.xlu0 %v5660, 64
        %v6362 = vpop.permute.xlu0 %6361
        %6363 = vrot.lane.b32.xlu0 %v5661, 64
        %v6364 = vpop.permute.xlu0 %6363
        %6365 = vrot.lane.b32.xlu0 %v5663, 64
        %v6366 = vpop.permute.xlu0 %6365
        %6367 = vrot.lane.b32.xlu0 %v5664, 64
        %v6368 = vpop.permute.xlu0 %6367
        %v6402 = vrot.slane %v5663, 1
        %v6403 = vrot.slane %v5664, 1
        %v6404 = vsel %vm447, %v6402, %v6403
        %v6405 = vrot.slane %v5665, 1
        %v6406 = vsel %vm447, %v6403, %v6405
        %6407 = vrot.lane.b32.xlu0 %v5726, 96
        %v6408 = vpop.permute.xlu0 %6407
        %6409 = vrot.lane.b32.xlu0 %v5728, 96
        %v6410 = vpop.permute.xlu0 %6409
        %6411 = vrot.lane.b32.xlu0 %v5731, 96
        %v6412 = vpop.permute.xlu0 %6411
        %6413 = vrot.lane.b32.xlu0 %v5733, 96
        %v6414 = vpop.permute.xlu0 %6413
        %6415 = vrot.lane.b32.xlu0 %v5736, 96
        %v6416 = vpop.permute.xlu0 %6415
        %6417 = vrot.lane.b32.xlu0 %v5738, 96
        %v6418 = vpop.permute.xlu0 %6417
        %6419 = vrot.lane.b32.xlu0 %v5741, 96
        %v6420 = vpop.permute.xlu0 %6419
        %6421 = vrot.lane.b32.xlu0 %v5743, 96
        %v6422 = vpop.permute.xlu0 %6421
        %6423 = vrot.lane.b32.xlu0 %v5746, 96
        %v6424 = vpop.permute.xlu0 %6423
        %6425 = vrot.lane.b32.xlu0 %v5748, 96
        %v6426 = vpop.permute.xlu0 %6425
        %6427 = vrot.lane.b32.xlu0 %v5751, 96
        %v6428 = vpop.permute.xlu0 %6427
        %6429 = vrot.lane.b32.xlu0 %v5753, 96
        %v6430 = vpop.permute.xlu0 %6429
        %6431 = vrot.lane.b32.xlu0 %v5756, 96
        %v6432 = vpop.permute.xlu0 %6431
        %6433 = vrot.lane.b32.xlu0 %v5758, 96
        %v6434 = vpop.permute.xlu0 %6433
        %6435 = vrot.lane.b32.xlu0 %v5761, 96
        %v6436 = vpop.permute.xlu0 %6435
        %6437 = vrot.lane.b32.xlu0 %v5763, 96
        %v6438 = vpop.permute.xlu0 %6437
        %6439 = vrot.lane.b32.xlu0 %v5766, 96
        %v6440 = vpop.permute.xlu0 %6439
        %6441 = vrot.lane.b32.xlu0 %v5768, 96
        %v6442 = vpop.permute.xlu0 %6441
        %6443 = vrot.lane.b32.xlu0 %v5771, 96
        %v6444 = vpop.permute.xlu0 %6443
        %6445 = vrot.lane.b32.xlu0 %v5773, 96
        %v6446 = vpop.permute.xlu0 %6445
        %6447 = vrot.lane.b32.xlu0 %v5776, 96
        %v6448 = vpop.permute.xlu0 %6447
        %6449 = vrot.lane.b32.xlu0 %v5778, 96
        %v6450 = vpop.permute.xlu0 %6449
        %6451 = vrot.lane.b32.xlu0 %v5781, 96
        %v6452 = vpop.permute.xlu0 %6451
        %6453 = vrot.lane.b32.xlu0 %v5783, 96
        %v6454 = vpop.permute.xlu0 %6453
        %6455 = vrot.lane.b32.xlu0 %v5786, 96
        %v6456 = vpop.permute.xlu0 %6455
        %6457 = vrot.lane.b32.xlu0 %v5788, 96
        %v6458 = vpop.permute.xlu0 %6457
        %6459 = vrot.lane.b32.xlu0 %v5791, 96
        %v6460 = vpop.permute.xlu0 %6459
        %6461 = vrot.lane.b32.xlu0 %v5793, 96
        %v6462 = vpop.permute.xlu0 %6461
        %6463 = vrot.lane.b32.xlu0 %v6167, 96
        %v6464 = vpop.permute.xlu0 %6463
        %6465 = vrot.lane.b32.xlu0 %v6169, 96
        %v6466 = vpop.permute.xlu0 %6465
        %6467 = vrot.lane.b32.xlu0 %v6404, 96
        %v6468 = vpop.permute.xlu0 %6467
        %6469 = vrot.lane.b32.xlu0 %v6406, 96
        %v6470 = vpop.permute.xlu0 %6469
        %v6503 = vrot.slane %v5663, 2
        %v6504 = vrot.slane %v5664, 2
        %v6505 = vsel %vm624, %v6503, %v6504
        %v6506 = vrot.slane %v5665, 2
        %v6507 = vsel %vm624, %v6504, %v6506
        %v6540 = vsel %vm224, %v5612, %v5795
        %v6541 = vsel %vm224, %v5613, %v5797
        %v6542 = vsel %vm224, %v5615, %v5799
        %v6543 = vsel %vm224, %v5616, %v5801
        %v6544 = vsel %vm224, %v5618, %v5803
        %v6545 = vsel %vm224, %v5619, %v5805
        %v6546 = vsel %vm224, %v5621, %v5807
        %v6547 = vsel %vm224, %v5622, %v5809
        %v6548 = vsel %vm224, %v5624, %v5811
        %v6549 = vsel %vm224, %v5625, %v5813
        %v6550 = vsel %vm224, %v5627, %v5815
        %v6551 = vsel %vm224, %v5628, %v5817
        %v6552 = vsel %vm224, %v5630, %v5819
        %v6553 = vsel %vm224, %v5631, %v5821
        %v6554 = vsel %vm224, %v5633, %v5823
        %v6555 = vsel %vm224, %v5634, %v5825
        %v6556 = vsel %vm224, %v5636, %v5827
        %v6557 = vsel %vm224, %v5637, %v5829
        %v6558 = vsel %vm224, %v5639, %v5831
        %v6559 = vsel %vm224, %v5640, %v5833
        %v6560 = vsel %vm224, %v5642, %v5835
        %v6561 = vsel %vm224, %v5643, %v5837
        %v6562 = vsel %vm224, %v5645, %v5839
        %v6563 = vsel %vm224, %v5646, %v5841
        %v6564 = vsel %vm224, %v5648, %v5843
        %v6565 = vsel %vm224, %v5649, %v5845
        %v6566 = vsel %vm224, %v5651, %v5847
        %v6567 = vsel %vm224, %v5652, %v5849
        %v6568 = vsel %vm224, %v5654, %v5851
        %v6569 = vsel %vm224, %v5655, %v5853
        %v6570 = vsel %vm224, %v5657, %v5855
        %v6571 = vsel %vm224, %v5658, %v5857
        %v6572 = vsel %vm1307, %v6540, %v5971
        %v6573 = vsel %vm1307, %v6541, %v5973
        %v6574 = vsel %vm1307, %v6542, %v5975
        %v6575 = vsel %vm1307, %v6543, %v5977
        %v6576 = vsel %vm1307, %v6544, %v5979
        %v6577 = vsel %vm1307, %v6545, %v5981
        %v6578 = vsel %vm1307, %v6546, %v5983
        %v6579 = vsel %vm1307, %v6547, %v5985
        %v6580 = vsel %vm1307, %v6548, %v5987
        %v6581 = vsel %vm1307, %v6549, %v5989
        %v6582 = vsel %vm1307, %v6550, %v5991
        %v6583 = vsel %vm1307, %v6551, %v5993
        %v6584 = vsel %vm1307, %v6552, %v5995
        %v6585 = vsel %vm1307, %v6553, %v5997
        %v6586 = vsel %vm1307, %v6554, %v5999
        %v6587 = vsel %vm1307, %v6555, %v6001
        %v6588 = vsel %vm1307, %v6556, %v6003
        %v6589 = vsel %vm1307, %v6557, %v6005
        %v6590 = vsel %vm1307, %v6558, %v6007
        %v6591 = vsel %vm1307, %v6559, %v6009
        %v6592 = vsel %vm1307, %v6560, %v6011
        %v6593 = vsel %vm1307, %v6561, %v6013
        %v6594 = vsel %vm1307, %v6562, %v6015
        %v6595 = vsel %vm1307, %v6563, %v6017
        %v6596 = vsel %vm1307, %v6564, %v6019
        %v6597 = vsel %vm1307, %v6565, %v6021
        %v6598 = vsel %vm1307, %v6566, %v6023
        %v6599 = vsel %vm1307, %v6567, %v6025
        %v6600 = vsel %vm1307, %v6568, %v6027
        %v6601 = vsel %vm1307, %v6569, %v6029
        %v6602 = vsel %vm1307, %v6570, %v6031
        %v6603 = vsel %vm1307, %v6571, %v6033
        %v6604 = vsel %vm1340, %v6572, %v6069
        %v6605 = vsel %vm1340, %v6573, %v6071
        %v6606 = vsel %vm1340, %v6574, %v6073
        %v6607 = vsel %vm1340, %v6575, %v6075
        %v6608 = vsel %vm1340, %v6576, %v6077
        %v6609 = vsel %vm1340, %v6577, %v6079
        %v6610 = vsel %vm1340, %v6578, %v6081
        %v6611 = vsel %vm1340, %v6579, %v6083
        %v6612 = vsel %vm1340, %v6580, %v6085
        %v6613 = vsel %vm1340, %v6581, %v6087
        %v6614 = vsel %vm1340, %v6582, %v6089
        %v6615 = vsel %vm1340, %v6583, %v6091
        %v6616 = vsel %vm1340, %v6584, %v6093
        %v6617 = vsel %vm1340, %v6585, %v6095
        %v6618 = vsel %vm1340, %v6586, %v6097
        %v6619 = vsel %vm1340, %v6587, %v6099
        %v6620 = vsel %vm1340, %v6588, %v6101
        %v6621 = vsel %vm1340, %v6589, %v6103
        %v6622 = vsel %vm1340, %v6590, %v6105
        %v6623 = vsel %vm1340, %v6591, %v6107
        %v6624 = vsel %vm1340, %v6592, %v6109
        %v6625 = vsel %vm1340, %v6593, %v6111
        %v6626 = vsel %vm1340, %v6594, %v6113
        %v6627 = vsel %vm1340, %v6595, %v6115
        %v6628 = vsel %vm1340, %v6596, %v6117
        %v6629 = vsel %vm1340, %v6597, %v6119
        %v6630 = vsel %vm1340, %v6598, %v6121
        %v6631 = vsel %vm1340, %v6599, %v6123
        %v6632 = vsel %vm1340, %v6600, %v6125
        %v6633 = vsel %vm1340, %v6601, %v6127
        %v6634 = vsel %vm1340, %v6602, %v6129
        %v6635 = vsel %vm1340, %v6603, %v6131
        %v6636 = vsel %vm224, %v5721, %v6208
        %v6637 = vsel %vm224, %v5723, %v6210
        %v6638 = vsel %vm224, %v5726, %v6212
        %v6639 = vsel %vm224, %v5728, %v6214
        %v6640 = vsel %vm224, %v5731, %v6216
        %v6641 = vsel %vm224, %v5733, %v6218
        %v6642 = vsel %vm224, %v5736, %v6220
        %v6643 = vsel %vm224, %v5738, %v6222
        %v6644 = vsel %vm224, %v5741, %v6224
        %v6645 = vsel %vm224, %v5743, %v6226
        %v6646 = vsel %vm224, %v5746, %v6228
        %v6647 = vsel %vm224, %v5748, %v6230
        %v6648 = vsel %vm224, %v5751, %v6232
        %v6649 = vsel %vm224, %v5753, %v6234
        %v6650 = vsel %vm224, %v5756, %v6236
        %v6651 = vsel %vm224, %v5758, %v6238
        %v6652 = vsel %vm224, %v5761, %v6240
        %v6653 = vsel %vm224, %v5763, %v6242
        %v6654 = vsel %vm224, %v5766, %v6244
        %v6655 = vsel %vm224, %v5768, %v6246
        %v6656 = vsel %vm224, %v5771, %v6248
        %v6657 = vsel %vm224, %v5773, %v6250
        %v6658 = vsel %vm224, %v5776, %v6252
        %v6659 = vsel %vm224, %v5778, %v6254
        %v6660 = vsel %vm224, %v5781, %v6256
        %v6661 = vsel %vm224, %v5783, %v6258
        %v6662 = vsel %vm224, %v5786, %v6260
        %v6663 = vsel %vm224, %v5788, %v6262
        %v6664 = vsel %vm224, %v5791, %v6264
        %v6665 = vsel %vm224, %v5793, %v6266
        %v6666 = vsel %vm224, %v6167, %v6268
        %v6667 = vsel %vm224, %v6169, %v6270
        %v6668 = vsel %vm1307, %v6636, %v6306
        %v6669 = vsel %vm1307, %v6637, %v6308
        %v6670 = vsel %vm1307, %v6638, %v6310
        %v6671 = vsel %vm1307, %v6639, %v6312
        %v6672 = vsel %vm1307, %v6640, %v6314
        %v6673 = vsel %vm1307, %v6641, %v6316
        %v6674 = vsel %vm1307, %v6642, %v6318
        %v6675 = vsel %vm1307, %v6643, %v6320
        %v6676 = vsel %vm1307, %v6644, %v6322
        %v6677 = vsel %vm1307, %v6645, %v6324
        %v6678 = vsel %vm1307, %v6646, %v6326
        %v6679 = vsel %vm1307, %v6647, %v6328
        %v6680 = vsel %vm1307, %v6648, %v6330
        %v6681 = vsel %vm1307, %v6649, %v6332
        %v6682 = vsel %vm1307, %v6650, %v6334
        %v6683 = vsel %vm1307, %v6651, %v6336
        %v6684 = vsel %vm1307, %v6652, %v6338
        %v6685 = vsel %vm1307, %v6653, %v6340
        %v6686 = vsel %vm1307, %v6654, %v6342
        %v6687 = vsel %vm1307, %v6655, %v6344
        %v6688 = vsel %vm1307, %v6656, %v6346
        %v6689 = vsel %vm1307, %v6657, %v6348
        %v6690 = vsel %vm1307, %v6658, %v6350
        %v6691 = vsel %vm1307, %v6659, %v6352
        %v6692 = vsel %vm1307, %v6660, %v6354
        %v6693 = vsel %vm1307, %v6661, %v6356
        %v6694 = vsel %vm1307, %v6662, %v6358
        %v6695 = vsel %vm1307, %v6663, %v6360
        %v6696 = vsel %vm1307, %v6664, %v6362
        %v6697 = vsel %vm1307, %v6665, %v6364
        %v6698 = vsel %vm1307, %v6666, %v6366
        %v6699 = vsel %vm1307, %v6667, %v6368
        %v6700 = vsel %vm1340, %v6668, %v6408
        %v6701 = vsel %vm1340, %v6669, %v6410
        %v6702 = vsel %vm1340, %v6670, %v6412
        %v6703 = vsel %vm1340, %v6671, %v6414
        %v6704 = vsel %vm1340, %v6672, %v6416
        %v6705 = vsel %vm1340, %v6673, %v6418
        %v6706 = vsel %vm1340, %v6674, %v6420
        %v6707 = vsel %vm1340, %v6675, %v6422
        %v6708 = vsel %vm1340, %v6676, %v6424
        %v6709 = vsel %vm1340, %v6677, %v6426
        %v6710 = vsel %vm1340, %v6678, %v6428
        %v6711 = vsel %vm1340, %v6679, %v6430
        %v6712 = vsel %vm1340, %v6680, %v6432
        %v6713 = vsel %vm1340, %v6681, %v6434
        %v6714 = vsel %vm1340, %v6682, %v6436
        %v6715 = vsel %vm1340, %v6683, %v6438
        %v6716 = vsel %vm1340, %v6684, %v6440
        %v6717 = vsel %vm1340, %v6685, %v6442
        %v6718 = vsel %vm1340, %v6686, %v6444
        %v6719 = vsel %vm1340, %v6687, %v6446
        %v6720 = vsel %vm1340, %v6688, %v6448
        %v6721 = vsel %vm1340, %v6689, %v6450
        %v6722 = vsel %vm1340, %v6690, %v6452
        %v6723 = vsel %vm1340, %v6691, %v6454
        %v6724 = vsel %vm1340, %v6692, %v6456
        %v6725 = vsel %vm1340, %v6693, %v6458
        %v6726 = vsel %vm1340, %v6694, %v6460
        %v6727 = vsel %vm1340, %v6695, %v6462
        %v6728 = vsel %vm1340, %v6696, %v6464
        %v6729 = vsel %vm1340, %v6697, %v6466
        %v6730 = vsel %vm1340, %v6698, %v6468
        %v6731 = vsel %vm1340, %v6699, %v6470
        %v6732 = vpack.c.bf16 %v6605, %v6604
        %v6733 = vpack.c.bf16 %v6701, %v6700
        %v6734 = vpack.c.bf16 %v5904, %v5902
        %v6735 = vpack.c.bf16 %v6607, %v6606
        %v6736 = vpack.c.bf16 %v6703, %v6702
        %v6737 = vpack.c.bf16 %v5909, %v5907
        %v6738 = vpack.c.bf16 %v6609, %v6608
        %v6739 = vpack.c.bf16 %v6705, %v6704
        %v6740 = vpack.c.bf16 %v5914, %v5912
        %v6741 = vpack.c.bf16 %v6611, %v6610
        %v6742 = vpack.c.bf16 %v6707, %v6706
        %v6743 = vpack.c.bf16 %v5919, %v5917
        %v6744 = vpack.c.bf16 %v6613, %v6612
        %v6745 = vpack.c.bf16 %v6709, %v6708
        %v6746 = vpack.c.bf16 %v5924, %v5922
        %v6747 = vpack.c.bf16 %v6615, %v6614
        %v6748 = vpack.c.bf16 %v6711, %v6710
        %v6749 = vpack.c.bf16 %v5929, %v5927
        %v6750 = vpack.c.bf16 %v6617, %v6616
        %v6751 = vpack.c.bf16 %v6713, %v6712
        %v6752 = vpack.c.bf16 %v5934, %v5932
        %v6753 = vpack.c.bf16 %v6619, %v6618
        %v6754 = vpack.c.bf16 %v6715, %v6714
        %v6755 = vpack.c.bf16 %v5939, %v5937
        %v6756 = vpack.c.bf16 %v6621, %v6620
        %v6757 = vpack.c.bf16 %v6717, %v6716
        %v6758 = vpack.c.bf16 %v5944, %v5942
        %v6759 = vpack.c.bf16 %v6623, %v6622
        %v6760 = vpack.c.bf16 %v6719, %v6718
        %v6761 = vpack.c.bf16 %v5949, %v5947
        %v6762 = vpack.c.bf16 %v6625, %v6624
        %v6763 = vpack.c.bf16 %v6721, %v6720
        %v6764 = vpack.c.bf16 %v5954, %v5952
        %v6765 = vpack.c.bf16 %v6627, %v6626
        %v6766 = vpack.c.bf16 %v6723, %v6722
        %v6767 = vpack.c.bf16 %v5959, %v5957
        %v6768 = vpack.c.bf16 %v6629, %v6628
        %v6769 = vpack.c.bf16 %v6725, %v6724
        %v6770 = vpack.c.bf16 %v5964, %v5962
        %v6771 = vpack.c.bf16 %v6631, %v6630
        %v6772 = vpack.c.bf16 %v6727, %v6726
        %v6773 = vpack.c.bf16 %v5969, %v5967
        %v6774 = vpack.c.bf16 %v6633, %v6632
        %v6775 = vpack.c.bf16 %v6729, %v6728
        %v6776 = vpack.c.bf16 %v6206, %v6204
        %v6777 = vpack.c.bf16 %v6635, %v6634
        %v6778 = vpack.c.bf16 %v6731, %v6730
        %v6779 = vpack.c.bf16 %v6507, %v6505
        %s6780 = scalar_lea.vmem %s1, 432
        %v6781 = vld [vmem:[%s6780] sm:$0xf]
        %v6782 = vld [vmem:[%s6780 + $0x4] sm:$0xf]
        %v6783 = vld [vmem:[%s6780 + $0x8] sm:$0xf]
        %v6784 = vld [vmem:[%s6780 + $0xc] sm:$0xf]
        %v6785 = vld [vmem:[%s6780 + $0x10] sm:$0xf]
        %v6786 = vld [vmem:[%s6780 + $0x14] sm:$0xf]
        %v6787 = vld [vmem:[%s6780 + $0x18] sm:$0xf]
        %v6788 = vld [vmem:[%s6780 + $0x1c] sm:$0xf]
        %v6789 = vld [vmem:[%s6780 + $0x20] sm:$0xf]
        %v6790 = vld [vmem:[%s6780 + $0x24] sm:$0xf]
        %v6791 = vld [vmem:[%s6780 + $0x28] sm:$0xf]
        %v6792 = vld [vmem:[%s6780 + $0x2c] sm:$0xf]
        %v6793 = vld [vmem:[%s6780 + $0x30] sm:$0xf]
        %v6794 = vld [vmem:[%s6780 + $0x34] sm:$0xf]
        %v6795 = vld [vmem:[%s6780 + $0x38] sm:$0xf]
        %v6796 = vld [vmem:[%s6780 + $0x3c] sm:$0xf]
        %v6797 = vld [vmem:[%s6780 + $0x40] sm:$0xf]
        %v6798 = vld [vmem:[%s6780 + $0x44] sm:$0xf]
        %v6799 = vld [vmem:[%s6780 + $0x48] sm:$0xf]
        %v6800 = vld [vmem:[%s6780 + $0x4c] sm:$0xf]
        %v6801 = vld [vmem:[%s6780 + $0x50] sm:$0xf]
        %v6802 = vld [vmem:[%s6780 + $0x54] sm:$0xf]
        %v6803 = vld [vmem:[%s6780 + $0x58] sm:$0xf]
        %v6804 = vld [vmem:[%s6780 + $0x5c] sm:$0xf]
        %v6805 = vld [vmem:[%s6780 + $0x60] sm:$0xf]
        %v6806 = vld [vmem:[%s6780 + $0x64] sm:$0xf]
        %v6807 = vld [vmem:[%s6780 + $0x68] sm:$0xf]
        %v6808 = vld [vmem:[%s6780 + $0x6c] sm:$0xf]
        %v6809 = vld [vmem:[%s6780 + $0x70] sm:$0xf]
        %v6810 = vld [vmem:[%s6780 + $0x74] sm:$0xf]
        %v6811 = vld [vmem:[%s6780 + $0x78] sm:$0xf]
        %v6812 = vld [vmem:[%s6780 + $0x7c] sm:$0xf]
        %v6813 = vld [vmem:[%s6780 + $0x80] sm:$0xf]
        %v6814 = vld [vmem:[%s6780 + $0x84] sm:$0xf]
        %v6815 = vld [vmem:[%s6780 + $0x88] sm:$0xf]
        %v6816 = vld [vmem:[%s6780 + $0x8c] sm:$0xf]
        %s6817 = scalar_lea.vmem %s2, 3
        %v6818 = vld [vmem:[%s6817] sm:$0x1]
        %v6820 = vlaneseq
        %v6821 = vshrl.u32 %v6820, 7
        %v6822 = vsub.s32 0, %v6821
        %v6823 = vrot.slane %v6818, %v6822
        %v6861 = vunpack.c.l.b16 %v6781
        %v6862 = vunpack.c.l.b16 %v6782
        %v6863 = vunpack.c.l.b16 %v6783
        %v6864 = vunpack.c.l.b16 %v6784
        %v6865 = vunpack.c.l.b16 %v6785
        %v6866 = vunpack.c.l.b16 %v6786
        %v6867 = vunpack.c.l.b16 %v6787
        %v6868 = vunpack.c.l.b16 %v6788
        %v6869 = vunpack.c.l.b16 %v6789
        %v6870 = vunpack.c.l.b16 %v6790
        %v6871 = vunpack.c.l.b16 %v6791
        %v6872 = vunpack.c.l.b16 %v6792
        %v6873 = vunpack.c.l.b16 %v6793
        %v6874 = vunpack.c.l.b16 %v6794
        %v6875 = vunpack.c.l.b16 %v6795
        %v6876 = vunpack.c.l.b16 %v6796
        %v6877 = vunpack.c.l.b16 %v6797
        %v6878 = vunpack.c.l.b16 %v6798
        %v6879 = vunpack.c.l.b16 %v6799
        %v6880 = vunpack.c.l.b16 %v6800
        %v6881 = vunpack.c.l.b16 %v6801
        %v6882 = vunpack.c.l.b16 %v6802
        %v6883 = vunpack.c.l.b16 %v6803
        %v6884 = vunpack.c.l.b16 %v6804
        %v6885 = vunpack.c.l.b16 %v6805
        %v6886 = vunpack.c.l.b16 %v6806
        %v6887 = vunpack.c.l.b16 %v6807
        %v6888 = vunpack.c.l.b16 %v6808
        %v6889 = vunpack.c.l.b16 %v6809
        %v6890 = vunpack.c.l.b16 %v6810
        %v6891 = vunpack.c.l.b16 %v6811
        %v6892 = vunpack.c.l.b16 %v6812
        %v6893 = vunpack.c.l.b16 %v6813
        %v6894 = vunpack.c.l.b16 %v6814
        %v6895 = vunpack.c.l.b16 %v6815
        %v6896 = vunpack.c.l.b16 %v6816
        %v6897 = vpack.c.b16 %v6862, %v6861
        %v6898 = vpack.c.b16 %v6864, %v6863
        %v6899 = vpack.c.b16 %v6866, %v6865
        %v6900 = vpack.c.b16 %v6868, %v6867
        %v6901 = vpack.c.b16 %v6870, %v6869
        %v6902 = vpack.c.b16 %v6872, %v6871
        %v6903 = vpack.c.b16 %v6874, %v6873
        %v6904 = vpack.c.b16 %v6876, %v6875
        %v6905 = vpack.c.b16 %v6878, %v6877
        %v6906 = vpack.c.b16 %v6880, %v6879
        %v6907 = vpack.c.b16 %v6882, %v6881
        %v6908 = vpack.c.b16 %v6884, %v6883
        %v6909 = vpack.c.b16 %v6886, %v6885
        %v6910 = vpack.c.b16 %v6888, %v6887
        %v6911 = vpack.c.b16 %v6890, %v6889
        %v6912 = vpack.c.b16 %v6892, %v6891
        %v6913 = vpack.c.b16 %v6894, %v6893
        %v6914 = vpack.c.b16 %v6896, %v6895
        %v6934 = vsel %vm224, %v6734, 0
        %v6937 = vsel %vm224, %v6737, 0
        %v6940 = vsel %vm224, %v6740, 0
        %v6943 = vsel %vm224, %v6743, 0
        %v6946 = vsel %vm224, %v6746, 0
        %v6949 = vsel %vm224, %v6749, 0
        %v6952 = vsel %vm224, %v6752, 0
        %v6955 = vsel %vm224, %v6755, 0
        %v6958 = vsel %vm224, %v6758, 0
        %v6961 = vsel %vm224, %v6761, 0
        %v6964 = vsel %vm224, %v6764, 0
        %v6967 = vsel %vm224, %v6767, 0
        %v6970 = vsel %vm224, %v6770, 0
        %v6973 = vsel %vm224, %v6773, 0
        %v6976 = vsel %vm224, %v6776, 0
        %v6979 = vsel %vm224, %v6779, 0
        %6981 = vmatprep.subr.bf16.mxu0 0
        %6982 = vmatpush1.bf16.msra.mxu0 %v6897
        %6983 = vmatprep.subr.bf16.mxu0 0
        %6984 = vmatpush1.bf16.msra.mxu0 %v6898
        %6985 = vmatprep.subr.bf16.mxu0 0
        %6986 = vmatpush1.bf16.msra.mxu0 %v6899
        %6987 = vmatprep.subr.bf16.mxu0 0
        %6988 = vmatpush1.bf16.msra.mxu0 %v6900
        %6989 = vmatprep.subr.bf16.mxu0 0
        %6990 = vmatpush1.bf16.msra.mxu0 %v6901
        %6991 = vmatprep.subr.bf16.mxu0 0
        %6992 = vmatpush1.bf16.msra.mxu0 %v6902
        %6993 = vmatprep.subr.bf16.mxu0 0
        %6994 = vmatpush1.bf16.msra.mxu0 %v6903
        %6995 = vmatprep.subr.bf16.mxu0 0
        %6996 = vmatpush1.bf16.msra.mxu0 %v6904
        %6997 = vmatprep.subr.bf16.mxu0 0
        %6998 = vmatpush1.bf16.msra.mxu0 %v6905
        %6999 = vmatprep.subr.bf16.mxu0 0
        %7000 = vmatpush1.bf16.msra.mxu0 %v6906
        %7001 = vmatprep.subr.bf16.mxu0 0
        %7002 = vmatpush1.bf16.msra.mxu0 %v6907
        %7003 = vmatprep.subr.bf16.mxu0 0
        %7004 = vmatpush1.bf16.msra.mxu0 %v6908
        %7005 = vmatprep.subr.bf16.mxu0 0
        %7006 = vmatpush1.bf16.msra.mxu0 %v6909
        %7007 = vmatprep.subr.bf16.mxu0 0
        %7008 = vmatpush1.bf16.msra.mxu0 %v6910
        %7009 = vmatprep.subr.bf16.mxu0 0
        %7010 = vmatpush1.bf16.msra.mxu0 %v6911
        %7011 = vmatprep.subr.bf16.mxu0 0
        %7012 = vmatpush1.bf16.msra.mxu0 %v6912
        %7013 = vmatprep.mubr.bf16.mxu0 %v6733
        %7014 = vmatmul.mubr.bf16.gmra.mrb[0].mxu0 %v6732
        %v7015 = vpop.f32.mrb[0].mxu0
        %v7016 = vadd.f32 %v6823, %v7015
        %v7017 = vpop.f32.mrb[0].mxu0
        %v7018 = vpop.f32.mrb[0].mxu0
        %v7019 = vadd.f32 %v6823, %v7018
        %v7020 = vpop.f32.mrb[0].mxu0
        %7021 = vmatprep.mubr.bf16.mxu0 %v6736
        %7022 = vmatmul.mubr.bf16.gmra.mrb[0].mxu0 %v6735
        %v7023 = vpop.f32.mrb[0].mxu0
        %v7024 = vadd.f32 %v6823, %v7023
        %v7025 = vpop.f32.mrb[0].mxu0
        %v7026 = vpop.f32.mrb[0].mxu0
        %v7027 = vadd.f32 %v6823, %v7026
        %v7028 = vpop.f32.mrb[0].mxu0
        %7029 = vmatprep.mubr.bf16.mxu0 %v6739
        %7030 = vmatmul.mubr.bf16.gmra.mrb[0].mxu0 %v6738
        %v7031 = vpop.f32.mrb[0].mxu0
        %v7032 = vadd.f32 %v6823, %v7031
        %v7033 = vpop.f32.mrb[0].mxu0
        %v7034 = vpop.f32.mrb[0].mxu0
        %v7035 = vadd.f32 %v6823, %v7034
        %v7036 = vpop.f32.mrb[0].mxu0
        %7037 = vmatprep.mubr.bf16.mxu0 %v6742
        %7038 = vmatmul.mubr.bf16.gmra.mrb[0].mxu0 %v6741
        %v7039 = vpop.f32.mrb[0].mxu0
        %v7040 = vadd.f32 %v6823, %v7039
        %v7041 = vpop.f32.mrb[0].mxu0
        %v7042 = vpop.f32.mrb[0].mxu0
        %v7043 = vadd.f32 %v6823, %v7042
        %v7044 = vpop.f32.mrb[0].mxu0
        %7045 = vmatprep.mubr.bf16.mxu0 %v6745
        %7046 = vmatmul.mubr.bf16.gmra.mrb[0].mxu0 %v6744
        %v7047 = vpop.f32.mrb[0].mxu0
        %v7048 = vadd.f32 %v6823, %v7047
        %v7049 = vpop.f32.mrb[0].mxu0
        %v7050 = vpop.f32.mrb[0].mxu0
        %v7051 = vadd.f32 %v6823, %v7050
        %v7052 = vpop.f32.mrb[0].mxu0
        %7053 = vmatprep.mubr.bf16.mxu0 %v6748
        %7054 = vmatmul.mubr.bf16.gmra.mrb[0].mxu0 %v6747
        %v7055 = vpop.f32.mrb[0].mxu0
        %v7056 = vadd.f32 %v6823, %v7055
        %v7057 = vpop.f32.mrb[0].mxu0
        %v7058 = vpop.f32.mrb[0].mxu0
        %v7059 = vadd.f32 %v6823, %v7058
        %v7060 = vpop.f32.mrb[0].mxu0
        %7061 = vmatprep.mubr.bf16.mxu0 %v6751
        %7062 = vmatmul.mubr.bf16.gmra.mrb[0].mxu0 %v6750
        %v7063 = vpop.f32.mrb[0].mxu0
        %v7064 = vadd.f32 %v6823, %v7063
        %v7065 = vpop.f32.mrb[0].mxu0
        %v7066 = vpop.f32.mrb[0].mxu0
        %v7067 = vadd.f32 %v6823, %v7066
        %v7068 = vpop.f32.mrb[0].mxu0
        %7069 = vmatprep.mubr.bf16.mxu0 %v6754
        %7070 = vmatmul.mubr.bf16.gmra.mrb[0].mxu0 %v6753
        %v7071 = vpop.f32.mrb[0].mxu0
        %v7072 = vadd.f32 %v6823, %v7071
        %v7073 = vpop.f32.mrb[0].mxu0
        %v7074 = vpop.f32.mrb[0].mxu0
        %v7075 = vadd.f32 %v6823, %v7074
        %v7076 = vpop.f32.mrb[0].mxu0
        %7077 = vmatprep.mubr.bf16.mxu0 %v6757
        %7078 = vmatmul.mubr.bf16.gmra.mrb[0].mxu0 %v6756
        %v7079 = vpop.f32.mrb[0].mxu0
        %v7080 = vadd.f32 %v6823, %v7079
        %v7081 = vpop.f32.mrb[0].mxu0
        %v7082 = vpop.f32.mrb[0].mxu0
        %v7083 = vadd.f32 %v6823, %v7082
        %v7084 = vpop.f32.mrb[0].mxu0
        %7085 = vmatprep.mubr.bf16.mxu0 %v6760
        %7086 = vmatmul.mubr.bf16.gmra.mrb[0].mxu0 %v6759
        %v7087 = vpop.f32.mrb[0].mxu0
        %v7088 = vadd.f32 %v6823, %v7087
        %v7089 = vpop.f32.mrb[0].mxu0
        %v7090 = vpop.f32.mrb[0].mxu0
        %v7091 = vadd.f32 %v6823, %v7090
        %v7092 = vpop.f32.mrb[0].mxu0
        %7093 = vmatprep.mubr.bf16.mxu0 %v6763
        %7094 = vmatmul.mubr.bf16.gmra.mrb[0].mxu0 %v6762
        %v7095 = vpop.f32.mrb[0].mxu0
        %v7096 = vadd.f32 %v6823, %v7095
        %v7097 = vpop.f32.mrb[0].mxu0
        %v7098 = vpop.f32.mrb[0].mxu0
        %v7099 = vadd.f32 %v6823, %v7098
        %v7100 = vpop.f32.mrb[0].mxu0
        %7101 = vmatprep.mubr.bf16.mxu0 %v6766
        %7102 = vmatmul.mubr.bf16.gmra.mrb[0].mxu0 %v6765
        %v7103 = vpop.f32.mrb[0].mxu0
        %v7104 = vadd.f32 %v6823, %v7103
        %v7105 = vpop.f32.mrb[0].mxu0
        %v7106 = vpop.f32.mrb[0].mxu0
        %v7107 = vadd.f32 %v6823, %v7106
        %v7108 = vpop.f32.mrb[0].mxu0
        %7109 = vmatprep.mubr.bf16.mxu0 %v6769
        %7110 = vmatmul.mubr.bf16.gmra.mrb[0].mxu0 %v6768
        %v7111 = vpop.f32.mrb[0].mxu0
        %v7112 = vadd.f32 %v6823, %v7111
        %v7113 = vpop.f32.mrb[0].mxu0
        %v7114 = vpop.f32.mrb[0].mxu0
        %v7115 = vadd.f32 %v6823, %v7114
        %v7116 = vpop.f32.mrb[0].mxu0
        %7117 = vmatprep.mubr.bf16.mxu0 %v6772
        %7118 = vmatmul.mubr.bf16.gmra.mrb[0].mxu0 %v6771
        %v7119 = vpop.f32.mrb[0].mxu0
        %v7120 = vadd.f32 %v6823, %v7119
        %v7121 = vpop.f32.mrb[0].mxu0
        %v7122 = vpop.f32.mrb[0].mxu0
        %v7123 = vadd.f32 %v6823, %v7122
        %v7124 = vpop.f32.mrb[0].mxu0
        %7125 = vmatprep.mubr.bf16.mxu0 %v6775
        %7126 = vmatmul.mubr.bf16.gmra.mrb[0].mxu0 %v6774
        %v7127 = vpop.f32.mrb[0].mxu0
        %v7128 = vadd.f32 %v6823, %v7127
        %v7129 = vpop.f32.mrb[0].mxu0
        %v7130 = vpop.f32.mrb[0].mxu0
        %v7131 = vadd.f32 %v6823, %v7130
        %v7132 = vpop.f32.mrb[0].mxu0
        %7133 = vmatprep.mubr.bf16.mxu0 %v6778
        %7134 = vmatmul.mubr.bf16.gmra.mrb[0].mxu0 %v6777
        %v7135 = vpop.f32.mrb[0].mxu0
        %v7136 = vadd.f32 %v6823, %v7135
        %v7137 = vpop.f32.mrb[0].mxu0
        %v7138 = vpop.f32.mrb[0].mxu0
        %v7139 = vadd.f32 %v6823, %v7138
        %v7140 = vpop.f32.mrb[0].mxu0
        %7141 = vdwg.mxu0
        %7142 = vmatprep.subr.bf16.mxu0 0
        %7143 = vmatpush1.bf16.msra.mxu0 %v6913
        %7144 = vmatprep.subr.bf16.mxu0 0
        %7145 = vmatpush1.bf16.msra.mxu0 %v6914
        %7146 = vmatprep.subr.bf16.mxu0 0
        %7147 = vmatpush1.bf16.msra.mxu0 0
        %7148 = vmatprep.subr.bf16.mxu0 0
        %7149 = vmatpush1.bf16.msra.mxu0 0
        %7150 = vmatprep.subr.bf16.mxu0 0
        %7151 = vmatpush1.bf16.msra.mxu0 0
        %7152 = vmatprep.subr.bf16.mxu0 0
        %7153 = vmatpush1.bf16.msra.mxu0 0
        %7154 = vmatprep.subr.bf16.mxu0 0
        %7155 = vmatpush1.bf16.msra.mxu0 0
        %7156 = vmatprep.subr.bf16.mxu0 0
        %7157 = vmatpush1.bf16.msra.mxu0 0
        %7158 = vmatprep.subr.bf16.mxu0 0
        %7159 = vmatpush1.bf16.msra.mxu0 0
        %7160 = vmatprep.subr.bf16.mxu0 0
        %7161 = vmatpush1.bf16.msra.mxu0 0
        %7162 = vmatprep.subr.bf16.mxu0 0
        %7163 = vmatpush1.bf16.msra.mxu0 0
        %7164 = vmatprep.subr.bf16.mxu0 0
        %7165 = vmatpush1.bf16.msra.mxu0 0
        %7166 = vmatprep.subr.bf16.mxu0 0
        %7167 = vmatpush1.bf16.msra.mxu0 0
        %7168 = vmatprep.subr.bf16.mxu0 0
        %7169 = vmatpush1.bf16.msra.mxu0 0
        %7170 = vmatprep.subr.bf16.mxu0 0
        %7171 = vmatpush1.bf16.msra.mxu0 0
        %7172 = vmatprep.subr.bf16.mxu0 0
        %7173 = vmatpush1.bf16.msra.mxu0 0
        %7174 = vmatprep.mubr.bf16.mxu0 0
        %7175 = vmatmul.mubr.bf16.gmra.mrb[0].mxu0 %v6934
        %v7176 = vpop.f32.mrb[0].mxu0
        %v7177 = vadd.f32 %v7016, %v7176
        %v7178 = vpop.f32.mrb[0].mxu0
        %v7179 = vpop.f32.mrb[0].mxu0
        %v7180 = vadd.f32 %v7019, %v7179
        %v7181 = vpop.f32.mrb[0].mxu0
        %7182 = vmatprep.mubr.bf16.mxu0 0
        %7183 = vmatmul.mubr.bf16.gmra.mrb[0].mxu0 %v6937
        %v7184 = vpop.f32.mrb[0].mxu0
        %v7185 = vadd.f32 %v7024, %v7184
        %v7186 = vpop.f32.mrb[0].mxu0
        %v7187 = vpop.f32.mrb[0].mxu0
        %v7188 = vadd.f32 %v7027, %v7187
        %v7189 = vpop.f32.mrb[0].mxu0
        %7190 = vmatprep.mubr.bf16.mxu0 0
        %7191 = vmatmul.mubr.bf16.gmra.mrb[0].mxu0 %v6940
        %v7192 = vpop.f32.mrb[0].mxu0
        %v7193 = vadd.f32 %v7032, %v7192
        %v7194 = vpop.f32.mrb[0].mxu0
        %v7195 = vpop.f32.mrb[0].mxu0
        %v7196 = vadd.f32 %v7035, %v7195
        %v7197 = vpop.f32.mrb[0].mxu0
        %7198 = vmatprep.mubr.bf16.mxu0 0
        %7199 = vmatmul.mubr.bf16.gmra.mrb[0].mxu0 %v6943
        %v7200 = vpop.f32.mrb[0].mxu0
        %v7201 = vadd.f32 %v7040, %v7200
        %v7202 = vpop.f32.mrb[0].mxu0
        %v7203 = vpop.f32.mrb[0].mxu0
        %v7204 = vadd.f32 %v7043, %v7203
        %v7205 = vpop.f32.mrb[0].mxu0
        %7206 = vmatprep.mubr.bf16.mxu0 0
        %7207 = vmatmul.mubr.bf16.gmra.mrb[0].mxu0 %v6946
        %v7208 = vpop.f32.mrb[0].mxu0
        %v7209 = vadd.f32 %v7048, %v7208
        %v7210 = vpop.f32.mrb[0].mxu0
        %v7211 = vpop.f32.mrb[0].mxu0
        %v7212 = vadd.f32 %v7051, %v7211
        %v7213 = vpop.f32.mrb[0].mxu0
        %7214 = vmatprep.mubr.bf16.mxu0 0
        %7215 = vmatmul.mubr.bf16.gmra.mrb[0].mxu0 %v6949
        %v7216 = vpop.f32.mrb[0].mxu0
        %v7217 = vadd.f32 %v7056, %v7216
        %v7218 = vpop.f32.mrb[0].mxu0
        %v7219 = vpop.f32.mrb[0].mxu0
        %v7220 = vadd.f32 %v7059, %v7219
        %v7221 = vpop.f32.mrb[0].mxu0
        %7222 = vmatprep.mubr.bf16.mxu0 0
        %7223 = vmatmul.mubr.bf16.gmra.mrb[0].mxu0 %v6952
        %v7224 = vpop.f32.mrb[0].mxu0
        %v7225 = vadd.f32 %v7064, %v7224
        %v7226 = vpop.f32.mrb[0].mxu0
        %v7227 = vpop.f32.mrb[0].mxu0
        %v7228 = vadd.f32 %v7067, %v7227
        %v7229 = vpop.f32.mrb[0].mxu0
        %7230 = vmatprep.mubr.bf16.mxu0 0
        %7231 = vmatmul.mubr.bf16.gmra.mrb[0].mxu0 %v6955
        %v7232 = vpop.f32.mrb[0].mxu0
        %v7233 = vadd.f32 %v7072, %v7232
        %v7234 = vpop.f32.mrb[0].mxu0
        %v7235 = vpop.f32.mrb[0].mxu0
        %v7236 = vadd.f32 %v7075, %v7235
        %v7237 = vpop.f32.mrb[0].mxu0
        %7238 = vmatprep.mubr.bf16.mxu0 0
        %7239 = vmatmul.mubr.bf16.gmra.mrb[0].mxu0 %v6958
        %v7240 = vpop.f32.mrb[0].mxu0
        %v7241 = vadd.f32 %v7080, %v7240
        %v7242 = vpop.f32.mrb[0].mxu0
        %v7243 = vpop.f32.mrb[0].mxu0
        %v7244 = vadd.f32 %v7083, %v7243
        %v7245 = vpop.f32.mrb[0].mxu0
        %7246 = vmatprep.mubr.bf16.mxu0 0
        %7247 = vmatmul.mubr.bf16.gmra.mrb[0].mxu0 %v6961
        %v7248 = vpop.f32.mrb[0].mxu0
        %v7249 = vadd.f32 %v7088, %v7248
        %v7250 = vpop.f32.mrb[0].mxu0
        %v7251 = vpop.f32.mrb[0].mxu0
        %v7252 = vadd.f32 %v7091, %v7251
        %v7253 = vpop.f32.mrb[0].mxu0
        %7254 = vmatprep.mubr.bf16.mxu0 0
        %7255 = vmatmul.mubr.bf16.gmra.mrb[0].mxu0 %v6964
        %v7256 = vpop.f32.mrb[0].mxu0
        %v7257 = vadd.f32 %v7096, %v7256
        %v7258 = vpop.f32.mrb[0].mxu0
        %v7259 = vpop.f32.mrb[0].mxu0
        %v7260 = vadd.f32 %v7099, %v7259
        %v7261 = vpop.f32.mrb[0].mxu0
        %7262 = vmatprep.mubr.bf16.mxu0 0
        %7263 = vmatmul.mubr.bf16.gmra.mrb[0].mxu0 %v6967
        %v7264 = vpop.f32.mrb[0].mxu0
        %v7265 = vadd.f32 %v7104, %v7264
        %v7266 = vpop.f32.mrb[0].mxu0
        %v7267 = vpop.f32.mrb[0].mxu0
        %v7268 = vadd.f32 %v7107, %v7267
        %v7269 = vpop.f32.mrb[0].mxu0
        %7270 = vmatprep.mubr.bf16.mxu0 0
        %7271 = vmatmul.mubr.bf16.gmra.mrb[0].mxu0 %v6970
        %v7272 = vpop.f32.mrb[0].mxu0
        %v7273 = vadd.f32 %v7112, %v7272
        %v7274 = vpop.f32.mrb[0].mxu0
        %v7275 = vpop.f32.mrb[0].mxu0
        %v7276 = vadd.f32 %v7115, %v7275
        %v7277 = vpop.f32.mrb[0].mxu0
        %7278 = vmatprep.mubr.bf16.mxu0 0
        %7279 = vmatmul.mubr.bf16.gmra.mrb[0].mxu0 %v6973
        %v7280 = vpop.f32.mrb[0].mxu0
        %v7281 = vadd.f32 %v7120, %v7280
        %v7282 = vpop.f32.mrb[0].mxu0
        %v7283 = vpop.f32.mrb[0].mxu0
        %v7284 = vadd.f32 %v7123, %v7283
        %v7285 = vpop.f32.mrb[0].mxu0
        %7286 = vmatprep.mubr.bf16.mxu0 0
        %7287 = vmatmul.mubr.bf16.gmra.mrb[0].mxu0 %v6976
        %v7288 = vpop.f32.mrb[0].mxu0
        %v7289 = vadd.f32 %v7128, %v7288
        %v7290 = vpop.f32.mrb[0].mxu0
        %v7291 = vpop.f32.mrb[0].mxu0
        %v7292 = vadd.f32 %v7131, %v7291
        %v7293 = vpop.f32.mrb[0].mxu0
        %7294 = vmatprep.mubr.bf16.mxu0 0
        %7295 = vmatmul.mubr.bf16.gmra.mrb[0].mxu0 %v6979
        %v7296 = vpop.f32.mrb[0].mxu0
        %v7297 = vadd.f32 %v7136, %v7296
        %v7298 = vpop.f32.mrb[0].mxu0
        %v7299 = vpop.f32.mrb[0].mxu0
        %v7300 = vadd.f32 %v7139, %v7299
        %v7301 = vpop.f32.mrb[0].mxu0
        %7302 = vdwg.mxu0
        %v7303 = vmax.f32 %v7177, 0.0
        %v7304 = vmax.f32 %v7180, 0.0
        %v7305 = vmax.f32 %v7185, 0.0
        %v7306 = vmax.f32 %v7188, 0.0
        %v7307 = vmax.f32 %v7193, 0.0
        %v7308 = vmax.f32 %v7196, 0.0
        %v7309 = vmax.f32 %v7201, 0.0
        %v7310 = vmax.f32 %v7204, 0.0
        %v7311 = vmax.f32 %v7209, 0.0
        %v7312 = vmax.f32 %v7212, 0.0
        %v7313 = vmax.f32 %v7217, 0.0
        %v7314 = vmax.f32 %v7220, 0.0
        %v7315 = vmax.f32 %v7225, 0.0
        %v7316 = vmax.f32 %v7228, 0.0
        %v7317 = vmax.f32 %v7233, 0.0
        %v7318 = vmax.f32 %v7236, 0.0
        %v7319 = vmax.f32 %v7241, 0.0
        %v7320 = vmax.f32 %v7244, 0.0
        %v7321 = vmax.f32 %v7249, 0.0
        %v7322 = vmax.f32 %v7252, 0.0
        %v7323 = vmax.f32 %v7257, 0.0
        %v7324 = vmax.f32 %v7260, 0.0
        %v7325 = vmax.f32 %v7265, 0.0
        %v7326 = vmax.f32 %v7268, 0.0
        %v7327 = vmax.f32 %v7273, 0.0
        %v7328 = vmax.f32 %v7276, 0.0
        %v7329 = vmax.f32 %v7281, 0.0
        %v7330 = vmax.f32 %v7284, 0.0
        %v7331 = vmax.f32 %v7289, 0.0
        %v7332 = vmax.f32 %v7292, 0.0
        %v7333 = vmax.f32 %v7297, 0.0
        %v7334 = vmax.f32 %v7300, 0.0
        %7335 = vst.msk [vmem:[%s312 + $0x1] sm:$0xff] %vm224, %v7303
        %7336 = vst.msk [vmem:[%s312 + $0x9] sm:$0xff] %vm224, %v7304
        %7337 = vst.msk [vmem:[%s312 + $0x19] sm:$0xff] %vm224, %v7305
        %7338 = vst.msk [vmem:[%s312 + $0x21] sm:$0xff] %vm224, %v7306
        %7339 = vst.msk [vmem:[%s312 + $0x31] sm:$0xff] %vm224, %v7307
        %7340 = vst.msk [vmem:[%s312 + $0x39] sm:$0xff] %vm224, %v7308
        %7341 = vst.msk [vmem:[%s312 + $0x49] sm:$0xff] %vm224, %v7309
        %7342 = vst.msk [vmem:[%s312 + $0x51] sm:$0xff] %vm224, %v7310
        %7343 = vst.msk [vmem:[%s312 + $0x61] sm:$0xff] %vm224, %v7311
        %7344 = vst.msk [vmem:[%s312 + $0x69] sm:$0xff] %vm224, %v7312
        %7345 = vst.msk [vmem:[%s312 + $0x79] sm:$0xff] %vm224, %v7313
        %7346 = vst.msk [vmem:[%s312 + $0x81] sm:$0xff] %vm224, %v7314
        %7347 = vst.msk [vmem:[%s312 + $0x91] sm:$0xff] %vm224, %v7315
        %7348 = vst.msk [vmem:[%s312 + $0x99] sm:$0xff] %vm224, %v7316
        %7349 = vst.msk [vmem:[%s312 + $0xa9] sm:$0xff] %vm224, %v7317
        %7350 = vst.msk [vmem:[%s312 + $0xb1] sm:$0xff] %vm224, %v7318
        %7351 = vst.msk [vmem:[%s312 + $0xc1] sm:$0xff] %vm224, %v7319
        %7352 = vst.msk [vmem:[%s312 + $0xc9] sm:$0xff] %vm224, %v7320
        %7353 = vst.msk [vmem:[%s312 + $0xd9] sm:$0xff] %vm224, %v7321
        %7354 = vst.msk [vmem:[%s312 + $0xe1] sm:$0xff] %vm224, %v7322
        %7355 = vst.msk [vmem:[%s312 + $0xf1] sm:$0xff] %vm224, %v7323
        %7356 = vst.msk [vmem:[%s312 + $0xf9] sm:$0xff] %vm224, %v7324
        %7357 = vst.msk [vmem:[%s312 + $0x109] sm:$0xff] %vm224, %v7325
        %7358 = vst.msk [vmem:[%s312 + $0x111] sm:$0xff] %vm224, %v7326
        %7359 = vst.msk [vmem:[%s312 + $0x121] sm:$0xff] %vm224, %v7327
        %7360 = vst.msk [vmem:[%s312 + $0x129] sm:$0xff] %vm224, %v7328
        %7361 = vst.msk [vmem:[%s312 + $0x139] sm:$0xff] %vm224, %v7329
        %7362 = vst.msk [vmem:[%s312 + $0x141] sm:$0xff] %vm224, %v7330
        %7363 = vst.msk [vmem:[%s312 + $0x151] sm:$0xff] %vm224, %v7331
        %7364 = vst.msk [vmem:[%s312 + $0x159] sm:$0xff] %vm224, %v7332
        %7365 = vst.msk [vmem:[%s312 + $0x169] sm:$0xff] %vm224, %v7333
        %7366 = vst.msk [vmem:[%s312 + $0x171] sm:$0xff] %vm224, %v7334
        %v7367 = vld [vmem:[#allocation2] sm:$0xff]
        %v7368 = vld [vmem:[#allocation2 + $0x8] sm:$0xff]
        %v7369 = vld [vmem:[#allocation2 + $0x10] sm:$0x3]
        %v7370 = vld [vmem:[#allocation2 + $0x18] sm:$0xff]
        %v7371 = vld [vmem:[#allocation2 + $0x20] sm:$0xff]
        %v7372 = vld [vmem:[#allocation2 + $0x28] sm:$0x3]
        %v7373 = vld [vmem:[#allocation2 + $0x30] sm:$0xff]
        %v7374 = vld [vmem:[#allocation2 + $0x38] sm:$0xff]
        %v7375 = vld [vmem:[#allocation2 + $0x40] sm:$0x3]
        %v7376 = vld [vmem:[#allocation2 + $0x48] sm:$0xff]
        %v7377 = vld [vmem:[#allocation2 + $0x50] sm:$0xff]
        %v7378 = vld [vmem:[#allocation2 + $0x58] sm:$0x3]
        %v7379 = vld [vmem:[#allocation2 + $0x60] sm:$0xff]
        %v7380 = vld [vmem:[#allocation2 + $0x68] sm:$0xff]
        %v7381 = vld [vmem:[#allocation2 + $0x70] sm:$0x3]
        %v7382 = vld [vmem:[#allocation2 + $0x78] sm:$0xff]
        %v7383 = vld [vmem:[#allocation2 + $0x80] sm:$0xff]
        %v7384 = vld [vmem:[#allocation2 + $0x88] sm:$0x3]
        %v7385 = vld [vmem:[#allocation2 + $0x90] sm:$0xff]
        %v7386 = vld [vmem:[#allocation2 + $0x98] sm:$0xff]
        %v7387 = vld [vmem:[#allocation2 + $0xa0] sm:$0x3]
        %v7388 = vld [vmem:[#allocation2 + $0xa8] sm:$0xff]
        %v7389 = vld [vmem:[#allocation2 + $0xb0] sm:$0xff]
        %v7390 = vld [vmem:[#allocation2 + $0xb8] sm:$0x3]
        %v7391 = vld [vmem:[#allocation2 + $0xc0] sm:$0xff]
        %v7392 = vld [vmem:[#allocation2 + $0xc8] sm:$0xff]
        %v7393 = vld [vmem:[#allocation2 + $0xd0] sm:$0x3]
        %v7394 = vld [vmem:[#allocation2 + $0xd8] sm:$0xff]
        %v7395 = vld [vmem:[#allocation2 + $0xe0] sm:$0xff]
        %v7396 = vld [vmem:[#allocation2 + $0xe8] sm:$0x3]
        %v7397 = vld [vmem:[#allocation2 + $0xf0] sm:$0xff]
        %v7398 = vld [vmem:[#allocation2 + $0xf8] sm:$0xff]
        %v7399 = vld [vmem:[#allocation2 + $0x100] sm:$0x3]
        %v7400 = vld [vmem:[#allocation2 + $0x108] sm:$0xff]
        %v7401 = vld [vmem:[#allocation2 + $0x110] sm:$0xff]
        %v7402 = vld [vmem:[#allocation2 + $0x118] sm:$0x3]
        %v7403 = vld [vmem:[#allocation2 + $0x120] sm:$0xff]
        %v7404 = vld [vmem:[#allocation2 + $0x128] sm:$0xff]
        %v7405 = vld [vmem:[#allocation2 + $0x130] sm:$0x3]
        %v7406 = vld [vmem:[#allocation2 + $0x138] sm:$0xff]
        %v7407 = vld [vmem:[#allocation2 + $0x140] sm:$0xff]
        %v7408 = vld [vmem:[#allocation2 + $0x148] sm:$0x3]
        %v7409 = vld [vmem:[#allocation2 + $0x150] sm:$0xff]
        %v7410 = vld [vmem:[#allocation2 + $0x158] sm:$0xff]
        %v7411 = vld [vmem:[#allocation2 + $0x160] sm:$0x3]
        %v7412 = vld [vmem:[#allocation2 + $0x168] sm:$0xff]
        %v7413 = vld [vmem:[#allocation2 + $0x170] sm:$0xff]
        %v7414 = vld [vmem:[#allocation2 + $0x178] sm:$0x3]
        %v7415 = vld [vmem:[#allocation2 + $0x180] sm:$0xff]
        %v7416 = vld [vmem:[#allocation2 + $0x188] sm:$0xff]
        %v7417 = vld [vmem:[#allocation2 + $0x190] sm:$0x3]
        %v7418 = vld [vmem:[#allocation2 + $0x198] sm:$0xff]
        %v7419 = vld [vmem:[#allocation2 + $0x1a0] sm:$0xff]
        %v7420 = vld [vmem:[#allocation2 + $0x1a8] sm:$0x3]
        %v7469 = vrot.slane %v7367, 1
        %v7470 = vrot.slane %v7368, 1
        %v7471 = vsel %vm447, %v7469, %v7470
        %v7472 = vrot.slane %v7369, 1
        %v7473 = vsel %vm447, %v7470, %v7472
        %v7474 = vrot.slane %v7370, 1
        %v7475 = vrot.slane %v7371, 1
        %v7476 = vsel %vm447, %v7474, %v7475
        %v7477 = vrot.slane %v7372, 1
        %v7478 = vsel %vm447, %v7475, %v7477
        %v7479 = vrot.slane %v7373, 1
        %v7480 = vrot.slane %v7374, 1
        %v7481 = vsel %vm447, %v7479, %v7480
        %v7482 = vrot.slane %v7375, 1
        %v7483 = vsel %vm447, %v7480, %v7482
        %v7484 = vrot.slane %v7376, 1
        %v7485 = vrot.slane %v7377, 1
        %v7486 = vsel %vm447, %v7484, %v7485
        %v7487 = vrot.slane %v7378, 1
        %v7488 = vsel %vm447, %v7485, %v7487
        %v7489 = vrot.slane %v7379, 1
        %v7490 = vrot.slane %v7380, 1
        %v7491 = vsel %vm447, %v7489, %v7490
        %v7492 = vrot.slane %v7381, 1
        %v7493 = vsel %vm447, %v7490, %v7492
        %v7494 = vrot.slane %v7382, 1
        %v7495 = vrot.slane %v7383, 1
        %v7496 = vsel %vm447, %v7494, %v7495
        %v7497 = vrot.slane %v7384, 1
        %v7498 = vsel %vm447, %v7495, %v7497
        %v7499 = vrot.slane %v7385, 1
        %v7500 = vrot.slane %v7386, 1
        %v7501 = vsel %vm447, %v7499, %v7500
        %v7502 = vrot.slane %v7387, 1
        %v7503 = vsel %vm447, %v7500, %v7502
        %v7504 = vrot.slane %v7388, 1
        %v7505 = vrot.slane %v7389, 1
        %v7506 = vsel %vm447, %v7504, %v7505
        %v7507 = vrot.slane %v7390, 1
        %v7508 = vsel %vm447, %v7505, %v7507
        %v7509 = vrot.slane %v7391, 1
        %v7510 = vrot.slane %v7392, 1
        %v7511 = vsel %vm447, %v7509, %v7510
        %v7512 = vrot.slane %v7393, 1
        %v7513 = vsel %vm447, %v7510, %v7512
        %v7514 = vrot.slane %v7394, 1
        %v7515 = vrot.slane %v7395, 1
        %v7516 = vsel %vm447, %v7514, %v7515
        %v7517 = vrot.slane %v7396, 1
        %v7518 = vsel %vm447, %v7515, %v7517
        %v7519 = vrot.slane %v7397, 1
        %v7520 = vrot.slane %v7398, 1
        %v7521 = vsel %vm447, %v7519, %v7520
        %v7522 = vrot.slane %v7399, 1
        %v7523 = vsel %vm447, %v7520, %v7522
        %v7524 = vrot.slane %v7400, 1
        %v7525 = vrot.slane %v7401, 1
        %v7526 = vsel %vm447, %v7524, %v7525
        %v7527 = vrot.slane %v7402, 1
        %v7528 = vsel %vm447, %v7525, %v7527
        %v7529 = vrot.slane %v7403, 1
        %v7530 = vrot.slane %v7404, 1
        %v7531 = vsel %vm447, %v7529, %v7530
        %v7532 = vrot.slane %v7405, 1
        %v7533 = vsel %vm447, %v7530, %v7532
        %v7534 = vrot.slane %v7406, 1
        %v7535 = vrot.slane %v7407, 1
        %v7536 = vsel %vm447, %v7534, %v7535
        %v7537 = vrot.slane %v7408, 1
        %v7538 = vsel %vm447, %v7535, %v7537
        %v7539 = vrot.slane %v7409, 1
        %v7540 = vrot.slane %v7410, 1
        %v7541 = vsel %vm447, %v7539, %v7540
        %v7542 = vrot.slane %v7411, 1
        %v7543 = vsel %vm447, %v7540, %v7542
        %v7544 = vrot.slane %v7412, 1
        %v7545 = vrot.slane %v7413, 1
        %v7546 = vsel %vm447, %v7544, %v7545
        %v7547 = vrot.slane %v7414, 1
        %v7548 = vsel %vm447, %v7545, %v7547
        %7549 = vrot.lane.b32.xlu0 %v7471, 32
        %v7550 = vpop.permute.xlu0 %7549
        %7551 = vrot.lane.b32.xlu0 %v7473, 32
        %v7552 = vpop.permute.xlu0 %7551
        %7553 = vrot.lane.b32.xlu0 %v7476, 32
        %v7554 = vpop.permute.xlu0 %7553
        %7555 = vrot.lane.b32.xlu0 %v7478, 32
        %v7556 = vpop.permute.xlu0 %7555
        %7557 = vrot.lane.b32.xlu0 %v7481, 32
        %v7558 = vpop.permute.xlu0 %7557
        %7559 = vrot.lane.b32.xlu0 %v7483, 32
        %v7560 = vpop.permute.xlu0 %7559
        %7561 = vrot.lane.b32.xlu0 %v7486, 32
        %v7562 = vpop.permute.xlu0 %7561
        %7563 = vrot.lane.b32.xlu0 %v7488, 32
        %v7564 = vpop.permute.xlu0 %7563
        %7565 = vrot.lane.b32.xlu0 %v7491, 32
        %v7566 = vpop.permute.xlu0 %7565
        %7567 = vrot.lane.b32.xlu0 %v7493, 32
        %v7568 = vpop.permute.xlu0 %7567
        %7569 = vrot.lane.b32.xlu0 %v7496, 32
        %v7570 = vpop.permute.xlu0 %7569
        %7571 = vrot.lane.b32.xlu0 %v7498, 32
        %v7572 = vpop.permute.xlu0 %7571
        %7573 = vrot.lane.b32.xlu0 %v7501, 32
        %v7574 = vpop.permute.xlu0 %7573
        %7575 = vrot.lane.b32.xlu0 %v7503, 32
        %v7576 = vpop.permute.xlu0 %7575
        %7577 = vrot.lane.b32.xlu0 %v7506, 32
        %v7578 = vpop.permute.xlu0 %7577
        %7579 = vrot.lane.b32.xlu0 %v7508, 32
        %v7580 = vpop.permute.xlu0 %7579
        %7581 = vrot.lane.b32.xlu0 %v7511, 32
        %v7582 = vpop.permute.xlu0 %7581
        %7583 = vrot.lane.b32.xlu0 %v7513, 32
        %v7584 = vpop.permute.xlu0 %7583
        %7585 = vrot.lane.b32.xlu0 %v7516, 32
        %v7586 = vpop.permute.xlu0 %7585
        %7587 = vrot.lane.b32.xlu0 %v7518, 32
        %v7588 = vpop.permute.xlu0 %7587
        %7589 = vrot.lane.b32.xlu0 %v7521, 32
        %v7590 = vpop.permute.xlu0 %7589
        %7591 = vrot.lane.b32.xlu0 %v7523, 32
        %v7592 = vpop.permute.xlu0 %7591
        %7593 = vrot.lane.b32.xlu0 %v7526, 32
        %v7594 = vpop.permute.xlu0 %7593
        %7595 = vrot.lane.b32.xlu0 %v7528, 32
        %v7596 = vpop.permute.xlu0 %7595
        %7597 = vrot.lane.b32.xlu0 %v7531, 32
        %v7598 = vpop.permute.xlu0 %7597
        %7599 = vrot.lane.b32.xlu0 %v7533, 32
        %v7600 = vpop.permute.xlu0 %7599
        %7601 = vrot.lane.b32.xlu0 %v7536, 32
        %v7602 = vpop.permute.xlu0 %7601
        %7603 = vrot.lane.b32.xlu0 %v7538, 32
        %v7604 = vpop.permute.xlu0 %7603
        %7605 = vrot.lane.b32.xlu0 %v7541, 32
        %v7606 = vpop.permute.xlu0 %7605
        %7607 = vrot.lane.b32.xlu0 %v7543, 32
        %v7608 = vpop.permute.xlu0 %7607
        %7609 = vrot.lane.b32.xlu0 %v7546, 32
        %v7610 = vpop.permute.xlu0 %7609
        %7611 = vrot.lane.b32.xlu0 %v7548, 32
        %v7612 = vpop.permute.xlu0 %7611
        %v7645 = vrot.slane %v7367, 2
        %v7646 = vrot.slane %v7368, 2
        %v7647 = vsel %vm624, %v7645, %v7646
        %v7648 = vrot.slane %v7369, 2
        %v7649 = vsel %vm624, %v7646, %v7648
        %v7650 = vrot.slane %v7370, 2
        %v7651 = vrot.slane %v7371, 2
        %v7652 = vsel %vm624, %v7650, %v7651
        %v7653 = vrot.slane %v7372, 2
        %v7654 = vsel %vm624, %v7651, %v7653
        %v7655 = vrot.slane %v7373, 2
        %v7656 = vrot.slane %v7374, 2
        %v7657 = vsel %vm624, %v7655, %v7656
        %v7658 = vrot.slane %v7375, 2
        %v7659 = vsel %vm624, %v7656, %v7658
        %v7660 = vrot.slane %v7376, 2
        %v7661 = vrot.slane %v7377, 2
        %v7662 = vsel %vm624, %v7660, %v7661
        %v7663 = vrot.slane %v7378, 2
        %v7664 = vsel %vm624, %v7661, %v7663
        %v7665 = vrot.slane %v7379, 2
        %v7666 = vrot.slane %v7380, 2
        %v7667 = vsel %vm624, %v7665, %v7666
        %v7668 = vrot.slane %v7381, 2
        %v7669 = vsel %vm624, %v7666, %v7668
        %v7670 = vrot.slane %v7382, 2
        %v7671 = vrot.slane %v7383, 2
        %v7672 = vsel %vm624, %v7670, %v7671
        %v7673 = vrot.slane %v7384, 2
        %v7674 = vsel %vm624, %v7671, %v7673
        %v7675 = vrot.slane %v7385, 2
        %v7676 = vrot.slane %v7386, 2
        %v7677 = vsel %vm624, %v7675, %v7676
        %v7678 = vrot.slane %v7387, 2
        %v7679 = vsel %vm624, %v7676, %v7678
        %v7680 = vrot.slane %v7388, 2
        %v7681 = vrot.slane %v7389, 2
        %v7682 = vsel %vm624, %v7680, %v7681
        %v7683 = vrot.slane %v7390, 2
        %v7684 = vsel %vm624, %v7681, %v7683
        %v7685 = vrot.slane %v7391, 2
        %v7686 = vrot.slane %v7392, 2
        %v7687 = vsel %vm624, %v7685, %v7686
        %v7688 = vrot.slane %v7393, 2
        %v7689 = vsel %vm624, %v7686, %v7688
        %v7690 = vrot.slane %v7394, 2
        %v7691 = vrot.slane %v7395, 2
        %v7692 = vsel %vm624, %v7690, %v7691
        %v7693 = vrot.slane %v7396, 2
        %v7694 = vsel %vm624, %v7691, %v7693
        %v7695 = vrot.slane %v7397, 2
        %v7696 = vrot.slane %v7398, 2
        %v7697 = vsel %vm624, %v7695, %v7696
        %v7698 = vrot.slane %v7399, 2
        %v7699 = vsel %vm624, %v7696, %v7698
        %v7700 = vrot.slane %v7400, 2
        %v7701 = vrot.slane %v7401, 2
        %v7702 = vsel %vm624, %v7700, %v7701
        %v7703 = vrot.slane %v7402, 2
        %v7704 = vsel %vm624, %v7701, %v7703
        %v7705 = vrot.slane %v7403, 2
        %v7706 = vrot.slane %v7404, 2
        %v7707 = vsel %vm624, %v7705, %v7706
        %v7708 = vrot.slane %v7405, 2
        %v7709 = vsel %vm624, %v7706, %v7708
        %v7710 = vrot.slane %v7406, 2
        %v7711 = vrot.slane %v7407, 2
        %v7712 = vsel %vm624, %v7710, %v7711
        %v7713 = vrot.slane %v7408, 2
        %v7714 = vsel %vm624, %v7711, %v7713
        %v7715 = vrot.slane %v7409, 2
        %v7716 = vrot.slane %v7410, 2
        %v7717 = vsel %vm624, %v7715, %v7716
        %v7718 = vrot.slane %v7411, 2
        %v7719 = vsel %vm624, %v7716, %v7718
        %v7720 = vrot.slane %v7412, 2
        %v7721 = vrot.slane %v7413, 2
        %v7722 = vsel %vm624, %v7720, %v7721
        %v7723 = vrot.slane %v7414, 2
        %v7724 = vsel %vm624, %v7721, %v7723
        %7725 = vrot.lane.b32.xlu0 %v7647, 64
        %v7726 = vpop.permute.xlu0 %7725
        %7727 = vrot.lane.b32.xlu0 %v7649, 64
        %v7728 = vpop.permute.xlu0 %7727
        %7729 = vrot.lane.b32.xlu0 %v7652, 64
        %v7730 = vpop.permute.xlu0 %7729
        %7731 = vrot.lane.b32.xlu0 %v7654, 64
        %v7732 = vpop.permute.xlu0 %7731
        %7733 = vrot.lane.b32.xlu0 %v7657, 64
        %v7734 = vpop.permute.xlu0 %7733
        %7735 = vrot.lane.b32.xlu0 %v7659, 64
        %v7736 = vpop.permute.xlu0 %7735
        %7737 = vrot.lane.b32.xlu0 %v7662, 64
        %v7738 = vpop.permute.xlu0 %7737
        %7739 = vrot.lane.b32.xlu0 %v7664, 64
        %v7740 = vpop.permute.xlu0 %7739
        %7741 = vrot.lane.b32.xlu0 %v7667, 64
        %v7742 = vpop.permute.xlu0 %7741
        %7743 = vrot.lane.b32.xlu0 %v7669, 64
        %v7744 = vpop.permute.xlu0 %7743
        %7745 = vrot.lane.b32.xlu0 %v7672, 64
        %v7746 = vpop.permute.xlu0 %7745
        %7747 = vrot.lane.b32.xlu0 %v7674, 64
        %v7748 = vpop.permute.xlu0 %7747
        %7749 = vrot.lane.b32.xlu0 %v7677, 64
        %v7750 = vpop.permute.xlu0 %7749
        %7751 = vrot.lane.b32.xlu0 %v7679, 64
        %v7752 = vpop.permute.xlu0 %7751
        %7753 = vrot.lane.b32.xlu0 %v7682, 64
        %v7754 = vpop.permute.xlu0 %7753
        %7755 = vrot.lane.b32.xlu0 %v7684, 64
        %v7756 = vpop.permute.xlu0 %7755
        %7757 = vrot.lane.b32.xlu0 %v7687, 64
        %v7758 = vpop.permute.xlu0 %7757
        %7759 = vrot.lane.b32.xlu0 %v7689, 64
        %v7760 = vpop.permute.xlu0 %7759
        %7761 = vrot.lane.b32.xlu0 %v7692, 64
        %v7762 = vpop.permute.xlu0 %7761
        %7763 = vrot.lane.b32.xlu0 %v7694, 64
        %v7764 = vpop.permute.xlu0 %7763
        %7765 = vrot.lane.b32.xlu0 %v7697, 64
        %v7766 = vpop.permute.xlu0 %7765
        %7767 = vrot.lane.b32.xlu0 %v7699, 64
        %v7768 = vpop.permute.xlu0 %7767
        %7769 = vrot.lane.b32.xlu0 %v7702, 64
        %v7770 = vpop.permute.xlu0 %7769
        %7771 = vrot.lane.b32.xlu0 %v7704, 64
        %v7772 = vpop.permute.xlu0 %7771
        %7773 = vrot.lane.b32.xlu0 %v7707, 64
        %v7774 = vpop.permute.xlu0 %7773
        %7775 = vrot.lane.b32.xlu0 %v7709, 64
        %v7776 = vpop.permute.xlu0 %7775
        %7777 = vrot.lane.b32.xlu0 %v7712, 64
        %v7778 = vpop.permute.xlu0 %7777
        %7779 = vrot.lane.b32.xlu0 %v7714, 64
        %v7780 = vpop.permute.xlu0 %7779
        %7781 = vrot.lane.b32.xlu0 %v7717, 64
        %v7782 = vpop.permute.xlu0 %7781
        %7783 = vrot.lane.b32.xlu0 %v7719, 64
        %v7784 = vpop.permute.xlu0 %7783
        %7785 = vrot.lane.b32.xlu0 %v7722, 64
        %v7786 = vpop.permute.xlu0 %7785
        %7787 = vrot.lane.b32.xlu0 %v7724, 64
        %v7788 = vpop.permute.xlu0 %7787
        %7823 = vrot.lane.b32.xlu0 %v7370, 96
        %v7824 = vpop.permute.xlu0 %7823
        %7825 = vrot.lane.b32.xlu0 %v7371, 96
        %v7826 = vpop.permute.xlu0 %7825
        %7827 = vrot.lane.b32.xlu0 %v7373, 96
        %v7828 = vpop.permute.xlu0 %7827
        %7829 = vrot.lane.b32.xlu0 %v7374, 96
        %v7830 = vpop.permute.xlu0 %7829
        %7831 = vrot.lane.b32.xlu0 %v7376, 96
        %v7832 = vpop.permute.xlu0 %7831
        %7833 = vrot.lane.b32.xlu0 %v7377, 96
        %v7834 = vpop.permute.xlu0 %7833
        %7835 = vrot.lane.b32.xlu0 %v7379, 96
        %v7836 = vpop.permute.xlu0 %7835
        %7837 = vrot.lane.b32.xlu0 %v7380, 96
        %v7838 = vpop.permute.xlu0 %7837
        %7839 = vrot.lane.b32.xlu0 %v7382, 96
        %v7840 = vpop.permute.xlu0 %7839
        %7841 = vrot.lane.b32.xlu0 %v7383, 96
        %v7842 = vpop.permute.xlu0 %7841
        %7843 = vrot.lane.b32.xlu0 %v7385, 96
        %v7844 = vpop.permute.xlu0 %7843
        %7845 = vrot.lane.b32.xlu0 %v7386, 96
        %v7846 = vpop.permute.xlu0 %7845
        %7847 = vrot.lane.b32.xlu0 %v7388, 96
        %v7848 = vpop.permute.xlu0 %7847
        %7849 = vrot.lane.b32.xlu0 %v7389, 96
        %v7850 = vpop.permute.xlu0 %7849
        %7851 = vrot.lane.b32.xlu0 %v7391, 96
        %v7852 = vpop.permute.xlu0 %7851
        %7853 = vrot.lane.b32.xlu0 %v7392, 96
        %v7854 = vpop.permute.xlu0 %7853
        %7855 = vrot.lane.b32.xlu0 %v7394, 96
        %v7856 = vpop.permute.xlu0 %7855
        %7857 = vrot.lane.b32.xlu0 %v7395, 96
        %v7858 = vpop.permute.xlu0 %7857
        %7859 = vrot.lane.b32.xlu0 %v7397, 96
        %v7860 = vpop.permute.xlu0 %7859
        %7861 = vrot.lane.b32.xlu0 %v7398, 96
        %v7862 = vpop.permute.xlu0 %7861
        %7863 = vrot.lane.b32.xlu0 %v7400, 96
        %v7864 = vpop.permute.xlu0 %7863
        %7865 = vrot.lane.b32.xlu0 %v7401, 96
        %v7866 = vpop.permute.xlu0 %7865
        %7867 = vrot.lane.b32.xlu0 %v7403, 96
        %v7868 = vpop.permute.xlu0 %7867
        %7869 = vrot.lane.b32.xlu0 %v7404, 96
        %v7870 = vpop.permute.xlu0 %7869
        %7871 = vrot.lane.b32.xlu0 %v7406, 96
        %v7872 = vpop.permute.xlu0 %7871
        %7873 = vrot.lane.b32.xlu0 %v7407, 96
        %v7874 = vpop.permute.xlu0 %7873
        %7875 = vrot.lane.b32.xlu0 %v7409, 96
        %v7876 = vpop.permute.xlu0 %7875
        %7877 = vrot.lane.b32.xlu0 %v7410, 96
        %v7878 = vpop.permute.xlu0 %7877
        %7879 = vrot.lane.b32.xlu0 %v7412, 96
        %v7880 = vpop.permute.xlu0 %7879
        %7881 = vrot.lane.b32.xlu0 %v7413, 96
        %v7882 = vpop.permute.xlu0 %7881
        %7883 = vrot.lane.b32.xlu0 %v7415, 96
        %v7884 = vpop.permute.xlu0 %7883
        %7885 = vrot.lane.b32.xlu0 %v7416, 96
        %v7886 = vpop.permute.xlu0 %7885
        %v7920 = vrot.slane %v7415, 1
        %v7921 = vrot.slane %v7416, 1
        %v7922 = vsel %vm447, %v7920, %v7921
        %v7923 = vrot.slane %v7417, 1
        %v7924 = vsel %vm447, %v7921, %v7923
        %v7957 = vrot.slane %v7415, 2
        %v7958 = vrot.slane %v7416, 2
        %v7959 = vsel %vm624, %v7957, %v7958
        %v7960 = vrot.slane %v7417, 2
        %v7961 = vsel %vm624, %v7958, %v7960
        %7962 = vrot.lane.b32.xlu0 %v7652, 32
        %v7963 = vpop.permute.xlu0 %7962
        %7964 = vrot.lane.b32.xlu0 %v7654, 32
        %v7965 = vpop.permute.xlu0 %7964
        %7966 = vrot.lane.b32.xlu0 %v7657, 32
        %v7967 = vpop.permute.xlu0 %7966
        %7968 = vrot.lane.b32.xlu0 %v7659, 32
        %v7969 = vpop.permute.xlu0 %7968
        %7970 = vrot.lane.b32.xlu0 %v7662, 32
        %v7971 = vpop.permute.xlu0 %7970
        %7972 = vrot.lane.b32.xlu0 %v7664, 32
        %v7973 = vpop.permute.xlu0 %7972
        %7974 = vrot.lane.b32.xlu0 %v7667, 32
        %v7975 = vpop.permute.xlu0 %7974
        %7976 = vrot.lane.b32.xlu0 %v7669, 32
        %v7977 = vpop.permute.xlu0 %7976
        %7978 = vrot.lane.b32.xlu0 %v7672, 32
        %v7979 = vpop.permute.xlu0 %7978
        %7980 = vrot.lane.b32.xlu0 %v7674, 32
        %v7981 = vpop.permute.xlu0 %7980
        %7982 = vrot.lane.b32.xlu0 %v7677, 32
        %v7983 = vpop.permute.xlu0 %7982
        %7984 = vrot.lane.b32.xlu0 %v7679, 32
        %v7985 = vpop.permute.xlu0 %7984
        %7986 = vrot.lane.b32.xlu0 %v7682, 32
        %v7987 = vpop.permute.xlu0 %7986
        %7988 = vrot.lane.b32.xlu0 %v7684, 32
        %v7989 = vpop.permute.xlu0 %7988
        %7990 = vrot.lane.b32.xlu0 %v7687, 32
        %v7991 = vpop.permute.xlu0 %7990
        %7992 = vrot.lane.b32.xlu0 %v7689, 32
        %v7993 = vpop.permute.xlu0 %7992
        %7994 = vrot.lane.b32.xlu0 %v7692, 32
        %v7995 = vpop.permute.xlu0 %7994
        %7996 = vrot.lane.b32.xlu0 %v7694, 32
        %v7997 = vpop.permute.xlu0 %7996
        %7998 = vrot.lane.b32.xlu0 %v7697, 32
        %v7999 = vpop.permute.xlu0 %7998
        %8000 = vrot.lane.b32.xlu0 %v7699, 32
        %v8001 = vpop.permute.xlu0 %8000
        %8002 = vrot.lane.b32.xlu0 %v7702, 32
        %v8003 = vpop.permute.xlu0 %8002
        %8004 = vrot.lane.b32.xlu0 %v7704, 32
        %v8005 = vpop.permute.xlu0 %8004
        %8006 = vrot.lane.b32.xlu0 %v7707, 32
        %v8007 = vpop.permute.xlu0 %8006
        %8008 = vrot.lane.b32.xlu0 %v7709, 32
        %v8009 = vpop.permute.xlu0 %8008
        %8010 = vrot.lane.b32.xlu0 %v7712, 32
        %v8011 = vpop.permute.xlu0 %8010
        %8012 = vrot.lane.b32.xlu0 %v7714, 32
        %v8013 = vpop.permute.xlu0 %8012
        %8014 = vrot.lane.b32.xlu0 %v7717, 32
        %v8015 = vpop.permute.xlu0 %8014
        %8016 = vrot.lane.b32.xlu0 %v7719, 32
        %v8017 = vpop.permute.xlu0 %8016
        %8018 = vrot.lane.b32.xlu0 %v7722, 32
        %v8019 = vpop.permute.xlu0 %8018
        %8020 = vrot.lane.b32.xlu0 %v7724, 32
        %v8021 = vpop.permute.xlu0 %8020
        %8022 = vrot.lane.b32.xlu0 %v7959, 32
        %v8023 = vpop.permute.xlu0 %8022
        %8024 = vrot.lane.b32.xlu0 %v7961, 32
        %v8025 = vpop.permute.xlu0 %8024
        %8060 = vrot.lane.b32.xlu0 %v7373, 64
        %v8061 = vpop.permute.xlu0 %8060
        %8062 = vrot.lane.b32.xlu0 %v7374, 64
        %v8063 = vpop.permute.xlu0 %8062
        %8064 = vrot.lane.b32.xlu0 %v7376, 64
        %v8065 = vpop.permute.xlu0 %8064
        %8066 = vrot.lane.b32.xlu0 %v7377, 64
        %v8067 = vpop.permute.xlu0 %8066
        %8068 = vrot.lane.b32.xlu0 %v7379, 64
        %v8069 = vpop.permute.xlu0 %8068
        %8070 = vrot.lane.b32.xlu0 %v7380, 64
        %v8071 = vpop.permute.xlu0 %8070
        %8072 = vrot.lane.b32.xlu0 %v7382, 64
        %v8073 = vpop.permute.xlu0 %8072
        %8074 = vrot.lane.b32.xlu0 %v7383, 64
        %v8075 = vpop.permute.xlu0 %8074
        %8076 = vrot.lane.b32.xlu0 %v7385, 64
        %v8077 = vpop.permute.xlu0 %8076
        %8078 = vrot.lane.b32.xlu0 %v7386, 64
        %v8079 = vpop.permute.xlu0 %8078
        %8080 = vrot.lane.b32.xlu0 %v7388, 64
        %v8081 = vpop.permute.xlu0 %8080
        %8082 = vrot.lane.b32.xlu0 %v7389, 64
        %v8083 = vpop.permute.xlu0 %8082
        %8084 = vrot.lane.b32.xlu0 %v7391, 64
        %v8085 = vpop.permute.xlu0 %8084
        %8086 = vrot.lane.b32.xlu0 %v7392, 64
        %v8087 = vpop.permute.xlu0 %8086
        %8088 = vrot.lane.b32.xlu0 %v7394, 64
        %v8089 = vpop.permute.xlu0 %8088
        %8090 = vrot.lane.b32.xlu0 %v7395, 64
        %v8091 = vpop.permute.xlu0 %8090
        %8092 = vrot.lane.b32.xlu0 %v7397, 64
        %v8093 = vpop.permute.xlu0 %8092
        %8094 = vrot.lane.b32.xlu0 %v7398, 64
        %v8095 = vpop.permute.xlu0 %8094
        %8096 = vrot.lane.b32.xlu0 %v7400, 64
        %v8097 = vpop.permute.xlu0 %8096
        %8098 = vrot.lane.b32.xlu0 %v7401, 64
        %v8099 = vpop.permute.xlu0 %8098
        %8100 = vrot.lane.b32.xlu0 %v7403, 64
        %v8101 = vpop.permute.xlu0 %8100
        %8102 = vrot.lane.b32.xlu0 %v7404, 64
        %v8103 = vpop.permute.xlu0 %8102
        %8104 = vrot.lane.b32.xlu0 %v7406, 64
        %v8105 = vpop.permute.xlu0 %8104
        %8106 = vrot.lane.b32.xlu0 %v7407, 64
        %v8107 = vpop.permute.xlu0 %8106
        %8108 = vrot.lane.b32.xlu0 %v7409, 64
        %v8109 = vpop.permute.xlu0 %8108
        %8110 = vrot.lane.b32.xlu0 %v7410, 64
        %v8111 = vpop.permute.xlu0 %8110
        %8112 = vrot.lane.b32.xlu0 %v7412, 64
        %v8113 = vpop.permute.xlu0 %8112
        %8114 = vrot.lane.b32.xlu0 %v7413, 64
        %v8115 = vpop.permute.xlu0 %8114
        %8116 = vrot.lane.b32.xlu0 %v7415, 64
        %v8117 = vpop.permute.xlu0 %8116
        %8118 = vrot.lane.b32.xlu0 %v7416, 64
        %v8119 = vpop.permute.xlu0 %8118
        %8120 = vrot.lane.b32.xlu0 %v7418, 64
        %v8121 = vpop.permute.xlu0 %8120
        %8122 = vrot.lane.b32.xlu0 %v7419, 64
        %v8123 = vpop.permute.xlu0 %8122
        %v8157 = vrot.slane %v7418, 1
        %v8158 = vrot.slane %v7419, 1
        %v8159 = vsel %vm447, %v8157, %v8158
        %v8160 = vrot.slane %v7420, 1
        %v8161 = vsel %vm447, %v8158, %v8160
        %8162 = vrot.lane.b32.xlu0 %v7481, 96
        %v8163 = vpop.permute.xlu0 %8162
        %8164 = vrot.lane.b32.xlu0 %v7483, 96
        %v8165 = vpop.permute.xlu0 %8164
        %8166 = vrot.lane.b32.xlu0 %v7486, 96
        %v8167 = vpop.permute.xlu0 %8166
        %8168 = vrot.lane.b32.xlu0 %v7488, 96
        %v8169 = vpop.permute.xlu0 %8168
        %8170 = vrot.lane.b32.xlu0 %v7491, 96
        %v8171 = vpop.permute.xlu0 %8170
        %8172 = vrot.lane.b32.xlu0 %v7493, 96
        %v8173 = vpop.permute.xlu0 %8172
        %8174 = vrot.lane.b32.xlu0 %v7496, 96
        %v8175 = vpop.permute.xlu0 %8174
        %8176 = vrot.lane.b32.xlu0 %v7498, 96
        %v8177 = vpop.permute.xlu0 %8176
        %8178 = vrot.lane.b32.xlu0 %v7501, 96
        %v8179 = vpop.permute.xlu0 %8178
        %8180 = vrot.lane.b32.xlu0 %v7503, 96
        %v8181 = vpop.permute.xlu0 %8180
        %8182 = vrot.lane.b32.xlu0 %v7506, 96
        %v8183 = vpop.permute.xlu0 %8182
        %8184 = vrot.lane.b32.xlu0 %v7508, 96
        %v8185 = vpop.permute.xlu0 %8184
        %8186 = vrot.lane.b32.xlu0 %v7511, 96
        %v8187 = vpop.permute.xlu0 %8186
        %8188 = vrot.lane.b32.xlu0 %v7513, 96
        %v8189 = vpop.permute.xlu0 %8188
        %8190 = vrot.lane.b32.xlu0 %v7516, 96
        %v8191 = vpop.permute.xlu0 %8190
        %8192 = vrot.lane.b32.xlu0 %v7518, 96
        %v8193 = vpop.permute.xlu0 %8192
        %8194 = vrot.lane.b32.xlu0 %v7521, 96
        %v8195 = vpop.permute.xlu0 %8194
        %8196 = vrot.lane.b32.xlu0 %v7523, 96
        %v8197 = vpop.permute.xlu0 %8196
        %8198 = vrot.lane.b32.xlu0 %v7526, 96
        %v8199 = vpop.permute.xlu0 %8198
        %8200 = vrot.lane.b32.xlu0 %v7528, 96
        %v8201 = vpop.permute.xlu0 %8200
        %8202 = vrot.lane.b32.xlu0 %v7531, 96
        %v8203 = vpop.permute.xlu0 %8202
        %8204 = vrot.lane.b32.xlu0 %v7533, 96
        %v8205 = vpop.permute.xlu0 %8204
        %8206 = vrot.lane.b32.xlu0 %v7536, 96
        %v8207 = vpop.permute.xlu0 %8206
        %8208 = vrot.lane.b32.xlu0 %v7538, 96
        %v8209 = vpop.permute.xlu0 %8208
        %8210 = vrot.lane.b32.xlu0 %v7541, 96
        %v8211 = vpop.permute.xlu0 %8210
        %8212 = vrot.lane.b32.xlu0 %v7543, 96
        %v8213 = vpop.permute.xlu0 %8212
        %8214 = vrot.lane.b32.xlu0 %v7546, 96
        %v8215 = vpop.permute.xlu0 %8214
        %8216 = vrot.lane.b32.xlu0 %v7548, 96
        %v8217 = vpop.permute.xlu0 %8216
        %8218 = vrot.lane.b32.xlu0 %v7922, 96
        %v8219 = vpop.permute.xlu0 %8218
        %8220 = vrot.lane.b32.xlu0 %v7924, 96
        %v8221 = vpop.permute.xlu0 %8220
        %8222 = vrot.lane.b32.xlu0 %v8159, 96
        %v8223 = vpop.permute.xlu0 %8222
        %8224 = vrot.lane.b32.xlu0 %v8161, 96
        %v8225 = vpop.permute.xlu0 %8224
        %v8258 = vrot.slane %v7418, 2
        %v8259 = vrot.slane %v7419, 2
        %v8260 = vsel %vm624, %v8258, %v8259
        %v8261 = vrot.slane %v7420, 2
        %v8262 = vsel %vm624, %v8259, %v8261
        %v8295 = vsel %vm224, %v7367, %v7550
        %v8296 = vsel %vm224, %v7368, %v7552
        %v8297 = vsel %vm224, %v7370, %v7554
        %v8298 = vsel %vm224, %v7371, %v7556
        %v8299 = vsel %vm224, %v7373, %v7558
        %v8300 = vsel %vm224, %v7374, %v7560
        %v8301 = vsel %vm224, %v7376, %v7562
        %v8302 = vsel %vm224, %v7377, %v7564
        %v8303 = vsel %vm224, %v7379, %v7566
        %v8304 = vsel %vm224, %v7380, %v7568
        %v8305 = vsel %vm224, %v7382, %v7570
        %v8306 = vsel %vm224, %v7383, %v7572
        %v8307 = vsel %vm224, %v7385, %v7574
        %v8308 = vsel %vm224, %v7386, %v7576
        %v8309 = vsel %vm224, %v7388, %v7578
        %v8310 = vsel %vm224, %v7389, %v7580
        %v8311 = vsel %vm224, %v7391, %v7582
        %v8312 = vsel %vm224, %v7392, %v7584
        %v8313 = vsel %vm224, %v7394, %v7586
        %v8314 = vsel %vm224, %v7395, %v7588
        %v8315 = vsel %vm224, %v7397, %v7590
        %v8316 = vsel %vm224, %v7398, %v7592
        %v8317 = vsel %vm224, %v7400, %v7594
        %v8318 = vsel %vm224, %v7401, %v7596
        %v8319 = vsel %vm224, %v7403, %v7598
        %v8320 = vsel %vm224, %v7404, %v7600
        %v8321 = vsel %vm224, %v7406, %v7602
        %v8322 = vsel %vm224, %v7407, %v7604
        %v8323 = vsel %vm224, %v7409, %v7606
        %v8324 = vsel %vm224, %v7410, %v7608
        %v8325 = vsel %vm224, %v7412, %v7610
        %v8326 = vsel %vm224, %v7413, %v7612
        %v8327 = vsel %vm1307, %v8295, %v7726
        %v8328 = vsel %vm1307, %v8296, %v7728
        %v8329 = vsel %vm1307, %v8297, %v7730
        %v8330 = vsel %vm1307, %v8298, %v7732
        %v8331 = vsel %vm1307, %v8299, %v7734
        %v8332 = vsel %vm1307, %v8300, %v7736
        %v8333 = vsel %vm1307, %v8301, %v7738
        %v8334 = vsel %vm1307, %v8302, %v7740
        %v8335 = vsel %vm1307, %v8303, %v7742
        %v8336 = vsel %vm1307, %v8304, %v7744
        %v8337 = vsel %vm1307, %v8305, %v7746
        %v8338 = vsel %vm1307, %v8306, %v7748
        %v8339 = vsel %vm1307, %v8307, %v7750
        %v8340 = vsel %vm1307, %v8308, %v7752
        %v8341 = vsel %vm1307, %v8309, %v7754
        %v8342 = vsel %vm1307, %v8310, %v7756
        %v8343 = vsel %vm1307, %v8311, %v7758
        %v8344 = vsel %vm1307, %v8312, %v7760
        %v8345 = vsel %vm1307, %v8313, %v7762
        %v8346 = vsel %vm1307, %v8314, %v7764
        %v8347 = vsel %vm1307, %v8315, %v7766
        %v8348 = vsel %vm1307, %v8316, %v7768
        %v8349 = vsel %vm1307, %v8317, %v7770
        %v8350 = vsel %vm1307, %v8318, %v7772
        %v8351 = vsel %vm1307, %v8319, %v7774
        %v8352 = vsel %vm1307, %v8320, %v7776
        %v8353 = vsel %vm1307, %v8321, %v7778
        %v8354 = vsel %vm1307, %v8322, %v7780
        %v8355 = vsel %vm1307, %v8323, %v7782
        %v8356 = vsel %vm1307, %v8324, %v7784
        %v8357 = vsel %vm1307, %v8325, %v7786
        %v8358 = vsel %vm1307, %v8326, %v7788
        %v8359 = vsel %vm1340, %v8327, %v7824
        %v8360 = vsel %vm1340, %v8328, %v7826
        %v8361 = vsel %vm1340, %v8329, %v7828
        %v8362 = vsel %vm1340, %v8330, %v7830
        %v8363 = vsel %vm1340, %v8331, %v7832
        %v8364 = vsel %vm1340, %v8332, %v7834
        %v8365 = vsel %vm1340, %v8333, %v7836
        %v8366 = vsel %vm1340, %v8334, %v7838
        %v8367 = vsel %vm1340, %v8335, %v7840
        %v8368 = vsel %vm1340, %v8336, %v7842
        %v8369 = vsel %vm1340, %v8337, %v7844
        %v8370 = vsel %vm1340, %v8338, %v7846
        %v8371 = vsel %vm1340, %v8339, %v7848
        %v8372 = vsel %vm1340, %v8340, %v7850
        %v8373 = vsel %vm1340, %v8341, %v7852
        %v8374 = vsel %vm1340, %v8342, %v7854
        %v8375 = vsel %vm1340, %v8343, %v7856
        %v8376 = vsel %vm1340, %v8344, %v7858
        %v8377 = vsel %vm1340, %v8345, %v7860
        %v8378 = vsel %vm1340, %v8346, %v7862
        %v8379 = vsel %vm1340, %v8347, %v7864
        %v8380 = vsel %vm1340, %v8348, %v7866
        %v8381 = vsel %vm1340, %v8349, %v7868
        %v8382 = vsel %vm1340, %v8350, %v7870
        %v8383 = vsel %vm1340, %v8351, %v7872
        %v8384 = vsel %vm1340, %v8352, %v7874
        %v8385 = vsel %vm1340, %v8353, %v7876
        %v8386 = vsel %vm1340, %v8354, %v7878
        %v8387 = vsel %vm1340, %v8355, %v7880
        %v8388 = vsel %vm1340, %v8356, %v7882
        %v8389 = vsel %vm1340, %v8357, %v7884
        %v8390 = vsel %vm1340, %v8358, %v7886
        %v8391 = vsel %vm224, %v7476, %v7963
        %v8392 = vsel %vm224, %v7478, %v7965
        %v8393 = vsel %vm224, %v7481, %v7967
        %v8394 = vsel %vm224, %v7483, %v7969
        %v8395 = vsel %vm224, %v7486, %v7971
        %v8396 = vsel %vm224, %v7488, %v7973
        %v8397 = vsel %vm224, %v7491, %v7975
        %v8398 = vsel %vm224, %v7493, %v7977
        %v8399 = vsel %vm224, %v7496, %v7979
        %v8400 = vsel %vm224, %v7498, %v7981
        %v8401 = vsel %vm224, %v7501, %v7983
        %v8402 = vsel %vm224, %v7503, %v7985
        %v8403 = vsel %vm224, %v7506, %v7987
        %v8404 = vsel %vm224, %v7508, %v7989
        %v8405 = vsel %vm224, %v7511, %v7991
        %v8406 = vsel %vm224, %v7513, %v7993
        %v8407 = vsel %vm224, %v7516, %v7995
        %v8408 = vsel %vm224, %v7518, %v7997
        %v8409 = vsel %vm224, %v7521, %v7999
        %v8410 = vsel %vm224, %v7523, %v8001
        %v8411 = vsel %vm224, %v7526, %v8003
        %v8412 = vsel %vm224, %v7528, %v8005
        %v8413 = vsel %vm224, %v7531, %v8007
        %v8414 = vsel %vm224, %v7533, %v8009
        %v8415 = vsel %vm224, %v7536, %v8011
        %v8416 = vsel %vm224, %v7538, %v8013
        %v8417 = vsel %vm224, %v7541, %v8015
        %v8418 = vsel %vm224, %v7543, %v8017
        %v8419 = vsel %vm224, %v7546, %v8019
        %v8420 = vsel %vm224, %v7548, %v8021
        %v8421 = vsel %vm224, %v7922, %v8023
        %v8422 = vsel %vm224, %v7924, %v8025
        %v8423 = vsel %vm1307, %v8391, %v8061
        %v8424 = vsel %vm1307, %v8392, %v8063
        %v8425 = vsel %vm1307, %v8393, %v8065
        %v8426 = vsel %vm1307, %v8394, %v8067
        %v8427 = vsel %vm1307, %v8395, %v8069
        %v8428 = vsel %vm1307, %v8396, %v8071
        %v8429 = vsel %vm1307, %v8397, %v8073
        %v8430 = vsel %vm1307, %v8398, %v8075
        %v8431 = vsel %vm1307, %v8399, %v8077
        %v8432 = vsel %vm1307, %v8400, %v8079
        %v8433 = vsel %vm1307, %v8401, %v8081
        %v8434 = vsel %vm1307, %v8402, %v8083
        %v8435 = vsel %vm1307, %v8403, %v8085
        %v8436 = vsel %vm1307, %v8404, %v8087
        %v8437 = vsel %vm1307, %v8405, %v8089
        %v8438 = vsel %vm1307, %v8406, %v8091
        %v8439 = vsel %vm1307, %v8407, %v8093
        %v8440 = vsel %vm1307, %v8408, %v8095
        %v8441 = vsel %vm1307, %v8409, %v8097
        %v8442 = vsel %vm1307, %v8410, %v8099
        %v8443 = vsel %vm1307, %v8411, %v8101
        %v8444 = vsel %vm1307, %v8412, %v8103
        %v8445 = vsel %vm1307, %v8413, %v8105
        %v8446 = vsel %vm1307, %v8414, %v8107
        %v8447 = vsel %vm1307, %v8415, %v8109
        %v8448 = vsel %vm1307, %v8416, %v8111
        %v8449 = vsel %vm1307, %v8417, %v8113
        %v8450 = vsel %vm1307, %v8418, %v8115
        %v8451 = vsel %vm1307, %v8419, %v8117
        %v8452 = vsel %vm1307, %v8420, %v8119
        %v8453 = vsel %vm1307, %v8421, %v8121
        %v8454 = vsel %vm1307, %v8422, %v8123
        %v8455 = vsel %vm1340, %v8423, %v8163
        %v8456 = vsel %vm1340, %v8424, %v8165
        %v8457 = vsel %vm1340, %v8425, %v8167
        %v8458 = vsel %vm1340, %v8426, %v8169
        %v8459 = vsel %vm1340, %v8427, %v8171
        %v8460 = vsel %vm1340, %v8428, %v8173
        %v8461 = vsel %vm1340, %v8429, %v8175
        %v8462 = vsel %vm1340, %v8430, %v8177
        %v8463 = vsel %vm1340, %v8431, %v8179
        %v8464 = vsel %vm1340, %v8432, %v8181
        %v8465 = vsel %vm1340, %v8433, %v8183
        %v8466 = vsel %vm1340, %v8434, %v8185
        %v8467 = vsel %vm1340, %v8435, %v8187
        %v8468 = vsel %vm1340, %v8436, %v8189
        %v8469 = vsel %vm1340, %v8437, %v8191
        %v8470 = vsel %vm1340, %v8438, %v8193
        %v8471 = vsel %vm1340, %v8439, %v8195
        %v8472 = vsel %vm1340, %v8440, %v8197
        %v8473 = vsel %vm1340, %v8441, %v8199
        %v8474 = vsel %vm1340, %v8442, %v8201
        %v8475 = vsel %vm1340, %v8443, %v8203
        %v8476 = vsel %vm1340, %v8444, %v8205
        %v8477 = vsel %vm1340, %v8445, %v8207
        %v8478 = vsel %vm1340, %v8446, %v8209
        %v8479 = vsel %vm1340, %v8447, %v8211
        %v8480 = vsel %vm1340, %v8448, %v8213
        %v8481 = vsel %vm1340, %v8449, %v8215
        %v8482 = vsel %vm1340, %v8450, %v8217
        %v8483 = vsel %vm1340, %v8451, %v8219
        %v8484 = vsel %vm1340, %v8452, %v8221
        %v8485 = vsel %vm1340, %v8453, %v8223
        %v8486 = vsel %vm1340, %v8454, %v8225
        %v8487 = vpack.c.bf16 %v8360, %v8359
        %v8488 = vpack.c.bf16 %v8456, %v8455
        %v8489 = vpack.c.bf16 %v7659, %v7657
        %v8490 = vpack.c.bf16 %v8362, %v8361
        %v8491 = vpack.c.bf16 %v8458, %v8457
        %v8492 = vpack.c.bf16 %v7664, %v7662
        %v8493 = vpack.c.bf16 %v8364, %v8363
        %v8494 = vpack.c.bf16 %v8460, %v8459
        %v8495 = vpack.c.bf16 %v7669, %v7667
        %v8496 = vpack.c.bf16 %v8366, %v8365
        %v8497 = vpack.c.bf16 %v8462, %v8461
        %v8498 = vpack.c.bf16 %v7674, %v7672
        %v8499 = vpack.c.bf16 %v8368, %v8367
        %v8500 = vpack.c.bf16 %v8464, %v8463
        %v8501 = vpack.c.bf16 %v7679, %v7677
        %v8502 = vpack.c.bf16 %v8370, %v8369
        %v8503 = vpack.c.bf16 %v8466, %v8465
        %v8504 = vpack.c.bf16 %v7684, %v7682
        %v8505 = vpack.c.bf16 %v8372, %v8371
        %v8506 = vpack.c.bf16 %v8468, %v8467
        %v8507 = vpack.c.bf16 %v7689, %v7687
        %v8508 = vpack.c.bf16 %v8374, %v8373
        %v8509 = vpack.c.bf16 %v8470, %v8469
        %v8510 = vpack.c.bf16 %v7694, %v7692
        %v8511 = vpack.c.bf16 %v8376, %v8375
        %v8512 = vpack.c.bf16 %v8472, %v8471
        %v8513 = vpack.c.bf16 %v7699, %v7697
        %v8514 = vpack.c.bf16 %v8378, %v8377
        %v8515 = vpack.c.bf16 %v8474, %v8473
        %v8516 = vpack.c.bf16 %v7704, %v7702
        %v8517 = vpack.c.bf16 %v8380, %v8379
        %v8518 = vpack.c.bf16 %v8476, %v8475
        %v8519 = vpack.c.bf16 %v7709, %v7707
        %v8520 = vpack.c.bf16 %v8382, %v8381
        %v8521 = vpack.c.bf16 %v8478, %v8477
        %v8522 = vpack.c.bf16 %v7714, %v7712
        %v8523 = vpack.c.bf16 %v8384, %v8383
        %v8524 = vpack.c.bf16 %v8480, %v8479
        %v8525 = vpack.c.bf16 %v7719, %v7717
        %v8526 = vpack.c.bf16 %v8386, %v8385
        %v8527 = vpack.c.bf16 %v8482, %v8481
        %v8528 = vpack.c.bf16 %v7724, %v7722
        %v8529 = vpack.c.bf16 %v8388, %v8387
        %v8530 = vpack.c.bf16 %v8484, %v8483
        %v8531 = vpack.c.bf16 %v7961, %v7959
        %v8532 = vpack.c.bf16 %v8390, %v8389
        %v8533 = vpack.c.bf16 %v8486, %v8485
        %v8534 = vpack.c.bf16 %v8262, %v8260
        %v8535 = vld [vmem:[%s3] sm:$0xf]
        %v8536 = vld [vmem:[%s3 + $0x4] sm:$0xf]
        %v8537 = vld [vmem:[%s3 + $0x8] sm:$0xf]
        %v8538 = vld [vmem:[%s3 + $0xc] sm:$0xf]
        %v8539 = vld [vmem:[%s3 + $0x10] sm:$0xf]
        %v8540 = vld [vmem:[%s3 + $0x14] sm:$0xf]
        %v8541 = vld [vmem:[%s3 + $0x18] sm:$0xf]
        %v8542 = vld [vmem:[%s3 + $0x1c] sm:$0xf]
        %v8543 = vld [vmem:[%s3 + $0x20] sm:$0xf]
        %v8544 = vld [vmem:[%s3 + $0x24] sm:$0xf]
        %v8545 = vld [vmem:[%s3 + $0x28] sm:$0xf]
        %v8546 = vld [vmem:[%s3 + $0x2c] sm:$0xf]
        %v8547 = vld [vmem:[%s3 + $0x30] sm:$0xf]
        %v8548 = vld [vmem:[%s3 + $0x34] sm:$0xf]
        %v8549 = vld [vmem:[%s3 + $0x38] sm:$0xf]
        %v8550 = vld [vmem:[%s3 + $0x3c] sm:$0xf]
        %v8551 = vld [vmem:[%s3 + $0x40] sm:$0xf]
        %v8552 = vld [vmem:[%s3 + $0x44] sm:$0xf]
        %v8553 = vld [vmem:[%s3 + $0x48] sm:$0xf]
        %v8554 = vld [vmem:[%s3 + $0x4c] sm:$0xf]
        %v8555 = vld [vmem:[%s3 + $0x50] sm:$0xf]
        %v8556 = vld [vmem:[%s3 + $0x54] sm:$0xf]
        %v8557 = vld [vmem:[%s3 + $0x58] sm:$0xf]
        %v8558 = vld [vmem:[%s3 + $0x5c] sm:$0xf]
        %v8559 = vld [vmem:[%s3 + $0x60] sm:$0xf]
        %v8560 = vld [vmem:[%s3 + $0x64] sm:$0xf]
        %v8561 = vld [vmem:[%s3 + $0x68] sm:$0xf]
        %v8562 = vld [vmem:[%s3 + $0x6c] sm:$0xf]
        %v8563 = vld [vmem:[%s3 + $0x70] sm:$0xf]
        %v8564 = vld [vmem:[%s3 + $0x74] sm:$0xf]
        %v8565 = vld [vmem:[%s3 + $0x78] sm:$0xf]
        %v8566 = vld [vmem:[%s3 + $0x7c] sm:$0xf]
        %v8567 = vld [vmem:[%s3 + $0x80] sm:$0xf]
        %v8568 = vld [vmem:[%s3 + $0x84] sm:$0xf]
        %v8569 = vld [vmem:[%s3 + $0x88] sm:$0xf]
        %v8570 = vld [vmem:[%s3 + $0x8c] sm:$0xf]
        %v8571 = vld [vmem:[%s4] sm:$0x1]
        %v8573 = vlaneseq
        %v8574 = vshrl.u32 %v8573, 7
        %v8575 = vsub.s32 0, %v8574
        %v8576 = vrot.slane %v8571, %v8575
        %v8614 = vunpack.c.l.b16 %v8535
        %v8615 = vunpack.c.l.b16 %v8536
        %v8616 = vunpack.c.l.b16 %v8537
        %v8617 = vunpack.c.l.b16 %v8538
        %v8618 = vunpack.c.l.b16 %v8539
        %v8619 = vunpack.c.l.b16 %v8540
        %v8620 = vunpack.c.l.b16 %v8541
        %v8621 = vunpack.c.l.b16 %v8542
        %v8622 = vunpack.c.l.b16 %v8543
        %v8623 = vunpack.c.l.b16 %v8544
        %v8624 = vunpack.c.l.b16 %v8545
        %v8625 = vunpack.c.l.b16 %v8546
        %v8626 = vunpack.c.l.b16 %v8547
        %v8627 = vunpack.c.l.b16 %v8548
        %v8628 = vunpack.c.l.b16 %v8549
        %v8629 = vunpack.c.l.b16 %v8550
        %v8630 = vunpack.c.l.b16 %v8551
        %v8631 = vunpack.c.l.b16 %v8552
        %v8632 = vunpack.c.l.b16 %v8553
        %v8633 = vunpack.c.l.b16 %v8554
        %v8634 = vunpack.c.l.b16 %v8555
        %v8635 = vunpack.c.l.b16 %v8556
        %v8636 = vunpack.c.l.b16 %v8557
        %v8637 = vunpack.c.l.b16 %v8558
        %v8638 = vunpack.c.l.b16 %v8559
        %v8639 = vunpack.c.l.b16 %v8560
        %v8640 = vunpack.c.l.b16 %v8561
        %v8641 = vunpack.c.l.b16 %v8562
        %v8642 = vunpack.c.l.b16 %v8563
        %v8643 = vunpack.c.l.b16 %v8564
        %v8644 = vunpack.c.l.b16 %v8565
        %v8645 = vunpack.c.l.b16 %v8566
        %v8646 = vunpack.c.l.b16 %v8567
        %v8647 = vunpack.c.l.b16 %v8568
        %v8648 = vunpack.c.l.b16 %v8569
        %v8649 = vunpack.c.l.b16 %v8570
        %v8650 = vpack.c.b16 %v8615, %v8614
        %v8651 = vpack.c.b16 %v8617, %v8616
        %v8652 = vpack.c.b16 %v8619, %v8618
        %v8653 = vpack.c.b16 %v8621, %v8620
        %v8654 = vpack.c.b16 %v8623, %v8622
        %v8655 = vpack.c.b16 %v8625, %v8624
        %v8656 = vpack.c.b16 %v8627, %v8626
        %v8657 = vpack.c.b16 %v8629, %v8628
        %v8658 = vpack.c.b16 %v8631, %v8630
        %v8659 = vpack.c.b16 %v8633, %v8632
        %v8660 = vpack.c.b16 %v8635, %v8634
        %v8661 = vpack.c.b16 %v8637, %v8636
        %v8662 = vpack.c.b16 %v8639, %v8638
        %v8663 = vpack.c.b16 %v8641, %v8640
        %v8664 = vpack.c.b16 %v8643, %v8642
        %v8665 = vpack.c.b16 %v8645, %v8644
        %v8666 = vpack.c.b16 %v8647, %v8646
        %v8667 = vpack.c.b16 %v8649, %v8648
        %v8687 = vsel %vm224, %v8489, 0
        %v8690 = vsel %vm224, %v8492, 0
        %v8693 = vsel %vm224, %v8495, 0
        %v8696 = vsel %vm224, %v8498, 0
        %v8699 = vsel %vm224, %v8501, 0
        %v8702 = vsel %vm224, %v8504, 0
        %v8705 = vsel %vm224, %v8507, 0
        %v8708 = vsel %vm224, %v8510, 0
        %v8711 = vsel %vm224, %v8513, 0
        %v8714 = vsel %vm224, %v8516, 0
        %v8717 = vsel %vm224, %v8519, 0
        %v8720 = vsel %vm224, %v8522, 0
        %v8723 = vsel %vm224, %v8525, 0
        %v8726 = vsel %vm224, %v8528, 0
        %v8729 = vsel %vm224, %v8531, 0
        %v8732 = vsel %vm224, %v8534, 0
        %8734 = vmatprep.subr.bf16.mxu0 0
        %8735 = vmatpush1.bf16.msra.mxu0 %v8650
        %8736 = vmatprep.subr.bf16.mxu0 0
        %8737 = vmatpush1.bf16.msra.mxu0 %v8651
        %8738 = vmatprep.subr.bf16.mxu0 0
        %8739 = vmatpush1.bf16.msra.mxu0 %v8652
        %8740 = vmatprep.subr.bf16.mxu0 0
        %8741 = vmatpush1.bf16.msra.mxu0 %v8653
        %8742 = vmatprep.subr.bf16.mxu0 0
        %8743 = vmatpush1.bf16.msra.mxu0 %v8654
        %8744 = vmatprep.subr.bf16.mxu0 0
        %8745 = vmatpush1.bf16.msra.mxu0 %v8655
        %8746 = vmatprep.subr.bf16.mxu0 0
        %8747 = vmatpush1.bf16.msra.mxu0 %v8656
        %8748 = vmatprep.subr.bf16.mxu0 0
        %8749 = vmatpush1.bf16.msra.mxu0 %v8657
        %8750 = vmatprep.subr.bf16.mxu0 0
        %8751 = vmatpush1.bf16.msra.mxu0 %v8658
        %8752 = vmatprep.subr.bf16.mxu0 0
        %8753 = vmatpush1.bf16.msra.mxu0 %v8659
        %8754 = vmatprep.subr.bf16.mxu0 0
        %8755 = vmatpush1.bf16.msra.mxu0 %v8660
        %8756 = vmatprep.subr.bf16.mxu0 0
        %8757 = vmatpush1.bf16.msra.mxu0 %v8661
        %8758 = vmatprep.subr.bf16.mxu0 0
        %8759 = vmatpush1.bf16.msra.mxu0 %v8662
        %8760 = vmatprep.subr.bf16.mxu0 0
        %8761 = vmatpush1.bf16.msra.mxu0 %v8663
        %8762 = vmatprep.subr.bf16.mxu0 0
        %8763 = vmatpush1.bf16.msra.mxu0 %v8664
        %8764 = vmatprep.subr.bf16.mxu0 0
        %8765 = vmatpush1.bf16.msra.mxu0 %v8665
        %8766 = vmatprep.mubr.bf16.mxu0 %v8488
        %8767 = vmatmul.mubr.bf16.gmra.mrb[0].mxu0 %v8487
        %v8768 = vpop.f32.mrb[0].mxu0
        %v8769 = vadd.f32 %v8576, %v8768
        %v8770 = vpop.f32.mrb[0].mxu0
        %v8771 = vpop.f32.mrb[0].mxu0
        %v8772 = vadd.f32 %v8576, %v8771
        %v8773 = vpop.f32.mrb[0].mxu0
        %8774 = vmatprep.mubr.bf16.mxu0 %v8491
        %8775 = vmatmul.mubr.bf16.gmra.mrb[0].mxu0 %v8490
        %v8776 = vpop.f32.mrb[0].mxu0
        %v8777 = vadd.f32 %v8576, %v8776
        %v8778 = vpop.f32.mrb[0].mxu0
        %v8779 = vpop.f32.mrb[0].mxu0
        %v8780 = vadd.f32 %v8576, %v8779
        %v8781 = vpop.f32.mrb[0].mxu0
        %8782 = vmatprep.mubr.bf16.mxu0 %v8494
        %8783 = vmatmul.mubr.bf16.gmra.mrb[0].mxu0 %v8493
        %v8784 = vpop.f32.mrb[0].mxu0
        %v8785 = vadd.f32 %v8576, %v8784
        %v8786 = vpop.f32.mrb[0].mxu0
        %v8787 = vpop.f32.mrb[0].mxu0
        %v8788 = vadd.f32 %v8576, %v8787
        %v8789 = vpop.f32.mrb[0].mxu0
        %8790 = vmatprep.mubr.bf16.mxu0 %v8497
        %8791 = vmatmul.mubr.bf16.gmra.mrb[0].mxu0 %v8496
        %v8792 = vpop.f32.mrb[0].mxu0
        %v8793 = vadd.f32 %v8576, %v8792
        %v8794 = vpop.f32.mrb[0].mxu0
        %v8795 = vpop.f32.mrb[0].mxu0
        %v8796 = vadd.f32 %v8576, %v8795
        %v8797 = vpop.f32.mrb[0].mxu0
        %8798 = vmatprep.mubr.bf16.mxu0 %v8500
        %8799 = vmatmul.mubr.bf16.gmra.mrb[0].mxu0 %v8499
        %v8800 = vpop.f32.mrb[0].mxu0
        %v8801 = vadd.f32 %v8576, %v8800
        %v8802 = vpop.f32.mrb[0].mxu0
        %v8803 = vpop.f32.mrb[0].mxu0
        %v8804 = vadd.f32 %v8576, %v8803
        %v8805 = vpop.f32.mrb[0].mxu0
        %8806 = vmatprep.mubr.bf16.mxu0 %v8503
        %8807 = vmatmul.mubr.bf16.gmra.mrb[0].mxu0 %v8502
        %v8808 = vpop.f32.mrb[0].mxu0
        %v8809 = vadd.f32 %v8576, %v8808
        %v8810 = vpop.f32.mrb[0].mxu0
        %v8811 = vpop.f32.mrb[0].mxu0
        %v8812 = vadd.f32 %v8576, %v8811
        %v8813 = vpop.f32.mrb[0].mxu0
        %8814 = vmatprep.mubr.bf16.mxu0 %v8506
        %8815 = vmatmul.mubr.bf16.gmra.mrb[0].mxu0 %v8505
        %v8816 = vpop.f32.mrb[0].mxu0
        %v8817 = vadd.f32 %v8576, %v8816
        %v8818 = vpop.f32.mrb[0].mxu0
        %v8819 = vpop.f32.mrb[0].mxu0
        %v8820 = vadd.f32 %v8576, %v8819
        %v8821 = vpop.f32.mrb[0].mxu0
        %8822 = vmatprep.mubr.bf16.mxu0 %v8509
        %8823 = vmatmul.mubr.bf16.gmra.mrb[0].mxu0 %v8508
        %v8824 = vpop.f32.mrb[0].mxu0
        %v8825 = vadd.f32 %v8576, %v8824
        %v8826 = vpop.f32.mrb[0].mxu0
        %v8827 = vpop.f32.mrb[0].mxu0
        %v8828 = vadd.f32 %v8576, %v8827
        %v8829 = vpop.f32.mrb[0].mxu0
        %8830 = vmatprep.mubr.bf16.mxu0 %v8512
        %8831 = vmatmul.mubr.bf16.gmra.mrb[0].mxu0 %v8511
        %v8832 = vpop.f32.mrb[0].mxu0
        %v8833 = vadd.f32 %v8576, %v8832
        %v8834 = vpop.f32.mrb[0].mxu0
        %v8835 = vpop.f32.mrb[0].mxu0
        %v8836 = vadd.f32 %v8576, %v8835
        %v8837 = vpop.f32.mrb[0].mxu0
        %8838 = vmatprep.mubr.bf16.mxu0 %v8515
        %8839 = vmatmul.mubr.bf16.gmra.mrb[0].mxu0 %v8514
        %v8840 = vpop.f32.mrb[0].mxu0
        %v8841 = vadd.f32 %v8576, %v8840
        %v8842 = vpop.f32.mrb[0].mxu0
        %v8843 = vpop.f32.mrb[0].mxu0
        %v8844 = vadd.f32 %v8576, %v8843
        %v8845 = vpop.f32.mrb[0].mxu0
        %8846 = vmatprep.mubr.bf16.mxu0 %v8518
        %8847 = vmatmul.mubr.bf16.gmra.mrb[0].mxu0 %v8517
        %v8848 = vpop.f32.mrb[0].mxu0
        %v8849 = vadd.f32 %v8576, %v8848
        %v8850 = vpop.f32.mrb[0].mxu0
        %v8851 = vpop.f32.mrb[0].mxu0
        %v8852 = vadd.f32 %v8576, %v8851
        %v8853 = vpop.f32.mrb[0].mxu0
        %8854 = vmatprep.mubr.bf16.mxu0 %v8521
        %8855 = vmatmul.mubr.bf16.gmra.mrb[0].mxu0 %v8520
        %v8856 = vpop.f32.mrb[0].mxu0
        %v8857 = vadd.f32 %v8576, %v8856
        %v8858 = vpop.f32.mrb[0].mxu0
        %v8859 = vpop.f32.mrb[0].mxu0
        %v8860 = vadd.f32 %v8576, %v8859
        %v8861 = vpop.f32.mrb[0].mxu0
        %8862 = vmatprep.mubr.bf16.mxu0 %v8524
        %8863 = vmatmul.mubr.bf16.gmra.mrb[0].mxu0 %v8523
        %v8864 = vpop.f32.mrb[0].mxu0
        %v8865 = vadd.f32 %v8576, %v8864
        %v8866 = vpop.f32.mrb[0].mxu0
        %v8867 = vpop.f32.mrb[0].mxu0
        %v8868 = vadd.f32 %v8576, %v8867
        %v8869 = vpop.f32.mrb[0].mxu0
        %8870 = vmatprep.mubr.bf16.mxu0 %v8527
        %8871 = vmatmul.mubr.bf16.gmra.mrb[0].mxu0 %v8526
        %v8872 = vpop.f32.mrb[0].mxu0
        %v8873 = vadd.f32 %v8576, %v8872
        %v8874 = vpop.f32.mrb[0].mxu0
        %v8875 = vpop.f32.mrb[0].mxu0
        %v8876 = vadd.f32 %v8576, %v8875
        %v8877 = vpop.f32.mrb[0].mxu0
        %8878 = vmatprep.mubr.bf16.mxu0 %v8530
        %8879 = vmatmul.mubr.bf16.gmra.mrb[0].mxu0 %v8529
        %v8880 = vpop.f32.mrb[0].mxu0
        %v8881 = vadd.f32 %v8576, %v8880
        %v8882 = vpop.f32.mrb[0].mxu0
        %v8883 = vpop.f32.mrb[0].mxu0
        %v8884 = vadd.f32 %v8576, %v8883
        %v8885 = vpop.f32.mrb[0].mxu0
        %8886 = vmatprep.mubr.bf16.mxu0 %v8533
        %8887 = vmatmul.mubr.bf16.gmra.mrb[0].mxu0 %v8532
        %v8888 = vpop.f32.mrb[0].mxu0
        %v8889 = vadd.f32 %v8576, %v8888
        %v8890 = vpop.f32.mrb[0].mxu0
        %v8891 = vpop.f32.mrb[0].mxu0
        %v8892 = vadd.f32 %v8576, %v8891
        %v8893 = vpop.f32.mrb[0].mxu0
        %8894 = vdwg.mxu0
        %8895 = vmatprep.subr.bf16.mxu0 0
        %8896 = vmatpush1.bf16.msra.mxu0 %v8666
        %8897 = vmatprep.subr.bf16.mxu0 0
        %8898 = vmatpush1.bf16.msra.mxu0 %v8667
        %8899 = vmatprep.subr.bf16.mxu0 0
        %8900 = vmatpush1.bf16.msra.mxu0 0
        %8901 = vmatprep.subr.bf16.mxu0 0
        %8902 = vmatpush1.bf16.msra.mxu0 0
        %8903 = vmatprep.subr.bf16.mxu0 0
        %8904 = vmatpush1.bf16.msra.mxu0 0
        %8905 = vmatprep.subr.bf16.mxu0 0
        %8906 = vmatpush1.bf16.msra.mxu0 0
        %8907 = vmatprep.subr.bf16.mxu0 0
        %8908 = vmatpush1.bf16.msra.mxu0 0
        %8909 = vmatprep.subr.bf16.mxu0 0
        %8910 = vmatpush1.bf16.msra.mxu0 0
        %8911 = vmatprep.subr.bf16.mxu0 0
        %8912 = vmatpush1.bf16.msra.mxu0 0
        %8913 = vmatprep.subr.bf16.mxu0 0
        %8914 = vmatpush1.bf16.msra.mxu0 0
        %8915 = vmatprep.subr.bf16.mxu0 0
        %8916 = vmatpush1.bf16.msra.mxu0 0
        %8917 = vmatprep.subr.bf16.mxu0 0
        %8918 = vmatpush1.bf16.msra.mxu0 0
        %8919 = vmatprep.subr.bf16.mxu0 0
        %8920 = vmatpush1.bf16.msra.mxu0 0
        %8921 = vmatprep.subr.bf16.mxu0 0
        %8922 = vmatpush1.bf16.msra.mxu0 0
        %8923 = vmatprep.subr.bf16.mxu0 0
        %8924 = vmatpush1.bf16.msra.mxu0 0
        %8925 = vmatprep.subr.bf16.mxu0 0
        %8926 = vmatpush1.bf16.msra.mxu0 0
        %8927 = vmatprep.mubr.bf16.mxu0 0
        %8928 = vmatmul.mubr.bf16.gmra.mrb[0].mxu0 %v8687
        %v8929 = vpop.f32.mrb[0].mxu0
        %v8930 = vadd.f32 %v8769, %v8929
        %v8931 = vpop.f32.mrb[0].mxu0
        %v8932 = vpop.f32.mrb[0].mxu0
        %v8933 = vadd.f32 %v8772, %v8932
        %v8934 = vpop.f32.mrb[0].mxu0
        %8935 = vmatprep.mubr.bf16.mxu0 0
        %8936 = vmatmul.mubr.bf16.gmra.mrb[0].mxu0 %v8690
        %v8937 = vpop.f32.mrb[0].mxu0
        %v8938 = vadd.f32 %v8777, %v8937
        %v8939 = vpop.f32.mrb[0].mxu0
        %v8940 = vpop.f32.mrb[0].mxu0
        %v8941 = vadd.f32 %v8780, %v8940
        %v8942 = vpop.f32.mrb[0].mxu0
        %8943 = vmatprep.mubr.bf16.mxu0 0
        %8944 = vmatmul.mubr.bf16.gmra.mrb[0].mxu0 %v8693
        %v8945 = vpop.f32.mrb[0].mxu0
        %v8946 = vadd.f32 %v8785, %v8945
        %v8947 = vpop.f32.mrb[0].mxu0
        %v8948 = vpop.f32.mrb[0].mxu0
        %v8949 = vadd.f32 %v8788, %v8948
        %v8950 = vpop.f32.mrb[0].mxu0
        %8951 = vmatprep.mubr.bf16.mxu0 0
        %8952 = vmatmul.mubr.bf16.gmra.mrb[0].mxu0 %v8696
        %v8953 = vpop.f32.mrb[0].mxu0
        %v8954 = vadd.f32 %v8793, %v8953
        %v8955 = vpop.f32.mrb[0].mxu0
        %v8956 = vpop.f32.mrb[0].mxu0
        %v8957 = vadd.f32 %v8796, %v8956
        %v8958 = vpop.f32.mrb[0].mxu0
        %8959 = vmatprep.mubr.bf16.mxu0 0
        %8960 = vmatmul.mubr.bf16.gmra.mrb[0].mxu0 %v8699
        %v8961 = vpop.f32.mrb[0].mxu0
        %v8962 = vadd.f32 %v8801, %v8961
        %v8963 = vpop.f32.mrb[0].mxu0
        %v8964 = vpop.f32.mrb[0].mxu0
        %v8965 = vadd.f32 %v8804, %v8964
        %v8966 = vpop.f32.mrb[0].mxu0
        %8967 = vmatprep.mubr.bf16.mxu0 0
        %8968 = vmatmul.mubr.bf16.gmra.mrb[0].mxu0 %v8702
        %v8969 = vpop.f32.mrb[0].mxu0
        %v8970 = vadd.f32 %v8809, %v8969
        %v8971 = vpop.f32.mrb[0].mxu0
        %v8972 = vpop.f32.mrb[0].mxu0
        %v8973 = vadd.f32 %v8812, %v8972
        %v8974 = vpop.f32.mrb[0].mxu0
        %8975 = vmatprep.mubr.bf16.mxu0 0
        %8976 = vmatmul.mubr.bf16.gmra.mrb[0].mxu0 %v8705
        %v8977 = vpop.f32.mrb[0].mxu0
        %v8978 = vadd.f32 %v8817, %v8977
        %v8979 = vpop.f32.mrb[0].mxu0
        %v8980 = vpop.f32.mrb[0].mxu0
        %v8981 = vadd.f32 %v8820, %v8980
        %v8982 = vpop.f32.mrb[0].mxu0
        %8983 = vmatprep.mubr.bf16.mxu0 0
        %8984 = vmatmul.mubr.bf16.gmra.mrb[0].mxu0 %v8708
        %v8985 = vpop.f32.mrb[0].mxu0
        %v8986 = vadd.f32 %v8825, %v8985
        %v8987 = vpop.f32.mrb[0].mxu0
        %v8988 = vpop.f32.mrb[0].mxu0
        %v8989 = vadd.f32 %v8828, %v8988
        %v8990 = vpop.f32.mrb[0].mxu0
        %8991 = vmatprep.mubr.bf16.mxu0 0
        %8992 = vmatmul.mubr.bf16.gmra.mrb[0].mxu0 %v8711
        %v8993 = vpop.f32.mrb[0].mxu0
        %v8994 = vadd.f32 %v8833, %v8993
        %v8995 = vpop.f32.mrb[0].mxu0
        %v8996 = vpop.f32.mrb[0].mxu0
        %v8997 = vadd.f32 %v8836, %v8996
        %v8998 = vpop.f32.mrb[0].mxu0
        %8999 = vmatprep.mubr.bf16.mxu0 0
        %9000 = vmatmul.mubr.bf16.gmra.mrb[0].mxu0 %v8714
        %v9001 = vpop.f32.mrb[0].mxu0
        %v9002 = vadd.f32 %v8841, %v9001
        %v9003 = vpop.f32.mrb[0].mxu0
        %v9004 = vpop.f32.mrb[0].mxu0
        %v9005 = vadd.f32 %v8844, %v9004
        %v9006 = vpop.f32.mrb[0].mxu0
        %9007 = vmatprep.mubr.bf16.mxu0 0
        %9008 = vmatmul.mubr.bf16.gmra.mrb[0].mxu0 %v8717
        %v9009 = vpop.f32.mrb[0].mxu0
        %v9010 = vadd.f32 %v8849, %v9009
        %v9011 = vpop.f32.mrb[0].mxu0
        %v9012 = vpop.f32.mrb[0].mxu0
        %v9013 = vadd.f32 %v8852, %v9012
        %v9014 = vpop.f32.mrb[0].mxu0
        %9015 = vmatprep.mubr.bf16.mxu0 0
        %9016 = vmatmul.mubr.bf16.gmra.mrb[0].mxu0 %v8720
        %v9017 = vpop.f32.mrb[0].mxu0
        %v9018 = vadd.f32 %v8857, %v9017
        %v9019 = vpop.f32.mrb[0].mxu0
        %v9020 = vpop.f32.mrb[0].mxu0
        %v9021 = vadd.f32 %v8860, %v9020
        %v9022 = vpop.f32.mrb[0].mxu0
        %9023 = vmatprep.mubr.bf16.mxu0 0
        %9024 = vmatmul.mubr.bf16.gmra.mrb[0].mxu0 %v8723
        %v9025 = vpop.f32.mrb[0].mxu0
        %v9026 = vadd.f32 %v8865, %v9025
        %v9027 = vpop.f32.mrb[0].mxu0
        %v9028 = vpop.f32.mrb[0].mxu0
        %v9029 = vadd.f32 %v8868, %v9028
        %v9030 = vpop.f32.mrb[0].mxu0
        %9031 = vmatprep.mubr.bf16.mxu0 0
        %9032 = vmatmul.mubr.bf16.gmra.mrb[0].mxu0 %v8726
        %v9033 = vpop.f32.mrb[0].mxu0
        %v9034 = vadd.f32 %v8873, %v9033
        %v9035 = vpop.f32.mrb[0].mxu0
        %v9036 = vpop.f32.mrb[0].mxu0
        %v9037 = vadd.f32 %v8876, %v9036
        %v9038 = vpop.f32.mrb[0].mxu0
        %9039 = vmatprep.mubr.bf16.mxu0 0
        %9040 = vmatmul.mubr.bf16.gmra.mrb[0].mxu0 %v8729
        %v9041 = vpop.f32.mrb[0].mxu0
        %v9042 = vadd.f32 %v8881, %v9041
        %v9043 = vpop.f32.mrb[0].mxu0
        %v9044 = vpop.f32.mrb[0].mxu0
        %v9045 = vadd.f32 %v8884, %v9044
        %v9046 = vpop.f32.mrb[0].mxu0
        %9047 = vmatprep.mubr.bf16.mxu0 0
        %9048 = vmatmul.mubr.bf16.gmra.mrb[0].mxu0 %v8732
        %v9049 = vpop.f32.mrb[0].mxu0
        %v9050 = vadd.f32 %v8889, %v9049
        %v9051 = vpop.f32.mrb[0].mxu0
        %v9052 = vpop.f32.mrb[0].mxu0
        %v9053 = vadd.f32 %v8892, %v9052
        %v9054 = vpop.f32.mrb[0].mxu0
        %9055 = vdwg.mxu0
        %9056 = vst [vmem:[%s217] sm:$0xff] %v8930
        %9057 = vst [vmem:[%s217 + $0x8] sm:$0xff] %v8933
        %9058 = vst [vmem:[%s217 + $0x10] sm:$0xff] %v8938
        %9059 = vst [vmem:[%s217 + $0x18] sm:$0xff] %v8941
        %9060 = vst [vmem:[%s217 + $0x20] sm:$0xff] %v8946
        %9061 = vst [vmem:[%s217 + $0x28] sm:$0xff] %v8949
        %9062 = vst [vmem:[%s217 + $0x30] sm:$0xff] %v8954
        %9063 = vst [vmem:[%s217 + $0x38] sm:$0xff] %v8957
        %9064 = vst [vmem:[%s217 + $0x40] sm:$0xff] %v8962
        %9065 = vst [vmem:[%s217 + $0x48] sm:$0xff] %v8965
        %9066 = vst [vmem:[%s217 + $0x50] sm:$0xff] %v8970
        %9067 = vst [vmem:[%s217 + $0x58] sm:$0xff] %v8973
        %9068 = vst [vmem:[%s217 + $0x60] sm:$0xff] %v8978
        %9069 = vst [vmem:[%s217 + $0x68] sm:$0xff] %v8981
        %9070 = vst [vmem:[%s217 + $0x70] sm:$0xff] %v8986
        %9071 = vst [vmem:[%s217 + $0x78] sm:$0xff] %v8989
        %9072 = vst [vmem:[%s217 + $0x80] sm:$0xff] %v8994
        %9073 = vst [vmem:[%s217 + $0x88] sm:$0xff] %v8997
        %9074 = vst [vmem:[%s217 + $0x90] sm:$0xff] %v9002
        %9075 = vst [vmem:[%s217 + $0x98] sm:$0xff] %v9005
        %9076 = vst [vmem:[%s217 + $0xa0] sm:$0xff] %v9010
        %9077 = vst [vmem:[%s217 + $0xa8] sm:$0xff] %v9013
        %9078 = vst [vmem:[%s217 + $0xb0] sm:$0xff] %v9018
        %9079 = vst [vmem:[%s217 + $0xb8] sm:$0xff] %v9021
        %9080 = vst [vmem:[%s217 + $0xc0] sm:$0xff] %v9026
        %9081 = vst [vmem:[%s217 + $0xc8] sm:$0xff] %v9029
        %9082 = vst [vmem:[%s217 + $0xd0] sm:$0xff] %v9034
        %9083 = vst [vmem:[%s217 + $0xd8] sm:$0xff] %v9037
        %9084 = vst [vmem:[%s217 + $0xe0] sm:$0xff] %v9042
        %9085 = vst [vmem:[%s217 + $0xe8] sm:$0xff] %v9045
        %9086 = vst [vmem:[%s217 + $0xf0] sm:$0xff] %v9050
        %9087 = vst [vmem:[%s217 + $0xf8] sm:$0xff] %v9053
        %s9088 = sand.u32 %s137, 1
        %s9089 = scalar_lea.sflag [#allocation4], %s9088
        %s9090 = sand.u32 %s137, 1
        %s9091 = smul.addr %s9090, 256
        %s9092 = scalar_lea.vmem [#allocation3], %s9091
        // Predicated region
        $region41: #{tpu_custom_call.1} parent=39 // pred_check
          %p9093 = pneg %p147
        $region42: #{tpu_custom_call.1} parent=39 // pred_check_branch
          %9095 = sbr.rel (%p9093) target = $region44
        $region43: #{tpu_custom_call.1} parent=39 // pred_region
          %s9097 = ssub.s32 4096, 4096
          %9098 = vsyncadd %s9089, %s9097
          %s9099 = smul.addr %s19, 32
          %s9100 = smul.addr %s9099, 128
          %s9101 = scalar_lea.hbm %s5, %s9100
          %s9102 = sshll.u32 %s9092, 4
          %s9103 = int_to_ptr.vmem [resolvable:$true] %s9102
          %9108 = dma.vmem_to_hbm [thread:$0]  %s9103, 4096, %s9101, %s9089, 128, 128, 8
        $region44: #{tpu_custom_call.1} parent=39 // pred_fallthru
          _
      $region40: #{tpu_custom_call.1} parent=5 // pred_fallthru
        _
      %p9109 = scmp.le.s32.totalorder 2, %s14
      // Predicated region
      $region45: #{tpu_custom_call.1} parent=5 // pred_check
        %p9110 = pneg %p9109
      $region46: #{tpu_custom_call.1} parent=5 // pred_check_branch
        %9112 = sbr.rel (%p9110) target = $region48
      $region47: #{tpu_custom_call.1} parent=5 // pred_region
        %s9113 = ssub.s32 %s14, 2
        // Predicated region
        $region49: #{tpu_custom_call.1} parent=47 // pred_check
          %p9114 = pneg %p153
        $region50: #{tpu_custom_call.1} parent=47 // pred_check_branch
          %9116 = sbr.rel (%p9114) target = $region52
        $region51: #{tpu_custom_call.1} parent=47 // pred_region
          %s9117 = sand.u32 %s138, 1
          %s9118 = scalar_lea.sflag [#allocation4], %s9117
          %s9119 = sand.u32 %s138, 1
          %s9120 = smul.addr %s9119, 256
          %s9121 = scalar_lea.vmem [#allocation3], %s9120
          %9122 = dma.done %s9118, 4096
        $region52: #{tpu_custom_call.1} parent=47 // pred_fallthru
          _
      $region48: #{tpu_custom_call.1} parent=5 // pred_fallthru
        _
    $region6: #{tpu_custom_call.1} parent=1 // loop_footer
      %s18 = sadd.s32 1, %s14
    $region7: #{tpu_custom_call.1} parent=1 // loop_footer_branch
      %13 = sbr.rel target = $region3
    $region8: #{tpu_custom_call.1} parent=1 // loop_exit
      _
    %9123 = vsyncpa [#allocation4], 1
    %s9124 = scalar_lea.sflag [#allocation4], 1
    %9125 = vsyncpa %s9124, 1

</llo_original>
